<compile_context>
chip_gen: v7x
topology: tpu7x:2x2x1
jax: 0.10.0
libtpu: 0.0.40
codegen_flags: <defaults>
</compile_context>

<pallas_src>
import functools

import jax
import jax.numpy as jnp
from jax.experimental import pallas as pl
from jax.experimental.pallas import tpu as pltpu


# ----------------------------------------------------------------------------
# Fused BA kernel: QKV linear -> masked multi-head attention -> MLP
# ----------------------------------------------------------------------------

def _ba_fused_kernel(x_ref, wqkv_ref, bqkv_ref, mask_ref, wmlp_ref, bmlp_ref,
                     o_ref, *, C, heads, scale, mxu_dtype):
    hd = C // heads

    def mm(a, b, dn=None):
        a = a.astype(mxu_dtype)
        b = b.astype(mxu_dtype)
        if dn is None:
            return jnp.dot(a, b, preferred_element_type=jnp.float32)
        return jax.lax.dot_general(a, b, dn, preferred_element_type=jnp.float32)

    x = x_ref[0].astype(jnp.float32)                        # (N_tok, C)
    qkv = mm(x, wqkv_ref[...]) + bqkv_ref[...]              # (N_tok, 3C)
    q = qkv[:, :C] * scale
    k = qkv[:, C:2 * C]
    v = qkv[:, 2 * C:]
    mask = mask_ref[0]                                      # (N_tok, N_tok) additive
    w_mlp = wmlp_ref[...]

    n_tok = x.shape[0]
    y = jnp.zeros((n_tok, C), jnp.float32)
    contract_last = (((1,), (1,)), ((), ()))                # a @ b.T on the MXU
    for h in range(heads):                                  # unrolled (4 heads)
        sl = slice(h * hd, (h + 1) * hd)
        s = mm(q[:, sl], k[:, sl], contract_last) + mask    # (N_tok, N_tok)
        m = jnp.max(s, axis=-1, keepdims=True)
        p = jnp.exp(s - m)
        denom = jnp.sum(p, axis=-1, keepdims=True)
        p = p * pl.reciprocal(denom, approx=True)           # EUP slot
        o_h = mm(p, v[:, sl])                               # (N_tok, hd)
        # Fold each head's output straight into the MLP (block matmul) -- avoids
        # an in-kernel concat and an extra (N_tok, C) temporary.
        y = y + mm(o_h, w_mlp[sl, :])
    y = y + bmlp_ref[...]
    o_ref[0] = y.astype(o_ref.dtype)


# ----------------------------------------------------------------------------
# JAX glue: window layout, routing, mask construction, wrapper
# ----------------------------------------------------------------------------

def _window_tokens(x_nchw, n_win):
    """NCHW -> window-major tokens (B, n_hw, s_hw, C)."""
    B, C, H, W = x_nchw.shape
    hs, ws = H // n_win, W // n_win
    x_nhwc = jnp.transpose(x_nchw, (0, 2, 3, 1))
    return (x_nhwc.reshape(B, n_win, hs, n_win, ws, C)
            .transpose(0, 1, 3, 2, 4, 5)
            .reshape(B, n_win * n_win, hs * ws, C))


def _routing_indices(xw, w_qkv, b_qkv, C, scale, topk):
    # WinProj('mean') + TopkRouting(diff_routing=False, param_routing=False).
    # mean-over-window commutes with the affine QKV projection, so q_win/k_win
    # are computed from window means of x (identical math to mean-after-linear).
    # r_weight (softmax of top-k logits) is unused since KVGather(mul_weight='none').
    # TODO(synk): top-k routing stays in plain JAX (tiny, data-dependent); there is
    # no in-kernel top-k primitive.
    x_mean = xw.mean(axis=2)                                   # (B, n_hw, C)
    q_win = x_mean @ w_qkv[:, :C] + b_qkv[:C]
    k_win = x_mean @ w_qkv[:, C:2 * C] + b_qkv[C:2 * C]
    logits = jnp.einsum("bmc,bnc->bmn", q_win * scale, k_win)
    _, r_idx = jax.lax.top_k(logits, topk)                     # (B, n_hw, topk)
    return r_idx


def ba_forward(x, params, *, n_win=8, num_heads=4, topk=3, use_bf16_mxu=False):
    B, C, H, W = x.shape
    hs, ws = H // n_win, W // n_win
    s_hw, n_hw = hs * ws, n_win * n_win
    n_tok = n_hw * s_hw
    scale = float(C) ** (-0.5)                                 # qk_dim ** -0.5

    w_qkv = params["w_qkv"].astype(jnp.float32)
    b_qkv = params["b_qkv"].astype(jnp.float32)
    w_mlp = params["w_mlp"].astype(jnp.float32)
    b_mlp = params["b_mlp"].astype(jnp.float32)

    xw = _window_tokens(x.astype(jnp.float32), n_win)          # (B, n_hw, s_hw, C)
    x_tok = xw.reshape(B, n_tok, C)

    # Routing + top-k -> equivalent additive attention mask (tiny JAX glue).
    r_idx = _routing_indices(xw, w_qkv, b_qkv, C, scale, topk)
    allowed = jnp.sum(jax.nn.one_hot(r_idx, n_hw, dtype=jnp.float32), axis=2) > 0.0
    allowed = jnp.repeat(jnp.repeat(allowed, s_hw, axis=1), s_hw, axis=2)
    add_mask = jnp.where(allowed, 0.0, -1e30).astype(jnp.float32)   # (B, n_tok, n_tok)

    kernel = functools.partial(
        _ba_fused_kernel, C=C, heads=num_heads, scale=scale,
        mxu_dtype=jnp.bfloat16 if use_bf16_mxu else jnp.float32)

    out_tok = pl.pallas_call(
        kernel,
        out_shape=jax.ShapeDtypeStruct((B, n_tok, C), jnp.float32),
        grid=(B,),
        in_specs=[
            pl.BlockSpec((1, n_tok, C), lambda b: (b, 0, 0)),
            pl.BlockSpec((C, 3 * C), lambda b: (0, 0)),
            pl.BlockSpec((1, 3 * C), lambda b: (0, 0)),
            pl.BlockSpec((1, n_tok, n_tok), lambda b: (b, 0, 0)),
            pl.BlockSpec((C, C), lambda b: (0, 0)),
            pl.BlockSpec((1, C), lambda b: (0, 0)),
        ],
        out_specs=pl.BlockSpec((1, n_tok, C), lambda b: (b, 0, 0)),
        compiler_params=pltpu.CompilerParams(
            dimension_semantics=("parallel",)),
    )(x_tok, w_qkv, b_qkv.reshape(1, 3 * C), add_mask, w_mlp, b_mlp.reshape(1, C))

    # '(b n_h n_w) heads (hs ws) c -> b (n_h hs) (n_w ws) (heads c)'
    out = (out_tok.reshape(B, n_win, n_win, hs, ws, C)
           .transpose(0, 1, 3, 2, 4, 5)
           .reshape(B, H, W, C))
    return out  # NHWC, exactly what BA.forward returns


# ----------------------------------------------------------------------------
# Pure-JAX reference (gather-based, mirrors the PyTorch forward) + demo
# ----------------------------------------------------------------------------

def ba_reference(x, params, *, n_win=8, num_heads=4, topk=3):
    B, C, H, W = x.shape
    hs, ws = H // n_win, W // n_win
    s_hw, n_hw = hs * ws, n_win * n_win
    hd = C // num_heads
    scale = float(C) ** (-0.5)
    w_qkv, b_qkv = params["w_qkv"], params["b_qkv"]
    w_mlp, b_mlp = params["w_mlp"], params["b_mlp"]

    xw = _window_tokens(x, n_win)                              # (B, n_hw, s_hw, C)
    qkv = xw @ w_qkv + b_qkv
    q_pix, kv_pix = qkv[..., :C], qkv[..., C:]

    r_idx = _routing_indices(xw, w_qkv, b_qkv, C, scale, topk)
    kv_sel = jax.vmap(lambda kvb, idxb: kvb[idxb])(kv_pix, r_idx)  # (B,n_hw,topk,s_hw,2C)
    k_sel, v_sel = kv_sel[..., :C], kv_sel[..., C:]

    L = topk * s_hw
    kh = k_sel.reshape(B, n_hw, L, num_heads, hd).transpose(0, 1, 3, 2, 4)
    vh = v_sel.reshape(B, n_hw, L, num_heads, hd).transpose(0, 1, 3, 2, 4)
    qh = q_pix.reshape(B, n_hw, s_hw, num_heads, hd).transpose(0, 1, 3, 2, 4)

    s = jnp.einsum("bwhqd,bwhkd->bwhqk", qh * scale, kh)
    p = jax.nn.softmax(s, axis=-1)
    o = jnp.einsum("bwhqk,bwhkd->bwhqd", p, vh)
    o = o.transpose(0, 1, 3, 2, 4).reshape(B, n_hw, s_hw, C)
    o = o @ w_mlp + b_mlp
    return (o.reshape(B, n_win, n_win, hs, ws, C)
            .transpose(0, 1, 3, 2, 4, 5)
            .reshape(B, H, W, C))


def init_params(key, C):
    ks = jax.random.split(key, 4)

    def nrm(k, shape, s=0.05):
        return jax.random.normal(k, shape, jnp.float32) * s

    return {
        "w_qkv": nrm(ks[0], (C, 3 * C)),   # nn.Linear(C, 3C) weight (stored transposed)
        "b_qkv": nrm(ks[1], (3 * C,)),
        "w_mlp": nrm(ks[2], (C, C)),
        "b_mlp": nrm(ks[3], (C,)),
    }


if __name__ == "__main__":
    # n_win=8 requires H, W divisible by 8; C=128 keeps every store lane-dense.
    B, C, H, W = 2, 128, 16, 16
    n_win, num_heads, topk = 8, 4, 3

    key = jax.random.PRNGKey(0)
    kx, kp = jax.random.split(key)
    x = jax.random.normal(kx, (B, C, H, W), jnp.float32)
    params = init_params(kp, C)

    fwd = jax.jit(lambda inp: ba_forward(inp, params, n_win=n_win,
                                         num_heads=num_heads, topk=topk))
    out = fwd(x)
    jax.block_until_ready(out)

    ref = ba_reference(x, params, n_win=n_win, num_heads=num_heads, topk=topk)
    assert out.shape == (B, H, W, C)
    assert bool(jnp.all(jnp.isfinite(out)))
    max_err = float(jnp.max(jnp.abs(out - ref)))
    assert bool(jnp.allclose(out, ref, atol=2e-2, rtol=2e-2)), max_err
    print("KERNEL_OK")
</pallas_src>

<mosaic_0001>
module attributes {stable_mosaic.version = 11 : i64} {
  func.func @_ba_fused_kernel(%arg0: i32, %arg1: memref<1x256x128xf32, #tpu.memory_space<vmem>>, %arg2: memref<128x384xf32, #tpu.memory_space<vmem>>, %arg3: memref<1x384xf32, #tpu.memory_space<vmem>>, %arg4: memref<1x256x256xf32, #tpu.memory_space<vmem>>, %arg5: memref<128x128xf32, #tpu.memory_space<vmem>>, %arg6: memref<1x128xf32, #tpu.memory_space<vmem>>, %arg7: memref<1x256x128xf32, #tpu.memory_space<vmem>>) attributes {dimension_semantics = [#tpu.dimension_semantics<parallel>], iteration_bounds = array<i64: 2>, scalar_prefetch = 0 : i64, scratch_operands = 0 : i64, tpu.core_type = #tpu.core_type<tc>, window_params = [{transform_indices = @transform_0, window_bounds = array<i64: 1, 256, 128>}, {pipeline_mode = #tpu.pipeline_mode<synchronous>, transform_indices = @transform_1, window_bounds = array<i64: 128, 384>}, {pipeline_mode = #tpu.pipeline_mode<synchronous>, transform_indices = @transform_2, window_bounds = array<i64: 1, 384>}, {transform_indices = @transform_3, window_bounds = array<i64: 1, 256, 256>}, {pipeline_mode = #tpu.pipeline_mode<synchronous>, transform_indices = @transform_4, window_bounds = array<i64: 128, 128>}, {pipeline_mode = #tpu.pipeline_mode<synchronous>, transform_indices = @transform_5, window_bounds = array<i64: 1, 128>}, {transform_indices = @transform_6, window_bounds = array<i64: 1, 256, 128>}]} {
    %c0 = arith.constant 0 : index
    %c0_0 = arith.constant 0 : index
    %c0_1 = arith.constant 0 : index
    %0 = vector.load %arg1[%c0, %c0_0, %c0_1] : memref<1x256x128xf32, #tpu.memory_space<vmem>>, vector<1x256x128xf32>
    %1 = vector.shape_cast %0 : vector<1x256x128xf32> to vector<256x128xf32>
    %c0_2 = arith.constant 0 : index
    %c0_3 = arith.constant 0 : index
    %2 = vector.load %arg2[%c0_2, %c0_3] : memref<128x384xf32, #tpu.memory_space<vmem>>, vector<128x384xf32>
    %cst = arith.constant dense<0.000000e+00> : vector<256x384xf32>
    %3 = tpu.matmul %1, %2, %cst {dimension_numbers = #tpu.dot_dimension_numbers<[1], [0], [0], [1], [0, 0, 1, 1], [], []>} : vector<256x128xf32>, vector<128x384xf32>, vector<256x384xf32> -> vector<256x384xf32>
    %c0_4 = arith.constant 0 : index
    %c0_5 = arith.constant 0 : index
    %4 = vector.load %arg3[%c0_4, %c0_5] : memref<1x384xf32, #tpu.memory_space<vmem>>, vector<1x384xf32>
    %5 = vector.broadcast %4 : vector<1x384xf32> to vector<256x384xf32>
    %6 = arith.addf %3, %5 : vector<256x384xf32>
    %7 = vector.extract_strided_slice %6 {offsets = [0, 0], sizes = [256, 128], strides = [1, 1]} : vector<256x384xf32> to vector<256x128xf32>
    %cst_6 = arith.constant 0.0883883461 : f32
    %8 = vector.broadcast %cst_6 : f32 to vector<256x128xf32>
    %9 = arith.mulf %7, %8 : vector<256x128xf32>
    %10 = vector.extract_strided_slice %6 {offsets = [0, 128], sizes = [256, 128], strides = [1, 1]} : vector<256x384xf32> to vector<256x128xf32>
    %11 = vector.extract_strided_slice %6 {offsets = [0, 256], sizes = [256, 128], strides = [1, 1]} : vector<256x384xf32> to vector<256x128xf32>
    %c0_7 = arith.constant 0 : index
    %c0_8 = arith.constant 0 : index
    %c0_9 = arith.constant 0 : index
    %12 = vector.load %arg4[%c0_7, %c0_8, %c0_9] : memref<1x256x256xf32, #tpu.memory_space<vmem>>, vector<1x256x256xf32>
    %13 = vector.shape_cast %12 : vector<1x256x256xf32> to vector<256x256xf32>
    %c0_10 = arith.constant 0 : index
    %c0_11 = arith.constant 0 : index
    %14 = vector.load %arg5[%c0_10, %c0_11] : memref<128x128xf32, #tpu.memory_space<vmem>>, vector<128x128xf32>
    %cst_12 = arith.constant 0.000000e+00 : f32
    %15 = vector.broadcast %cst_12 : f32 to vector<256x128xf32>
    %16 = vector.extract_strided_slice %9 {offsets = [0, 0], sizes = [256, 32], strides = [1, 1]} : vector<256x128xf32> to vector<256x32xf32>
    %17 = vector.extract_strided_slice %10 {offsets = [0, 0], sizes = [256, 32], strides = [1, 1]} : vector<256x128xf32> to vector<256x32xf32>
    %cst_13 = arith.constant dense<0.000000e+00> : vector<256x256xf32>
    %18 = tpu.matmul %16, %17, %cst_13 {dimension_numbers = #tpu.dot_dimension_numbers<[1], [1], [0], [0], [0, 0, 1, 0], [], []>} : vector<256x32xf32>, vector<256x32xf32>, vector<256x256xf32> -> vector<256x256xf32>
    %19 = arith.addf %18, %13 : vector<256x256xf32>
    %cst_14 = arith.constant dense<0xFF800000> : vector<256xf32>
    %20 = vector.multi_reduction <maximumf>, %19, %cst_14 [1] : vector<256x256xf32> to vector<256xf32>
    %21 = vector.shape_cast %20 : vector<256xf32> to vector<256x1xf32>
    %22 = vector.broadcast %21 : vector<256x1xf32> to vector<256x256xf32>
    %23 = arith.subf %19, %22 : vector<256x256xf32>
    %24 = math.exp %23 : vector<256x256xf32>
    %cst_15 = arith.constant dense<0.000000e+00> : vector<256xf32>
    %25 = vector.multi_reduction <add>, %24, %cst_15 [1] : vector<256x256xf32> to vector<256xf32>
    %26 = vector.shape_cast %25 : vector<256xf32> to vector<256x1xf32>
    %27 = tpu.reciprocal %26 {approx = true} : vector<256x1xf32> -> vector<256x1xf32>
    %28 = vector.broadcast %27 : vector<256x1xf32> to vector<256x256xf32>
    %29 = arith.mulf %24, %28 : vector<256x256xf32>
    %30 = vector.extract_strided_slice %11 {offsets = [0, 0], sizes = [256, 32], strides = [1, 1]} : vector<256x128xf32> to vector<256x32xf32>
    %cst_16 = arith.constant dense<0.000000e+00> : vector<256x32xf32>
    %31 = tpu.matmul %29, %30, %cst_16 {dimension_numbers = #tpu.dot_dimension_numbers<[1], [0], [0], [1], [0, 0, 1, 1], [], []>} : vector<256x256xf32>, vector<256x32xf32>, vector<256x32xf32> -> vector<256x32xf32>
    %32 = vector.extract_strided_slice %14 {offsets = [0, 0], sizes = [32, 128], strides = [1, 1]} : vector<128x128xf32> to vector<32x128xf32>
    %cst_17 = arith.constant dense<0.000000e+00> : vector<256x128xf32>
    %33 = tpu.matmul %31, %32, %cst_17 {dimension_numbers = #tpu.dot_dimension_numbers<[1], [0], [0], [1], [0, 0, 1, 1], [], []>} : vector<256x32xf32>, vector<32x128xf32>, vector<256x128xf32> -> vector<256x128xf32>
    %34 = arith.addf %15, %33 : vector<256x128xf32>
    %35 = vector.extract_strided_slice %9 {offsets = [0, 32], sizes = [256, 32], strides = [1, 1]} : vector<256x128xf32> to vector<256x32xf32>
    %36 = vector.extract_strided_slice %10 {offsets = [0, 32], sizes = [256, 32], strides = [1, 1]} : vector<256x128xf32> to vector<256x32xf32>
    %cst_18 = arith.constant dense<0.000000e+00> : vector<256x256xf32>
    %37 = tpu.matmul %35, %36, %cst_18 {dimension_numbers = #tpu.dot_dimension_numbers<[1], [1], [0], [0], [0, 0, 1, 0], [], []>} : vector<256x32xf32>, vector<256x32xf32>, vector<256x256xf32> -> vector<256x256xf32>
    %38 = arith.addf %37, %13 : vector<256x256xf32>
    %cst_19 = arith.constant dense<0xFF800000> : vector<256xf32>
    %39 = vector.multi_reduction <maximumf>, %38, %cst_19 [1] : vector<256x256xf32> to vector<256xf32>
    %40 = vector.shape_cast %39 : vector<256xf32> to vector<256x1xf32>
    %41 = vector.broadcast %40 : vector<256x1xf32> to vector<256x256xf32>
    %42 = arith.subf %38, %41 : vector<256x256xf32>
    %43 = math.exp %42 : vector<256x256xf32>
    %cst_20 = arith.constant dense<0.000000e+00> : vector<256xf32>
    %44 = vector.multi_reduction <add>, %43, %cst_20 [1] : vector<256x256xf32> to vector<256xf32>
    %45 = vector.shape_cast %44 : vector<256xf32> to vector<256x1xf32>
    %46 = tpu.reciprocal %45 {approx = true} : vector<256x1xf32> -> vector<256x1xf32>
    %47 = vector.broadcast %46 : vector<256x1xf32> to vector<256x256xf32>
    %48 = arith.mulf %43, %47 : vector<256x256xf32>
    %49 = vector.extract_strided_slice %11 {offsets = [0, 32], sizes = [256, 32], strides = [1, 1]} : vector<256x128xf32> to vector<256x32xf32>
    %cst_21 = arith.constant dense<0.000000e+00> : vector<256x32xf32>
    %50 = tpu.matmul %48, %49, %cst_21 {dimension_numbers = #tpu.dot_dimension_numbers<[1], [0], [0], [1], [0, 0, 1, 1], [], []>} : vector<256x256xf32>, vector<256x32xf32>, vector<256x32xf32> -> vector<256x32xf32>
    %51 = vector.extract_strided_slice %14 {offsets = [32, 0], sizes = [32, 128], strides = [1, 1]} : vector<128x128xf32> to vector<32x128xf32>
    %cst_22 = arith.constant dense<0.000000e+00> : vector<256x128xf32>
    %52 = tpu.matmul %50, %51, %cst_22 {dimension_numbers = #tpu.dot_dimension_numbers<[1], [0], [0], [1], [0, 0, 1, 1], [], []>} : vector<256x32xf32>, vector<32x128xf32>, vector<256x128xf32> -> vector<256x128xf32>
    %53 = arith.addf %34, %52 : vector<256x128xf32>
    %54 = vector.extract_strided_slice %9 {offsets = [0, 64], sizes = [256, 32], strides = [1, 1]} : vector<256x128xf32> to vector<256x32xf32>
    %55 = vector.extract_strided_slice %10 {offsets = [0, 64], sizes = [256, 32], strides = [1, 1]} : vector<256x128xf32> to vector<256x32xf32>
    %cst_23 = arith.constant dense<0.000000e+00> : vector<256x256xf32>
    %56 = tpu.matmul %54, %55, %cst_23 {dimension_numbers = #tpu.dot_dimension_numbers<[1], [1], [0], [0], [0, 0, 1, 0], [], []>} : vector<256x32xf32>, vector<256x32xf32>, vector<256x256xf32> -> vector<256x256xf32>
    %57 = arith.addf %56, %13 : vector<256x256xf32>
    %cst_24 = arith.constant dense<0xFF800000> : vector<256xf32>
    %58 = vector.multi_reduction <maximumf>, %57, %cst_24 [1] : vector<256x256xf32> to vector<256xf32>
    %59 = vector.shape_cast %58 : vector<256xf32> to vector<256x1xf32>
    %60 = vector.broadcast %59 : vector<256x1xf32> to vector<256x256xf32>
    %61 = arith.subf %57, %60 : vector<256x256xf32>
    %62 = math.exp %61 : vector<256x256xf32>
    %cst_25 = arith.constant dense<0.000000e+00> : vector<256xf32>
    %63 = vector.multi_reduction <add>, %62, %cst_25 [1] : vector<256x256xf32> to vector<256xf32>
    %64 = vector.shape_cast %63 : vector<256xf32> to vector<256x1xf32>
    %65 = tpu.reciprocal %64 {approx = true} : vector<256x1xf32> -> vector<256x1xf32>
    %66 = vector.broadcast %65 : vector<256x1xf32> to vector<256x256xf32>
    %67 = arith.mulf %62, %66 : vector<256x256xf32>
    %68 = vector.extract_strided_slice %11 {offsets = [0, 64], sizes = [256, 32], strides = [1, 1]} : vector<256x128xf32> to vector<256x32xf32>
    %cst_26 = arith.constant dense<0.000000e+00> : vector<256x32xf32>
    %69 = tpu.matmul %67, %68, %cst_26 {dimension_numbers = #tpu.dot_dimension_numbers<[1], [0], [0], [1], [0, 0, 1, 1], [], []>} : vector<256x256xf32>, vector<256x32xf32>, vector<256x32xf32> -> vector<256x32xf32>
    %70 = vector.extract_strided_slice %14 {offsets = [64, 0], sizes = [32, 128], strides = [1, 1]} : vector<128x128xf32> to vector<32x128xf32>
    %cst_27 = arith.constant dense<0.000000e+00> : vector<256x128xf32>
    %71 = tpu.matmul %69, %70, %cst_27 {dimension_numbers = #tpu.dot_dimension_numbers<[1], [0], [0], [1], [0, 0, 1, 1], [], []>} : vector<256x32xf32>, vector<32x128xf32>, vector<256x128xf32> -> vector<256x128xf32>
    %72 = arith.addf %53, %71 : vector<256x128xf32>
    %73 = vector.extract_strided_slice %9 {offsets = [0, 96], sizes = [256, 32], strides = [1, 1]} : vector<256x128xf32> to vector<256x32xf32>
    %74 = vector.extract_strided_slice %10 {offsets = [0, 96], sizes = [256, 32], strides = [1, 1]} : vector<256x128xf32> to vector<256x32xf32>
    %cst_28 = arith.constant dense<0.000000e+00> : vector<256x256xf32>
    %75 = tpu.matmul %73, %74, %cst_28 {dimension_numbers = #tpu.dot_dimension_numbers<[1], [1], [0], [0], [0, 0, 1, 0], [], []>} : vector<256x32xf32>, vector<256x32xf32>, vector<256x256xf32> -> vector<256x256xf32>
    %76 = arith.addf %75, %13 : vector<256x256xf32>
    %cst_29 = arith.constant dense<0xFF800000> : vector<256xf32>
    %77 = vector.multi_reduction <maximumf>, %76, %cst_29 [1] : vector<256x256xf32> to vector<256xf32>
    %78 = vector.shape_cast %77 : vector<256xf32> to vector<256x1xf32>
    %79 = vector.broadcast %78 : vector<256x1xf32> to vector<256x256xf32>
    %80 = arith.subf %76, %79 : vector<256x256xf32>
    %81 = math.exp %80 : vector<256x256xf32>
    %cst_30 = arith.constant dense<0.000000e+00> : vector<256xf32>
    %82 = vector.multi_reduction <add>, %81, %cst_30 [1] : vector<256x256xf32> to vector<256xf32>
    %83 = vector.shape_cast %82 : vector<256xf32> to vector<256x1xf32>
    %84 = tpu.reciprocal %83 {approx = true} : vector<256x1xf32> -> vector<256x1xf32>
    %85 = vector.broadcast %84 : vector<256x1xf32> to vector<256x256xf32>
    %86 = arith.mulf %81, %85 : vector<256x256xf32>
    %87 = vector.extract_strided_slice %11 {offsets = [0, 96], sizes = [256, 32], strides = [1, 1]} : vector<256x128xf32> to vector<256x32xf32>
    %cst_31 = arith.constant dense<0.000000e+00> : vector<256x32xf32>
    %88 = tpu.matmul %86, %87, %cst_31 {dimension_numbers = #tpu.dot_dimension_numbers<[1], [0], [0], [1], [0, 0, 1, 1], [], []>} : vector<256x256xf32>, vector<256x32xf32>, vector<256x32xf32> -> vector<256x32xf32>
    %89 = vector.extract_strided_slice %14 {offsets = [96, 0], sizes = [32, 128], strides = [1, 1]} : vector<128x128xf32> to vector<32x128xf32>
    %cst_32 = arith.constant dense<0.000000e+00> : vector<256x128xf32>
    %90 = tpu.matmul %88, %89, %cst_32 {dimension_numbers = #tpu.dot_dimension_numbers<[1], [0], [0], [1], [0, 0, 1, 1], [], []>} : vector<256x32xf32>, vector<32x128xf32>, vector<256x128xf32> -> vector<256x128xf32>
    %91 = arith.addf %72, %90 : vector<256x128xf32>
    %c0_33 = arith.constant 0 : index
    %c0_34 = arith.constant 0 : index
    %92 = vector.load %arg6[%c0_33, %c0_34] : memref<1x128xf32, #tpu.memory_space<vmem>>, vector<1x128xf32>
    %93 = vector.broadcast %92 : vector<1x128xf32> to vector<256x128xf32>
    %94 = arith.addf %91, %93 : vector<256x128xf32>
    %c0_35 = arith.constant 0 : index
    %c0_36 = arith.constant 0 : index
    %c0_37 = arith.constant 0 : index
    %95 = vector.load %arg7[%c0_35, %c0_36, %c0_37] : memref<1x256x128xf32, #tpu.memory_space<vmem>>, vector<1x256x128xf32>
    %96 = vector.shape_cast %95 : vector<1x256x128xf32> to vector<256x128xf32>
    %97 = vector.shape_cast %94 : vector<256x128xf32> to vector<1x256x128xf32>
    tpu.vector_store %arg7[%c0_35, %c0_36, %c0_37], %97 {strides = array<i32>} : memref<1x256x128xf32, #tpu.memory_space<vmem>>, vector<1x256x128xf32>,
    return
  }
  func.func @transform_0(%arg0: i32) -> (i32, i32, i32) {
    %c0_i32 = arith.constant 0 : i32
    %c0_i32_0 = arith.constant 0 : i32
    %c0_i32_1 = arith.constant 0 : i32
    return %arg0, %c0_i32, %c0_i32_0 : i32, i32, i32
  }
  func.func @transform_1(%arg0: i32) -> (i32, i32) {
    %c0_i32 = arith.constant 0 : i32
    %c0_i32_0 = arith.constant 0 : i32
    %c0_i32_1 = arith.constant 0 : i32
    return %c0_i32, %c0_i32_0 : i32, i32
  }
  func.func @transform_2(%arg0: i32) -> (i32, i32) {
    %c0_i32 = arith.constant 0 : i32
    %c0_i32_0 = arith.constant 0 : i32
    %c0_i32_1 = arith.constant 0 : i32
    return %c0_i32, %c0_i32_0 : i32, i32
  }
  func.func @transform_3(%arg0: i32) -> (i32, i32, i32) {
    %c0_i32 = arith.constant 0 : i32
    %c0_i32_0 = arith.constant 0 : i32
    %c0_i32_1 = arith.constant 0 : i32
    return %arg0, %c0_i32, %c0_i32_0 : i32, i32, i32
  }
  func.func @transform_4(%arg0: i32) -> (i32, i32) {
    %c0_i32 = arith.constant 0 : i32
    %c0_i32_0 = arith.constant 0 : i32
    %c0_i32_1 = arith.constant 0 : i32
    return %c0_i32, %c0_i32_0 : i32, i32
  }
  func.func @transform_5(%arg0: i32) -> (i32, i32) {
    %c0_i32 = arith.constant 0 : i32
    %c0_i32_0 = arith.constant 0 : i32
    %c0_i32_1 = arith.constant 0 : i32
    return %c0_i32, %c0_i32_0 : i32, i32
  }
  func.func @transform_6(%arg0: i32) -> (i32, i32, i32) {
    %c0_i32 = arith.constant 0 : i32
    %c0_i32_0 = arith.constant 0 : i32
    %c0_i32_1 = arith.constant 0 : i32
    return %arg0, %c0_i32, %c0_i32_0 : i32, i32, i32
  }
}

</mosaic_0001>

<llo_original>
// kernel: _lambda_.1
$region0: #{_lambda_.1}
  #allocation0 [shape = 'u32[]', space=smem, size = 0x4, offset = 0x4, fixed_abs, tag = 'smem constant byte address 0x4 - core index']
  #allocation1 [shape = 'u32[144,128]{1,0:T(1,128)}', space=vmem, size = 0x12000, scoped, tag = 'internal scratch']
  %s0 = inlined_call_operand.vmem [shape: f32[2,256,128], index: 0, kind: input, shape index: {}]
  %s1 = inlined_call_operand.vmem [shape: f32[128,384], index: 1, kind: input, shape index: {}]
  %s2 = inlined_call_operand.vmem [shape: f32[1,384], index: 2, kind: input, shape index: {}]
  %s3 = inlined_call_operand.vmem [shape: f32[2,256,256], index: 3, kind: input, shape index: {}]
  %s4 = inlined_call_operand.vmem [shape: f32[128,128], index: 4, kind: input, shape index: {}]
  %s5 = inlined_call_operand.vmem [shape: f32[1,128], index: 5, kind: input, shape index: {}]
  %s6 = inlined_call_operand.vmem [shape: f32[2,256,128], index: 6, kind: output, shape index: {}]
  %s7 = sld [smem:[#allocation0]]
  $region57: #{_lambda_.1} parent=0
    _
  %s9 = ssub.s32 1, %s7
  %s10 = scalar_select 0, %s9, %s7
  loop: start=0, step=1, limit=4
  $region2: #{_lambda_.1} parent=0 // loop_pre_header
    _
  $region3: #{_lambda_.1} parent=0 // loop_header
    %s12 = sphi 0, %s16
    %p13 = scmp.ge.s32.totalorder %s12, 4
    %s22 = sphi 0, %s24
    %s25 = sphi 0, %s22
    %s26 = sphi 0, %s25
    %s42 = sphi 0, %s26
    %s46 = sphi 0, %s46
    %s48 = sphi 0, %s46
    %s49 = sphi 0, %s48
    %s63 = sphi 0, %s49
    %s67 = sphi 0, %s67
    %s69 = sphi 0, %s67
    %s70 = sphi 0, %s69
    %s84 = sphi 0, %s70
    %s90 = sphi 0, %s92
    %s93 = sphi 0, %s90
    %s94 = sphi 0, %s93
    %s110 = sphi 0, %s94
    %s114 = sphi 0, %s114
    %s116 = sphi 0, %s114
    %s117 = sphi 0, %s116
    %s131 = sphi 0, %s117
    %s135 = sphi 0, %s135
    %s137 = sphi 0, %s135
    %s138 = sphi 0, %s137
    %s152 = sphi 0, %s138
    %s158 = sphi 0, %s160
    %s161 = sphi 0, %s158
    %s162 = sphi 0, %s161
    %s178 = sphi 0, %s162
  $region4: #{_lambda_.1} parent=0 // loop_header_branch
    %15 = sbr.rel (%p13) target = $region8
  $region5: #{_lambda_.1} parent=0 // loop_body
    %s17 = ssub.s32 %s12, 1
    %s18 = ssub.s32 %s12, 2
    %s19 = sadd.s32 %s12, 1
    %s20 = ssub.s32 %s12, %s19
    %p21 = scmp.eq.s32.totalorder %s20, 0
    %s23 = sadd.s32 %s22, 1
    %s24 = scalar_select %p21, %s22, %s23
    %p27 = pneg %p21
    %p28 = scmp.eq.s32.totalorder %s12, 1
    %p29 = por %p27, %p28
    %p30 = scmp.ne.s32.totalorder %s22, %s25
    %p31 = scmp.eq.s32.totalorder %s12, 0
    %p32 = por %p30, %p31
    %p33 = scmp.ne.s32.totalorder %s22, %s25
    %p34 = scmp.eq.s32.totalorder %s17, 1
    %p35 = por %p33, %p34
    %p36 = scmp.ne.s32.totalorder %s25, %s26
    %p37 = scmp.eq.s32.totalorder %s17, 0
    %p38 = por %p36, %p37
    %p39 = scmp.ne.s32.totalorder %s25, %s26
    %p40 = scmp.eq.s32.totalorder %s18, 1
    %p41 = por %p39, %p40
    %p43 = scmp.ne.s32.totalorder %s26, %s42
    %p44 = scmp.eq.s32.totalorder %s18, 0
    %p45 = por %p43, %p44
    %s47 = sadd.s32 %s46, 1
    %p50 = scmp.eq.s32.totalorder %s12, 1
    %p51 = scmp.ne.s32.totalorder %s46, %s48
    %p52 = scmp.eq.s32.totalorder %s12, 0
    %p53 = por %p51, %p52
    %p54 = scmp.ne.s32.totalorder %s46, %s48
    %p55 = scmp.eq.s32.totalorder %s17, 1
    %p56 = por %p54, %p55
    %p57 = scmp.ne.s32.totalorder %s48, %s49
    %p58 = scmp.eq.s32.totalorder %s17, 0
    %p59 = por %p57, %p58
    %p60 = scmp.ne.s32.totalorder %s48, %s49
    %p61 = scmp.eq.s32.totalorder %s18, 1
    %p62 = por %p60, %p61
    %p64 = scmp.ne.s32.totalorder %s49, %s63
    %p65 = scmp.eq.s32.totalorder %s18, 0
    %p66 = por %p64, %p65
    %s68 = sadd.s32 %s67, 1
    %p71 = scmp.eq.s32.totalorder %s12, 1
    %p72 = scmp.ne.s32.totalorder %s67, %s69
    %p73 = scmp.eq.s32.totalorder %s12, 0
    %p74 = por %p72, %p73
    %p75 = scmp.ne.s32.totalorder %s67, %s69
    %p76 = scmp.eq.s32.totalorder %s17, 1
    %p77 = por %p75, %p76
    %p78 = scmp.ne.s32.totalorder %s69, %s70
    %p79 = scmp.eq.s32.totalorder %s17, 0
    %p80 = por %p78, %p79
    %p81 = scmp.ne.s32.totalorder %s69, %s70
    %p82 = scmp.eq.s32.totalorder %s18, 1
    %p83 = por %p81, %p82
    %p85 = scmp.ne.s32.totalorder %s70, %s84
    %p86 = scmp.eq.s32.totalorder %s18, 0
    %p87 = por %p85, %p86
    %s88 = ssub.s32 %s12, %s19
    %p89 = scmp.eq.s32.totalorder %s88, 0
    %s91 = sadd.s32 %s90, 1
    %s92 = scalar_select %p89, %s90, %s91
    %p95 = pneg %p89
    %p96 = scmp.eq.s32.totalorder %s12, 1
    %p97 = por %p95, %p96
    %p98 = scmp.ne.s32.totalorder %s90, %s93
    %p99 = scmp.eq.s32.totalorder %s12, 0
    %p100 = por %p98, %p99
    %p101 = scmp.ne.s32.totalorder %s90, %s93
    %p102 = scmp.eq.s32.totalorder %s17, 1
    %p103 = por %p101, %p102
    %p104 = scmp.ne.s32.totalorder %s93, %s94
    %p105 = scmp.eq.s32.totalorder %s17, 0
    %p106 = por %p104, %p105
    %p107 = scmp.ne.s32.totalorder %s93, %s94
    %p108 = scmp.eq.s32.totalorder %s18, 1
    %p109 = por %p107, %p108
    %p111 = scmp.ne.s32.totalorder %s94, %s110
    %p112 = scmp.eq.s32.totalorder %s18, 0
    %p113 = por %p111, %p112
    %s115 = sadd.s32 %s114, 1
    %p118 = scmp.eq.s32.totalorder %s12, 1
    %p119 = scmp.ne.s32.totalorder %s114, %s116
    %p120 = scmp.eq.s32.totalorder %s12, 0
    %p121 = por %p119, %p120
    %p122 = scmp.ne.s32.totalorder %s114, %s116
    %p123 = scmp.eq.s32.totalorder %s17, 1
    %p124 = por %p122, %p123
    %p125 = scmp.ne.s32.totalorder %s116, %s117
    %p126 = scmp.eq.s32.totalorder %s17, 0
    %p127 = por %p125, %p126
    %p128 = scmp.ne.s32.totalorder %s116, %s117
    %p129 = scmp.eq.s32.totalorder %s18, 1
    %p130 = por %p128, %p129
    %p132 = scmp.ne.s32.totalorder %s117, %s131
    %p133 = scmp.eq.s32.totalorder %s18, 0
    %p134 = por %p132, %p133
    %s136 = sadd.s32 %s135, 1
    %p139 = scmp.eq.s32.totalorder %s12, 1
    %p140 = scmp.ne.s32.totalorder %s135, %s137
    %p141 = scmp.eq.s32.totalorder %s12, 0
    %p142 = por %p140, %p141
    %p143 = scmp.ne.s32.totalorder %s135, %s137
    %p144 = scmp.eq.s32.totalorder %s17, 1
    %p145 = por %p143, %p144
    %p146 = scmp.ne.s32.totalorder %s137, %s138
    %p147 = scmp.eq.s32.totalorder %s17, 0
    %p148 = por %p146, %p147
    %p149 = scmp.ne.s32.totalorder %s137, %s138
    %p150 = scmp.eq.s32.totalorder %s18, 1
    %p151 = por %p149, %p150
    %p153 = scmp.ne.s32.totalorder %s138, %s152
    %p154 = scmp.eq.s32.totalorder %s18, 0
    %p155 = por %p153, %p154
    %s156 = ssub.s32 %s12, %s19
    %p157 = scmp.eq.s32.totalorder %s156, 0
    %s159 = sadd.s32 %s158, 1
    %s160 = scalar_select %p157, %s158, %s159
    %p163 = pneg %p157
    %p164 = scmp.eq.s32.totalorder %s12, 1
    %p165 = por %p163, %p164
    %p166 = scmp.ne.s32.totalorder %s158, %s161
    %p167 = scmp.eq.s32.totalorder %s12, 0
    %p168 = por %p166, %p167
    %p169 = scmp.ne.s32.totalorder %s158, %s161
    %p170 = scmp.eq.s32.totalorder %s17, 1
    %p171 = por %p169, %p170
    %p172 = scmp.ne.s32.totalorder %s161, %s162
    %p173 = scmp.eq.s32.totalorder %s17, 0
    %p174 = por %p172, %p173
    %p175 = scmp.ne.s32.totalorder %s161, %s162
    %p176 = scmp.eq.s32.totalorder %s18, 1
    %p177 = por %p175, %p176
    %p179 = scmp.ne.s32.totalorder %s162, %s178
    %p180 = scmp.eq.s32.totalorder %s18, 0
    %p181 = por %p179, %p180
    %p182 = scmp.le.s32.totalorder 1, %s12
    %p183 = scmp.lt.s32.totalorder %s12, 3
    %p184 = pnand %p182, %p183
    %p185 = pneg %p184
    // Predicated region
    $region9: #{_lambda_.1} parent=5 // pred_check
      _
    $region10: #{_lambda_.1} parent=5 // pred_check_branch
      %187 = sbr.rel (%p184) target = $region12
    $region11: #{_lambda_.1} parent=5 // pred_region
      %s188 = ssub.s32 %s12, 1
      // Predicated region
      $region13: #{_lambda_.1} parent=11 // pred_check
        %p189 = pneg %p59
      $region14: #{_lambda_.1} parent=11 // pred_check_branch
        %191 = sbr.rel (%p189) target = $region16
      $region15: #{_lambda_.1} parent=11 // pred_region
        _
      $region16: #{_lambda_.1} parent=11 // pred_fallthru
        _
      // Predicated region
      $region17: #{_lambda_.1} parent=11 // pred_check
        %p192 = pneg %p80
      $region18: #{_lambda_.1} parent=11 // pred_check_branch
        %194 = sbr.rel (%p192) target = $region20
      $region19: #{_lambda_.1} parent=11 // pred_region
        _
      $region20: #{_lambda_.1} parent=11 // pred_fallthru
        _
      // Predicated region
      $region21: #{_lambda_.1} parent=11 // pred_check
        %p195 = pneg %p127
      $region22: #{_lambda_.1} parent=11 // pred_check_branch
        %197 = sbr.rel (%p195) target = $region24
      $region23: #{_lambda_.1} parent=11 // pred_region
        _
      $region24: #{_lambda_.1} parent=11 // pred_fallthru
        _
      // Predicated region
      $region25: #{_lambda_.1} parent=11 // pred_check
        %p198 = pneg %p148
      $region26: #{_lambda_.1} parent=11 // pred_check_branch
        %200 = sbr.rel (%p198) target = $region28
      $region27: #{_lambda_.1} parent=11 // pred_region
        _
      $region28: #{_lambda_.1} parent=11 // pred_fallthru
        _
    $region12: #{_lambda_.1} parent=5 // pred_fallthru
      _
    %p201 = scmp.lt.s32.totalorder %s12, 2
    // Predicated region
    $region29: #{_lambda_.1} parent=5 // pred_check
      %p202 = pneg %p201
    $region30: #{_lambda_.1} parent=5 // pred_check_branch
      %204 = sbr.rel (%p202) target = $region32
    $region31: #{_lambda_.1} parent=5 // pred_region
      // Predicated region
      $region33: #{_lambda_.1} parent=31 // pred_check
        %p205 = pneg %p32
      $region34: #{_lambda_.1} parent=31 // pred_check_branch
        %207 = sbr.rel (%p205) target = $region36
      $region35: #{_lambda_.1} parent=31 // pred_region
        %p208 = scmp.lt.s32.totalorder %s12, 1
        %s209 = scalar_select %p208, %s12, 1
        %s210 = smul.addr %s209, 32
        %s211 = smul.addr %s210, 8
        %s212 = scalar_lea.vmem %s0, %s211
      $region36: #{_lambda_.1} parent=31 // pred_fallthru
        _
      // Predicated region
      $region37: #{_lambda_.1} parent=31 // pred_check
        %p213 = pneg %p100
      $region38: #{_lambda_.1} parent=31 // pred_check_branch
        %215 = sbr.rel (%p213) target = $region40
      $region39: #{_lambda_.1} parent=31 // pred_region
        %p216 = scmp.lt.s32.totalorder %s12, 1
        %s217 = scalar_select %p216, %s12, 1
        %s218 = smul.addr %s217, 64
        %s219 = smul.addr %s218, 8
        %s220 = scalar_lea.vmem %s3, %s219
      $region40: #{_lambda_.1} parent=31 // pred_fallthru
        _
    $region32: #{_lambda_.1} parent=5 // pred_fallthru
      _
    %p221 = scmp.le.s32.totalorder 1, %s12
    %p222 = scmp.lt.s32.totalorder %s12, 3
    %p223 = pnand %p221, %p222
    %p224 = pneg %p223
    // Predicated region
    $region41: #{_lambda_.1} parent=5 // pred_check
      _
    $region42: #{_lambda_.1} parent=5 // pred_check_branch
      %226 = sbr.rel (%p223) target = $region44
    $region43: #{_lambda_.1} parent=5 // pred_region
      %s227 = ssub.s32 %s12, 1
      %p228 = scmp.lt.s32.totalorder %s17, 1
      %s229 = scalar_select %p228, %s17, 1
      %s230 = smul.addr %s229, 32
      %s231 = smul.addr %s230, 8
      %s232 = scalar_lea.vmem %s0, %s231
      %p233 = pneg %p38
      %p234 = pneg %p35
      %p235 = pneg %p59
      %p236 = pneg %p56
      %p237 = pneg %p80
      %p238 = pneg %p77
      %p239 = scmp.lt.s32.totalorder %s17, 1
      %s240 = scalar_select %p239, %s17, 1
      %s241 = smul.addr %s240, 64
      %s242 = smul.addr %s241, 8
      %s243 = scalar_lea.vmem %s3, %s242
      %p244 = pneg %p106
      %p245 = pneg %p103
      %p246 = pneg %p127
      %p247 = pneg %p124
      %p248 = pneg %p148
      %p249 = pneg %p145
      %p250 = pneg %p174
      %p251 = pneg %p171
      %p252 = scmp.lt.s32.totalorder %s17, 1
      %s253 = scalar_select %p252, %s17, 1
      %s254 = smul.addr %s253, 32
      %s255 = smul.addr %s254, 8
      %s256 = scalar_lea.vmem %s6, %s255
      %p257 = scmp.lt.s32.totalorder %s17, 1
      %s258 = scalar_select %p257, %s17, 1
      %s259 = smul.addr %s258, 32
      %s260 = smul.addr %s259, 8
      %s261 = scalar_lea.vmem %s0, %s260
      %p262 = scmp.lt.s32.totalorder %s17, 1
      %s263 = scalar_select %p262, %s17, 1
      %s264 = smul.addr %s263, 64
      %s265 = smul.addr %s264, 8
      %s266 = scalar_lea.vmem %s3, %s265
      %p267 = scmp.lt.s32.totalorder %s17, 1
      %s268 = scalar_select %p267, %s17, 1
      %s269 = smul.addr %s268, 32
      %s270 = smul.addr %s269, 8
      %s271 = scalar_lea.vmem %s6, %s270
      %v272 = vld [vmem:[%s261] sm:$0xff]
      %v273 = vld [vmem:[%s261 + $0x8] sm:$0xff]
      %v274 = vld [vmem:[%s261 + $0x10] sm:$0xff]
      %v275 = vld [vmem:[%s261 + $0x18] sm:$0xff]
      %v276 = vld [vmem:[%s261 + $0x20] sm:$0xff]
      %v277 = vld [vmem:[%s261 + $0x28] sm:$0xff]
      %v278 = vld [vmem:[%s261 + $0x30] sm:$0xff]
      %v279 = vld [vmem:[%s261 + $0x38] sm:$0xff]
      %v280 = vld [vmem:[%s261 + $0x40] sm:$0xff]
      %v281 = vld [vmem:[%s261 + $0x48] sm:$0xff]
      %v282 = vld [vmem:[%s261 + $0x50] sm:$0xff]
      %v283 = vld [vmem:[%s261 + $0x58] sm:$0xff]
      %v284 = vld [vmem:[%s261 + $0x60] sm:$0xff]
      %v285 = vld [vmem:[%s261 + $0x68] sm:$0xff]
      %v286 = vld [vmem:[%s261 + $0x70] sm:$0xff]
      %v287 = vld [vmem:[%s261 + $0x78] sm:$0xff]
      %v288 = vld [vmem:[%s261 + $0x80] sm:$0xff]
      %v289 = vld [vmem:[%s261 + $0x88] sm:$0xff]
      %v290 = vld [vmem:[%s261 + $0x90] sm:$0xff]
      %v291 = vld [vmem:[%s261 + $0x98] sm:$0xff]
      %v292 = vld [vmem:[%s261 + $0xa0] sm:$0xff]
      %v293 = vld [vmem:[%s261 + $0xa8] sm:$0xff]
      %v294 = vld [vmem:[%s261 + $0xb0] sm:$0xff]
      %v295 = vld [vmem:[%s261 + $0xb8] sm:$0xff]
      %v296 = vld [vmem:[%s261 + $0xc0] sm:$0xff]
      %v297 = vld [vmem:[%s261 + $0xc8] sm:$0xff]
      %v298 = vld [vmem:[%s261 + $0xd0] sm:$0xff]
      %v299 = vld [vmem:[%s261 + $0xd8] sm:$0xff]
      %v300 = vld [vmem:[%s261 + $0xe0] sm:$0xff]
      %v301 = vld [vmem:[%s261 + $0xe8] sm:$0xff]
      %v302 = vld [vmem:[%s261 + $0xf0] sm:$0xff]
      %v303 = vld [vmem:[%s261 + $0xf8] sm:$0xff]
      %v304 = vld [vmem:[%s1] sm:$0xff]
      %v305 = vld [vmem:[%s1 + $0x8] sm:$0xff]
      %v306 = vld [vmem:[%s1 + $0x10] sm:$0xff]
      %v307 = vld [vmem:[%s1 + $0x18] sm:$0xff]
      %v308 = vld [vmem:[%s1 + $0x20] sm:$0xff]
      %v309 = vld [vmem:[%s1 + $0x28] sm:$0xff]
      %v310 = vld [vmem:[%s1 + $0x30] sm:$0xff]
      %v311 = vld [vmem:[%s1 + $0x38] sm:$0xff]
      %v312 = vld [vmem:[%s1 + $0x40] sm:$0xff]
      %v313 = vld [vmem:[%s1 + $0x48] sm:$0xff]
      %v314 = vld [vmem:[%s1 + $0x50] sm:$0xff]
      %v315 = vld [vmem:[%s1 + $0x58] sm:$0xff]
      %v316 = vld [vmem:[%s1 + $0x60] sm:$0xff]
      %v317 = vld [vmem:[%s1 + $0x68] sm:$0xff]
      %v318 = vld [vmem:[%s1 + $0x70] sm:$0xff]
      %v319 = vld [vmem:[%s1 + $0x78] sm:$0xff]
      %v320 = vld [vmem:[%s1 + $0x80] sm:$0xff]
      %v321 = vld [vmem:[%s1 + $0x88] sm:$0xff]
      %v322 = vld [vmem:[%s1 + $0x90] sm:$0xff]
      %v323 = vld [vmem:[%s1 + $0x98] sm:$0xff]
      %v324 = vld [vmem:[%s1 + $0xa0] sm:$0xff]
      %v325 = vld [vmem:[%s1 + $0xa8] sm:$0xff]
      %v326 = vld [vmem:[%s1 + $0xb0] sm:$0xff]
      %v327 = vld [vmem:[%s1 + $0xb8] sm:$0xff]
      %v328 = vld [vmem:[%s1 + $0xc0] sm:$0xff]
      %v329 = vld [vmem:[%s1 + $0xc8] sm:$0xff]
      %v330 = vld [vmem:[%s1 + $0xd0] sm:$0xff]
      %v331 = vld [vmem:[%s1 + $0xd8] sm:$0xff]
      %v332 = vld [vmem:[%s1 + $0xe0] sm:$0xff]
      %v333 = vld [vmem:[%s1 + $0xe8] sm:$0xff]
      %v334 = vld [vmem:[%s1 + $0xf0] sm:$0xff]
      %v335 = vld [vmem:[%s1 + $0xf8] sm:$0xff]
      %v336 = vld [vmem:[%s1 + $0x100] sm:$0xff]
      %v337 = vld [vmem:[%s1 + $0x108] sm:$0xff]
      %v338 = vld [vmem:[%s1 + $0x110] sm:$0xff]
      %v339 = vld [vmem:[%s1 + $0x118] sm:$0xff]
      %v340 = vld [vmem:[%s1 + $0x120] sm:$0xff]
      %v341 = vld [vmem:[%s1 + $0x128] sm:$0xff]
      %v342 = vld [vmem:[%s1 + $0x130] sm:$0xff]
      %v343 = vld [vmem:[%s1 + $0x138] sm:$0xff]
      %v344 = vld [vmem:[%s1 + $0x140] sm:$0xff]
      %v345 = vld [vmem:[%s1 + $0x148] sm:$0xff]
      %v346 = vld [vmem:[%s1 + $0x150] sm:$0xff]
      %v347 = vld [vmem:[%s1 + $0x158] sm:$0xff]
      %v348 = vld [vmem:[%s1 + $0x160] sm:$0xff]
      %v349 = vld [vmem:[%s1 + $0x168] sm:$0xff]
      %v350 = vld [vmem:[%s1 + $0x170] sm:$0xff]
      %v351 = vld [vmem:[%s1 + $0x178] sm:$0xff]
      %v352 = vld [vmem:[%s2] sm:$0x7]
      %v354 = vlaneseq
      %v355 = vshrl.u32 %v354, 7
      %v356 = vsub.s32 0, %v355
      %v357 = vrot.slane %v352, %v356
      %v358 = vlaneseq
      %v359 = vshrl.u32 %v358, 7
      %v360 = vsub.s32 1, %v359
      %v361 = vrot.slane %v352, %v360
      %v362 = vlaneseq
      %v363 = vshrl.u32 %v362, 7
      %v364 = vsub.s32 2, %v363
      %v365 = vrot.slane %v352, %v364
      %369 = vmatprep.subr.mxu0 %v305
      %370 = vmatpush1.msra.mxu0 %v304
      %371 = vmatprep.subr.mxu0 %v308
      %372 = vmatpush1.msra.mxu0 %v307
      %373 = vmatprep.subr.mxu0 %v311
      %374 = vmatpush1.msra.mxu0 %v310
      %375 = vmatprep.subr.mxu0 %v314
      %376 = vmatpush1.msra.mxu0 %v313
      %377 = vmatprep.subr.mxu0 %v317
      %378 = vmatpush1.msra.mxu0 %v316
      %379 = vmatprep.subr.mxu0 %v320
      %380 = vmatpush1.msra.mxu0 %v319
      %381 = vmatprep.subr.mxu0 %v323
      %382 = vmatpush1.msra.mxu0 %v322
      %383 = vmatprep.subr.mxu0 %v326
      %384 = vmatpush1.msra.mxu0 %v325
      %385 = vmatprep.subr.mxu0 %v329
      %386 = vmatpush1.msra.mxu0 %v328
      %387 = vmatprep.subr.mxu0 %v332
      %388 = vmatpush1.msra.mxu0 %v331
      %389 = vmatprep.subr.mxu0 %v335
      %390 = vmatpush1.msra.mxu0 %v334
      %391 = vmatprep.subr.mxu0 %v338
      %392 = vmatpush1.msra.mxu0 %v337
      %393 = vmatprep.subr.mxu0 %v341
      %394 = vmatpush1.msra.mxu0 %v340
      %395 = vmatprep.subr.mxu0 %v344
      %396 = vmatpush1.msra.mxu0 %v343
      %397 = vmatprep.subr.mxu0 %v347
      %398 = vmatpush1.msra.mxu0 %v346
      %399 = vmatprep.subr.mxu0 %v350
      %400 = vmatpush1.msra.mxu0 %v349
      %401 = vmatprep.subr.mxu0 0.0
      %402 = vmatpush1.msra.mxu0 0.0
      %403 = vmatprep.subr.mxu0 0.0
      %404 = vmatpush1.msra.mxu0 0.0
      %405 = vmatprep.subr.mxu0 0.0
      %406 = vmatpush1.msra.mxu0 0.0
      %407 = vmatprep.subr.mxu0 0.0
      %408 = vmatpush1.msra.mxu0 0.0
      %409 = vmatprep.subr.mxu0 0.0
      %410 = vmatpush1.msra.mxu0 0.0
      %411 = vmatprep.subr.mxu0 0.0
      %412 = vmatpush1.msra.mxu0 0.0
      %413 = vmatprep.subr.mxu0 0.0
      %414 = vmatpush1.msra.mxu0 0.0
      %415 = vmatprep.subr.mxu0 0.0
      %416 = vmatpush1.msra.mxu0 0.0
      %417 = vmatprep.subr.mxu0 0.0
      %418 = vmatpush1.msra.mxu0 0.0
      %419 = vmatprep.subr.mxu0 0.0
      %420 = vmatpush1.msra.mxu0 0.0
      %421 = vmatprep.subr.mxu0 0.0
      %422 = vmatpush1.msra.mxu0 0.0
      %423 = vmatprep.subr.mxu0 0.0
      %424 = vmatpush1.msra.mxu0 0.0
      %425 = vmatprep.subr.mxu0 0.0
      %426 = vmatpush1.msra.mxu0 0.0
      %427 = vmatprep.subr.mxu0 0.0
      %428 = vmatpush1.msra.mxu0 0.0
      %429 = vmatprep.subr.mxu0 0.0
      %430 = vmatpush1.msra.mxu0 0.0
      %431 = vmatprep.subr.mxu0 0.0
      %432 = vmatpush1.msra.mxu0 0.0
      %433 = vmatprep.mubr.f32.mxu0 0.0
      %434 = vmatmul.mubr.f32.gmra.mrb[0].mxu0 %v272
      %v435 = vpop.f32.mrb[0].mxu0
      %v436 = vadd.f32 %v357, %v435
      %v437 = vpop.f32.mrb[0].mxu0
      %v438 = vadd.f32 %v361, %v437
      %439 = vmatprep.mubr.f32.mxu0 0.0
      %440 = vmatmul.mubr.f32.gmra.mrb[0].mxu0 %v273
      %v441 = vpop.f32.mrb[0].mxu0
      %v442 = vadd.f32 %v357, %v441
      %v443 = vpop.f32.mrb[0].mxu0
      %v444 = vadd.f32 %v361, %v443
      %445 = vmatprep.mubr.f32.mxu0 0.0
      %446 = vmatmul.mubr.f32.gmra.mrb[0].mxu0 %v274
      %v447 = vpop.f32.mrb[0].mxu0
      %v448 = vadd.f32 %v357, %v447
      %v449 = vpop.f32.mrb[0].mxu0
      %v450 = vadd.f32 %v361, %v449
      %451 = vmatprep.mubr.f32.mxu0 0.0
      %452 = vmatmul.mubr.f32.gmra.mrb[0].mxu0 %v275
      %v453 = vpop.f32.mrb[0].mxu0
      %v454 = vadd.f32 %v357, %v453
      %v455 = vpop.f32.mrb[0].mxu0
      %v456 = vadd.f32 %v361, %v455
      %457 = vmatprep.mubr.f32.mxu0 0.0
      %458 = vmatmul.mubr.f32.gmra.mrb[0].mxu0 %v276
      %v459 = vpop.f32.mrb[0].mxu0
      %v460 = vadd.f32 %v357, %v459
      %v461 = vpop.f32.mrb[0].mxu0
      %v462 = vadd.f32 %v361, %v461
      %463 = vmatprep.mubr.f32.mxu0 0.0
      %464 = vmatmul.mubr.f32.gmra.mrb[0].mxu0 %v277
      %v465 = vpop.f32.mrb[0].mxu0
      %v466 = vadd.f32 %v357, %v465
      %v467 = vpop.f32.mrb[0].mxu0
      %v468 = vadd.f32 %v361, %v467
      %469 = vmatprep.mubr.f32.mxu0 0.0
      %470 = vmatmul.mubr.f32.gmra.mrb[0].mxu0 %v278
      %v471 = vpop.f32.mrb[0].mxu0
      %v472 = vadd.f32 %v357, %v471
      %v473 = vpop.f32.mrb[0].mxu0
      %v474 = vadd.f32 %v361, %v473
      %475 = vmatprep.mubr.f32.mxu0 0.0
      %476 = vmatmul.mubr.f32.gmra.mrb[0].mxu0 %v279
      %v477 = vpop.f32.mrb[0].mxu0
      %v478 = vadd.f32 %v357, %v477
      %v479 = vpop.f32.mrb[0].mxu0
      %v480 = vadd.f32 %v361, %v479
      %481 = vmatprep.mubr.f32.mxu0 0.0
      %482 = vmatmul.mubr.f32.gmra.mrb[0].mxu0 %v280
      %v483 = vpop.f32.mrb[0].mxu0
      %v484 = vadd.f32 %v357, %v483
      %v485 = vpop.f32.mrb[0].mxu0
      %v486 = vadd.f32 %v361, %v485
      %487 = vmatprep.mubr.f32.mxu0 0.0
      %488 = vmatmul.mubr.f32.gmra.mrb[0].mxu0 %v281
      %v489 = vpop.f32.mrb[0].mxu0
      %v490 = vadd.f32 %v357, %v489
      %v491 = vpop.f32.mrb[0].mxu0
      %v492 = vadd.f32 %v361, %v491
      %493 = vmatprep.mubr.f32.mxu0 0.0
      %494 = vmatmul.mubr.f32.gmra.mrb[0].mxu0 %v282
      %v495 = vpop.f32.mrb[0].mxu0
      %v496 = vadd.f32 %v357, %v495
      %v497 = vpop.f32.mrb[0].mxu0
      %v498 = vadd.f32 %v361, %v497
      %499 = vmatprep.mubr.f32.mxu0 0.0
      %500 = vmatmul.mubr.f32.gmra.mrb[0].mxu0 %v283
      %v501 = vpop.f32.mrb[0].mxu0
      %v502 = vadd.f32 %v357, %v501
      %v503 = vpop.f32.mrb[0].mxu0
      %v504 = vadd.f32 %v361, %v503
      %505 = vmatprep.mubr.f32.mxu0 0.0
      %506 = vmatmul.mubr.f32.gmra.mrb[0].mxu0 %v284
      %v507 = vpop.f32.mrb[0].mxu0
      %v508 = vadd.f32 %v357, %v507
      %v509 = vpop.f32.mrb[0].mxu0
      %v510 = vadd.f32 %v361, %v509
      %511 = vmatprep.mubr.f32.mxu0 0.0
      %512 = vmatmul.mubr.f32.gmra.mrb[0].mxu0 %v285
      %v513 = vpop.f32.mrb[0].mxu0
      %v514 = vadd.f32 %v357, %v513
      %v515 = vpop.f32.mrb[0].mxu0
      %v516 = vadd.f32 %v361, %v515
      %517 = vmatprep.mubr.f32.mxu0 0.0
      %518 = vmatmul.mubr.f32.gmra.mrb[0].mxu0 %v286
      %v519 = vpop.f32.mrb[0].mxu0
      %v520 = vadd.f32 %v357, %v519
      %v521 = vpop.f32.mrb[0].mxu0
      %v522 = vadd.f32 %v361, %v521
      %523 = vmatprep.mubr.f32.mxu0 0.0
      %524 = vmatmul.mubr.f32.gmra.mrb[0].mxu0 %v287
      %v525 = vpop.f32.mrb[0].mxu0
      %v526 = vadd.f32 %v357, %v525
      %v527 = vpop.f32.mrb[0].mxu0
      %v528 = vadd.f32 %v361, %v527
      %529 = vmatprep.mubr.f32.mxu0 0.0
      %530 = vmatmul.mubr.f32.gmra.mrb[0].mxu0 %v288
      %v531 = vpop.f32.mrb[0].mxu0
      %v532 = vadd.f32 %v357, %v531
      %v533 = vpop.f32.mrb[0].mxu0
      %v534 = vadd.f32 %v361, %v533
      %535 = vmatprep.mubr.f32.mxu0 0.0
      %536 = vmatmul.mubr.f32.gmra.mrb[0].mxu0 %v289
      %v537 = vpop.f32.mrb[0].mxu0
      %v538 = vadd.f32 %v357, %v537
      %v539 = vpop.f32.mrb[0].mxu0
      %v540 = vadd.f32 %v361, %v539
      %541 = vmatprep.mubr.f32.mxu0 0.0
      %542 = vmatmul.mubr.f32.gmra.mrb[0].mxu0 %v290
      %v543 = vpop.f32.mrb[0].mxu0
      %v544 = vadd.f32 %v357, %v543
      %v545 = vpop.f32.mrb[0].mxu0
      %v546 = vadd.f32 %v361, %v545
      %547 = vmatprep.mubr.f32.mxu0 0.0
      %548 = vmatmul.mubr.f32.gmra.mrb[0].mxu0 %v291
      %v549 = vpop.f32.mrb[0].mxu0
      %v550 = vadd.f32 %v357, %v549
      %v551 = vpop.f32.mrb[0].mxu0
      %v552 = vadd.f32 %v361, %v551
      %553 = vmatprep.mubr.f32.mxu0 0.0
      %554 = vmatmul.mubr.f32.gmra.mrb[0].mxu0 %v292
      %v555 = vpop.f32.mrb[0].mxu0
      %v556 = vadd.f32 %v357, %v555
      %v557 = vpop.f32.mrb[0].mxu0
      %v558 = vadd.f32 %v361, %v557
      %559 = vmatprep.mubr.f32.mxu0 0.0
      %560 = vmatmul.mubr.f32.gmra.mrb[0].mxu0 %v293
      %v561 = vpop.f32.mrb[0].mxu0
      %v562 = vadd.f32 %v357, %v561
      %v563 = vpop.f32.mrb[0].mxu0
      %v564 = vadd.f32 %v361, %v563
      %565 = vmatprep.mubr.f32.mxu0 0.0
      %566 = vmatmul.mubr.f32.gmra.mrb[0].mxu0 %v294
      %v567 = vpop.f32.mrb[0].mxu0
      %v568 = vadd.f32 %v357, %v567
      %v569 = vpop.f32.mrb[0].mxu0
      %v570 = vadd.f32 %v361, %v569
      %571 = vmatprep.mubr.f32.mxu0 0.0
      %572 = vmatmul.mubr.f32.gmra.mrb[0].mxu0 %v295
      %v573 = vpop.f32.mrb[0].mxu0
      %v574 = vadd.f32 %v357, %v573
      %v575 = vpop.f32.mrb[0].mxu0
      %v576 = vadd.f32 %v361, %v575
      %577 = vmatprep.mubr.f32.mxu0 0.0
      %578 = vmatmul.mubr.f32.gmra.mrb[0].mxu0 %v296
      %v579 = vpop.f32.mrb[0].mxu0
      %v580 = vadd.f32 %v357, %v579
      %v581 = vpop.f32.mrb[0].mxu0
      %v582 = vadd.f32 %v361, %v581
      %583 = vmatprep.mubr.f32.mxu0 0.0
      %584 = vmatmul.mubr.f32.gmra.mrb[0].mxu0 %v297
      %v585 = vpop.f32.mrb[0].mxu0
      %v586 = vadd.f32 %v357, %v585
      %v587 = vpop.f32.mrb[0].mxu0
      %v588 = vadd.f32 %v361, %v587
      %589 = vmatprep.mubr.f32.mxu0 0.0
      %590 = vmatmul.mubr.f32.gmra.mrb[0].mxu0 %v298
      %v591 = vpop.f32.mrb[0].mxu0
      %v592 = vadd.f32 %v357, %v591
      %v593 = vpop.f32.mrb[0].mxu0
      %v594 = vadd.f32 %v361, %v593
      %595 = vmatprep.mubr.f32.mxu0 0.0
      %596 = vmatmul.mubr.f32.gmra.mrb[0].mxu0 %v299
      %v597 = vpop.f32.mrb[0].mxu0
      %v598 = vadd.f32 %v357, %v597
      %v599 = vpop.f32.mrb[0].mxu0
      %v600 = vadd.f32 %v361, %v599
      %601 = vmatprep.mubr.f32.mxu0 0.0
      %602 = vmatmul.mubr.f32.gmra.mrb[0].mxu0 %v300
      %v603 = vpop.f32.mrb[0].mxu0
      %v604 = vadd.f32 %v357, %v603
      %v605 = vpop.f32.mrb[0].mxu0
      %v606 = vadd.f32 %v361, %v605
      %607 = vmatprep.mubr.f32.mxu0 0.0
      %608 = vmatmul.mubr.f32.gmra.mrb[0].mxu0 %v301
      %v609 = vpop.f32.mrb[0].mxu0
      %v610 = vadd.f32 %v357, %v609
      %v611 = vpop.f32.mrb[0].mxu0
      %v612 = vadd.f32 %v361, %v611
      %613 = vmatprep.mubr.f32.mxu0 0.0
      %614 = vmatmul.mubr.f32.gmra.mrb[0].mxu0 %v302
      %v615 = vpop.f32.mrb[0].mxu0
      %v616 = vadd.f32 %v357, %v615
      %v617 = vpop.f32.mrb[0].mxu0
      %v618 = vadd.f32 %v361, %v617
      %619 = vmatprep.mubr.f32.mxu0 0.0
      %620 = vmatmul.mubr.f32.gmra.mrb[0].mxu0 %v303
      %v621 = vpop.f32.mrb[0].mxu0
      %v622 = vadd.f32 %v357, %v621
      %v623 = vpop.f32.mrb[0].mxu0
      %v624 = vadd.f32 %v361, %v623
      %625 = vdwg.mxu0
      %626 = vmatprep.subr.mxu0 0.0
      %627 = vmatpush1.msra.mxu0 %v306
      %628 = vmatprep.subr.mxu0 0.0
      %629 = vmatpush1.msra.mxu0 %v309
      %630 = vmatprep.subr.mxu0 0.0
      %631 = vmatpush1.msra.mxu0 %v312
      %632 = vmatprep.subr.mxu0 0.0
      %633 = vmatpush1.msra.mxu0 %v315
      %634 = vmatprep.subr.mxu0 0.0
      %635 = vmatpush1.msra.mxu0 %v318
      %636 = vmatprep.subr.mxu0 0.0
      %637 = vmatpush1.msra.mxu0 %v321
      %638 = vmatprep.subr.mxu0 0.0
      %639 = vmatpush1.msra.mxu0 %v324
      %640 = vmatprep.subr.mxu0 0.0
      %641 = vmatpush1.msra.mxu0 %v327
      %642 = vmatprep.subr.mxu0 0.0
      %643 = vmatpush1.msra.mxu0 %v330
      %644 = vmatprep.subr.mxu0 0.0
      %645 = vmatpush1.msra.mxu0 %v333
      %646 = vmatprep.subr.mxu0 0.0
      %647 = vmatpush1.msra.mxu0 %v336
      %648 = vmatprep.subr.mxu0 0.0
      %649 = vmatpush1.msra.mxu0 %v339
      %650 = vmatprep.subr.mxu0 0.0
      %651 = vmatpush1.msra.mxu0 %v342
      %652 = vmatprep.subr.mxu0 0.0
      %653 = vmatpush1.msra.mxu0 %v345
      %654 = vmatprep.subr.mxu0 0.0
      %655 = vmatpush1.msra.mxu0 %v348
      %656 = vmatprep.subr.mxu0 0.0
      %657 = vmatpush1.msra.mxu0 %v351
      %658 = vmatprep.subr.mxu0 0.0
      %659 = vmatpush1.msra.mxu0 0.0
      %660 = vmatprep.subr.mxu0 0.0
      %661 = vmatpush1.msra.mxu0 0.0
      %662 = vmatprep.subr.mxu0 0.0
      %663 = vmatpush1.msra.mxu0 0.0
      %664 = vmatprep.subr.mxu0 0.0
      %665 = vmatpush1.msra.mxu0 0.0
      %666 = vmatprep.subr.mxu0 0.0
      %667 = vmatpush1.msra.mxu0 0.0
      %668 = vmatprep.subr.mxu0 0.0
      %669 = vmatpush1.msra.mxu0 0.0
      %670 = vmatprep.subr.mxu0 0.0
      %671 = vmatpush1.msra.mxu0 0.0
      %672 = vmatprep.subr.mxu0 0.0
      %673 = vmatpush1.msra.mxu0 0.0
      %674 = vmatprep.subr.mxu0 0.0
      %675 = vmatpush1.msra.mxu0 0.0
      %676 = vmatprep.subr.mxu0 0.0
      %677 = vmatpush1.msra.mxu0 0.0
      %678 = vmatprep.subr.mxu0 0.0
      %679 = vmatpush1.msra.mxu0 0.0
      %680 = vmatprep.subr.mxu0 0.0
      %681 = vmatpush1.msra.mxu0 0.0
      %682 = vmatprep.subr.mxu0 0.0
      %683 = vmatpush1.msra.mxu0 0.0
      %684 = vmatprep.subr.mxu0 0.0
      %685 = vmatpush1.msra.mxu0 0.0
      %686 = vmatprep.subr.mxu0 0.0
      %687 = vmatpush1.msra.mxu0 0.0
      %688 = vmatprep.subr.mxu0 0.0
      %689 = vmatpush1.msra.mxu0 0.0
      %690 = vmatprep.mubr.f32.mxu0 0.0
      %691 = vmatmul.mubr.f32.gmra.mrb[0].mxu0 %v272
      %v692 = vpop.f32.mrb[0].mxu0
      %v693 = vadd.f32 %v365, %v692
      %v694 = vpop.f32.mrb[0].mxu0
      %695 = vmatprep.mubr.f32.mxu0 0.0
      %696 = vmatmul.mubr.f32.gmra.mrb[0].mxu0 %v273
      %v697 = vpop.f32.mrb[0].mxu0
      %v698 = vadd.f32 %v365, %v697
      %v699 = vpop.f32.mrb[0].mxu0
      %700 = vmatprep.mubr.f32.mxu0 0.0
      %701 = vmatmul.mubr.f32.gmra.mrb[0].mxu0 %v274
      %v702 = vpop.f32.mrb[0].mxu0
      %v703 = vadd.f32 %v365, %v702
      %v704 = vpop.f32.mrb[0].mxu0
      %705 = vmatprep.mubr.f32.mxu0 0.0
      %706 = vmatmul.mubr.f32.gmra.mrb[0].mxu0 %v275
      %v707 = vpop.f32.mrb[0].mxu0
      %v708 = vadd.f32 %v365, %v707
      %v709 = vpop.f32.mrb[0].mxu0
      %710 = vmatprep.mubr.f32.mxu0 0.0
      %711 = vmatmul.mubr.f32.gmra.mrb[0].mxu0 %v276
      %v712 = vpop.f32.mrb[0].mxu0
      %v713 = vadd.f32 %v365, %v712
      %v714 = vpop.f32.mrb[0].mxu0
      %715 = vmatprep.mubr.f32.mxu0 0.0
      %716 = vmatmul.mubr.f32.gmra.mrb[0].mxu0 %v277
      %v717 = vpop.f32.mrb[0].mxu0
      %v718 = vadd.f32 %v365, %v717
      %v719 = vpop.f32.mrb[0].mxu0
      %720 = vmatprep.mubr.f32.mxu0 0.0
      %721 = vmatmul.mubr.f32.gmra.mrb[0].mxu0 %v278
      %v722 = vpop.f32.mrb[0].mxu0
      %v723 = vadd.f32 %v365, %v722
      %v724 = vpop.f32.mrb[0].mxu0
      %725 = vmatprep.mubr.f32.mxu0 0.0
      %726 = vmatmul.mubr.f32.gmra.mrb[0].mxu0 %v279
      %v727 = vpop.f32.mrb[0].mxu0
      %v728 = vadd.f32 %v365, %v727
      %v729 = vpop.f32.mrb[0].mxu0
      %730 = vmatprep.mubr.f32.mxu0 0.0
      %731 = vmatmul.mubr.f32.gmra.mrb[0].mxu0 %v280
      %v732 = vpop.f32.mrb[0].mxu0
      %v733 = vadd.f32 %v365, %v732
      %v734 = vpop.f32.mrb[0].mxu0
      %735 = vmatprep.mubr.f32.mxu0 0.0
      %736 = vmatmul.mubr.f32.gmra.mrb[0].mxu0 %v281
      %v737 = vpop.f32.mrb[0].mxu0
      %v738 = vadd.f32 %v365, %v737
      %v739 = vpop.f32.mrb[0].mxu0
      %740 = vmatprep.mubr.f32.mxu0 0.0
      %741 = vmatmul.mubr.f32.gmra.mrb[0].mxu0 %v282
      %v742 = vpop.f32.mrb[0].mxu0
      %v743 = vadd.f32 %v365, %v742
      %v744 = vpop.f32.mrb[0].mxu0
      %745 = vmatprep.mubr.f32.mxu0 0.0
      %746 = vmatmul.mubr.f32.gmra.mrb[0].mxu0 %v283
      %v747 = vpop.f32.mrb[0].mxu0
      %v748 = vadd.f32 %v365, %v747
      %v749 = vpop.f32.mrb[0].mxu0
      %750 = vmatprep.mubr.f32.mxu0 0.0
      %751 = vmatmul.mubr.f32.gmra.mrb[0].mxu0 %v284
      %v752 = vpop.f32.mrb[0].mxu0
      %v753 = vadd.f32 %v365, %v752
      %v754 = vpop.f32.mrb[0].mxu0
      %755 = vmatprep.mubr.f32.mxu0 0.0
      %756 = vmatmul.mubr.f32.gmra.mrb[0].mxu0 %v285
      %v757 = vpop.f32.mrb[0].mxu0
      %v758 = vadd.f32 %v365, %v757
      %v759 = vpop.f32.mrb[0].mxu0
      %760 = vmatprep.mubr.f32.mxu0 0.0
      %761 = vmatmul.mubr.f32.gmra.mrb[0].mxu0 %v286
      %v762 = vpop.f32.mrb[0].mxu0
      %v763 = vadd.f32 %v365, %v762
      %v764 = vpop.f32.mrb[0].mxu0
      %765 = vmatprep.mubr.f32.mxu0 0.0
      %766 = vmatmul.mubr.f32.gmra.mrb[0].mxu0 %v287
      %v767 = vpop.f32.mrb[0].mxu0
      %v768 = vadd.f32 %v365, %v767
      %v769 = vpop.f32.mrb[0].mxu0
      %770 = vmatprep.mubr.f32.mxu0 0.0
      %771 = vmatmul.mubr.f32.gmra.mrb[0].mxu0 %v288
      %v772 = vpop.f32.mrb[0].mxu0
      %v773 = vadd.f32 %v365, %v772
      %v774 = vpop.f32.mrb[0].mxu0
      %775 = vmatprep.mubr.f32.mxu0 0.0
      %776 = vmatmul.mubr.f32.gmra.mrb[0].mxu0 %v289
      %v777 = vpop.f32.mrb[0].mxu0
      %v778 = vadd.f32 %v365, %v777
      %v779 = vpop.f32.mrb[0].mxu0
      %780 = vmatprep.mubr.f32.mxu0 0.0
      %781 = vmatmul.mubr.f32.gmra.mrb[0].mxu0 %v290
      %v782 = vpop.f32.mrb[0].mxu0
      %v783 = vadd.f32 %v365, %v782
      %v784 = vpop.f32.mrb[0].mxu0
      %785 = vmatprep.mubr.f32.mxu0 0.0
      %786 = vmatmul.mubr.f32.gmra.mrb[0].mxu0 %v291
      %v787 = vpop.f32.mrb[0].mxu0
      %v788 = vadd.f32 %v365, %v787
      %v789 = vpop.f32.mrb[0].mxu0
      %790 = vmatprep.mubr.f32.mxu0 0.0
      %791 = vmatmul.mubr.f32.gmra.mrb[0].mxu0 %v292
      %v792 = vpop.f32.mrb[0].mxu0
      %v793 = vadd.f32 %v365, %v792
      %v794 = vpop.f32.mrb[0].mxu0
      %795 = vmatprep.mubr.f32.mxu0 0.0
      %796 = vmatmul.mubr.f32.gmra.mrb[0].mxu0 %v293
      %v797 = vpop.f32.mrb[0].mxu0
      %v798 = vadd.f32 %v365, %v797
      %v799 = vpop.f32.mrb[0].mxu0
      %800 = vmatprep.mubr.f32.mxu0 0.0
      %801 = vmatmul.mubr.f32.gmra.mrb[0].mxu0 %v294
      %v802 = vpop.f32.mrb[0].mxu0
      %v803 = vadd.f32 %v365, %v802
      %v804 = vpop.f32.mrb[0].mxu0
      %805 = vmatprep.mubr.f32.mxu0 0.0
      %806 = vmatmul.mubr.f32.gmra.mrb[0].mxu0 %v295
      %v807 = vpop.f32.mrb[0].mxu0
      %v808 = vadd.f32 %v365, %v807
      %v809 = vpop.f32.mrb[0].mxu0
      %810 = vmatprep.mubr.f32.mxu0 0.0
      %811 = vmatmul.mubr.f32.gmra.mrb[0].mxu0 %v296
      %v812 = vpop.f32.mrb[0].mxu0
      %v813 = vadd.f32 %v365, %v812
      %v814 = vpop.f32.mrb[0].mxu0
      %815 = vmatprep.mubr.f32.mxu0 0.0
      %816 = vmatmul.mubr.f32.gmra.mrb[0].mxu0 %v297
      %v817 = vpop.f32.mrb[0].mxu0
      %v818 = vadd.f32 %v365, %v817
      %v819 = vpop.f32.mrb[0].mxu0
      %820 = vmatprep.mubr.f32.mxu0 0.0
      %821 = vmatmul.mubr.f32.gmra.mrb[0].mxu0 %v298
      %v822 = vpop.f32.mrb[0].mxu0
      %v823 = vadd.f32 %v365, %v822
      %v824 = vpop.f32.mrb[0].mxu0
      %825 = vmatprep.mubr.f32.mxu0 0.0
      %826 = vmatmul.mubr.f32.gmra.mrb[0].mxu0 %v299
      %v827 = vpop.f32.mrb[0].mxu0
      %v828 = vadd.f32 %v365, %v827
      %v829 = vpop.f32.mrb[0].mxu0
      %830 = vmatprep.mubr.f32.mxu0 0.0
      %831 = vmatmul.mubr.f32.gmra.mrb[0].mxu0 %v300
      %v832 = vpop.f32.mrb[0].mxu0
      %v833 = vadd.f32 %v365, %v832
      %v834 = vpop.f32.mrb[0].mxu0
      %835 = vmatprep.mubr.f32.mxu0 0.0
      %836 = vmatmul.mubr.f32.gmra.mrb[0].mxu0 %v301
      %v837 = vpop.f32.mrb[0].mxu0
      %v838 = vadd.f32 %v365, %v837
      %v839 = vpop.f32.mrb[0].mxu0
      %840 = vmatprep.mubr.f32.mxu0 0.0
      %841 = vmatmul.mubr.f32.gmra.mrb[0].mxu0 %v302
      %v842 = vpop.f32.mrb[0].mxu0
      %v843 = vadd.f32 %v365, %v842
      %v844 = vpop.f32.mrb[0].mxu0
      %845 = vmatprep.mubr.f32.mxu0 0.0
      %846 = vmatmul.mubr.f32.gmra.mrb[0].mxu0 %v303
      %v847 = vpop.f32.mrb[0].mxu0
      %v848 = vadd.f32 %v365, %v847
      %v849 = vpop.f32.mrb[0].mxu0
      %850 = vdwg.mxu0
      %v851 = vmul.f32 %v436, 0.088388346
      %v852 = vmul.f32 %v442, 0.088388346
      %v853 = vmul.f32 %v448, 0.088388346
      %v854 = vmul.f32 %v454, 0.088388346
      %v855 = vmul.f32 %v460, 0.088388346
      %v856 = vmul.f32 %v466, 0.088388346
      %v857 = vmul.f32 %v472, 0.088388346
      %v858 = vmul.f32 %v478, 0.088388346
      %v859 = vmul.f32 %v484, 0.088388346
      %v860 = vmul.f32 %v490, 0.088388346
      %v861 = vmul.f32 %v496, 0.088388346
      %v862 = vmul.f32 %v502, 0.088388346
      %v863 = vmul.f32 %v508, 0.088388346
      %v864 = vmul.f32 %v514, 0.088388346
      %v865 = vmul.f32 %v520, 0.088388346
      %v866 = vmul.f32 %v526, 0.088388346
      %v867 = vmul.f32 %v532, 0.088388346
      %v868 = vmul.f32 %v538, 0.088388346
      %v869 = vmul.f32 %v544, 0.088388346
      %v870 = vmul.f32 %v550, 0.088388346
      %v871 = vmul.f32 %v556, 0.088388346
      %v872 = vmul.f32 %v562, 0.088388346
      %v873 = vmul.f32 %v568, 0.088388346
      %v874 = vmul.f32 %v574, 0.088388346
      %v875 = vmul.f32 %v580, 0.088388346
      %v876 = vmul.f32 %v586, 0.088388346
      %v877 = vmul.f32 %v592, 0.088388346
      %v878 = vmul.f32 %v598, 0.088388346
      %v879 = vmul.f32 %v604, 0.088388346
      %v880 = vmul.f32 %v610, 0.088388346
      %v881 = vmul.f32 %v616, 0.088388346
      %v882 = vmul.f32 %v622, 0.088388346
      %v883 = vld [vmem:[%s266] sm:$0xff]
      %v884 = vld [vmem:[%s266 + $0x8] sm:$0xff]
      %v885 = vld [vmem:[%s266 + $0x10] sm:$0xff]
      %v886 = vld [vmem:[%s266 + $0x18] sm:$0xff]
      %v887 = vld [vmem:[%s266 + $0x20] sm:$0xff]
      %v888 = vld [vmem:[%s266 + $0x28] sm:$0xff]
      %v889 = vld [vmem:[%s266 + $0x30] sm:$0xff]
      %v890 = vld [vmem:[%s266 + $0x38] sm:$0xff]
      %v891 = vld [vmem:[%s266 + $0x40] sm:$0xff]
      %v892 = vld [vmem:[%s266 + $0x48] sm:$0xff]
      %v893 = vld [vmem:[%s266 + $0x50] sm:$0xff]
      %v894 = vld [vmem:[%s266 + $0x58] sm:$0xff]
      %v895 = vld [vmem:[%s266 + $0x60] sm:$0xff]
      %v896 = vld [vmem:[%s266 + $0x68] sm:$0xff]
      %v897 = vld [vmem:[%s266 + $0x70] sm:$0xff]
      %v898 = vld [vmem:[%s266 + $0x78] sm:$0xff]
      %v899 = vld [vmem:[%s266 + $0x80] sm:$0xff]
      %v900 = vld [vmem:[%s266 + $0x88] sm:$0xff]
      %v901 = vld [vmem:[%s266 + $0x90] sm:$0xff]
      %v902 = vld [vmem:[%s266 + $0x98] sm:$0xff]
      %v903 = vld [vmem:[%s266 + $0xa0] sm:$0xff]
      %v904 = vld [vmem:[%s266 + $0xa8] sm:$0xff]
      %v905 = vld [vmem:[%s266 + $0xb0] sm:$0xff]
      %v906 = vld [vmem:[%s266 + $0xb8] sm:$0xff]
      %v907 = vld [vmem:[%s266 + $0xc0] sm:$0xff]
      %v908 = vld [vmem:[%s266 + $0xc8] sm:$0xff]
      %v909 = vld [vmem:[%s266 + $0xd0] sm:$0xff]
      %v910 = vld [vmem:[%s266 + $0xd8] sm:$0xff]
      %v911 = vld [vmem:[%s266 + $0xe0] sm:$0xff]
      %v912 = vld [vmem:[%s266 + $0xe8] sm:$0xff]
      %v913 = vld [vmem:[%s266 + $0xf0] sm:$0xff]
      %v914 = vld [vmem:[%s266 + $0xf8] sm:$0xff]
      %v915 = vld [vmem:[%s266 + $0x100] sm:$0xff]
      %v916 = vld [vmem:[%s266 + $0x108] sm:$0xff]
      %v917 = vld [vmem:[%s266 + $0x110] sm:$0xff]
      %v918 = vld [vmem:[%s266 + $0x118] sm:$0xff]
      %v919 = vld [vmem:[%s266 + $0x120] sm:$0xff]
      %v920 = vld [vmem:[%s266 + $0x128] sm:$0xff]
      %v921 = vld [vmem:[%s266 + $0x130] sm:$0xff]
      %v922 = vld [vmem:[%s266 + $0x138] sm:$0xff]
      %v923 = vld [vmem:[%s266 + $0x140] sm:$0xff]
      %v924 = vld [vmem:[%s266 + $0x148] sm:$0xff]
      %v925 = vld [vmem:[%s266 + $0x150] sm:$0xff]
      %v926 = vld [vmem:[%s266 + $0x158] sm:$0xff]
      %v927 = vld [vmem:[%s266 + $0x160] sm:$0xff]
      %v928 = vld [vmem:[%s266 + $0x168] sm:$0xff]
      %v929 = vld [vmem:[%s266 + $0x170] sm:$0xff]
      %v930 = vld [vmem:[%s266 + $0x178] sm:$0xff]
      %v931 = vld [vmem:[%s266 + $0x180] sm:$0xff]
      %v932 = vld [vmem:[%s266 + $0x188] sm:$0xff]
      %v933 = vld [vmem:[%s266 + $0x190] sm:$0xff]
      %v934 = vld [vmem:[%s266 + $0x198] sm:$0xff]
      %v935 = vld [vmem:[%s266 + $0x1a0] sm:$0xff]
      %v936 = vld [vmem:[%s266 + $0x1a8] sm:$0xff]
      %v937 = vld [vmem:[%s266 + $0x1b0] sm:$0xff]
      %v938 = vld [vmem:[%s266 + $0x1b8] sm:$0xff]
      %v939 = vld [vmem:[%s266 + $0x1c0] sm:$0xff]
      %v940 = vld [vmem:[%s266 + $0x1c8] sm:$0xff]
      %v941 = vld [vmem:[%s266 + $0x1d0] sm:$0xff]
      %v942 = vld [vmem:[%s266 + $0x1d8] sm:$0xff]
      %v943 = vld [vmem:[%s266 + $0x1e0] sm:$0xff]
      %v944 = vld [vmem:[%s266 + $0x1e8] sm:$0xff]
      %v945 = vld [vmem:[%s266 + $0x1f0] sm:$0xff]
      %v946 = vld [vmem:[%s266 + $0x1f8] sm:$0xff]
      %v947 = vld [vmem:[%s4] sm:$0xff]
      %v948 = vld [vmem:[%s4 + $0x8] sm:$0xff]
      %v949 = vld [vmem:[%s4 + $0x10] sm:$0xff]
      %v950 = vld [vmem:[%s4 + $0x18] sm:$0xff]
      %v951 = vld [vmem:[%s4 + $0x20] sm:$0xff]
      %v952 = vld [vmem:[%s4 + $0x28] sm:$0xff]
      %v953 = vld [vmem:[%s4 + $0x30] sm:$0xff]
      %v954 = vld [vmem:[%s4 + $0x38] sm:$0xff]
      %v955 = vld [vmem:[%s4 + $0x40] sm:$0xff]
      %v956 = vld [vmem:[%s4 + $0x48] sm:$0xff]
      %v957 = vld [vmem:[%s4 + $0x50] sm:$0xff]
      %v958 = vld [vmem:[%s4 + $0x58] sm:$0xff]
      %v959 = vld [vmem:[%s4 + $0x60] sm:$0xff]
      %v960 = vld [vmem:[%s4 + $0x68] sm:$0xff]
      %v961 = vld [vmem:[%s4 + $0x70] sm:$0xff]
      %v962 = vld [vmem:[%s4 + $0x78] sm:$0xff]
      %vm963 = vcmask 261120
      %v965 = vsel %vm963, %v851, 0
      %v968 = vsel %vm963, %v852, 0
      %v971 = vsel %vm963, %v853, 0
      %v974 = vsel %vm963, %v854, 0
      %v977 = vsel %vm963, %v855, 0
      %v980 = vsel %vm963, %v856, 0
      %v983 = vsel %vm963, %v857, 0
      %v986 = vsel %vm963, %v858, 0
      %v989 = vsel %vm963, %v859, 0
      %v992 = vsel %vm963, %v860, 0
      %v995 = vsel %vm963, %v861, 0
      %v998 = vsel %vm963, %v862, 0
      %v1001 = vsel %vm963, %v863, 0
      %v1004 = vsel %vm963, %v864, 0
      %v1007 = vsel %vm963, %v865, 0
      %v1010 = vsel %vm963, %v866, 0
      %v1013 = vsel %vm963, %v867, 0
      %v1016 = vsel %vm963, %v868, 0
      %v1019 = vsel %vm963, %v869, 0
      %v1022 = vsel %vm963, %v870, 0
      %v1025 = vsel %vm963, %v871, 0
      %v1028 = vsel %vm963, %v872, 0
      %v1031 = vsel %vm963, %v873, 0
      %v1034 = vsel %vm963, %v874, 0
      %v1037 = vsel %vm963, %v875, 0
      %v1040 = vsel %vm963, %v876, 0
      %v1043 = vsel %vm963, %v877, 0
      %v1046 = vsel %vm963, %v878, 0
      %v1049 = vsel %vm963, %v879, 0
      %v1052 = vsel %vm963, %v880, 0
      %v1055 = vsel %vm963, %v881, 0
      %v1058 = vsel %vm963, %v882, 0
      %v1061 = vsel %vm963, %v438, 0
      %v1064 = vsel %vm963, %v444, 0
      %v1067 = vsel %vm963, %v450, 0
      %v1070 = vsel %vm963, %v456, 0
      %v1073 = vsel %vm963, %v462, 0
      %v1076 = vsel %vm963, %v468, 0
      %v1079 = vsel %vm963, %v474, 0
      %v1082 = vsel %vm963, %v480, 0
      %v1085 = vsel %vm963, %v486, 0
      %v1088 = vsel %vm963, %v492, 0
      %v1091 = vsel %vm963, %v498, 0
      %v1094 = vsel %vm963, %v504, 0
      %v1097 = vsel %vm963, %v510, 0
      %v1100 = vsel %vm963, %v516, 0
      %v1103 = vsel %vm963, %v522, 0
      %v1106 = vsel %vm963, %v528, 0
      %v1109 = vsel %vm963, %v534, 0
      %v1112 = vsel %vm963, %v540, 0
      %v1115 = vsel %vm963, %v546, 0
      %v1118 = vsel %vm963, %v552, 0
      %v1121 = vsel %vm963, %v558, 0
      %v1124 = vsel %vm963, %v564, 0
      %v1127 = vsel %vm963, %v570, 0
      %v1130 = vsel %vm963, %v576, 0
      %v1133 = vsel %vm963, %v582, 0
      %v1136 = vsel %vm963, %v588, 0
      %v1139 = vsel %vm963, %v594, 0
      %v1142 = vsel %vm963, %v600, 0
      %v1145 = vsel %vm963, %v606, 0
      %v1148 = vsel %vm963, %v612, 0
      %v1151 = vsel %vm963, %v618, 0
      %v1154 = vsel %vm963, %v624, 0
      %1156 = vmatprep.subr.mxu0 0.0
      %1157 = vmatpush1.xpose.msra.mxu0 %v1061
      %1158 = vmatprep.subr.mxu0 0.0
      %1159 = vmatpush1.xpose.msra.mxu0 %v1064
      %1160 = vmatprep.subr.mxu0 0.0
      %1161 = vmatpush1.xpose.msra.mxu0 %v1067
      %1162 = vmatprep.subr.mxu0 0.0
      %1163 = vmatpush1.xpose.msra.mxu0 %v1070
      %1164 = vmatprep.subr.mxu0 0.0
      %1165 = vmatpush1.xpose.msra.mxu0 %v1073
      %1166 = vmatprep.subr.mxu0 0.0
      %1167 = vmatpush1.xpose.msra.mxu0 %v1076
      %1168 = vmatprep.subr.mxu0 0.0
      %1169 = vmatpush1.xpose.msra.mxu0 %v1079
      %1170 = vmatprep.subr.mxu0 0.0
      %1171 = vmatpush1.xpose.msra.mxu0 %v1082
      %1172 = vmatprep.subr.mxu0 0.0
      %1173 = vmatpush1.xpose.msra.mxu0 %v1085
      %1174 = vmatprep.subr.mxu0 0.0
      %1175 = vmatpush1.xpose.msra.mxu0 %v1088
      %1176 = vmatprep.subr.mxu0 0.0
      %1177 = vmatpush1.xpose.msra.mxu0 %v1091
      %1178 = vmatprep.subr.mxu0 0.0
      %1179 = vmatpush1.xpose.msra.mxu0 %v1094
      %1180 = vmatprep.subr.mxu0 0.0
      %1181 = vmatpush1.xpose.msra.mxu0 %v1097
      %1182 = vmatprep.subr.mxu0 0.0
      %1183 = vmatpush1.xpose.msra.mxu0 %v1100
      %1184 = vmatprep.subr.mxu0 0.0
      %1185 = vmatpush1.xpose.msra.mxu0 %v1103
      %1186 = vmatprep.subr.mxu0 0.0
      %1187 = vmatpush1.xpose.msra.mxu0 %v1106
      %1188 = vmatprep.subr.mxu0 0.0
      %1189 = vmatpush1.xpose.msra.mxu0 %v1109
      %1190 = vmatprep.subr.mxu0 0.0
      %1191 = vmatpush1.xpose.msra.mxu0 %v1112
      %1192 = vmatprep.subr.mxu0 0.0
      %1193 = vmatpush1.xpose.msra.mxu0 %v1115
      %1194 = vmatprep.subr.mxu0 0.0
      %1195 = vmatpush1.xpose.msra.mxu0 %v1118
      %1196 = vmatprep.subr.mxu0 0.0
      %1197 = vmatpush1.xpose.msra.mxu0 %v1121
      %1198 = vmatprep.subr.mxu0 0.0
      %1199 = vmatpush1.xpose.msra.mxu0 %v1124
      %1200 = vmatprep.subr.mxu0 0.0
      %1201 = vmatpush1.xpose.msra.mxu0 %v1127
      %1202 = vmatprep.subr.mxu0 0.0
      %1203 = vmatpush1.xpose.msra.mxu0 %v1130
      %1204 = vmatprep.subr.mxu0 0.0
      %1205 = vmatpush1.xpose.msra.mxu0 %v1133
      %1206 = vmatprep.subr.mxu0 0.0
      %1207 = vmatpush1.xpose.msra.mxu0 %v1136
      %1208 = vmatprep.subr.mxu0 0.0
      %1209 = vmatpush1.xpose.msra.mxu0 %v1139
      %1210 = vmatprep.subr.mxu0 0.0
      %1211 = vmatpush1.xpose.msra.mxu0 %v1142
      %1212 = vmatprep.subr.mxu0 0.0
      %1213 = vmatpush1.xpose.msra.mxu0 %v1145
      %1214 = vmatprep.subr.mxu0 0.0
      %1215 = vmatpush1.xpose.msra.mxu0 %v1148
      %1216 = vmatprep.subr.mxu0 0.0
      %1217 = vmatpush1.xpose.msra.mxu0 %v1151
      %1218 = vmatprep.subr.mxu0 0.0
      %1219 = vmatpush1.xpose.msra.mxu0 %v1154
      %1220 = vmatprep.mubr.f32.mxu0 0.0
      %1221 = vmatmul.mubr.f32.gmra.mrb[0].mxu0 %v965
      %v1222 = vpop.f32.mrb[0].mxu0
      %v1223 = vadd.f32 %v883, %v1222
      %v1224 = vpop.f32.mrb[0].mxu0
      %v1225 = vadd.f32 %v884, %v1224
      %1226 = vmatprep.mubr.f32.mxu0 0.0
      %1227 = vmatmul.mubr.f32.gmra.mrb[0].mxu0 %v968
      %v1228 = vpop.f32.mrb[0].mxu0
      %v1229 = vadd.f32 %v885, %v1228
      %v1230 = vpop.f32.mrb[0].mxu0
      %v1231 = vadd.f32 %v886, %v1230
      %1232 = vmatprep.mubr.f32.mxu0 0.0
      %1233 = vmatmul.mubr.f32.gmra.mrb[0].mxu0 %v971
      %v1234 = vpop.f32.mrb[0].mxu0
      %v1235 = vadd.f32 %v887, %v1234
      %v1236 = vpop.f32.mrb[0].mxu0
      %v1237 = vadd.f32 %v888, %v1236
      %1238 = vmatprep.mubr.f32.mxu0 0.0
      %1239 = vmatmul.mubr.f32.gmra.mrb[0].mxu0 %v974
      %v1240 = vpop.f32.mrb[0].mxu0
      %v1241 = vadd.f32 %v889, %v1240
      %v1242 = vpop.f32.mrb[0].mxu0
      %v1243 = vadd.f32 %v890, %v1242
      %1244 = vmatprep.mubr.f32.mxu0 0.0
      %1245 = vmatmul.mubr.f32.gmra.mrb[0].mxu0 %v977
      %v1246 = vpop.f32.mrb[0].mxu0
      %v1247 = vadd.f32 %v891, %v1246
      %v1248 = vpop.f32.mrb[0].mxu0
      %v1249 = vadd.f32 %v892, %v1248
      %1250 = vmatprep.mubr.f32.mxu0 0.0
      %1251 = vmatmul.mubr.f32.gmra.mrb[0].mxu0 %v980
      %v1252 = vpop.f32.mrb[0].mxu0
      %v1253 = vadd.f32 %v893, %v1252
      %v1254 = vpop.f32.mrb[0].mxu0
      %v1255 = vadd.f32 %v894, %v1254
      %1256 = vmatprep.mubr.f32.mxu0 0.0
      %1257 = vmatmul.mubr.f32.gmra.mrb[0].mxu0 %v983
      %v1258 = vpop.f32.mrb[0].mxu0
      %v1259 = vadd.f32 %v895, %v1258
      %v1260 = vpop.f32.mrb[0].mxu0
      %v1261 = vadd.f32 %v896, %v1260
      %1262 = vmatprep.mubr.f32.mxu0 0.0
      %1263 = vmatmul.mubr.f32.gmra.mrb[0].mxu0 %v986
      %v1264 = vpop.f32.mrb[0].mxu0
      %v1265 = vadd.f32 %v897, %v1264
      %v1266 = vpop.f32.mrb[0].mxu0
      %v1267 = vadd.f32 %v898, %v1266
      %1268 = vmatprep.mubr.f32.mxu0 0.0
      %1269 = vmatmul.mubr.f32.gmra.mrb[0].mxu0 %v989
      %v1270 = vpop.f32.mrb[0].mxu0
      %v1271 = vadd.f32 %v899, %v1270
      %v1272 = vpop.f32.mrb[0].mxu0
      %v1273 = vadd.f32 %v900, %v1272
      %1274 = vmatprep.mubr.f32.mxu0 0.0
      %1275 = vmatmul.mubr.f32.gmra.mrb[0].mxu0 %v992
      %v1276 = vpop.f32.mrb[0].mxu0
      %v1277 = vadd.f32 %v901, %v1276
      %v1278 = vpop.f32.mrb[0].mxu0
      %v1279 = vadd.f32 %v902, %v1278
      %1280 = vmatprep.mubr.f32.mxu0 0.0
      %1281 = vmatmul.mubr.f32.gmra.mrb[0].mxu0 %v995
      %v1282 = vpop.f32.mrb[0].mxu0
      %v1283 = vadd.f32 %v903, %v1282
      %v1284 = vpop.f32.mrb[0].mxu0
      %v1285 = vadd.f32 %v904, %v1284
      %1286 = vmatprep.mubr.f32.mxu0 0.0
      %1287 = vmatmul.mubr.f32.gmra.mrb[0].mxu0 %v998
      %v1288 = vpop.f32.mrb[0].mxu0
      %v1289 = vadd.f32 %v905, %v1288
      %v1290 = vpop.f32.mrb[0].mxu0
      %v1291 = vadd.f32 %v906, %v1290
      %1292 = vmatprep.mubr.f32.mxu0 0.0
      %1293 = vmatmul.mubr.f32.gmra.mrb[0].mxu0 %v1001
      %v1294 = vpop.f32.mrb[0].mxu0
      %v1295 = vadd.f32 %v907, %v1294
      %v1296 = vpop.f32.mrb[0].mxu0
      %v1297 = vadd.f32 %v908, %v1296
      %1298 = vmatprep.mubr.f32.mxu0 0.0
      %1299 = vmatmul.mubr.f32.gmra.mrb[0].mxu0 %v1004
      %v1300 = vpop.f32.mrb[0].mxu0
      %v1301 = vadd.f32 %v909, %v1300
      %v1302 = vpop.f32.mrb[0].mxu0
      %v1303 = vadd.f32 %v910, %v1302
      %1304 = vmatprep.mubr.f32.mxu0 0.0
      %1305 = vmatmul.mubr.f32.gmra.mrb[0].mxu0 %v1007
      %v1306 = vpop.f32.mrb[0].mxu0
      %v1307 = vadd.f32 %v911, %v1306
      %v1308 = vpop.f32.mrb[0].mxu0
      %v1309 = vadd.f32 %v912, %v1308
      %1310 = vmatprep.mubr.f32.mxu0 0.0
      %1311 = vmatmul.mubr.f32.gmra.mrb[0].mxu0 %v1010
      %v1312 = vpop.f32.mrb[0].mxu0
      %v1313 = vadd.f32 %v913, %v1312
      %v1314 = vpop.f32.mrb[0].mxu0
      %v1315 = vadd.f32 %v914, %v1314
      %1316 = vmatprep.mubr.f32.mxu0 0.0
      %1317 = vmatmul.mubr.f32.gmra.mrb[0].mxu0 %v1013
      %v1318 = vpop.f32.mrb[0].mxu0
      %v1319 = vadd.f32 %v915, %v1318
      %v1320 = vpop.f32.mrb[0].mxu0
      %v1321 = vadd.f32 %v916, %v1320
      %1322 = vmatprep.mubr.f32.mxu0 0.0
      %1323 = vmatmul.mubr.f32.gmra.mrb[0].mxu0 %v1016
      %v1324 = vpop.f32.mrb[0].mxu0
      %v1325 = vadd.f32 %v917, %v1324
      %v1326 = vpop.f32.mrb[0].mxu0
      %v1327 = vadd.f32 %v918, %v1326
      %1328 = vmatprep.mubr.f32.mxu0 0.0
      %1329 = vmatmul.mubr.f32.gmra.mrb[0].mxu0 %v1019
      %v1330 = vpop.f32.mrb[0].mxu0
      %v1331 = vadd.f32 %v919, %v1330
      %v1332 = vpop.f32.mrb[0].mxu0
      %v1333 = vadd.f32 %v920, %v1332
      %1334 = vmatprep.mubr.f32.mxu0 0.0
      %1335 = vmatmul.mubr.f32.gmra.mrb[0].mxu0 %v1022
      %v1336 = vpop.f32.mrb[0].mxu0
      %v1337 = vadd.f32 %v921, %v1336
      %v1338 = vpop.f32.mrb[0].mxu0
      %v1339 = vadd.f32 %v922, %v1338
      %1340 = vmatprep.mubr.f32.mxu0 0.0
      %1341 = vmatmul.mubr.f32.gmra.mrb[0].mxu0 %v1025
      %v1342 = vpop.f32.mrb[0].mxu0
      %v1343 = vadd.f32 %v923, %v1342
      %v1344 = vpop.f32.mrb[0].mxu0
      %v1345 = vadd.f32 %v924, %v1344
      %1346 = vmatprep.mubr.f32.mxu0 0.0
      %1347 = vmatmul.mubr.f32.gmra.mrb[0].mxu0 %v1028
      %v1348 = vpop.f32.mrb[0].mxu0
      %v1349 = vadd.f32 %v925, %v1348
      %v1350 = vpop.f32.mrb[0].mxu0
      %v1351 = vadd.f32 %v926, %v1350
      %1352 = vmatprep.mubr.f32.mxu0 0.0
      %1353 = vmatmul.mubr.f32.gmra.mrb[0].mxu0 %v1031
      %v1354 = vpop.f32.mrb[0].mxu0
      %v1355 = vadd.f32 %v927, %v1354
      %v1356 = vpop.f32.mrb[0].mxu0
      %v1357 = vadd.f32 %v928, %v1356
      %1358 = vmatprep.mubr.f32.mxu0 0.0
      %1359 = vmatmul.mubr.f32.gmra.mrb[0].mxu0 %v1034
      %v1360 = vpop.f32.mrb[0].mxu0
      %v1361 = vadd.f32 %v929, %v1360
      %v1362 = vpop.f32.mrb[0].mxu0
      %v1363 = vadd.f32 %v930, %v1362
      %1364 = vmatprep.mubr.f32.mxu0 0.0
      %1365 = vmatmul.mubr.f32.gmra.mrb[0].mxu0 %v1037
      %v1366 = vpop.f32.mrb[0].mxu0
      %v1367 = vadd.f32 %v931, %v1366
      %v1368 = vpop.f32.mrb[0].mxu0
      %v1369 = vadd.f32 %v932, %v1368
      %1370 = vmatprep.mubr.f32.mxu0 0.0
      %1371 = vmatmul.mubr.f32.gmra.mrb[0].mxu0 %v1040
      %v1372 = vpop.f32.mrb[0].mxu0
      %v1373 = vadd.f32 %v933, %v1372
      %v1374 = vpop.f32.mrb[0].mxu0
      %v1375 = vadd.f32 %v934, %v1374
      %1376 = vmatprep.mubr.f32.mxu0 0.0
      %1377 = vmatmul.mubr.f32.gmra.mrb[0].mxu0 %v1043
      %v1378 = vpop.f32.mrb[0].mxu0
      %v1379 = vadd.f32 %v935, %v1378
      %v1380 = vpop.f32.mrb[0].mxu0
      %v1381 = vadd.f32 %v936, %v1380
      %1382 = vmatprep.mubr.f32.mxu0 0.0
      %1383 = vmatmul.mubr.f32.gmra.mrb[0].mxu0 %v1046
      %v1384 = vpop.f32.mrb[0].mxu0
      %v1385 = vadd.f32 %v937, %v1384
      %v1386 = vpop.f32.mrb[0].mxu0
      %v1387 = vadd.f32 %v938, %v1386
      %1388 = vmatprep.mubr.f32.mxu0 0.0
      %1389 = vmatmul.mubr.f32.gmra.mrb[0].mxu0 %v1049
      %v1390 = vpop.f32.mrb[0].mxu0
      %v1391 = vadd.f32 %v939, %v1390
      %v1392 = vpop.f32.mrb[0].mxu0
      %v1393 = vadd.f32 %v940, %v1392
      %1394 = vmatprep.mubr.f32.mxu0 0.0
      %1395 = vmatmul.mubr.f32.gmra.mrb[0].mxu0 %v1052
      %v1396 = vpop.f32.mrb[0].mxu0
      %v1397 = vadd.f32 %v941, %v1396
      %v1398 = vpop.f32.mrb[0].mxu0
      %v1399 = vadd.f32 %v942, %v1398
      %1400 = vmatprep.mubr.f32.mxu0 0.0
      %1401 = vmatmul.mubr.f32.gmra.mrb[0].mxu0 %v1055
      %v1402 = vpop.f32.mrb[0].mxu0
      %v1403 = vadd.f32 %v943, %v1402
      %v1404 = vpop.f32.mrb[0].mxu0
      %v1405 = vadd.f32 %v944, %v1404
      %1406 = vmatprep.mubr.f32.mxu0 0.0
      %1407 = vmatmul.mubr.f32.gmra.mrb[0].mxu0 %v1058
      %v1408 = vpop.f32.mrb[0].mxu0
      %v1409 = vadd.f32 %v945, %v1408
      %v1410 = vpop.f32.mrb[0].mxu0
      %v1411 = vadd.f32 %v946, %v1410
      %1412 = vdwg.mxu0
      %v1413 = vmax.f32 %v1223, %v1225
      %1414 = vmax.xlane.f32.xlu0 %v1413
      %v1415 = vpop.xlane.xlu0 %1414
      %v1416 = vmax.f32 %v1229, %v1231
      %1417 = vmax.xlane.f32.xlu0 %v1416
      %v1418 = vpop.xlane.xlu0 %1417
      %v1419 = vmax.f32 %v1235, %v1237
      %1420 = vmax.xlane.f32.xlu0 %v1419
      %v1421 = vpop.xlane.xlu0 %1420
      %v1422 = vmax.f32 %v1241, %v1243
      %1423 = vmax.xlane.f32.xlu0 %v1422
      %v1424 = vpop.xlane.xlu0 %1423
      %v1425 = vmax.f32 %v1247, %v1249
      %1426 = vmax.xlane.f32.xlu0 %v1425
      %v1427 = vpop.xlane.xlu0 %1426
      %v1428 = vmax.f32 %v1253, %v1255
      %1429 = vmax.xlane.f32.xlu0 %v1428
      %v1430 = vpop.xlane.xlu0 %1429
      %v1431 = vmax.f32 %v1259, %v1261
      %1432 = vmax.xlane.f32.xlu0 %v1431
      %v1433 = vpop.xlane.xlu0 %1432
      %v1434 = vmax.f32 %v1265, %v1267
      %1435 = vmax.xlane.f32.xlu0 %v1434
      %v1436 = vpop.xlane.xlu0 %1435
      %v1437 = vmax.f32 %v1271, %v1273
      %1438 = vmax.xlane.f32.xlu0 %v1437
      %v1439 = vpop.xlane.xlu0 %1438
      %v1440 = vmax.f32 %v1277, %v1279
      %1441 = vmax.xlane.f32.xlu0 %v1440
      %v1442 = vpop.xlane.xlu0 %1441
      %v1443 = vmax.f32 %v1283, %v1285
      %1444 = vmax.xlane.f32.xlu0 %v1443
      %v1445 = vpop.xlane.xlu0 %1444
      %v1446 = vmax.f32 %v1289, %v1291
      %1447 = vmax.xlane.f32.xlu0 %v1446
      %v1448 = vpop.xlane.xlu0 %1447
      %v1449 = vmax.f32 %v1295, %v1297
      %1450 = vmax.xlane.f32.xlu0 %v1449
      %v1451 = vpop.xlane.xlu0 %1450
      %v1452 = vmax.f32 %v1301, %v1303
      %1453 = vmax.xlane.f32.xlu0 %v1452
      %v1454 = vpop.xlane.xlu0 %1453
      %v1455 = vmax.f32 %v1307, %v1309
      %1456 = vmax.xlane.f32.xlu0 %v1455
      %v1457 = vpop.xlane.xlu0 %1456
      %v1458 = vmax.f32 %v1313, %v1315
      %1459 = vmax.xlane.f32.xlu0 %v1458
      %v1460 = vpop.xlane.xlu0 %1459
      %v1461 = vmax.f32 %v1319, %v1321
      %1462 = vmax.xlane.f32.xlu0 %v1461
      %v1463 = vpop.xlane.xlu0 %1462
      %v1464 = vmax.f32 %v1325, %v1327
      %1465 = vmax.xlane.f32.xlu0 %v1464
      %v1466 = vpop.xlane.xlu0 %1465
      %v1467 = vmax.f32 %v1331, %v1333
      %1468 = vmax.xlane.f32.xlu0 %v1467
      %v1469 = vpop.xlane.xlu0 %1468
      %v1470 = vmax.f32 %v1337, %v1339
      %1471 = vmax.xlane.f32.xlu0 %v1470
      %v1472 = vpop.xlane.xlu0 %1471
      %v1473 = vmax.f32 %v1343, %v1345
      %1474 = vmax.xlane.f32.xlu0 %v1473
      %v1475 = vpop.xlane.xlu0 %1474
      %v1476 = vmax.f32 %v1349, %v1351
      %1477 = vmax.xlane.f32.xlu0 %v1476
      %v1478 = vpop.xlane.xlu0 %1477
      %v1479 = vmax.f32 %v1355, %v1357
      %1480 = vmax.xlane.f32.xlu0 %v1479
      %v1481 = vpop.xlane.xlu0 %1480
      %v1482 = vmax.f32 %v1361, %v1363
      %1483 = vmax.xlane.f32.xlu0 %v1482
      %v1484 = vpop.xlane.xlu0 %1483
      %v1485 = vmax.f32 %v1367, %v1369
      %1486 = vmax.xlane.f32.xlu0 %v1485
      %v1487 = vpop.xlane.xlu0 %1486
      %v1488 = vmax.f32 %v1373, %v1375
      %1489 = vmax.xlane.f32.xlu0 %v1488
      %v1490 = vpop.xlane.xlu0 %1489
      %v1491 = vmax.f32 %v1379, %v1381
      %1492 = vmax.xlane.f32.xlu0 %v1491
      %v1493 = vpop.xlane.xlu0 %1492
      %v1494 = vmax.f32 %v1385, %v1387
      %1495 = vmax.xlane.f32.xlu0 %v1494
      %v1496 = vpop.xlane.xlu0 %1495
      %v1497 = vmax.f32 %v1391, %v1393
      %1498 = vmax.xlane.f32.xlu0 %v1497
      %v1499 = vpop.xlane.xlu0 %1498
      %v1500 = vmax.f32 %v1397, %v1399
      %1501 = vmax.xlane.f32.xlu0 %v1500
      %v1502 = vpop.xlane.xlu0 %1501
      %v1503 = vmax.f32 %v1403, %v1405
      %1504 = vmax.xlane.f32.xlu0 %v1503
      %v1505 = vpop.xlane.xlu0 %1504
      %v1506 = vmax.f32 %v1409, %v1411
      %1507 = vmax.xlane.f32.xlu0 %v1506
      %v1508 = vpop.xlane.xlu0 %1507
      %v1509 = vsub.f32 %v1223, %v1415
      %v1510 = vsub.f32 %v1225, %v1415
      %v1511 = vsub.f32 %v1229, %v1418
      %v1512 = vsub.f32 %v1231, %v1418
      %v1513 = vsub.f32 %v1235, %v1421
      %v1514 = vsub.f32 %v1237, %v1421
      %v1515 = vsub.f32 %v1241, %v1424
      %v1516 = vsub.f32 %v1243, %v1424
      %v1517 = vsub.f32 %v1247, %v1427
      %v1518 = vsub.f32 %v1249, %v1427
      %v1519 = vsub.f32 %v1253, %v1430
      %v1520 = vsub.f32 %v1255, %v1430
      %v1521 = vsub.f32 %v1259, %v1433
      %v1522 = vsub.f32 %v1261, %v1433
      %v1523 = vsub.f32 %v1265, %v1436
      %v1524 = vsub.f32 %v1267, %v1436
      %v1525 = vsub.f32 %v1271, %v1439
      %v1526 = vsub.f32 %v1273, %v1439
      %v1527 = vsub.f32 %v1277, %v1442
      %v1528 = vsub.f32 %v1279, %v1442
      %v1529 = vsub.f32 %v1283, %v1445
      %v1530 = vsub.f32 %v1285, %v1445
      %v1531 = vsub.f32 %v1289, %v1448
      %v1532 = vsub.f32 %v1291, %v1448
      %v1533 = vsub.f32 %v1295, %v1451
      %v1534 = vsub.f32 %v1297, %v1451
      %v1535 = vsub.f32 %v1301, %v1454
      %v1536 = vsub.f32 %v1303, %v1454
      %v1537 = vsub.f32 %v1307, %v1457
      %v1538 = vsub.f32 %v1309, %v1457
      %v1539 = vsub.f32 %v1313, %v1460
      %v1540 = vsub.f32 %v1315, %v1460
      %v1541 = vsub.f32 %v1319, %v1463
      %v1542 = vsub.f32 %v1321, %v1463
      %v1543 = vsub.f32 %v1325, %v1466
      %v1544 = vsub.f32 %v1327, %v1466
      %v1545 = vsub.f32 %v1331, %v1469
      %v1546 = vsub.f32 %v1333, %v1469
      %v1547 = vsub.f32 %v1337, %v1472
      %v1548 = vsub.f32 %v1339, %v1472
      %v1549 = vsub.f32 %v1343, %v1475
      %v1550 = vsub.f32 %v1345, %v1475
      %v1551 = vsub.f32 %v1349, %v1478
      %v1552 = vsub.f32 %v1351, %v1478
      %v1553 = vsub.f32 %v1355, %v1481
      %v1554 = vsub.f32 %v1357, %v1481
      %v1555 = vsub.f32 %v1361, %v1484
      %v1556 = vsub.f32 %v1363, %v1484
      %v1557 = vsub.f32 %v1367, %v1487
      %v1558 = vsub.f32 %v1369, %v1487
      %v1559 = vsub.f32 %v1373, %v1490
      %v1560 = vsub.f32 %v1375, %v1490
      %v1561 = vsub.f32 %v1379, %v1493
      %v1562 = vsub.f32 %v1381, %v1493
      %v1563 = vsub.f32 %v1385, %v1496
      %v1564 = vsub.f32 %v1387, %v1496
      %v1565 = vsub.f32 %v1391, %v1499
      %v1566 = vsub.f32 %v1393, %v1499
      %v1567 = vsub.f32 %v1397, %v1502
      %v1568 = vsub.f32 %v1399, %v1502
      %v1569 = vsub.f32 %v1403, %v1505
      %v1570 = vsub.f32 %v1405, %v1505
      %v1571 = vsub.f32 %v1409, %v1508
      %v1572 = vsub.f32 %v1411, %v1508
      %v1573 = vmul.f32 %v1509, 1.442695
      %v1574 = vpow.pop %v1573
      %v1575 = vmul.f32 %v1510, 1.442695
      %v1576 = vpow.pop %v1575
      %v1577 = vmul.f32 %v1511, 1.442695
      %v1578 = vpow.pop %v1577
      %v1579 = vmul.f32 %v1512, 1.442695
      %v1580 = vpow.pop %v1579
      %v1581 = vmul.f32 %v1513, 1.442695
      %v1582 = vpow.pop %v1581
      %v1583 = vmul.f32 %v1514, 1.442695
      %v1584 = vpow.pop %v1583
      %v1585 = vmul.f32 %v1515, 1.442695
      %v1586 = vpow.pop %v1585
      %v1587 = vmul.f32 %v1516, 1.442695
      %v1588 = vpow.pop %v1587
      %v1589 = vmul.f32 %v1517, 1.442695
      %v1590 = vpow.pop %v1589
      %v1591 = vmul.f32 %v1518, 1.442695
      %v1592 = vpow.pop %v1591
      %v1593 = vmul.f32 %v1519, 1.442695
      %v1594 = vpow.pop %v1593
      %v1595 = vmul.f32 %v1520, 1.442695
      %v1596 = vpow.pop %v1595
      %v1597 = vmul.f32 %v1521, 1.442695
      %v1598 = vpow.pop %v1597
      %v1599 = vmul.f32 %v1522, 1.442695
      %v1600 = vpow.pop %v1599
      %v1601 = vmul.f32 %v1523, 1.442695
      %v1602 = vpow.pop %v1601
      %v1603 = vmul.f32 %v1524, 1.442695
      %v1604 = vpow.pop %v1603
      %v1605 = vmul.f32 %v1525, 1.442695
      %v1606 = vpow.pop %v1605
      %v1607 = vmul.f32 %v1526, 1.442695
      %v1608 = vpow.pop %v1607
      %v1609 = vmul.f32 %v1527, 1.442695
      %v1610 = vpow.pop %v1609
      %v1611 = vmul.f32 %v1528, 1.442695
      %v1612 = vpow.pop %v1611
      %v1613 = vmul.f32 %v1529, 1.442695
      %v1614 = vpow.pop %v1613
      %v1615 = vmul.f32 %v1530, 1.442695
      %v1616 = vpow.pop %v1615
      %v1617 = vmul.f32 %v1531, 1.442695
      %v1618 = vpow.pop %v1617
      %v1619 = vmul.f32 %v1532, 1.442695
      %v1620 = vpow.pop %v1619
      %v1621 = vmul.f32 %v1533, 1.442695
      %v1622 = vpow.pop %v1621
      %v1623 = vmul.f32 %v1534, 1.442695
      %v1624 = vpow.pop %v1623
      %v1625 = vmul.f32 %v1535, 1.442695
      %v1626 = vpow.pop %v1625
      %v1627 = vmul.f32 %v1536, 1.442695
      %v1628 = vpow.pop %v1627
      %v1629 = vmul.f32 %v1537, 1.442695
      %v1630 = vpow.pop %v1629
      %v1631 = vmul.f32 %v1538, 1.442695
      %v1632 = vpow.pop %v1631
      %v1633 = vmul.f32 %v1539, 1.442695
      %v1634 = vpow.pop %v1633
      %v1635 = vmul.f32 %v1540, 1.442695
      %v1636 = vpow.pop %v1635
      %v1637 = vmul.f32 %v1541, 1.442695
      %v1638 = vpow.pop %v1637
      %v1639 = vmul.f32 %v1542, 1.442695
      %v1640 = vpow.pop %v1639
      %v1641 = vmul.f32 %v1543, 1.442695
      %v1642 = vpow.pop %v1641
      %v1643 = vmul.f32 %v1544, 1.442695
      %v1644 = vpow.pop %v1643
      %v1645 = vmul.f32 %v1545, 1.442695
      %v1646 = vpow.pop %v1645
      %v1647 = vmul.f32 %v1546, 1.442695
      %v1648 = vpow.pop %v1647
      %v1649 = vmul.f32 %v1547, 1.442695
      %v1650 = vpow.pop %v1649
      %v1651 = vmul.f32 %v1548, 1.442695
      %v1652 = vpow.pop %v1651
      %v1653 = vmul.f32 %v1549, 1.442695
      %v1654 = vpow.pop %v1653
      %v1655 = vmul.f32 %v1550, 1.442695
      %v1656 = vpow.pop %v1655
      %v1657 = vmul.f32 %v1551, 1.442695
      %v1658 = vpow.pop %v1657
      %v1659 = vmul.f32 %v1552, 1.442695
      %v1660 = vpow.pop %v1659
      %v1661 = vmul.f32 %v1553, 1.442695
      %v1662 = vpow.pop %v1661
      %v1663 = vmul.f32 %v1554, 1.442695
      %v1664 = vpow.pop %v1663
      %v1665 = vmul.f32 %v1555, 1.442695
      %v1666 = vpow.pop %v1665
      %v1667 = vmul.f32 %v1556, 1.442695
      %v1668 = vpow.pop %v1667
      %v1669 = vmul.f32 %v1557, 1.442695
      %v1670 = vpow.pop %v1669
      %v1671 = vmul.f32 %v1558, 1.442695
      %v1672 = vpow.pop %v1671
      %v1673 = vmul.f32 %v1559, 1.442695
      %v1674 = vpow.pop %v1673
      %v1675 = vmul.f32 %v1560, 1.442695
      %v1676 = vpow.pop %v1675
      %v1677 = vmul.f32 %v1561, 1.442695
      %v1678 = vpow.pop %v1677
      %v1679 = vmul.f32 %v1562, 1.442695
      %v1680 = vpow.pop %v1679
      %v1681 = vmul.f32 %v1563, 1.442695
      %v1682 = vpow.pop %v1681
      %v1683 = vmul.f32 %v1564, 1.442695
      %v1684 = vpow.pop %v1683
      %v1685 = vmul.f32 %v1565, 1.442695
      %v1686 = vpow.pop %v1685
      %v1687 = vmul.f32 %v1566, 1.442695
      %v1688 = vpow.pop %v1687
      %v1689 = vmul.f32 %v1567, 1.442695
      %v1690 = vpow.pop %v1689
      %v1691 = vmul.f32 %v1568, 1.442695
      %v1692 = vpow.pop %v1691
      %v1693 = vmul.f32 %v1569, 1.442695
      %v1694 = vpow.pop %v1693
      %v1695 = vmul.f32 %v1570, 1.442695
      %v1696 = vpow.pop %v1695
      %v1697 = vmul.f32 %v1571, 1.442695
      %v1698 = vpow.pop %v1697
      %v1699 = vmul.f32 %v1572, 1.442695
      %v1700 = vpow.pop %v1699
      %v1701 = vadd.f32 %v1574, %v1576
      %1702 = vadd.xlane.f32.xlu0 %v1701
      %v1703 = vpop.xlane.xlu0 %1702
      %v1704 = vadd.f32 %v1578, %v1580
      %1705 = vadd.xlane.f32.xlu0 %v1704
      %v1706 = vpop.xlane.xlu0 %1705
      %v1707 = vadd.f32 %v1582, %v1584
      %1708 = vadd.xlane.f32.xlu0 %v1707
      %v1709 = vpop.xlane.xlu0 %1708
      %v1710 = vadd.f32 %v1586, %v1588
      %1711 = vadd.xlane.f32.xlu0 %v1710
      %v1712 = vpop.xlane.xlu0 %1711
      %v1713 = vadd.f32 %v1590, %v1592
      %1714 = vadd.xlane.f32.xlu0 %v1713
      %v1715 = vpop.xlane.xlu0 %1714
      %v1716 = vadd.f32 %v1594, %v1596
      %1717 = vadd.xlane.f32.xlu0 %v1716
      %v1718 = vpop.xlane.xlu0 %1717
      %v1719 = vadd.f32 %v1598, %v1600
      %1720 = vadd.xlane.f32.xlu0 %v1719
      %v1721 = vpop.xlane.xlu0 %1720
      %v1722 = vadd.f32 %v1602, %v1604
      %1723 = vadd.xlane.f32.xlu0 %v1722
      %v1724 = vpop.xlane.xlu0 %1723
      %v1725 = vadd.f32 %v1606, %v1608
      %1726 = vadd.xlane.f32.xlu0 %v1725
      %v1727 = vpop.xlane.xlu0 %1726
      %v1728 = vadd.f32 %v1610, %v1612
      %1729 = vadd.xlane.f32.xlu0 %v1728
      %v1730 = vpop.xlane.xlu0 %1729
      %v1731 = vadd.f32 %v1614, %v1616
      %1732 = vadd.xlane.f32.xlu0 %v1731
      %v1733 = vpop.xlane.xlu0 %1732
      %v1734 = vadd.f32 %v1618, %v1620
      %1735 = vadd.xlane.f32.xlu0 %v1734
      %v1736 = vpop.xlane.xlu0 %1735
      %v1737 = vadd.f32 %v1622, %v1624
      %1738 = vadd.xlane.f32.xlu0 %v1737
      %v1739 = vpop.xlane.xlu0 %1738
      %v1740 = vadd.f32 %v1626, %v1628
      %1741 = vadd.xlane.f32.xlu0 %v1740
      %v1742 = vpop.xlane.xlu0 %1741
      %v1743 = vadd.f32 %v1630, %v1632
      %1744 = vadd.xlane.f32.xlu0 %v1743
      %v1745 = vpop.xlane.xlu0 %1744
      %v1746 = vadd.f32 %v1634, %v1636
      %1747 = vadd.xlane.f32.xlu0 %v1746
      %v1748 = vpop.xlane.xlu0 %1747
      %v1749 = vadd.f32 %v1638, %v1640
      %1750 = vadd.xlane.f32.xlu0 %v1749
      %v1751 = vpop.xlane.xlu0 %1750
      %v1752 = vadd.f32 %v1642, %v1644
      %1753 = vadd.xlane.f32.xlu0 %v1752
      %v1754 = vpop.xlane.xlu0 %1753
      %v1755 = vadd.f32 %v1646, %v1648
      %1756 = vadd.xlane.f32.xlu0 %v1755
      %v1757 = vpop.xlane.xlu0 %1756
      %v1758 = vadd.f32 %v1650, %v1652
      %1759 = vadd.xlane.f32.xlu0 %v1758
      %v1760 = vpop.xlane.xlu0 %1759
      %v1761 = vadd.f32 %v1654, %v1656
      %1762 = vadd.xlane.f32.xlu0 %v1761
      %v1763 = vpop.xlane.xlu0 %1762
      %v1764 = vadd.f32 %v1658, %v1660
      %1765 = vadd.xlane.f32.xlu0 %v1764
      %v1766 = vpop.xlane.xlu0 %1765
      %v1767 = vadd.f32 %v1662, %v1664
      %1768 = vadd.xlane.f32.xlu0 %v1767
      %v1769 = vpop.xlane.xlu0 %1768
      %v1770 = vadd.f32 %v1666, %v1668
      %1771 = vadd.xlane.f32.xlu0 %v1770
      %v1772 = vpop.xlane.xlu0 %1771
      %v1773 = vadd.f32 %v1670, %v1672
      %1774 = vadd.xlane.f32.xlu0 %v1773
      %v1775 = vpop.xlane.xlu0 %1774
      %v1776 = vadd.f32 %v1674, %v1676
      %1777 = vadd.xlane.f32.xlu0 %v1776
      %v1778 = vpop.xlane.xlu0 %1777
      %v1779 = vadd.f32 %v1678, %v1680
      %1780 = vadd.xlane.f32.xlu0 %v1779
      %v1781 = vpop.xlane.xlu0 %1780
      %v1782 = vadd.f32 %v1682, %v1684
      %1783 = vadd.xlane.f32.xlu0 %v1782
      %v1784 = vpop.xlane.xlu0 %1783
      %v1785 = vadd.f32 %v1686, %v1688
      %1786 = vadd.xlane.f32.xlu0 %v1785
      %v1787 = vpop.xlane.xlu0 %1786
      %v1788 = vadd.f32 %v1690, %v1692
      %1789 = vadd.xlane.f32.xlu0 %v1788
      %v1790 = vpop.xlane.xlu0 %1789
      %v1791 = vadd.f32 %v1694, %v1696
      %1792 = vadd.xlane.f32.xlu0 %v1791
      %v1793 = vpop.xlane.xlu0 %1792
      %v1794 = vadd.f32 %v1698, %v1700
      %1795 = vadd.xlane.f32.xlu0 %v1794
      %v1796 = vpop.xlane.xlu0 %1795
      %v1797 = vrcp.pop %v1703
      %v1798 = vrcp.pop %v1706
      %v1799 = vrcp.pop %v1709
      %v1800 = vrcp.pop %v1712
      %v1801 = vrcp.pop %v1715
      %v1802 = vrcp.pop %v1718
      %v1803 = vrcp.pop %v1721
      %v1804 = vrcp.pop %v1724
      %v1805 = vrcp.pop %v1727
      %v1806 = vrcp.pop %v1730
      %v1807 = vrcp.pop %v1733
      %v1808 = vrcp.pop %v1736
      %v1809 = vrcp.pop %v1739
      %v1810 = vrcp.pop %v1742
      %v1811 = vrcp.pop %v1745
      %v1812 = vrcp.pop %v1748
      %v1813 = vrcp.pop %v1751
      %v1814 = vrcp.pop %v1754
      %v1815 = vrcp.pop %v1757
      %v1816 = vrcp.pop %v1760
      %v1817 = vrcp.pop %v1763
      %v1818 = vrcp.pop %v1766
      %v1819 = vrcp.pop %v1769
      %v1820 = vrcp.pop %v1772
      %v1821 = vrcp.pop %v1775
      %v1822 = vrcp.pop %v1778
      %v1823 = vrcp.pop %v1781
      %v1824 = vrcp.pop %v1784
      %v1825 = vrcp.pop %v1787
      %v1826 = vrcp.pop %v1790
      %v1827 = vrcp.pop %v1793
      %v1828 = vrcp.pop %v1796
      %v1829 = vmul.f32 %v1574, %v1797
      %v1830 = vmul.f32 %v1576, %v1797
      %v1831 = vmul.f32 %v1578, %v1798
      %v1832 = vmul.f32 %v1580, %v1798
      %v1833 = vmul.f32 %v1582, %v1799
      %v1834 = vmul.f32 %v1584, %v1799
      %v1835 = vmul.f32 %v1586, %v1800
      %v1836 = vmul.f32 %v1588, %v1800
      %v1837 = vmul.f32 %v1590, %v1801
      %v1838 = vmul.f32 %v1592, %v1801
      %v1839 = vmul.f32 %v1594, %v1802
      %v1840 = vmul.f32 %v1596, %v1802
      %v1841 = vmul.f32 %v1598, %v1803
      %v1842 = vmul.f32 %v1600, %v1803
      %v1843 = vmul.f32 %v1602, %v1804
      %v1844 = vmul.f32 %v1604, %v1804
      %v1845 = vmul.f32 %v1606, %v1805
      %v1846 = vmul.f32 %v1608, %v1805
      %v1847 = vmul.f32 %v1610, %v1806
      %v1848 = vmul.f32 %v1612, %v1806
      %v1849 = vmul.f32 %v1614, %v1807
      %v1850 = vmul.f32 %v1616, %v1807
      %v1851 = vmul.f32 %v1618, %v1808
      %v1852 = vmul.f32 %v1620, %v1808
      %v1853 = vmul.f32 %v1622, %v1809
      %v1854 = vmul.f32 %v1624, %v1809
      %v1855 = vmul.f32 %v1626, %v1810
      %v1856 = vmul.f32 %v1628, %v1810
      %v1857 = vmul.f32 %v1630, %v1811
      %v1858 = vmul.f32 %v1632, %v1811
      %v1859 = vmul.f32 %v1634, %v1812
      %v1860 = vmul.f32 %v1636, %v1812
      %v1861 = vmul.f32 %v1638, %v1813
      %v1862 = vmul.f32 %v1640, %v1813
      %v1863 = vmul.f32 %v1642, %v1814
      %v1864 = vmul.f32 %v1644, %v1814
      %v1865 = vmul.f32 %v1646, %v1815
      %v1866 = vmul.f32 %v1648, %v1815
      %v1867 = vmul.f32 %v1650, %v1816
      %v1868 = vmul.f32 %v1652, %v1816
      %v1869 = vmul.f32 %v1654, %v1817
      %v1870 = vmul.f32 %v1656, %v1817
      %v1871 = vmul.f32 %v1658, %v1818
      %v1872 = vmul.f32 %v1660, %v1818
      %v1873 = vmul.f32 %v1662, %v1819
      %v1874 = vmul.f32 %v1664, %v1819
      %v1875 = vmul.f32 %v1666, %v1820
      %v1876 = vmul.f32 %v1668, %v1820
      %v1877 = vmul.f32 %v1670, %v1821
      %v1878 = vmul.f32 %v1672, %v1821
      %v1879 = vmul.f32 %v1674, %v1822
      %v1880 = vmul.f32 %v1676, %v1822
      %v1881 = vmul.f32 %v1678, %v1823
      %v1882 = vmul.f32 %v1680, %v1823
      %v1883 = vmul.f32 %v1682, %v1824
      %v1884 = vmul.f32 %v1684, %v1824
      %v1885 = vmul.f32 %v1686, %v1825
      %v1886 = vmul.f32 %v1688, %v1825
      %v1887 = vmul.f32 %v1690, %v1826
      %v1888 = vmul.f32 %v1692, %v1826
      %v1889 = vmul.f32 %v1694, %v1827
      %v1890 = vmul.f32 %v1696, %v1827
      %v1891 = vmul.f32 %v1698, %v1828
      %v1892 = vmul.f32 %v1700, %v1828
      %1893 = vmatprep.subr.mxu0 0.0
      %1894 = vmatpush1.msra.mxu0 %v693
      %1895 = vmatprep.subr.mxu0 0.0
      %1896 = vmatpush1.msra.mxu0 %v698
      %1897 = vmatprep.subr.mxu0 0.0
      %1898 = vmatpush1.msra.mxu0 %v703
      %1899 = vmatprep.subr.mxu0 0.0
      %1900 = vmatpush1.msra.mxu0 %v708
      %1901 = vmatprep.subr.mxu0 0.0
      %1902 = vmatpush1.msra.mxu0 %v713
      %1903 = vmatprep.subr.mxu0 0.0
      %1904 = vmatpush1.msra.mxu0 %v718
      %1905 = vmatprep.subr.mxu0 0.0
      %1906 = vmatpush1.msra.mxu0 %v723
      %1907 = vmatprep.subr.mxu0 0.0
      %1908 = vmatpush1.msra.mxu0 %v728
      %1909 = vmatprep.subr.mxu0 0.0
      %1910 = vmatpush1.msra.mxu0 %v733
      %1911 = vmatprep.subr.mxu0 0.0
      %1912 = vmatpush1.msra.mxu0 %v738
      %1913 = vmatprep.subr.mxu0 0.0
      %1914 = vmatpush1.msra.mxu0 %v743
      %1915 = vmatprep.subr.mxu0 0.0
      %1916 = vmatpush1.msra.mxu0 %v748
      %1917 = vmatprep.subr.mxu0 0.0
      %1918 = vmatpush1.msra.mxu0 %v753
      %1919 = vmatprep.subr.mxu0 0.0
      %1920 = vmatpush1.msra.mxu0 %v758
      %1921 = vmatprep.subr.mxu0 0.0
      %1922 = vmatpush1.msra.mxu0 %v763
      %1923 = vmatprep.subr.mxu0 0.0
      %1924 = vmatpush1.msra.mxu0 %v768
      %1925 = vmatprep.subr.mxu0 0.0
      %1926 = vmatpush1.msra.mxu0 %v773
      %1927 = vmatprep.subr.mxu0 0.0
      %1928 = vmatpush1.msra.mxu0 %v778
      %1929 = vmatprep.subr.mxu0 0.0
      %1930 = vmatpush1.msra.mxu0 %v783
      %1931 = vmatprep.subr.mxu0 0.0
      %1932 = vmatpush1.msra.mxu0 %v788
      %1933 = vmatprep.subr.mxu0 0.0
      %1934 = vmatpush1.msra.mxu0 %v793
      %1935 = vmatprep.subr.mxu0 0.0
      %1936 = vmatpush1.msra.mxu0 %v798
      %1937 = vmatprep.subr.mxu0 0.0
      %1938 = vmatpush1.msra.mxu0 %v803
      %1939 = vmatprep.subr.mxu0 0.0
      %1940 = vmatpush1.msra.mxu0 %v808
      %1941 = vmatprep.subr.mxu0 0.0
      %1942 = vmatpush1.msra.mxu0 %v813
      %1943 = vmatprep.subr.mxu0 0.0
      %1944 = vmatpush1.msra.mxu0 %v818
      %1945 = vmatprep.subr.mxu0 0.0
      %1946 = vmatpush1.msra.mxu0 %v823
      %1947 = vmatprep.subr.mxu0 0.0
      %1948 = vmatpush1.msra.mxu0 %v828
      %1949 = vmatprep.subr.mxu0 0.0
      %1950 = vmatpush1.msra.mxu0 %v833
      %1951 = vmatprep.subr.mxu0 0.0
      %1952 = vmatpush1.msra.mxu0 %v838
      %1953 = vmatprep.subr.mxu0 0.0
      %1954 = vmatpush1.msra.mxu0 %v843
      %1955 = vmatprep.subr.mxu0 0.0
      %1956 = vmatpush1.msra.mxu0 %v848
      %1957 = vmatprep.mubr.f32.mxu0 %v1830
      %1958 = vmatmul.mubr.f32.gmra.mrb[0].mxu0 %v1829
      %v1959 = vpop.f32.mrb[0].mxu0
      %v1960 = vadd.f32 0.0, %v1959
      %v1961 = vpop.f32.mrb[0].mxu0
      %1962 = vmatprep.mubr.f32.mxu0 %v1832
      %1963 = vmatmul.mubr.f32.gmra.mrb[0].mxu0 %v1831
      %v1964 = vpop.f32.mrb[0].mxu0
      %v1965 = vadd.f32 0.0, %v1964
      %v1966 = vpop.f32.mrb[0].mxu0
      %1967 = vmatprep.mubr.f32.mxu0 %v1834
      %1968 = vmatmul.mubr.f32.gmra.mrb[0].mxu0 %v1833
      %v1969 = vpop.f32.mrb[0].mxu0
      %v1970 = vadd.f32 0.0, %v1969
      %v1971 = vpop.f32.mrb[0].mxu0
      %1972 = vmatprep.mubr.f32.mxu0 %v1836
      %1973 = vmatmul.mubr.f32.gmra.mrb[0].mxu0 %v1835
      %v1974 = vpop.f32.mrb[0].mxu0
      %v1975 = vadd.f32 0.0, %v1974
      %v1976 = vpop.f32.mrb[0].mxu0
      %1977 = vmatprep.mubr.f32.mxu0 %v1838
      %1978 = vmatmul.mubr.f32.gmra.mrb[0].mxu0 %v1837
      %v1979 = vpop.f32.mrb[0].mxu0
      %v1980 = vadd.f32 0.0, %v1979
      %v1981 = vpop.f32.mrb[0].mxu0
      %1982 = vmatprep.mubr.f32.mxu0 %v1840
      %1983 = vmatmul.mubr.f32.gmra.mrb[0].mxu0 %v1839
      %v1984 = vpop.f32.mrb[0].mxu0
      %v1985 = vadd.f32 0.0, %v1984
      %v1986 = vpop.f32.mrb[0].mxu0
      %1987 = vmatprep.mubr.f32.mxu0 %v1842
      %1988 = vmatmul.mubr.f32.gmra.mrb[0].mxu0 %v1841
      %v1989 = vpop.f32.mrb[0].mxu0
      %v1990 = vadd.f32 0.0, %v1989
      %v1991 = vpop.f32.mrb[0].mxu0
      %1992 = vmatprep.mubr.f32.mxu0 %v1844
      %1993 = vmatmul.mubr.f32.gmra.mrb[0].mxu0 %v1843
      %v1994 = vpop.f32.mrb[0].mxu0
      %v1995 = vadd.f32 0.0, %v1994
      %v1996 = vpop.f32.mrb[0].mxu0
      %1997 = vmatprep.mubr.f32.mxu0 %v1846
      %1998 = vmatmul.mubr.f32.gmra.mrb[0].mxu0 %v1845
      %v1999 = vpop.f32.mrb[0].mxu0
      %v2000 = vadd.f32 0.0, %v1999
      %v2001 = vpop.f32.mrb[0].mxu0
      %2002 = vmatprep.mubr.f32.mxu0 %v1848
      %2003 = vmatmul.mubr.f32.gmra.mrb[0].mxu0 %v1847
      %v2004 = vpop.f32.mrb[0].mxu0
      %v2005 = vadd.f32 0.0, %v2004
      %v2006 = vpop.f32.mrb[0].mxu0
      %2007 = vmatprep.mubr.f32.mxu0 %v1850
      %2008 = vmatmul.mubr.f32.gmra.mrb[0].mxu0 %v1849
      %v2009 = vpop.f32.mrb[0].mxu0
      %v2010 = vadd.f32 0.0, %v2009
      %v2011 = vpop.f32.mrb[0].mxu0
      %2012 = vmatprep.mubr.f32.mxu0 %v1852
      %2013 = vmatmul.mubr.f32.gmra.mrb[0].mxu0 %v1851
      %v2014 = vpop.f32.mrb[0].mxu0
      %v2015 = vadd.f32 0.0, %v2014
      %v2016 = vpop.f32.mrb[0].mxu0
      %2017 = vmatprep.mubr.f32.mxu0 %v1854
      %2018 = vmatmul.mubr.f32.gmra.mrb[0].mxu0 %v1853
      %v2019 = vpop.f32.mrb[0].mxu0
      %v2020 = vadd.f32 0.0, %v2019
      %v2021 = vpop.f32.mrb[0].mxu0
      %2022 = vmatprep.mubr.f32.mxu0 %v1856
      %2023 = vmatmul.mubr.f32.gmra.mrb[0].mxu0 %v1855
      %v2024 = vpop.f32.mrb[0].mxu0
      %v2025 = vadd.f32 0.0, %v2024
      %v2026 = vpop.f32.mrb[0].mxu0
      %2027 = vmatprep.mubr.f32.mxu0 %v1858
      %2028 = vmatmul.mubr.f32.gmra.mrb[0].mxu0 %v1857
      %v2029 = vpop.f32.mrb[0].mxu0
      %v2030 = vadd.f32 0.0, %v2029
      %v2031 = vpop.f32.mrb[0].mxu0
      %2032 = vmatprep.mubr.f32.mxu0 %v1860
      %2033 = vmatmul.mubr.f32.gmra.mrb[0].mxu0 %v1859
      %v2034 = vpop.f32.mrb[0].mxu0
      %v2035 = vadd.f32 0.0, %v2034
      %v2036 = vpop.f32.mrb[0].mxu0
      %2037 = vmatprep.mubr.f32.mxu0 %v1862
      %2038 = vmatmul.mubr.f32.gmra.mrb[0].mxu0 %v1861
      %v2039 = vpop.f32.mrb[0].mxu0
      %v2040 = vadd.f32 0.0, %v2039
      %v2041 = vpop.f32.mrb[0].mxu0
      %2042 = vmatprep.mubr.f32.mxu0 %v1864
      %2043 = vmatmul.mubr.f32.gmra.mrb[0].mxu0 %v1863
      %v2044 = vpop.f32.mrb[0].mxu0
      %v2045 = vadd.f32 0.0, %v2044
      %v2046 = vpop.f32.mrb[0].mxu0
      %2047 = vmatprep.mubr.f32.mxu0 %v1866
      %2048 = vmatmul.mubr.f32.gmra.mrb[0].mxu0 %v1865
      %v2049 = vpop.f32.mrb[0].mxu0
      %v2050 = vadd.f32 0.0, %v2049
      %v2051 = vpop.f32.mrb[0].mxu0
      %2052 = vmatprep.mubr.f32.mxu0 %v1868
      %2053 = vmatmul.mubr.f32.gmra.mrb[0].mxu0 %v1867
      %v2054 = vpop.f32.mrb[0].mxu0
      %v2055 = vadd.f32 0.0, %v2054
      %v2056 = vpop.f32.mrb[0].mxu0
      %2057 = vmatprep.mubr.f32.mxu0 %v1870
      %2058 = vmatmul.mubr.f32.gmra.mrb[0].mxu0 %v1869
      %v2059 = vpop.f32.mrb[0].mxu0
      %v2060 = vadd.f32 0.0, %v2059
      %v2061 = vpop.f32.mrb[0].mxu0
      %2062 = vmatprep.mubr.f32.mxu0 %v1872
      %2063 = vmatmul.mubr.f32.gmra.mrb[0].mxu0 %v1871
      %v2064 = vpop.f32.mrb[0].mxu0
      %v2065 = vadd.f32 0.0, %v2064
      %v2066 = vpop.f32.mrb[0].mxu0
      %2067 = vmatprep.mubr.f32.mxu0 %v1874
      %2068 = vmatmul.mubr.f32.gmra.mrb[0].mxu0 %v1873
      %v2069 = vpop.f32.mrb[0].mxu0
      %v2070 = vadd.f32 0.0, %v2069
      %v2071 = vpop.f32.mrb[0].mxu0
      %2072 = vmatprep.mubr.f32.mxu0 %v1876
      %2073 = vmatmul.mubr.f32.gmra.mrb[0].mxu0 %v1875
      %v2074 = vpop.f32.mrb[0].mxu0
      %v2075 = vadd.f32 0.0, %v2074
      %v2076 = vpop.f32.mrb[0].mxu0
      %2077 = vmatprep.mubr.f32.mxu0 %v1878
      %2078 = vmatmul.mubr.f32.gmra.mrb[0].mxu0 %v1877
      %v2079 = vpop.f32.mrb[0].mxu0
      %v2080 = vadd.f32 0.0, %v2079
      %v2081 = vpop.f32.mrb[0].mxu0
      %2082 = vmatprep.mubr.f32.mxu0 %v1880
      %2083 = vmatmul.mubr.f32.gmra.mrb[0].mxu0 %v1879
      %v2084 = vpop.f32.mrb[0].mxu0
      %v2085 = vadd.f32 0.0, %v2084
      %v2086 = vpop.f32.mrb[0].mxu0
      %2087 = vmatprep.mubr.f32.mxu0 %v1882
      %2088 = vmatmul.mubr.f32.gmra.mrb[0].mxu0 %v1881
      %v2089 = vpop.f32.mrb[0].mxu0
      %v2090 = vadd.f32 0.0, %v2089
      %v2091 = vpop.f32.mrb[0].mxu0
      %2092 = vmatprep.mubr.f32.mxu0 %v1884
      %2093 = vmatmul.mubr.f32.gmra.mrb[0].mxu0 %v1883
      %v2094 = vpop.f32.mrb[0].mxu0
      %v2095 = vadd.f32 0.0, %v2094
      %v2096 = vpop.f32.mrb[0].mxu0
      %2097 = vmatprep.mubr.f32.mxu0 %v1886
      %2098 = vmatmul.mubr.f32.gmra.mrb[0].mxu0 %v1885
      %v2099 = vpop.f32.mrb[0].mxu0
      %v2100 = vadd.f32 0.0, %v2099
      %v2101 = vpop.f32.mrb[0].mxu0
      %2102 = vmatprep.mubr.f32.mxu0 %v1888
      %2103 = vmatmul.mubr.f32.gmra.mrb[0].mxu0 %v1887
      %v2104 = vpop.f32.mrb[0].mxu0
      %v2105 = vadd.f32 0.0, %v2104
      %v2106 = vpop.f32.mrb[0].mxu0
      %2107 = vmatprep.mubr.f32.mxu0 %v1890
      %2108 = vmatmul.mubr.f32.gmra.mrb[0].mxu0 %v1889
      %v2109 = vpop.f32.mrb[0].mxu0
      %v2110 = vadd.f32 0.0, %v2109
      %v2111 = vpop.f32.mrb[0].mxu0
      %2112 = vmatprep.mubr.f32.mxu0 %v1892
      %2113 = vmatmul.mubr.f32.gmra.mrb[0].mxu0 %v1891
      %v2114 = vpop.f32.mrb[0].mxu0
      %v2115 = vadd.f32 0.0, %v2114
      %v2116 = vpop.f32.mrb[0].mxu0
      %2117 = vdwg.mxu0
      %2118 = vrot.lane.b32.xlu0 %v851, 96
      %v2119 = vpop.permute.xlu0 %2118
      %2120 = vrot.lane.b32.xlu0 %v852, 96
      %v2121 = vpop.permute.xlu0 %2120
      %2122 = vrot.lane.b32.xlu0 %v853, 96
      %v2123 = vpop.permute.xlu0 %2122
      %2124 = vrot.lane.b32.xlu0 %v854, 96
      %v2125 = vpop.permute.xlu0 %2124
      %2126 = vrot.lane.b32.xlu0 %v855, 96
      %v2127 = vpop.permute.xlu0 %2126
      %2128 = vrot.lane.b32.xlu0 %v856, 96
      %v2129 = vpop.permute.xlu0 %2128
      %2130 = vrot.lane.b32.xlu0 %v857, 96
      %v2131 = vpop.permute.xlu0 %2130
      %2132 = vrot.lane.b32.xlu0 %v858, 96
      %v2133 = vpop.permute.xlu0 %2132
      %2134 = vrot.lane.b32.xlu0 %v859, 96
      %v2135 = vpop.permute.xlu0 %2134
      %2136 = vrot.lane.b32.xlu0 %v860, 96
      %v2137 = vpop.permute.xlu0 %2136
      %2138 = vrot.lane.b32.xlu0 %v861, 96
      %v2139 = vpop.permute.xlu0 %2138
      %2140 = vrot.lane.b32.xlu0 %v862, 96
      %v2141 = vpop.permute.xlu0 %2140
      %2142 = vrot.lane.b32.xlu0 %v863, 96
      %v2143 = vpop.permute.xlu0 %2142
      %2144 = vrot.lane.b32.xlu0 %v864, 96
      %v2145 = vpop.permute.xlu0 %2144
      %2146 = vrot.lane.b32.xlu0 %v865, 96
      %v2147 = vpop.permute.xlu0 %2146
      %2148 = vrot.lane.b32.xlu0 %v866, 96
      %v2149 = vpop.permute.xlu0 %2148
      %2150 = vrot.lane.b32.xlu0 %v867, 96
      %v2151 = vpop.permute.xlu0 %2150
      %2152 = vrot.lane.b32.xlu0 %v868, 96
      %v2153 = vpop.permute.xlu0 %2152
      %2154 = vrot.lane.b32.xlu0 %v869, 96
      %v2155 = vpop.permute.xlu0 %2154
      %2156 = vrot.lane.b32.xlu0 %v870, 96
      %v2157 = vpop.permute.xlu0 %2156
      %2158 = vrot.lane.b32.xlu0 %v871, 96
      %v2159 = vpop.permute.xlu0 %2158
      %2160 = vrot.lane.b32.xlu0 %v872, 96
      %v2161 = vpop.permute.xlu0 %2160
      %2162 = vrot.lane.b32.xlu0 %v873, 96
      %v2163 = vpop.permute.xlu0 %2162
      %2164 = vrot.lane.b32.xlu0 %v874, 96
      %v2165 = vpop.permute.xlu0 %2164
      %2166 = vrot.lane.b32.xlu0 %v875, 96
      %v2167 = vpop.permute.xlu0 %2166
      %2168 = vrot.lane.b32.xlu0 %v876, 96
      %v2169 = vpop.permute.xlu0 %2168
      %2170 = vrot.lane.b32.xlu0 %v877, 96
      %v2171 = vpop.permute.xlu0 %2170
      %2172 = vrot.lane.b32.xlu0 %v878, 96
      %v2173 = vpop.permute.xlu0 %2172
      %2174 = vrot.lane.b32.xlu0 %v879, 96
      %v2175 = vpop.permute.xlu0 %2174
      %2176 = vrot.lane.b32.xlu0 %v880, 96
      %v2177 = vpop.permute.xlu0 %2176
      %2178 = vrot.lane.b32.xlu0 %v881, 96
      %v2179 = vpop.permute.xlu0 %2178
      %2180 = vrot.lane.b32.xlu0 %v882, 96
      %v2181 = vpop.permute.xlu0 %2180
      %2182 = vrot.lane.b32.xlu0 %v438, 96
      %v2183 = vpop.permute.xlu0 %2182
      %2184 = vrot.lane.b32.xlu0 %v444, 96
      %v2185 = vpop.permute.xlu0 %2184
      %2186 = vrot.lane.b32.xlu0 %v450, 96
      %v2187 = vpop.permute.xlu0 %2186
      %2188 = vrot.lane.b32.xlu0 %v456, 96
      %v2189 = vpop.permute.xlu0 %2188
      %2190 = vrot.lane.b32.xlu0 %v462, 96
      %v2191 = vpop.permute.xlu0 %2190
      %2192 = vrot.lane.b32.xlu0 %v468, 96
      %v2193 = vpop.permute.xlu0 %2192
      %2194 = vrot.lane.b32.xlu0 %v474, 96
      %v2195 = vpop.permute.xlu0 %2194
      %2196 = vrot.lane.b32.xlu0 %v480, 96
      %v2197 = vpop.permute.xlu0 %2196
      %2198 = vrot.lane.b32.xlu0 %v486, 96
      %v2199 = vpop.permute.xlu0 %2198
      %2200 = vrot.lane.b32.xlu0 %v492, 96
      %v2201 = vpop.permute.xlu0 %2200
      %2202 = vrot.lane.b32.xlu0 %v498, 96
      %v2203 = vpop.permute.xlu0 %2202
      %2204 = vrot.lane.b32.xlu0 %v504, 96
      %v2205 = vpop.permute.xlu0 %2204
      %2206 = vrot.lane.b32.xlu0 %v510, 96
      %v2207 = vpop.permute.xlu0 %2206
      %2208 = vrot.lane.b32.xlu0 %v516, 96
      %v2209 = vpop.permute.xlu0 %2208
      %2210 = vrot.lane.b32.xlu0 %v522, 96
      %v2211 = vpop.permute.xlu0 %2210
      %2212 = vrot.lane.b32.xlu0 %v528, 96
      %v2213 = vpop.permute.xlu0 %2212
      %2214 = vrot.lane.b32.xlu0 %v534, 96
      %v2215 = vpop.permute.xlu0 %2214
      %2216 = vrot.lane.b32.xlu0 %v540, 96
      %v2217 = vpop.permute.xlu0 %2216
      %2218 = vrot.lane.b32.xlu0 %v546, 96
      %v2219 = vpop.permute.xlu0 %2218
      %2220 = vrot.lane.b32.xlu0 %v552, 96
      %v2221 = vpop.permute.xlu0 %2220
      %2222 = vrot.lane.b32.xlu0 %v558, 96
      %v2223 = vpop.permute.xlu0 %2222
      %2224 = vrot.lane.b32.xlu0 %v564, 96
      %v2225 = vpop.permute.xlu0 %2224
      %2226 = vrot.lane.b32.xlu0 %v570, 96
      %v2227 = vpop.permute.xlu0 %2226
      %2228 = vrot.lane.b32.xlu0 %v576, 96
      %v2229 = vpop.permute.xlu0 %2228
      %2230 = vrot.lane.b32.xlu0 %v582, 96
      %v2231 = vpop.permute.xlu0 %2230
      %2232 = vrot.lane.b32.xlu0 %v588, 96
      %v2233 = vpop.permute.xlu0 %2232
      %2234 = vrot.lane.b32.xlu0 %v594, 96
      %v2235 = vpop.permute.xlu0 %2234
      %2236 = vrot.lane.b32.xlu0 %v600, 96
      %v2237 = vpop.permute.xlu0 %2236
      %2238 = vrot.lane.b32.xlu0 %v606, 96
      %v2239 = vpop.permute.xlu0 %2238
      %2240 = vrot.lane.b32.xlu0 %v612, 96
      %v2241 = vpop.permute.xlu0 %2240
      %2242 = vrot.lane.b32.xlu0 %v618, 96
      %v2243 = vpop.permute.xlu0 %2242
      %2244 = vrot.lane.b32.xlu0 %v624, 96
      %v2245 = vpop.permute.xlu0 %2244
      %v2246 = vsel %vm963, %v2119, 0
      %v2248 = vsel %vm963, %v2121, 0
      %v2250 = vsel %vm963, %v2123, 0
      %v2252 = vsel %vm963, %v2125, 0
      %v2254 = vsel %vm963, %v2127, 0
      %v2256 = vsel %vm963, %v2129, 0
      %v2258 = vsel %vm963, %v2131, 0
      %v2260 = vsel %vm963, %v2133, 0
      %v2262 = vsel %vm963, %v2135, 0
      %v2264 = vsel %vm963, %v2137, 0
      %v2266 = vsel %vm963, %v2139, 0
      %v2268 = vsel %vm963, %v2141, 0
      %v2270 = vsel %vm963, %v2143, 0
      %v2272 = vsel %vm963, %v2145, 0
      %v2274 = vsel %vm963, %v2147, 0
      %v2276 = vsel %vm963, %v2149, 0
      %v2278 = vsel %vm963, %v2151, 0
      %v2280 = vsel %vm963, %v2153, 0
      %v2282 = vsel %vm963, %v2155, 0
      %v2284 = vsel %vm963, %v2157, 0
      %v2286 = vsel %vm963, %v2159, 0
      %v2288 = vsel %vm963, %v2161, 0
      %v2290 = vsel %vm963, %v2163, 0
      %v2292 = vsel %vm963, %v2165, 0
      %v2294 = vsel %vm963, %v2167, 0
      %v2296 = vsel %vm963, %v2169, 0
      %v2298 = vsel %vm963, %v2171, 0
      %v2300 = vsel %vm963, %v2173, 0
      %v2302 = vsel %vm963, %v2175, 0
      %v2304 = vsel %vm963, %v2177, 0
      %v2306 = vsel %vm963, %v2179, 0
      %v2308 = vsel %vm963, %v2181, 0
      %v2310 = vsel %vm963, %v2183, 0
      %v2312 = vsel %vm963, %v2185, 0
      %v2314 = vsel %vm963, %v2187, 0
      %v2316 = vsel %vm963, %v2189, 0
      %v2318 = vsel %vm963, %v2191, 0
      %v2320 = vsel %vm963, %v2193, 0
      %v2322 = vsel %vm963, %v2195, 0
      %v2324 = vsel %vm963, %v2197, 0
      %v2326 = vsel %vm963, %v2199, 0
      %v2328 = vsel %vm963, %v2201, 0
      %v2330 = vsel %vm963, %v2203, 0
      %v2332 = vsel %vm963, %v2205, 0
      %v2334 = vsel %vm963, %v2207, 0
      %v2336 = vsel %vm963, %v2209, 0
      %v2338 = vsel %vm963, %v2211, 0
      %v2340 = vsel %vm963, %v2213, 0
      %v2342 = vsel %vm963, %v2215, 0
      %v2344 = vsel %vm963, %v2217, 0
      %v2346 = vsel %vm963, %v2219, 0
      %v2348 = vsel %vm963, %v2221, 0
      %v2350 = vsel %vm963, %v2223, 0
      %v2352 = vsel %vm963, %v2225, 0
      %v2354 = vsel %vm963, %v2227, 0
      %v2356 = vsel %vm963, %v2229, 0
      %v2358 = vsel %vm963, %v2231, 0
      %v2360 = vsel %vm963, %v2233, 0
      %v2362 = vsel %vm963, %v2235, 0
      %v2364 = vsel %vm963, %v2237, 0
      %v2366 = vsel %vm963, %v2239, 0
      %v2368 = vsel %vm963, %v2241, 0
      %v2370 = vsel %vm963, %v2243, 0
      %v2372 = vsel %vm963, %v2245, 0
      %2374 = vmatprep.subr.mxu0 0.0
      %2375 = vmatpush1.xpose.msra.mxu0 %v2310
      %2376 = vmatprep.subr.mxu0 0.0
      %2377 = vmatpush1.xpose.msra.mxu0 %v2312
      %2378 = vmatprep.subr.mxu0 0.0
      %2379 = vmatpush1.xpose.msra.mxu0 %v2314
      %2380 = vmatprep.subr.mxu0 0.0
      %2381 = vmatpush1.xpose.msra.mxu0 %v2316
      %2382 = vmatprep.subr.mxu0 0.0
      %2383 = vmatpush1.xpose.msra.mxu0 %v2318
      %2384 = vmatprep.subr.mxu0 0.0
      %2385 = vmatpush1.xpose.msra.mxu0 %v2320
      %2386 = vmatprep.subr.mxu0 0.0
      %2387 = vmatpush1.xpose.msra.mxu0 %v2322
      %2388 = vmatprep.subr.mxu0 0.0
      %2389 = vmatpush1.xpose.msra.mxu0 %v2324
      %2390 = vmatprep.subr.mxu0 0.0
      %2391 = vmatpush1.xpose.msra.mxu0 %v2326
      %2392 = vmatprep.subr.mxu0 0.0
      %2393 = vmatpush1.xpose.msra.mxu0 %v2328
      %2394 = vmatprep.subr.mxu0 0.0
      %2395 = vmatpush1.xpose.msra.mxu0 %v2330
      %2396 = vmatprep.subr.mxu0 0.0
      %2397 = vmatpush1.xpose.msra.mxu0 %v2332
      %2398 = vmatprep.subr.mxu0 0.0
      %2399 = vmatpush1.xpose.msra.mxu0 %v2334
      %2400 = vmatprep.subr.mxu0 0.0
      %2401 = vmatpush1.xpose.msra.mxu0 %v2336
      %2402 = vmatprep.subr.mxu0 0.0
      %2403 = vmatpush1.xpose.msra.mxu0 %v2338
      %2404 = vmatprep.subr.mxu0 0.0
      %2405 = vmatpush1.xpose.msra.mxu0 %v2340
      %2406 = vmatprep.subr.mxu0 0.0
      %2407 = vmatpush1.xpose.msra.mxu0 %v2342
      %2408 = vmatprep.subr.mxu0 0.0
      %2409 = vmatpush1.xpose.msra.mxu0 %v2344
      %2410 = vmatprep.subr.mxu0 0.0
      %2411 = vmatpush1.xpose.msra.mxu0 %v2346
      %2412 = vmatprep.subr.mxu0 0.0
      %2413 = vmatpush1.xpose.msra.mxu0 %v2348
      %2414 = vmatprep.subr.mxu0 0.0
      %2415 = vmatpush1.xpose.msra.mxu0 %v2350
      %2416 = vmatprep.subr.mxu0 0.0
      %2417 = vmatpush1.xpose.msra.mxu0 %v2352
      %2418 = vmatprep.subr.mxu0 0.0
      %2419 = vmatpush1.xpose.msra.mxu0 %v2354
      %2420 = vmatprep.subr.mxu0 0.0
      %2421 = vmatpush1.xpose.msra.mxu0 %v2356
      %2422 = vmatprep.subr.mxu0 0.0
      %2423 = vmatpush1.xpose.msra.mxu0 %v2358
      %2424 = vmatprep.subr.mxu0 0.0
      %2425 = vmatpush1.xpose.msra.mxu0 %v2360
      %2426 = vmatprep.subr.mxu0 0.0
      %2427 = vmatpush1.xpose.msra.mxu0 %v2362
      %2428 = vmatprep.subr.mxu0 0.0
      %2429 = vmatpush1.xpose.msra.mxu0 %v2364
      %2430 = vmatprep.subr.mxu0 0.0
      %2431 = vmatpush1.xpose.msra.mxu0 %v2366
      %2432 = vmatprep.subr.mxu0 0.0
      %2433 = vmatpush1.xpose.msra.mxu0 %v2368
      %2434 = vmatprep.subr.mxu0 0.0
      %2435 = vmatpush1.xpose.msra.mxu0 %v2370
      %2436 = vmatprep.subr.mxu0 0.0
      %2437 = vmatpush1.xpose.msra.mxu0 %v2372
      %2438 = vmatprep.mubr.f32.mxu0 0.0
      %2439 = vmatmul.mubr.f32.gmra.mrb[0].mxu0 %v2246
      %v2440 = vpop.f32.mrb[0].mxu0
      %v2441 = vadd.f32 %v883, %v2440
      %v2442 = vpop.f32.mrb[0].mxu0
      %v2443 = vadd.f32 %v884, %v2442
      %2444 = vmatprep.mubr.f32.mxu0 0.0
      %2445 = vmatmul.mubr.f32.gmra.mrb[0].mxu0 %v2248
      %v2446 = vpop.f32.mrb[0].mxu0
      %v2447 = vadd.f32 %v885, %v2446
      %v2448 = vpop.f32.mrb[0].mxu0
      %v2449 = vadd.f32 %v886, %v2448
      %2450 = vmatprep.mubr.f32.mxu0 0.0
      %2451 = vmatmul.mubr.f32.gmra.mrb[0].mxu0 %v2250
      %v2452 = vpop.f32.mrb[0].mxu0
      %v2453 = vadd.f32 %v887, %v2452
      %v2454 = vpop.f32.mrb[0].mxu0
      %v2455 = vadd.f32 %v888, %v2454
      %2456 = vmatprep.mubr.f32.mxu0 0.0
      %2457 = vmatmul.mubr.f32.gmra.mrb[0].mxu0 %v2252
      %v2458 = vpop.f32.mrb[0].mxu0
      %v2459 = vadd.f32 %v889, %v2458
      %v2460 = vpop.f32.mrb[0].mxu0
      %v2461 = vadd.f32 %v890, %v2460
      %2462 = vmatprep.mubr.f32.mxu0 0.0
      %2463 = vmatmul.mubr.f32.gmra.mrb[0].mxu0 %v2254
      %v2464 = vpop.f32.mrb[0].mxu0
      %v2465 = vadd.f32 %v891, %v2464
      %v2466 = vpop.f32.mrb[0].mxu0
      %v2467 = vadd.f32 %v892, %v2466
      %2468 = vmatprep.mubr.f32.mxu0 0.0
      %2469 = vmatmul.mubr.f32.gmra.mrb[0].mxu0 %v2256
      %v2470 = vpop.f32.mrb[0].mxu0
      %v2471 = vadd.f32 %v893, %v2470
      %v2472 = vpop.f32.mrb[0].mxu0
      %v2473 = vadd.f32 %v894, %v2472
      %2474 = vmatprep.mubr.f32.mxu0 0.0
      %2475 = vmatmul.mubr.f32.gmra.mrb[0].mxu0 %v2258
      %v2476 = vpop.f32.mrb[0].mxu0
      %v2477 = vadd.f32 %v895, %v2476
      %v2478 = vpop.f32.mrb[0].mxu0
      %v2479 = vadd.f32 %v896, %v2478
      %2480 = vmatprep.mubr.f32.mxu0 0.0
      %2481 = vmatmul.mubr.f32.gmra.mrb[0].mxu0 %v2260
      %v2482 = vpop.f32.mrb[0].mxu0
      %v2483 = vadd.f32 %v897, %v2482
      %v2484 = vpop.f32.mrb[0].mxu0
      %v2485 = vadd.f32 %v898, %v2484
      %2486 = vmatprep.mubr.f32.mxu0 0.0
      %2487 = vmatmul.mubr.f32.gmra.mrb[0].mxu0 %v2262
      %v2488 = vpop.f32.mrb[0].mxu0
      %v2489 = vadd.f32 %v899, %v2488
      %v2490 = vpop.f32.mrb[0].mxu0
      %v2491 = vadd.f32 %v900, %v2490
      %2492 = vmatprep.mubr.f32.mxu0 0.0
      %2493 = vmatmul.mubr.f32.gmra.mrb[0].mxu0 %v2264
      %v2494 = vpop.f32.mrb[0].mxu0
      %v2495 = vadd.f32 %v901, %v2494
      %v2496 = vpop.f32.mrb[0].mxu0
      %v2497 = vadd.f32 %v902, %v2496
      %2498 = vmatprep.mubr.f32.mxu0 0.0
      %2499 = vmatmul.mubr.f32.gmra.mrb[0].mxu0 %v2266
      %v2500 = vpop.f32.mrb[0].mxu0
      %v2501 = vadd.f32 %v903, %v2500
      %v2502 = vpop.f32.mrb[0].mxu0
      %v2503 = vadd.f32 %v904, %v2502
      %2504 = vmatprep.mubr.f32.mxu0 0.0
      %2505 = vmatmul.mubr.f32.gmra.mrb[0].mxu0 %v2268
      %v2506 = vpop.f32.mrb[0].mxu0
      %v2507 = vadd.f32 %v905, %v2506
      %v2508 = vpop.f32.mrb[0].mxu0
      %v2509 = vadd.f32 %v906, %v2508
      %2510 = vmatprep.mubr.f32.mxu0 0.0
      %2511 = vmatmul.mubr.f32.gmra.mrb[0].mxu0 %v2270
      %v2512 = vpop.f32.mrb[0].mxu0
      %v2513 = vadd.f32 %v907, %v2512
      %v2514 = vpop.f32.mrb[0].mxu0
      %v2515 = vadd.f32 %v908, %v2514
      %2516 = vmatprep.mubr.f32.mxu0 0.0
      %2517 = vmatmul.mubr.f32.gmra.mrb[0].mxu0 %v2272
      %v2518 = vpop.f32.mrb[0].mxu0
      %v2519 = vadd.f32 %v909, %v2518
      %v2520 = vpop.f32.mrb[0].mxu0
      %v2521 = vadd.f32 %v910, %v2520
      %2522 = vmatprep.mubr.f32.mxu0 0.0
      %2523 = vmatmul.mubr.f32.gmra.mrb[0].mxu0 %v2274
      %v2524 = vpop.f32.mrb[0].mxu0
      %v2525 = vadd.f32 %v911, %v2524
      %v2526 = vpop.f32.mrb[0].mxu0
      %v2527 = vadd.f32 %v912, %v2526
      %2528 = vmatprep.mubr.f32.mxu0 0.0
      %2529 = vmatmul.mubr.f32.gmra.mrb[0].mxu0 %v2276
      %v2530 = vpop.f32.mrb[0].mxu0
      %v2531 = vadd.f32 %v913, %v2530
      %v2532 = vpop.f32.mrb[0].mxu0
      %v2533 = vadd.f32 %v914, %v2532
      %2534 = vmatprep.mubr.f32.mxu0 0.0
      %2535 = vmatmul.mubr.f32.gmra.mrb[0].mxu0 %v2278
      %v2536 = vpop.f32.mrb[0].mxu0
      %v2537 = vadd.f32 %v915, %v2536
      %v2538 = vpop.f32.mrb[0].mxu0
      %v2539 = vadd.f32 %v916, %v2538
      %2540 = vmatprep.mubr.f32.mxu0 0.0
      %2541 = vmatmul.mubr.f32.gmra.mrb[0].mxu0 %v2280
      %v2542 = vpop.f32.mrb[0].mxu0
      %v2543 = vadd.f32 %v917, %v2542
      %v2544 = vpop.f32.mrb[0].mxu0
      %v2545 = vadd.f32 %v918, %v2544
      %2546 = vmatprep.mubr.f32.mxu0 0.0
      %2547 = vmatmul.mubr.f32.gmra.mrb[0].mxu0 %v2282
      %v2548 = vpop.f32.mrb[0].mxu0
      %v2549 = vadd.f32 %v919, %v2548
      %v2550 = vpop.f32.mrb[0].mxu0
      %v2551 = vadd.f32 %v920, %v2550
      %2552 = vmatprep.mubr.f32.mxu0 0.0
      %2553 = vmatmul.mubr.f32.gmra.mrb[0].mxu0 %v2284
      %v2554 = vpop.f32.mrb[0].mxu0
      %v2555 = vadd.f32 %v921, %v2554
      %v2556 = vpop.f32.mrb[0].mxu0
      %v2557 = vadd.f32 %v922, %v2556
      %2558 = vmatprep.mubr.f32.mxu0 0.0
      %2559 = vmatmul.mubr.f32.gmra.mrb[0].mxu0 %v2286
      %v2560 = vpop.f32.mrb[0].mxu0
      %v2561 = vadd.f32 %v923, %v2560
      %v2562 = vpop.f32.mrb[0].mxu0
      %v2563 = vadd.f32 %v924, %v2562
      %2564 = vmatprep.mubr.f32.mxu0 0.0
      %2565 = vmatmul.mubr.f32.gmra.mrb[0].mxu0 %v2288
      %v2566 = vpop.f32.mrb[0].mxu0
      %v2567 = vadd.f32 %v925, %v2566
      %v2568 = vpop.f32.mrb[0].mxu0
      %v2569 = vadd.f32 %v926, %v2568
      %2570 = vmatprep.mubr.f32.mxu0 0.0
      %2571 = vmatmul.mubr.f32.gmra.mrb[0].mxu0 %v2290
      %v2572 = vpop.f32.mrb[0].mxu0
      %v2573 = vadd.f32 %v927, %v2572
      %v2574 = vpop.f32.mrb[0].mxu0
      %v2575 = vadd.f32 %v928, %v2574
      %2576 = vmatprep.mubr.f32.mxu0 0.0
      %2577 = vmatmul.mubr.f32.gmra.mrb[0].mxu0 %v2292
      %v2578 = vpop.f32.mrb[0].mxu0
      %v2579 = vadd.f32 %v929, %v2578
      %v2580 = vpop.f32.mrb[0].mxu0
      %v2581 = vadd.f32 %v930, %v2580
      %2582 = vmatprep.mubr.f32.mxu0 0.0
      %2583 = vmatmul.mubr.f32.gmra.mrb[0].mxu0 %v2294
      %v2584 = vpop.f32.mrb[0].mxu0
      %v2585 = vadd.f32 %v931, %v2584
      %v2586 = vpop.f32.mrb[0].mxu0
      %v2587 = vadd.f32 %v932, %v2586
      %2588 = vmatprep.mubr.f32.mxu0 0.0
      %2589 = vmatmul.mubr.f32.gmra.mrb[0].mxu0 %v2296
      %v2590 = vpop.f32.mrb[0].mxu0
      %v2591 = vadd.f32 %v933, %v2590
      %v2592 = vpop.f32.mrb[0].mxu0
      %v2593 = vadd.f32 %v934, %v2592
      %2594 = vmatprep.mubr.f32.mxu0 0.0
      %2595 = vmatmul.mubr.f32.gmra.mrb[0].mxu0 %v2298
      %v2596 = vpop.f32.mrb[0].mxu0
      %v2597 = vadd.f32 %v935, %v2596
      %v2598 = vpop.f32.mrb[0].mxu0
      %v2599 = vadd.f32 %v936, %v2598
      %2600 = vmatprep.mubr.f32.mxu0 0.0
      %2601 = vmatmul.mubr.f32.gmra.mrb[0].mxu0 %v2300
      %v2602 = vpop.f32.mrb[0].mxu0
      %v2603 = vadd.f32 %v937, %v2602
      %v2604 = vpop.f32.mrb[0].mxu0
      %v2605 = vadd.f32 %v938, %v2604
      %2606 = vmatprep.mubr.f32.mxu0 0.0
      %2607 = vmatmul.mubr.f32.gmra.mrb[0].mxu0 %v2302
      %v2608 = vpop.f32.mrb[0].mxu0
      %v2609 = vadd.f32 %v939, %v2608
      %v2610 = vpop.f32.mrb[0].mxu0
      %v2611 = vadd.f32 %v940, %v2610
      %2612 = vmatprep.mubr.f32.mxu0 0.0
      %2613 = vmatmul.mubr.f32.gmra.mrb[0].mxu0 %v2304
      %v2614 = vpop.f32.mrb[0].mxu0
      %v2615 = vadd.f32 %v941, %v2614
      %v2616 = vpop.f32.mrb[0].mxu0
      %v2617 = vadd.f32 %v942, %v2616
      %2618 = vmatprep.mubr.f32.mxu0 0.0
      %2619 = vmatmul.mubr.f32.gmra.mrb[0].mxu0 %v2306
      %v2620 = vpop.f32.mrb[0].mxu0
      %v2621 = vadd.f32 %v943, %v2620
      %v2622 = vpop.f32.mrb[0].mxu0
      %v2623 = vadd.f32 %v944, %v2622
      %2624 = vmatprep.mubr.f32.mxu0 0.0
      %2625 = vmatmul.mubr.f32.gmra.mrb[0].mxu0 %v2308
      %v2626 = vpop.f32.mrb[0].mxu0
      %v2627 = vadd.f32 %v945, %v2626
      %v2628 = vpop.f32.mrb[0].mxu0
      %v2629 = vadd.f32 %v946, %v2628
      %2630 = vdwg.mxu0
      %v2631 = vmax.f32 %v2441, %v2443
      %2632 = vmax.xlane.f32.xlu0 %v2631
      %v2633 = vpop.xlane.xlu0 %2632
      %v2634 = vmax.f32 %v2447, %v2449
      %2635 = vmax.xlane.f32.xlu0 %v2634
      %v2636 = vpop.xlane.xlu0 %2635
      %v2637 = vmax.f32 %v2453, %v2455
      %2638 = vmax.xlane.f32.xlu0 %v2637
      %v2639 = vpop.xlane.xlu0 %2638
      %v2640 = vmax.f32 %v2459, %v2461
      %2641 = vmax.xlane.f32.xlu0 %v2640
      %v2642 = vpop.xlane.xlu0 %2641
      %v2643 = vmax.f32 %v2465, %v2467
      %2644 = vmax.xlane.f32.xlu0 %v2643
      %v2645 = vpop.xlane.xlu0 %2644
      %v2646 = vmax.f32 %v2471, %v2473
      %2647 = vmax.xlane.f32.xlu0 %v2646
      %v2648 = vpop.xlane.xlu0 %2647
      %v2649 = vmax.f32 %v2477, %v2479
      %2650 = vmax.xlane.f32.xlu0 %v2649
      %v2651 = vpop.xlane.xlu0 %2650
      %v2652 = vmax.f32 %v2483, %v2485
      %2653 = vmax.xlane.f32.xlu0 %v2652
      %v2654 = vpop.xlane.xlu0 %2653
      %v2655 = vmax.f32 %v2489, %v2491
      %2656 = vmax.xlane.f32.xlu0 %v2655
      %v2657 = vpop.xlane.xlu0 %2656
      %v2658 = vmax.f32 %v2495, %v2497
      %2659 = vmax.xlane.f32.xlu0 %v2658
      %v2660 = vpop.xlane.xlu0 %2659
      %v2661 = vmax.f32 %v2501, %v2503
      %2662 = vmax.xlane.f32.xlu0 %v2661
      %v2663 = vpop.xlane.xlu0 %2662
      %v2664 = vmax.f32 %v2507, %v2509
      %2665 = vmax.xlane.f32.xlu0 %v2664
      %v2666 = vpop.xlane.xlu0 %2665
      %v2667 = vmax.f32 %v2513, %v2515
      %2668 = vmax.xlane.f32.xlu0 %v2667
      %v2669 = vpop.xlane.xlu0 %2668
      %v2670 = vmax.f32 %v2519, %v2521
      %2671 = vmax.xlane.f32.xlu0 %v2670
      %v2672 = vpop.xlane.xlu0 %2671
      %v2673 = vmax.f32 %v2525, %v2527
      %2674 = vmax.xlane.f32.xlu0 %v2673
      %v2675 = vpop.xlane.xlu0 %2674
      %v2676 = vmax.f32 %v2531, %v2533
      %2677 = vmax.xlane.f32.xlu0 %v2676
      %v2678 = vpop.xlane.xlu0 %2677
      %v2679 = vmax.f32 %v2537, %v2539
      %2680 = vmax.xlane.f32.xlu0 %v2679
      %v2681 = vpop.xlane.xlu0 %2680
      %v2682 = vmax.f32 %v2543, %v2545
      %2683 = vmax.xlane.f32.xlu0 %v2682
      %v2684 = vpop.xlane.xlu0 %2683
      %v2685 = vmax.f32 %v2549, %v2551
      %2686 = vmax.xlane.f32.xlu0 %v2685
      %v2687 = vpop.xlane.xlu0 %2686
      %v2688 = vmax.f32 %v2555, %v2557
      %2689 = vmax.xlane.f32.xlu0 %v2688
      %v2690 = vpop.xlane.xlu0 %2689
      %v2691 = vmax.f32 %v2561, %v2563
      %2692 = vmax.xlane.f32.xlu0 %v2691
      %v2693 = vpop.xlane.xlu0 %2692
      %v2694 = vmax.f32 %v2567, %v2569
      %2695 = vmax.xlane.f32.xlu0 %v2694
      %v2696 = vpop.xlane.xlu0 %2695
      %v2697 = vmax.f32 %v2573, %v2575
      %2698 = vmax.xlane.f32.xlu0 %v2697
      %v2699 = vpop.xlane.xlu0 %2698
      %v2700 = vmax.f32 %v2579, %v2581
      %2701 = vmax.xlane.f32.xlu0 %v2700
      %v2702 = vpop.xlane.xlu0 %2701
      %v2703 = vmax.f32 %v2585, %v2587
      %2704 = vmax.xlane.f32.xlu0 %v2703
      %v2705 = vpop.xlane.xlu0 %2704
      %v2706 = vmax.f32 %v2591, %v2593
      %2707 = vmax.xlane.f32.xlu0 %v2706
      %v2708 = vpop.xlane.xlu0 %2707
      %v2709 = vmax.f32 %v2597, %v2599
      %2710 = vmax.xlane.f32.xlu0 %v2709
      %v2711 = vpop.xlane.xlu0 %2710
      %v2712 = vmax.f32 %v2603, %v2605
      %2713 = vmax.xlane.f32.xlu0 %v2712
      %v2714 = vpop.xlane.xlu0 %2713
      %v2715 = vmax.f32 %v2609, %v2611
      %2716 = vmax.xlane.f32.xlu0 %v2715
      %v2717 = vpop.xlane.xlu0 %2716
      %v2718 = vmax.f32 %v2615, %v2617
      %2719 = vmax.xlane.f32.xlu0 %v2718
      %v2720 = vpop.xlane.xlu0 %2719
      %v2721 = vmax.f32 %v2621, %v2623
      %2722 = vmax.xlane.f32.xlu0 %v2721
      %v2723 = vpop.xlane.xlu0 %2722
      %v2724 = vmax.f32 %v2627, %v2629
      %2725 = vmax.xlane.f32.xlu0 %v2724
      %v2726 = vpop.xlane.xlu0 %2725
      %v2727 = vsub.f32 %v2441, %v2633
      %v2728 = vsub.f32 %v2443, %v2633
      %v2729 = vsub.f32 %v2447, %v2636
      %v2730 = vsub.f32 %v2449, %v2636
      %v2731 = vsub.f32 %v2453, %v2639
      %v2732 = vsub.f32 %v2455, %v2639
      %v2733 = vsub.f32 %v2459, %v2642
      %v2734 = vsub.f32 %v2461, %v2642
      %v2735 = vsub.f32 %v2465, %v2645
      %v2736 = vsub.f32 %v2467, %v2645
      %v2737 = vsub.f32 %v2471, %v2648
      %v2738 = vsub.f32 %v2473, %v2648
      %v2739 = vsub.f32 %v2477, %v2651
      %v2740 = vsub.f32 %v2479, %v2651
      %v2741 = vsub.f32 %v2483, %v2654
      %v2742 = vsub.f32 %v2485, %v2654
      %v2743 = vsub.f32 %v2489, %v2657
      %v2744 = vsub.f32 %v2491, %v2657
      %v2745 = vsub.f32 %v2495, %v2660
      %v2746 = vsub.f32 %v2497, %v2660
      %v2747 = vsub.f32 %v2501, %v2663
      %v2748 = vsub.f32 %v2503, %v2663
      %v2749 = vsub.f32 %v2507, %v2666
      %v2750 = vsub.f32 %v2509, %v2666
      %v2751 = vsub.f32 %v2513, %v2669
      %v2752 = vsub.f32 %v2515, %v2669
      %v2753 = vsub.f32 %v2519, %v2672
      %v2754 = vsub.f32 %v2521, %v2672
      %v2755 = vsub.f32 %v2525, %v2675
      %v2756 = vsub.f32 %v2527, %v2675
      %v2757 = vsub.f32 %v2531, %v2678
      %v2758 = vsub.f32 %v2533, %v2678
      %v2759 = vsub.f32 %v2537, %v2681
      %v2760 = vsub.f32 %v2539, %v2681
      %v2761 = vsub.f32 %v2543, %v2684
      %v2762 = vsub.f32 %v2545, %v2684
      %v2763 = vsub.f32 %v2549, %v2687
      %v2764 = vsub.f32 %v2551, %v2687
      %v2765 = vsub.f32 %v2555, %v2690
      %v2766 = vsub.f32 %v2557, %v2690
      %v2767 = vsub.f32 %v2561, %v2693
      %v2768 = vsub.f32 %v2563, %v2693
      %v2769 = vsub.f32 %v2567, %v2696
      %v2770 = vsub.f32 %v2569, %v2696
      %v2771 = vsub.f32 %v2573, %v2699
      %v2772 = vsub.f32 %v2575, %v2699
      %v2773 = vsub.f32 %v2579, %v2702
      %v2774 = vsub.f32 %v2581, %v2702
      %v2775 = vsub.f32 %v2585, %v2705
      %v2776 = vsub.f32 %v2587, %v2705
      %v2777 = vsub.f32 %v2591, %v2708
      %v2778 = vsub.f32 %v2593, %v2708
      %v2779 = vsub.f32 %v2597, %v2711
      %v2780 = vsub.f32 %v2599, %v2711
      %v2781 = vsub.f32 %v2603, %v2714
      %v2782 = vsub.f32 %v2605, %v2714
      %v2783 = vsub.f32 %v2609, %v2717
      %v2784 = vsub.f32 %v2611, %v2717
      %v2785 = vsub.f32 %v2615, %v2720
      %v2786 = vsub.f32 %v2617, %v2720
      %v2787 = vsub.f32 %v2621, %v2723
      %v2788 = vsub.f32 %v2623, %v2723
      %v2789 = vsub.f32 %v2627, %v2726
      %v2790 = vsub.f32 %v2629, %v2726
      %v2791 = vmul.f32 %v2727, 1.442695
      %v2792 = vpow.pop %v2791
      %v2793 = vmul.f32 %v2728, 1.442695
      %v2794 = vpow.pop %v2793
      %v2795 = vmul.f32 %v2729, 1.442695
      %v2796 = vpow.pop %v2795
      %v2797 = vmul.f32 %v2730, 1.442695
      %v2798 = vpow.pop %v2797
      %v2799 = vmul.f32 %v2731, 1.442695
      %v2800 = vpow.pop %v2799
      %v2801 = vmul.f32 %v2732, 1.442695
      %v2802 = vpow.pop %v2801
      %v2803 = vmul.f32 %v2733, 1.442695
      %v2804 = vpow.pop %v2803
      %v2805 = vmul.f32 %v2734, 1.442695
      %v2806 = vpow.pop %v2805
      %v2807 = vmul.f32 %v2735, 1.442695
      %v2808 = vpow.pop %v2807
      %v2809 = vmul.f32 %v2736, 1.442695
      %v2810 = vpow.pop %v2809
      %v2811 = vmul.f32 %v2737, 1.442695
      %v2812 = vpow.pop %v2811
      %v2813 = vmul.f32 %v2738, 1.442695
      %v2814 = vpow.pop %v2813
      %v2815 = vmul.f32 %v2739, 1.442695
      %v2816 = vpow.pop %v2815
      %v2817 = vmul.f32 %v2740, 1.442695
      %v2818 = vpow.pop %v2817
      %v2819 = vmul.f32 %v2741, 1.442695
      %v2820 = vpow.pop %v2819
      %v2821 = vmul.f32 %v2742, 1.442695
      %v2822 = vpow.pop %v2821
      %v2823 = vmul.f32 %v2743, 1.442695
      %v2824 = vpow.pop %v2823
      %v2825 = vmul.f32 %v2744, 1.442695
      %v2826 = vpow.pop %v2825
      %v2827 = vmul.f32 %v2745, 1.442695
      %v2828 = vpow.pop %v2827
      %v2829 = vmul.f32 %v2746, 1.442695
      %v2830 = vpow.pop %v2829
      %v2831 = vmul.f32 %v2747, 1.442695
      %v2832 = vpow.pop %v2831
      %v2833 = vmul.f32 %v2748, 1.442695
      %v2834 = vpow.pop %v2833
      %v2835 = vmul.f32 %v2749, 1.442695
      %v2836 = vpow.pop %v2835
      %v2837 = vmul.f32 %v2750, 1.442695
      %v2838 = vpow.pop %v2837
      %v2839 = vmul.f32 %v2751, 1.442695
      %v2840 = vpow.pop %v2839
      %v2841 = vmul.f32 %v2752, 1.442695
      %v2842 = vpow.pop %v2841
      %v2843 = vmul.f32 %v2753, 1.442695
      %v2844 = vpow.pop %v2843
      %v2845 = vmul.f32 %v2754, 1.442695
      %v2846 = vpow.pop %v2845
      %v2847 = vmul.f32 %v2755, 1.442695
      %v2848 = vpow.pop %v2847
      %v2849 = vmul.f32 %v2756, 1.442695
      %v2850 = vpow.pop %v2849
      %v2851 = vmul.f32 %v2757, 1.442695
      %v2852 = vpow.pop %v2851
      %v2853 = vmul.f32 %v2758, 1.442695
      %v2854 = vpow.pop %v2853
      %v2855 = vmul.f32 %v2759, 1.442695
      %v2856 = vpow.pop %v2855
      %v2857 = vmul.f32 %v2760, 1.442695
      %v2858 = vpow.pop %v2857
      %v2859 = vmul.f32 %v2761, 1.442695
      %v2860 = vpow.pop %v2859
      %v2861 = vmul.f32 %v2762, 1.442695
      %v2862 = vpow.pop %v2861
      %v2863 = vmul.f32 %v2763, 1.442695
      %v2864 = vpow.pop %v2863
      %v2865 = vmul.f32 %v2764, 1.442695
      %v2866 = vpow.pop %v2865
      %v2867 = vmul.f32 %v2765, 1.442695
      %v2868 = vpow.pop %v2867
      %v2869 = vmul.f32 %v2766, 1.442695
      %v2870 = vpow.pop %v2869
      %v2871 = vmul.f32 %v2767, 1.442695
      %v2872 = vpow.pop %v2871
      %v2873 = vmul.f32 %v2768, 1.442695
      %v2874 = vpow.pop %v2873
      %v2875 = vmul.f32 %v2769, 1.442695
      %v2876 = vpow.pop %v2875
      %v2877 = vmul.f32 %v2770, 1.442695
      %v2878 = vpow.pop %v2877
      %v2879 = vmul.f32 %v2771, 1.442695
      %v2880 = vpow.pop %v2879
      %v2881 = vmul.f32 %v2772, 1.442695
      %v2882 = vpow.pop %v2881
      %v2883 = vmul.f32 %v2773, 1.442695
      %v2884 = vpow.pop %v2883
      %v2885 = vmul.f32 %v2774, 1.442695
      %v2886 = vpow.pop %v2885
      %v2887 = vmul.f32 %v2775, 1.442695
      %v2888 = vpow.pop %v2887
      %v2889 = vmul.f32 %v2776, 1.442695
      %v2890 = vpow.pop %v2889
      %v2891 = vmul.f32 %v2777, 1.442695
      %v2892 = vpow.pop %v2891
      %v2893 = vmul.f32 %v2778, 1.442695
      %v2894 = vpow.pop %v2893
      %v2895 = vmul.f32 %v2779, 1.442695
      %v2896 = vpow.pop %v2895
      %v2897 = vmul.f32 %v2780, 1.442695
      %v2898 = vpow.pop %v2897
      %v2899 = vmul.f32 %v2781, 1.442695
      %v2900 = vpow.pop %v2899
      %v2901 = vmul.f32 %v2782, 1.442695
      %v2902 = vpow.pop %v2901
      %v2903 = vmul.f32 %v2783, 1.442695
      %v2904 = vpow.pop %v2903
      %v2905 = vmul.f32 %v2784, 1.442695
      %v2906 = vpow.pop %v2905
      %v2907 = vmul.f32 %v2785, 1.442695
      %v2908 = vpow.pop %v2907
      %v2909 = vmul.f32 %v2786, 1.442695
      %v2910 = vpow.pop %v2909
      %v2911 = vmul.f32 %v2787, 1.442695
      %v2912 = vpow.pop %v2911
      %v2913 = vmul.f32 %v2788, 1.442695
      %v2914 = vpow.pop %v2913
      %v2915 = vmul.f32 %v2789, 1.442695
      %v2916 = vpow.pop %v2915
      %v2917 = vmul.f32 %v2790, 1.442695
      %v2918 = vpow.pop %v2917
      %v2919 = vadd.f32 %v2792, %v2794
      %2920 = vadd.xlane.f32.xlu0 %v2919
      %v2921 = vpop.xlane.xlu0 %2920
      %v2922 = vadd.f32 %v2796, %v2798
      %2923 = vadd.xlane.f32.xlu0 %v2922
      %v2924 = vpop.xlane.xlu0 %2923
      %v2925 = vadd.f32 %v2800, %v2802
      %2926 = vadd.xlane.f32.xlu0 %v2925
      %v2927 = vpop.xlane.xlu0 %2926
      %v2928 = vadd.f32 %v2804, %v2806
      %2929 = vadd.xlane.f32.xlu0 %v2928
      %v2930 = vpop.xlane.xlu0 %2929
      %v2931 = vadd.f32 %v2808, %v2810
      %2932 = vadd.xlane.f32.xlu0 %v2931
      %v2933 = vpop.xlane.xlu0 %2932
      %v2934 = vadd.f32 %v2812, %v2814
      %2935 = vadd.xlane.f32.xlu0 %v2934
      %v2936 = vpop.xlane.xlu0 %2935
      %v2937 = vadd.f32 %v2816, %v2818
      %2938 = vadd.xlane.f32.xlu0 %v2937
      %v2939 = vpop.xlane.xlu0 %2938
      %v2940 = vadd.f32 %v2820, %v2822
      %2941 = vadd.xlane.f32.xlu0 %v2940
      %v2942 = vpop.xlane.xlu0 %2941
      %v2943 = vadd.f32 %v2824, %v2826
      %2944 = vadd.xlane.f32.xlu0 %v2943
      %v2945 = vpop.xlane.xlu0 %2944
      %v2946 = vadd.f32 %v2828, %v2830
      %2947 = vadd.xlane.f32.xlu0 %v2946
      %v2948 = vpop.xlane.xlu0 %2947
      %v2949 = vadd.f32 %v2832, %v2834
      %2950 = vadd.xlane.f32.xlu0 %v2949
      %v2951 = vpop.xlane.xlu0 %2950
      %v2952 = vadd.f32 %v2836, %v2838
      %2953 = vadd.xlane.f32.xlu0 %v2952
      %v2954 = vpop.xlane.xlu0 %2953
      %v2955 = vadd.f32 %v2840, %v2842
      %2956 = vadd.xlane.f32.xlu0 %v2955
      %v2957 = vpop.xlane.xlu0 %2956
      %v2958 = vadd.f32 %v2844, %v2846
      %2959 = vadd.xlane.f32.xlu0 %v2958
      %v2960 = vpop.xlane.xlu0 %2959
      %v2961 = vadd.f32 %v2848, %v2850
      %2962 = vadd.xlane.f32.xlu0 %v2961
      %v2963 = vpop.xlane.xlu0 %2962
      %v2964 = vadd.f32 %v2852, %v2854
      %2965 = vadd.xlane.f32.xlu0 %v2964
      %v2966 = vpop.xlane.xlu0 %2965
      %v2967 = vadd.f32 %v2856, %v2858
      %2968 = vadd.xlane.f32.xlu0 %v2967
      %v2969 = vpop.xlane.xlu0 %2968
      %v2970 = vadd.f32 %v2860, %v2862
      %2971 = vadd.xlane.f32.xlu0 %v2970
      %v2972 = vpop.xlane.xlu0 %2971
      %v2973 = vadd.f32 %v2864, %v2866
      %2974 = vadd.xlane.f32.xlu0 %v2973
      %v2975 = vpop.xlane.xlu0 %2974
      %v2976 = vadd.f32 %v2868, %v2870
      %2977 = vadd.xlane.f32.xlu0 %v2976
      %v2978 = vpop.xlane.xlu0 %2977
      %v2979 = vadd.f32 %v2872, %v2874
      %2980 = vadd.xlane.f32.xlu0 %v2979
      %v2981 = vpop.xlane.xlu0 %2980
      %v2982 = vadd.f32 %v2876, %v2878
      %2983 = vadd.xlane.f32.xlu0 %v2982
      %v2984 = vpop.xlane.xlu0 %2983
      %v2985 = vadd.f32 %v2880, %v2882
      %2986 = vadd.xlane.f32.xlu0 %v2985
      %v2987 = vpop.xlane.xlu0 %2986
      %v2988 = vadd.f32 %v2884, %v2886
      %2989 = vadd.xlane.f32.xlu0 %v2988
      %v2990 = vpop.xlane.xlu0 %2989
      %v2991 = vadd.f32 %v2888, %v2890
      %2992 = vadd.xlane.f32.xlu0 %v2991
      %v2993 = vpop.xlane.xlu0 %2992
      %v2994 = vadd.f32 %v2892, %v2894
      %2995 = vadd.xlane.f32.xlu0 %v2994
      %v2996 = vpop.xlane.xlu0 %2995
      %v2997 = vadd.f32 %v2896, %v2898
      %2998 = vadd.xlane.f32.xlu0 %v2997
      %v2999 = vpop.xlane.xlu0 %2998
      %v3000 = vadd.f32 %v2900, %v2902
      %3001 = vadd.xlane.f32.xlu0 %v3000
      %v3002 = vpop.xlane.xlu0 %3001
      %v3003 = vadd.f32 %v2904, %v2906
      %3004 = vadd.xlane.f32.xlu0 %v3003
      %v3005 = vpop.xlane.xlu0 %3004
      %v3006 = vadd.f32 %v2908, %v2910
      %3007 = vadd.xlane.f32.xlu0 %v3006
      %v3008 = vpop.xlane.xlu0 %3007
      %v3009 = vadd.f32 %v2912, %v2914
      %3010 = vadd.xlane.f32.xlu0 %v3009
      %v3011 = vpop.xlane.xlu0 %3010
      %v3012 = vadd.f32 %v2916, %v2918
      %3013 = vadd.xlane.f32.xlu0 %v3012
      %v3014 = vpop.xlane.xlu0 %3013
      %v3015 = vrcp.pop %v2921
      %v3016 = vrcp.pop %v2924
      %v3017 = vrcp.pop %v2927
      %v3018 = vrcp.pop %v2930
      %v3019 = vrcp.pop %v2933
      %v3020 = vrcp.pop %v2936
      %v3021 = vrcp.pop %v2939
      %v3022 = vrcp.pop %v2942
      %v3023 = vrcp.pop %v2945
      %v3024 = vrcp.pop %v2948
      %v3025 = vrcp.pop %v2951
      %v3026 = vrcp.pop %v2954
      %v3027 = vrcp.pop %v2957
      %v3028 = vrcp.pop %v2960
      %v3029 = vrcp.pop %v2963
      %v3030 = vrcp.pop %v2966
      %v3031 = vrcp.pop %v2969
      %v3032 = vrcp.pop %v2972
      %v3033 = vrcp.pop %v2975
      %v3034 = vrcp.pop %v2978
      %v3035 = vrcp.pop %v2981
      %v3036 = vrcp.pop %v2984
      %v3037 = vrcp.pop %v2987
      %v3038 = vrcp.pop %v2990
      %v3039 = vrcp.pop %v2993
      %v3040 = vrcp.pop %v2996
      %v3041 = vrcp.pop %v2999
      %v3042 = vrcp.pop %v3002
      %v3043 = vrcp.pop %v3005
      %v3044 = vrcp.pop %v3008
      %v3045 = vrcp.pop %v3011
      %v3046 = vrcp.pop %v3014
      %v3047 = vmul.f32 %v2792, %v3015
      %v3048 = vmul.f32 %v2794, %v3015
      %v3049 = vmul.f32 %v2796, %v3016
      %v3050 = vmul.f32 %v2798, %v3016
      %v3051 = vmul.f32 %v2800, %v3017
      %v3052 = vmul.f32 %v2802, %v3017
      %v3053 = vmul.f32 %v2804, %v3018
      %v3054 = vmul.f32 %v2806, %v3018
      %v3055 = vmul.f32 %v2808, %v3019
      %v3056 = vmul.f32 %v2810, %v3019
      %v3057 = vmul.f32 %v2812, %v3020
      %v3058 = vmul.f32 %v2814, %v3020
      %v3059 = vmul.f32 %v2816, %v3021
      %v3060 = vmul.f32 %v2818, %v3021
      %v3061 = vmul.f32 %v2820, %v3022
      %v3062 = vmul.f32 %v2822, %v3022
      %v3063 = vmul.f32 %v2824, %v3023
      %v3064 = vmul.f32 %v2826, %v3023
      %v3065 = vmul.f32 %v2828, %v3024
      %v3066 = vmul.f32 %v2830, %v3024
      %v3067 = vmul.f32 %v2832, %v3025
      %v3068 = vmul.f32 %v2834, %v3025
      %v3069 = vmul.f32 %v2836, %v3026
      %v3070 = vmul.f32 %v2838, %v3026
      %v3071 = vmul.f32 %v2840, %v3027
      %v3072 = vmul.f32 %v2842, %v3027
      %v3073 = vmul.f32 %v2844, %v3028
      %v3074 = vmul.f32 %v2846, %v3028
      %v3075 = vmul.f32 %v2848, %v3029
      %v3076 = vmul.f32 %v2850, %v3029
      %v3077 = vmul.f32 %v2852, %v3030
      %v3078 = vmul.f32 %v2854, %v3030
      %v3079 = vmul.f32 %v2856, %v3031
      %v3080 = vmul.f32 %v2858, %v3031
      %v3081 = vmul.f32 %v2860, %v3032
      %v3082 = vmul.f32 %v2862, %v3032
      %v3083 = vmul.f32 %v2864, %v3033
      %v3084 = vmul.f32 %v2866, %v3033
      %v3085 = vmul.f32 %v2868, %v3034
      %v3086 = vmul.f32 %v2870, %v3034
      %v3087 = vmul.f32 %v2872, %v3035
      %v3088 = vmul.f32 %v2874, %v3035
      %v3089 = vmul.f32 %v2876, %v3036
      %v3090 = vmul.f32 %v2878, %v3036
      %v3091 = vmul.f32 %v2880, %v3037
      %v3092 = vmul.f32 %v2882, %v3037
      %v3093 = vmul.f32 %v2884, %v3038
      %v3094 = vmul.f32 %v2886, %v3038
      %v3095 = vmul.f32 %v2888, %v3039
      %v3096 = vmul.f32 %v2890, %v3039
      %v3097 = vmul.f32 %v2892, %v3040
      %v3098 = vmul.f32 %v2894, %v3040
      %v3099 = vmul.f32 %v2896, %v3041
      %v3100 = vmul.f32 %v2898, %v3041
      %v3101 = vmul.f32 %v2900, %v3042
      %v3102 = vmul.f32 %v2902, %v3042
      %v3103 = vmul.f32 %v2904, %v3043
      %v3104 = vmul.f32 %v2906, %v3043
      %v3105 = vmul.f32 %v2908, %v3044
      %v3106 = vmul.f32 %v2910, %v3044
      %v3107 = vmul.f32 %v2912, %v3045
      %v3108 = vmul.f32 %v2914, %v3045
      %v3109 = vmul.f32 %v2916, %v3046
      %v3110 = vmul.f32 %v2918, %v3046
      %3143 = vrot.lane.b32.xlu0 %v693, 96
      %v3144 = vpop.permute.xlu0 %3143
      %3145 = vrot.lane.b32.xlu0 %v698, 96
      %v3146 = vpop.permute.xlu0 %3145
      %3147 = vrot.lane.b32.xlu0 %v703, 96
      %v3148 = vpop.permute.xlu0 %3147
      %3149 = vrot.lane.b32.xlu0 %v708, 96
      %v3150 = vpop.permute.xlu0 %3149
      %3151 = vrot.lane.b32.xlu0 %v713, 96
      %v3152 = vpop.permute.xlu0 %3151
      %3153 = vrot.lane.b32.xlu0 %v718, 96
      %v3154 = vpop.permute.xlu0 %3153
      %3155 = vrot.lane.b32.xlu0 %v723, 96
      %v3156 = vpop.permute.xlu0 %3155
      %3157 = vrot.lane.b32.xlu0 %v728, 96
      %v3158 = vpop.permute.xlu0 %3157
      %3159 = vrot.lane.b32.xlu0 %v733, 96
      %v3160 = vpop.permute.xlu0 %3159
      %3161 = vrot.lane.b32.xlu0 %v738, 96
      %v3162 = vpop.permute.xlu0 %3161
      %3163 = vrot.lane.b32.xlu0 %v743, 96
      %v3164 = vpop.permute.xlu0 %3163
      %3165 = vrot.lane.b32.xlu0 %v748, 96
      %v3166 = vpop.permute.xlu0 %3165
      %3167 = vrot.lane.b32.xlu0 %v753, 96
      %v3168 = vpop.permute.xlu0 %3167
      %3169 = vrot.lane.b32.xlu0 %v758, 96
      %v3170 = vpop.permute.xlu0 %3169
      %3171 = vrot.lane.b32.xlu0 %v763, 96
      %v3172 = vpop.permute.xlu0 %3171
      %3173 = vrot.lane.b32.xlu0 %v768, 96
      %v3174 = vpop.permute.xlu0 %3173
      %3175 = vrot.lane.b32.xlu0 %v773, 96
      %v3176 = vpop.permute.xlu0 %3175
      %3177 = vrot.lane.b32.xlu0 %v778, 96
      %v3178 = vpop.permute.xlu0 %3177
      %3179 = vrot.lane.b32.xlu0 %v783, 96
      %v3180 = vpop.permute.xlu0 %3179
      %3181 = vrot.lane.b32.xlu0 %v788, 96
      %v3182 = vpop.permute.xlu0 %3181
      %3183 = vrot.lane.b32.xlu0 %v793, 96
      %v3184 = vpop.permute.xlu0 %3183
      %3185 = vrot.lane.b32.xlu0 %v798, 96
      %v3186 = vpop.permute.xlu0 %3185
      %3187 = vrot.lane.b32.xlu0 %v803, 96
      %v3188 = vpop.permute.xlu0 %3187
      %3189 = vrot.lane.b32.xlu0 %v808, 96
      %v3190 = vpop.permute.xlu0 %3189
      %3191 = vrot.lane.b32.xlu0 %v813, 96
      %v3192 = vpop.permute.xlu0 %3191
      %3193 = vrot.lane.b32.xlu0 %v818, 96
      %v3194 = vpop.permute.xlu0 %3193
      %3195 = vrot.lane.b32.xlu0 %v823, 96
      %v3196 = vpop.permute.xlu0 %3195
      %3197 = vrot.lane.b32.xlu0 %v828, 96
      %v3198 = vpop.permute.xlu0 %3197
      %3199 = vrot.lane.b32.xlu0 %v833, 96
      %v3200 = vpop.permute.xlu0 %3199
      %3201 = vrot.lane.b32.xlu0 %v838, 96
      %v3202 = vpop.permute.xlu0 %3201
      %3203 = vrot.lane.b32.xlu0 %v843, 96
      %v3204 = vpop.permute.xlu0 %3203
      %3205 = vrot.lane.b32.xlu0 %v848, 96
      %v3206 = vpop.permute.xlu0 %3205
      %3239 = vmatprep.subr.mxu0 0.0
      %3240 = vmatpush1.msra.mxu0 %v3144
      %3241 = vmatprep.subr.mxu0 0.0
      %3242 = vmatpush1.msra.mxu0 %v3146
      %3243 = vmatprep.subr.mxu0 0.0
      %3244 = vmatpush1.msra.mxu0 %v3148
      %3245 = vmatprep.subr.mxu0 0.0
      %3246 = vmatpush1.msra.mxu0 %v3150
      %3247 = vmatprep.subr.mxu0 0.0
      %3248 = vmatpush1.msra.mxu0 %v3152
      %3249 = vmatprep.subr.mxu0 0.0
      %3250 = vmatpush1.msra.mxu0 %v3154
      %3251 = vmatprep.subr.mxu0 0.0
      %3252 = vmatpush1.msra.mxu0 %v3156
      %3253 = vmatprep.subr.mxu0 0.0
      %3254 = vmatpush1.msra.mxu0 %v3158
      %3255 = vmatprep.subr.mxu0 0.0
      %3256 = vmatpush1.msra.mxu0 %v3160
      %3257 = vmatprep.subr.mxu0 0.0
      %3258 = vmatpush1.msra.mxu0 %v3162
      %3259 = vmatprep.subr.mxu0 0.0
      %3260 = vmatpush1.msra.mxu0 %v3164
      %3261 = vmatprep.subr.mxu0 0.0
      %3262 = vmatpush1.msra.mxu0 %v3166
      %3263 = vmatprep.subr.mxu0 0.0
      %3264 = vmatpush1.msra.mxu0 %v3168
      %3265 = vmatprep.subr.mxu0 0.0
      %3266 = vmatpush1.msra.mxu0 %v3170
      %3267 = vmatprep.subr.mxu0 0.0
      %3268 = vmatpush1.msra.mxu0 %v3172
      %3269 = vmatprep.subr.mxu0 0.0
      %3270 = vmatpush1.msra.mxu0 %v3174
      %3271 = vmatprep.subr.mxu0 0.0
      %3272 = vmatpush1.msra.mxu0 %v3176
      %3273 = vmatprep.subr.mxu0 0.0
      %3274 = vmatpush1.msra.mxu0 %v3178
      %3275 = vmatprep.subr.mxu0 0.0
      %3276 = vmatpush1.msra.mxu0 %v3180
      %3277 = vmatprep.subr.mxu0 0.0
      %3278 = vmatpush1.msra.mxu0 %v3182
      %3279 = vmatprep.subr.mxu0 0.0
      %3280 = vmatpush1.msra.mxu0 %v3184
      %3281 = vmatprep.subr.mxu0 0.0
      %3282 = vmatpush1.msra.mxu0 %v3186
      %3283 = vmatprep.subr.mxu0 0.0
      %3284 = vmatpush1.msra.mxu0 %v3188
      %3285 = vmatprep.subr.mxu0 0.0
      %3286 = vmatpush1.msra.mxu0 %v3190
      %3287 = vmatprep.subr.mxu0 0.0
      %3288 = vmatpush1.msra.mxu0 %v3192
      %3289 = vmatprep.subr.mxu0 0.0
      %3290 = vmatpush1.msra.mxu0 %v3194
      %3291 = vmatprep.subr.mxu0 0.0
      %3292 = vmatpush1.msra.mxu0 %v3196
      %3293 = vmatprep.subr.mxu0 0.0
      %3294 = vmatpush1.msra.mxu0 %v3198
      %3295 = vmatprep.subr.mxu0 0.0
      %3296 = vmatpush1.msra.mxu0 %v3200
      %3297 = vmatprep.subr.mxu0 0.0
      %3298 = vmatpush1.msra.mxu0 %v3202
      %3299 = vmatprep.subr.mxu0 0.0
      %3300 = vmatpush1.msra.mxu0 %v3204
      %3301 = vmatprep.subr.mxu0 0.0
      %3302 = vmatpush1.msra.mxu0 %v3206
      %3303 = vmatprep.mubr.f32.mxu0 %v3048
      %3304 = vmatmul.mubr.f32.gmra.mrb[0].mxu0 %v3047
      %v3305 = vpop.f32.mrb[0].mxu0
      %v3306 = vadd.f32 0.0, %v3305
      %v3307 = vpop.f32.mrb[0].mxu0
      %3308 = vmatprep.mubr.f32.mxu0 %v3050
      %3309 = vmatmul.mubr.f32.gmra.mrb[0].mxu0 %v3049
      %v3310 = vpop.f32.mrb[0].mxu0
      %v3311 = vadd.f32 0.0, %v3310
      %v3312 = vpop.f32.mrb[0].mxu0
      %3313 = vmatprep.mubr.f32.mxu0 %v3052
      %3314 = vmatmul.mubr.f32.gmra.mrb[0].mxu0 %v3051
      %v3315 = vpop.f32.mrb[0].mxu0
      %v3316 = vadd.f32 0.0, %v3315
      %v3317 = vpop.f32.mrb[0].mxu0
      %3318 = vmatprep.mubr.f32.mxu0 %v3054
      %3319 = vmatmul.mubr.f32.gmra.mrb[0].mxu0 %v3053
      %v3320 = vpop.f32.mrb[0].mxu0
      %v3321 = vadd.f32 0.0, %v3320
      %v3322 = vpop.f32.mrb[0].mxu0
      %3323 = vmatprep.mubr.f32.mxu0 %v3056
      %3324 = vmatmul.mubr.f32.gmra.mrb[0].mxu0 %v3055
      %v3325 = vpop.f32.mrb[0].mxu0
      %v3326 = vadd.f32 0.0, %v3325
      %v3327 = vpop.f32.mrb[0].mxu0
      %3328 = vmatprep.mubr.f32.mxu0 %v3058
      %3329 = vmatmul.mubr.f32.gmra.mrb[0].mxu0 %v3057
      %v3330 = vpop.f32.mrb[0].mxu0
      %v3331 = vadd.f32 0.0, %v3330
      %v3332 = vpop.f32.mrb[0].mxu0
      %3333 = vmatprep.mubr.f32.mxu0 %v3060
      %3334 = vmatmul.mubr.f32.gmra.mrb[0].mxu0 %v3059
      %v3335 = vpop.f32.mrb[0].mxu0
      %v3336 = vadd.f32 0.0, %v3335
      %v3337 = vpop.f32.mrb[0].mxu0
      %3338 = vmatprep.mubr.f32.mxu0 %v3062
      %3339 = vmatmul.mubr.f32.gmra.mrb[0].mxu0 %v3061
      %v3340 = vpop.f32.mrb[0].mxu0
      %v3341 = vadd.f32 0.0, %v3340
      %v3342 = vpop.f32.mrb[0].mxu0
      %3343 = vmatprep.mubr.f32.mxu0 %v3064
      %3344 = vmatmul.mubr.f32.gmra.mrb[0].mxu0 %v3063
      %v3345 = vpop.f32.mrb[0].mxu0
      %v3346 = vadd.f32 0.0, %v3345
      %v3347 = vpop.f32.mrb[0].mxu0
      %3348 = vmatprep.mubr.f32.mxu0 %v3066
      %3349 = vmatmul.mubr.f32.gmra.mrb[0].mxu0 %v3065
      %v3350 = vpop.f32.mrb[0].mxu0
      %v3351 = vadd.f32 0.0, %v3350
      %v3352 = vpop.f32.mrb[0].mxu0
      %3353 = vmatprep.mubr.f32.mxu0 %v3068
      %3354 = vmatmul.mubr.f32.gmra.mrb[0].mxu0 %v3067
      %v3355 = vpop.f32.mrb[0].mxu0
      %v3356 = vadd.f32 0.0, %v3355
      %v3357 = vpop.f32.mrb[0].mxu0
      %3358 = vmatprep.mubr.f32.mxu0 %v3070
      %3359 = vmatmul.mubr.f32.gmra.mrb[0].mxu0 %v3069
      %v3360 = vpop.f32.mrb[0].mxu0
      %v3361 = vadd.f32 0.0, %v3360
      %v3362 = vpop.f32.mrb[0].mxu0
      %3363 = vmatprep.mubr.f32.mxu0 %v3072
      %3364 = vmatmul.mubr.f32.gmra.mrb[0].mxu0 %v3071
      %v3365 = vpop.f32.mrb[0].mxu0
      %v3366 = vadd.f32 0.0, %v3365
      %v3367 = vpop.f32.mrb[0].mxu0
      %3368 = vmatprep.mubr.f32.mxu0 %v3074
      %3369 = vmatmul.mubr.f32.gmra.mrb[0].mxu0 %v3073
      %v3370 = vpop.f32.mrb[0].mxu0
      %v3371 = vadd.f32 0.0, %v3370
      %v3372 = vpop.f32.mrb[0].mxu0
      %3373 = vmatprep.mubr.f32.mxu0 %v3076
      %3374 = vmatmul.mubr.f32.gmra.mrb[0].mxu0 %v3075
      %v3375 = vpop.f32.mrb[0].mxu0
      %v3376 = vadd.f32 0.0, %v3375
      %v3377 = vpop.f32.mrb[0].mxu0
      %3378 = vmatprep.mubr.f32.mxu0 %v3078
      %3379 = vmatmul.mubr.f32.gmra.mrb[0].mxu0 %v3077
      %v3380 = vpop.f32.mrb[0].mxu0
      %v3381 = vadd.f32 0.0, %v3380
      %v3382 = vpop.f32.mrb[0].mxu0
      %3383 = vmatprep.mubr.f32.mxu0 %v3080
      %3384 = vmatmul.mubr.f32.gmra.mrb[0].mxu0 %v3079
      %v3385 = vpop.f32.mrb[0].mxu0
      %v3386 = vadd.f32 0.0, %v3385
      %v3387 = vpop.f32.mrb[0].mxu0
      %3388 = vmatprep.mubr.f32.mxu0 %v3082
      %3389 = vmatmul.mubr.f32.gmra.mrb[0].mxu0 %v3081
      %v3390 = vpop.f32.mrb[0].mxu0
      %v3391 = vadd.f32 0.0, %v3390
      %v3392 = vpop.f32.mrb[0].mxu0
      %3393 = vmatprep.mubr.f32.mxu0 %v3084
      %3394 = vmatmul.mubr.f32.gmra.mrb[0].mxu0 %v3083
      %v3395 = vpop.f32.mrb[0].mxu0
      %v3396 = vadd.f32 0.0, %v3395
      %v3397 = vpop.f32.mrb[0].mxu0
      %3398 = vmatprep.mubr.f32.mxu0 %v3086
      %3399 = vmatmul.mubr.f32.gmra.mrb[0].mxu0 %v3085
      %v3400 = vpop.f32.mrb[0].mxu0
      %v3401 = vadd.f32 0.0, %v3400
      %v3402 = vpop.f32.mrb[0].mxu0
      %3403 = vmatprep.mubr.f32.mxu0 %v3088
      %3404 = vmatmul.mubr.f32.gmra.mrb[0].mxu0 %v3087
      %v3405 = vpop.f32.mrb[0].mxu0
      %v3406 = vadd.f32 0.0, %v3405
      %v3407 = vpop.f32.mrb[0].mxu0
      %3408 = vmatprep.mubr.f32.mxu0 %v3090
      %3409 = vmatmul.mubr.f32.gmra.mrb[0].mxu0 %v3089
      %v3410 = vpop.f32.mrb[0].mxu0
      %v3411 = vadd.f32 0.0, %v3410
      %v3412 = vpop.f32.mrb[0].mxu0
      %3413 = vmatprep.mubr.f32.mxu0 %v3092
      %3414 = vmatmul.mubr.f32.gmra.mrb[0].mxu0 %v3091
      %v3415 = vpop.f32.mrb[0].mxu0
      %v3416 = vadd.f32 0.0, %v3415
      %v3417 = vpop.f32.mrb[0].mxu0
      %3418 = vmatprep.mubr.f32.mxu0 %v3094
      %3419 = vmatmul.mubr.f32.gmra.mrb[0].mxu0 %v3093
      %v3420 = vpop.f32.mrb[0].mxu0
      %v3421 = vadd.f32 0.0, %v3420
      %v3422 = vpop.f32.mrb[0].mxu0
      %3423 = vmatprep.mubr.f32.mxu0 %v3096
      %3424 = vmatmul.mubr.f32.gmra.mrb[0].mxu0 %v3095
      %v3425 = vpop.f32.mrb[0].mxu0
      %v3426 = vadd.f32 0.0, %v3425
      %v3427 = vpop.f32.mrb[0].mxu0
      %3428 = vmatprep.mubr.f32.mxu0 %v3098
      %3429 = vmatmul.mubr.f32.gmra.mrb[0].mxu0 %v3097
      %v3430 = vpop.f32.mrb[0].mxu0
      %v3431 = vadd.f32 0.0, %v3430
      %v3432 = vpop.f32.mrb[0].mxu0
      %3433 = vmatprep.mubr.f32.mxu0 %v3100
      %3434 = vmatmul.mubr.f32.gmra.mrb[0].mxu0 %v3099
      %v3435 = vpop.f32.mrb[0].mxu0
      %v3436 = vadd.f32 0.0, %v3435
      %v3437 = vpop.f32.mrb[0].mxu0
      %3438 = vmatprep.mubr.f32.mxu0 %v3102
      %3439 = vmatmul.mubr.f32.gmra.mrb[0].mxu0 %v3101
      %v3440 = vpop.f32.mrb[0].mxu0
      %v3441 = vadd.f32 0.0, %v3440
      %v3442 = vpop.f32.mrb[0].mxu0
      %3443 = vmatprep.mubr.f32.mxu0 %v3104
      %3444 = vmatmul.mubr.f32.gmra.mrb[0].mxu0 %v3103
      %v3445 = vpop.f32.mrb[0].mxu0
      %v3446 = vadd.f32 0.0, %v3445
      %v3447 = vpop.f32.mrb[0].mxu0
      %3448 = vmatprep.mubr.f32.mxu0 %v3106
      %3449 = vmatmul.mubr.f32.gmra.mrb[0].mxu0 %v3105
      %v3450 = vpop.f32.mrb[0].mxu0
      %v3451 = vadd.f32 0.0, %v3450
      %v3452 = vpop.f32.mrb[0].mxu0
      %3453 = vmatprep.mubr.f32.mxu0 %v3108
      %3454 = vmatmul.mubr.f32.gmra.mrb[0].mxu0 %v3107
      %v3455 = vpop.f32.mrb[0].mxu0
      %v3456 = vadd.f32 0.0, %v3455
      %v3457 = vpop.f32.mrb[0].mxu0
      %3458 = vmatprep.mubr.f32.mxu0 %v3110
      %3459 = vmatmul.mubr.f32.gmra.mrb[0].mxu0 %v3109
      %v3460 = vpop.f32.mrb[0].mxu0
      %v3461 = vadd.f32 0.0, %v3460
      %v3462 = vpop.f32.mrb[0].mxu0
      %3463 = vdwg.mxu0
      %v3465 = vsel %vm963, %v3306, 0
      %v3468 = vsel %vm963, %v3311, 0
      %v3471 = vsel %vm963, %v3316, 0
      %v3474 = vsel %vm963, %v3321, 0
      %v3477 = vsel %vm963, %v3326, 0
      %v3480 = vsel %vm963, %v3331, 0
      %v3483 = vsel %vm963, %v3336, 0
      %v3486 = vsel %vm963, %v3341, 0
      %v3489 = vsel %vm963, %v3346, 0
      %v3492 = vsel %vm963, %v3351, 0
      %v3495 = vsel %vm963, %v3356, 0
      %v3498 = vsel %vm963, %v3361, 0
      %v3501 = vsel %vm963, %v3366, 0
      %v3504 = vsel %vm963, %v3371, 0
      %v3507 = vsel %vm963, %v3376, 0
      %v3510 = vsel %vm963, %v3381, 0
      %v3513 = vsel %vm963, %v3386, 0
      %v3516 = vsel %vm963, %v3391, 0
      %v3519 = vsel %vm963, %v3396, 0
      %v3522 = vsel %vm963, %v3401, 0
      %v3525 = vsel %vm963, %v3406, 0
      %v3528 = vsel %vm963, %v3411, 0
      %v3531 = vsel %vm963, %v3416, 0
      %v3534 = vsel %vm963, %v3421, 0
      %v3537 = vsel %vm963, %v3426, 0
      %v3540 = vsel %vm963, %v3431, 0
      %v3543 = vsel %vm963, %v3436, 0
      %v3546 = vsel %vm963, %v3441, 0
      %v3549 = vsel %vm963, %v3446, 0
      %v3552 = vsel %vm963, %v3451, 0
      %v3555 = vsel %vm963, %v3456, 0
      %v3558 = vsel %vm963, %v3461, 0
      %3560 = vmatprep.subr.mxu0 0.0
      %3561 = vmatpush1.msra.mxu0 %v951
      %3562 = vmatprep.subr.mxu0 0.0
      %3563 = vmatpush1.msra.mxu0 %v952
      %3564 = vmatprep.subr.mxu0 0.0
      %3565 = vmatpush1.msra.mxu0 %v953
      %3566 = vmatprep.subr.mxu0 0.0
      %3567 = vmatpush1.msra.mxu0 %v954
      %3568 = vmatprep.subr.mxu0 0.0
      %3569 = vmatpush1.msra.mxu0 0.0
      %3570 = vmatprep.subr.mxu0 0.0
      %3571 = vmatpush1.msra.mxu0 0.0
      %3572 = vmatprep.subr.mxu0 0.0
      %3573 = vmatpush1.msra.mxu0 0.0
      %3574 = vmatprep.subr.mxu0 0.0
      %3575 = vmatpush1.msra.mxu0 0.0
      %3576 = vmatprep.subr.mxu0 0.0
      %3577 = vmatpush1.msra.mxu0 0.0
      %3578 = vmatprep.subr.mxu0 0.0
      %3579 = vmatpush1.msra.mxu0 0.0
      %3580 = vmatprep.subr.mxu0 0.0
      %3581 = vmatpush1.msra.mxu0 0.0
      %3582 = vmatprep.subr.mxu0 0.0
      %3583 = vmatpush1.msra.mxu0 0.0
      %3584 = vmatprep.subr.mxu0 0.0
      %3585 = vmatpush1.msra.mxu0 0.0
      %3586 = vmatprep.subr.mxu0 0.0
      %3587 = vmatpush1.msra.mxu0 0.0
      %3588 = vmatprep.subr.mxu0 0.0
      %3589 = vmatpush1.msra.mxu0 0.0
      %3590 = vmatprep.subr.mxu0 0.0
      %3591 = vmatpush1.msra.mxu0 0.0
      %3592 = vmatprep.subr.mxu0 0.0
      %3593 = vmatpush1.msra.mxu0 0.0
      %3594 = vmatprep.subr.mxu0 0.0
      %3595 = vmatpush1.msra.mxu0 0.0
      %3596 = vmatprep.subr.mxu0 0.0
      %3597 = vmatpush1.msra.mxu0 0.0
      %3598 = vmatprep.subr.mxu0 0.0
      %3599 = vmatpush1.msra.mxu0 0.0
      %3600 = vmatprep.subr.mxu0 0.0
      %3601 = vmatpush1.msra.mxu0 0.0
      %3602 = vmatprep.subr.mxu0 0.0
      %3603 = vmatpush1.msra.mxu0 0.0
      %3604 = vmatprep.subr.mxu0 0.0
      %3605 = vmatpush1.msra.mxu0 0.0
      %3606 = vmatprep.subr.mxu0 0.0
      %3607 = vmatpush1.msra.mxu0 0.0
      %3608 = vmatprep.subr.mxu0 0.0
      %3609 = vmatpush1.msra.mxu0 0.0
      %3610 = vmatprep.subr.mxu0 0.0
      %3611 = vmatpush1.msra.mxu0 0.0
      %3612 = vmatprep.subr.mxu0 0.0
      %3613 = vmatpush1.msra.mxu0 0.0
      %3614 = vmatprep.subr.mxu0 0.0
      %3615 = vmatpush1.msra.mxu0 0.0
      %3616 = vmatprep.subr.mxu0 0.0
      %3617 = vmatpush1.msra.mxu0 0.0
      %3618 = vmatprep.subr.mxu0 0.0
      %3619 = vmatpush1.msra.mxu0 0.0
      %3620 = vmatprep.subr.mxu0 0.0
      %3621 = vmatpush1.msra.mxu0 0.0
      %3622 = vmatprep.subr.mxu0 0.0
      %3623 = vmatpush1.msra.mxu0 0.0
      %3624 = vmatprep.mubr.f32.mxu0 0.0
      %3625 = vmatmul.mubr.f32.gmra.mrb[0].mxu0 %v3465
      %v3626 = vpop.f32.mrb[0].mxu0
      %v3627 = vadd.f32 0.0, %v3626
      %v3628 = vpop.f32.mrb[0].mxu0
      %3629 = vmatprep.mubr.f32.mxu0 0.0
      %3630 = vmatmul.mubr.f32.gmra.mrb[0].mxu0 %v3468
      %v3631 = vpop.f32.mrb[0].mxu0
      %v3632 = vadd.f32 0.0, %v3631
      %v3633 = vpop.f32.mrb[0].mxu0
      %3634 = vmatprep.mubr.f32.mxu0 0.0
      %3635 = vmatmul.mubr.f32.gmra.mrb[0].mxu0 %v3471
      %v3636 = vpop.f32.mrb[0].mxu0
      %v3637 = vadd.f32 0.0, %v3636
      %v3638 = vpop.f32.mrb[0].mxu0
      %3639 = vmatprep.mubr.f32.mxu0 0.0
      %3640 = vmatmul.mubr.f32.gmra.mrb[0].mxu0 %v3474
      %v3641 = vpop.f32.mrb[0].mxu0
      %v3642 = vadd.f32 0.0, %v3641
      %v3643 = vpop.f32.mrb[0].mxu0
      %3644 = vmatprep.mubr.f32.mxu0 0.0
      %3645 = vmatmul.mubr.f32.gmra.mrb[0].mxu0 %v3477
      %v3646 = vpop.f32.mrb[0].mxu0
      %v3647 = vadd.f32 0.0, %v3646
      %v3648 = vpop.f32.mrb[0].mxu0
      %3649 = vmatprep.mubr.f32.mxu0 0.0
      %3650 = vmatmul.mubr.f32.gmra.mrb[0].mxu0 %v3480
      %v3651 = vpop.f32.mrb[0].mxu0
      %v3652 = vadd.f32 0.0, %v3651
      %v3653 = vpop.f32.mrb[0].mxu0
      %3654 = vmatprep.mubr.f32.mxu0 0.0
      %3655 = vmatmul.mubr.f32.gmra.mrb[0].mxu0 %v3483
      %v3656 = vpop.f32.mrb[0].mxu0
      %v3657 = vadd.f32 0.0, %v3656
      %v3658 = vpop.f32.mrb[0].mxu0
      %3659 = vmatprep.mubr.f32.mxu0 0.0
      %3660 = vmatmul.mubr.f32.gmra.mrb[0].mxu0 %v3486
      %v3661 = vpop.f32.mrb[0].mxu0
      %v3662 = vadd.f32 0.0, %v3661
      %v3663 = vpop.f32.mrb[0].mxu0
      %3664 = vmatprep.mubr.f32.mxu0 0.0
      %3665 = vmatmul.mubr.f32.gmra.mrb[0].mxu0 %v3489
      %v3666 = vpop.f32.mrb[0].mxu0
      %v3667 = vadd.f32 0.0, %v3666
      %v3668 = vpop.f32.mrb[0].mxu0
      %3669 = vmatprep.mubr.f32.mxu0 0.0
      %3670 = vmatmul.mubr.f32.gmra.mrb[0].mxu0 %v3492
      %v3671 = vpop.f32.mrb[0].mxu0
      %v3672 = vadd.f32 0.0, %v3671
      %v3673 = vpop.f32.mrb[0].mxu0
      %3674 = vmatprep.mubr.f32.mxu0 0.0
      %3675 = vmatmul.mubr.f32.gmra.mrb[0].mxu0 %v3495
      %v3676 = vpop.f32.mrb[0].mxu0
      %v3677 = vadd.f32 0.0, %v3676
      %v3678 = vpop.f32.mrb[0].mxu0
      %3679 = vmatprep.mubr.f32.mxu0 0.0
      %3680 = vmatmul.mubr.f32.gmra.mrb[0].mxu0 %v3498
      %v3681 = vpop.f32.mrb[0].mxu0
      %v3682 = vadd.f32 0.0, %v3681
      %v3683 = vpop.f32.mrb[0].mxu0
      %3684 = vmatprep.mubr.f32.mxu0 0.0
      %3685 = vmatmul.mubr.f32.gmra.mrb[0].mxu0 %v3501
      %v3686 = vpop.f32.mrb[0].mxu0
      %v3687 = vadd.f32 0.0, %v3686
      %v3688 = vpop.f32.mrb[0].mxu0
      %3689 = vmatprep.mubr.f32.mxu0 0.0
      %3690 = vmatmul.mubr.f32.gmra.mrb[0].mxu0 %v3504
      %v3691 = vpop.f32.mrb[0].mxu0
      %v3692 = vadd.f32 0.0, %v3691
      %v3693 = vpop.f32.mrb[0].mxu0
      %3694 = vmatprep.mubr.f32.mxu0 0.0
      %3695 = vmatmul.mubr.f32.gmra.mrb[0].mxu0 %v3507
      %v3696 = vpop.f32.mrb[0].mxu0
      %v3697 = vadd.f32 0.0, %v3696
      %v3698 = vpop.f32.mrb[0].mxu0
      %3699 = vmatprep.mubr.f32.mxu0 0.0
      %3700 = vmatmul.mubr.f32.gmra.mrb[0].mxu0 %v3510
      %v3701 = vpop.f32.mrb[0].mxu0
      %v3702 = vadd.f32 0.0, %v3701
      %v3703 = vpop.f32.mrb[0].mxu0
      %3704 = vmatprep.mubr.f32.mxu0 0.0
      %3705 = vmatmul.mubr.f32.gmra.mrb[0].mxu0 %v3513
      %v3706 = vpop.f32.mrb[0].mxu0
      %v3707 = vadd.f32 0.0, %v3706
      %v3708 = vpop.f32.mrb[0].mxu0
      %3709 = vmatprep.mubr.f32.mxu0 0.0
      %3710 = vmatmul.mubr.f32.gmra.mrb[0].mxu0 %v3516
      %v3711 = vpop.f32.mrb[0].mxu0
      %v3712 = vadd.f32 0.0, %v3711
      %v3713 = vpop.f32.mrb[0].mxu0
      %3714 = vmatprep.mubr.f32.mxu0 0.0
      %3715 = vmatmul.mubr.f32.gmra.mrb[0].mxu0 %v3519
      %v3716 = vpop.f32.mrb[0].mxu0
      %v3717 = vadd.f32 0.0, %v3716
      %v3718 = vpop.f32.mrb[0].mxu0
      %3719 = vmatprep.mubr.f32.mxu0 0.0
      %3720 = vmatmul.mubr.f32.gmra.mrb[0].mxu0 %v3522
      %v3721 = vpop.f32.mrb[0].mxu0
      %v3722 = vadd.f32 0.0, %v3721
      %v3723 = vpop.f32.mrb[0].mxu0
      %3724 = vmatprep.mubr.f32.mxu0 0.0
      %3725 = vmatmul.mubr.f32.gmra.mrb[0].mxu0 %v3525
      %v3726 = vpop.f32.mrb[0].mxu0
      %v3727 = vadd.f32 0.0, %v3726
      %v3728 = vpop.f32.mrb[0].mxu0
      %3729 = vmatprep.mubr.f32.mxu0 0.0
      %3730 = vmatmul.mubr.f32.gmra.mrb[0].mxu0 %v3528
      %v3731 = vpop.f32.mrb[0].mxu0
      %v3732 = vadd.f32 0.0, %v3731
      %v3733 = vpop.f32.mrb[0].mxu0
      %3734 = vmatprep.mubr.f32.mxu0 0.0
      %3735 = vmatmul.mubr.f32.gmra.mrb[0].mxu0 %v3531
      %v3736 = vpop.f32.mrb[0].mxu0
      %v3737 = vadd.f32 0.0, %v3736
      %v3738 = vpop.f32.mrb[0].mxu0
      %3739 = vmatprep.mubr.f32.mxu0 0.0
      %3740 = vmatmul.mubr.f32.gmra.mrb[0].mxu0 %v3534
      %v3741 = vpop.f32.mrb[0].mxu0
      %v3742 = vadd.f32 0.0, %v3741
      %v3743 = vpop.f32.mrb[0].mxu0
      %3744 = vmatprep.mubr.f32.mxu0 0.0
      %3745 = vmatmul.mubr.f32.gmra.mrb[0].mxu0 %v3537
      %v3746 = vpop.f32.mrb[0].mxu0
      %v3747 = vadd.f32 0.0, %v3746
      %v3748 = vpop.f32.mrb[0].mxu0
      %3749 = vmatprep.mubr.f32.mxu0 0.0
      %3750 = vmatmul.mubr.f32.gmra.mrb[0].mxu0 %v3540
      %v3751 = vpop.f32.mrb[0].mxu0
      %v3752 = vadd.f32 0.0, %v3751
      %v3753 = vpop.f32.mrb[0].mxu0
      %3754 = vmatprep.mubr.f32.mxu0 0.0
      %3755 = vmatmul.mubr.f32.gmra.mrb[0].mxu0 %v3543
      %v3756 = vpop.f32.mrb[0].mxu0
      %v3757 = vadd.f32 0.0, %v3756
      %v3758 = vpop.f32.mrb[0].mxu0
      %3759 = vmatprep.mubr.f32.mxu0 0.0
      %3760 = vmatmul.mubr.f32.gmra.mrb[0].mxu0 %v3546
      %v3761 = vpop.f32.mrb[0].mxu0
      %v3762 = vadd.f32 0.0, %v3761
      %v3763 = vpop.f32.mrb[0].mxu0
      %3764 = vmatprep.mubr.f32.mxu0 0.0
      %3765 = vmatmul.mubr.f32.gmra.mrb[0].mxu0 %v3549
      %v3766 = vpop.f32.mrb[0].mxu0
      %v3767 = vadd.f32 0.0, %v3766
      %v3768 = vpop.f32.mrb[0].mxu0
      %3769 = vmatprep.mubr.f32.mxu0 0.0
      %3770 = vmatmul.mubr.f32.gmra.mrb[0].mxu0 %v3552
      %v3771 = vpop.f32.mrb[0].mxu0
      %v3772 = vadd.f32 0.0, %v3771
      %v3773 = vpop.f32.mrb[0].mxu0
      %3774 = vmatprep.mubr.f32.mxu0 0.0
      %3775 = vmatmul.mubr.f32.gmra.mrb[0].mxu0 %v3555
      %v3776 = vpop.f32.mrb[0].mxu0
      %v3777 = vadd.f32 0.0, %v3776
      %v3778 = vpop.f32.mrb[0].mxu0
      %3779 = vmatprep.mubr.f32.mxu0 0.0
      %3780 = vmatmul.mubr.f32.gmra.mrb[0].mxu0 %v3558
      %v3781 = vpop.f32.mrb[0].mxu0
      %v3782 = vadd.f32 0.0, %v3781
      %v3783 = vpop.f32.mrb[0].mxu0
      %3784 = vdwg.mxu0
      %v3786 = vsel %vm963, %v1960, 0
      %v3789 = vsel %vm963, %v1965, 0
      %v3792 = vsel %vm963, %v1970, 0
      %v3795 = vsel %vm963, %v1975, 0
      %v3798 = vsel %vm963, %v1980, 0
      %v3801 = vsel %vm963, %v1985, 0
      %v3804 = vsel %vm963, %v1990, 0
      %v3807 = vsel %vm963, %v1995, 0
      %v3810 = vsel %vm963, %v2000, 0
      %v3813 = vsel %vm963, %v2005, 0
      %v3816 = vsel %vm963, %v2010, 0
      %v3819 = vsel %vm963, %v2015, 0
      %v3822 = vsel %vm963, %v2020, 0
      %v3825 = vsel %vm963, %v2025, 0
      %v3828 = vsel %vm963, %v2030, 0
      %v3831 = vsel %vm963, %v2035, 0
      %v3834 = vsel %vm963, %v2040, 0
      %v3837 = vsel %vm963, %v2045, 0
      %v3840 = vsel %vm963, %v2050, 0
      %v3843 = vsel %vm963, %v2055, 0
      %v3846 = vsel %vm963, %v2060, 0
      %v3849 = vsel %vm963, %v2065, 0
      %v3852 = vsel %vm963, %v2070, 0
      %v3855 = vsel %vm963, %v2075, 0
      %v3858 = vsel %vm963, %v2080, 0
      %v3861 = vsel %vm963, %v2085, 0
      %v3864 = vsel %vm963, %v2090, 0
      %v3867 = vsel %vm963, %v2095, 0
      %v3870 = vsel %vm963, %v2100, 0
      %v3873 = vsel %vm963, %v2105, 0
      %v3876 = vsel %vm963, %v2110, 0
      %v3879 = vsel %vm963, %v2115, 0
      %3881 = vmatprep.subr.mxu0 0.0
      %3882 = vmatpush1.msra.mxu0 %v947
      %3883 = vmatprep.subr.mxu0 0.0
      %3884 = vmatpush1.msra.mxu0 %v948
      %3885 = vmatprep.subr.mxu0 0.0
      %3886 = vmatpush1.msra.mxu0 %v949
      %3887 = vmatprep.subr.mxu0 0.0
      %3888 = vmatpush1.msra.mxu0 %v950
      %3889 = vmatprep.subr.mxu0 0.0
      %3890 = vmatpush1.msra.mxu0 0.0
      %3891 = vmatprep.subr.mxu0 0.0
      %3892 = vmatpush1.msra.mxu0 0.0
      %3893 = vmatprep.subr.mxu0 0.0
      %3894 = vmatpush1.msra.mxu0 0.0
      %3895 = vmatprep.subr.mxu0 0.0
      %3896 = vmatpush1.msra.mxu0 0.0
      %3897 = vmatprep.subr.mxu0 0.0
      %3898 = vmatpush1.msra.mxu0 0.0
      %3899 = vmatprep.subr.mxu0 0.0
      %3900 = vmatpush1.msra.mxu0 0.0
      %3901 = vmatprep.subr.mxu0 0.0
      %3902 = vmatpush1.msra.mxu0 0.0
      %3903 = vmatprep.subr.mxu0 0.0
      %3904 = vmatpush1.msra.mxu0 0.0
      %3905 = vmatprep.subr.mxu0 0.0
      %3906 = vmatpush1.msra.mxu0 0.0
      %3907 = vmatprep.subr.mxu0 0.0
      %3908 = vmatpush1.msra.mxu0 0.0
      %3909 = vmatprep.subr.mxu0 0.0
      %3910 = vmatpush1.msra.mxu0 0.0
      %3911 = vmatprep.subr.mxu0 0.0
      %3912 = vmatpush1.msra.mxu0 0.0
      %3913 = vmatprep.subr.mxu0 0.0
      %3914 = vmatpush1.msra.mxu0 0.0
      %3915 = vmatprep.subr.mxu0 0.0
      %3916 = vmatpush1.msra.mxu0 0.0
      %3917 = vmatprep.subr.mxu0 0.0
      %3918 = vmatpush1.msra.mxu0 0.0
      %3919 = vmatprep.subr.mxu0 0.0
      %3920 = vmatpush1.msra.mxu0 0.0
      %3921 = vmatprep.subr.mxu0 0.0
      %3922 = vmatpush1.msra.mxu0 0.0
      %3923 = vmatprep.subr.mxu0 0.0
      %3924 = vmatpush1.msra.mxu0 0.0
      %3925 = vmatprep.subr.mxu0 0.0
      %3926 = vmatpush1.msra.mxu0 0.0
      %3927 = vmatprep.subr.mxu0 0.0
      %3928 = vmatpush1.msra.mxu0 0.0
      %3929 = vmatprep.subr.mxu0 0.0
      %3930 = vmatpush1.msra.mxu0 0.0
      %3931 = vmatprep.subr.mxu0 0.0
      %3932 = vmatpush1.msra.mxu0 0.0
      %3933 = vmatprep.subr.mxu0 0.0
      %3934 = vmatpush1.msra.mxu0 0.0
      %3935 = vmatprep.subr.mxu0 0.0
      %3936 = vmatpush1.msra.mxu0 0.0
      %3937 = vmatprep.subr.mxu0 0.0
      %3938 = vmatpush1.msra.mxu0 0.0
      %3939 = vmatprep.subr.mxu0 0.0
      %3940 = vmatpush1.msra.mxu0 0.0
      %3941 = vmatprep.subr.mxu0 0.0
      %3942 = vmatpush1.msra.mxu0 0.0
      %3943 = vmatprep.subr.mxu0 0.0
      %3944 = vmatpush1.msra.mxu0 0.0
      %3945 = vmatprep.mubr.f32.mxu0 0.0
      %3946 = vmatmul.mubr.f32.gmra.mrb[0].mxu0 %v3786
      %v3947 = vpop.f32.mrb[0].mxu0
      %v3948 = vadd.f32 %v3627, %v3947
      %v3949 = vpop.f32.mrb[0].mxu0
      %3950 = vmatprep.mubr.f32.mxu0 0.0
      %3951 = vmatmul.mubr.f32.gmra.mrb[0].mxu0 %v3789
      %v3952 = vpop.f32.mrb[0].mxu0
      %v3953 = vadd.f32 %v3632, %v3952
      %v3954 = vpop.f32.mrb[0].mxu0
      %3955 = vmatprep.mubr.f32.mxu0 0.0
      %3956 = vmatmul.mubr.f32.gmra.mrb[0].mxu0 %v3792
      %v3957 = vpop.f32.mrb[0].mxu0
      %v3958 = vadd.f32 %v3637, %v3957
      %v3959 = vpop.f32.mrb[0].mxu0
      %3960 = vmatprep.mubr.f32.mxu0 0.0
      %3961 = vmatmul.mubr.f32.gmra.mrb[0].mxu0 %v3795
      %v3962 = vpop.f32.mrb[0].mxu0
      %v3963 = vadd.f32 %v3642, %v3962
      %v3964 = vpop.f32.mrb[0].mxu0
      %3965 = vmatprep.mubr.f32.mxu0 0.0
      %3966 = vmatmul.mubr.f32.gmra.mrb[0].mxu0 %v3798
      %v3967 = vpop.f32.mrb[0].mxu0
      %v3968 = vadd.f32 %v3647, %v3967
      %v3969 = vpop.f32.mrb[0].mxu0
      %3970 = vmatprep.mubr.f32.mxu0 0.0
      %3971 = vmatmul.mubr.f32.gmra.mrb[0].mxu0 %v3801
      %v3972 = vpop.f32.mrb[0].mxu0
      %v3973 = vadd.f32 %v3652, %v3972
      %v3974 = vpop.f32.mrb[0].mxu0
      %3975 = vmatprep.mubr.f32.mxu0 0.0
      %3976 = vmatmul.mubr.f32.gmra.mrb[0].mxu0 %v3804
      %v3977 = vpop.f32.mrb[0].mxu0
      %v3978 = vadd.f32 %v3657, %v3977
      %v3979 = vpop.f32.mrb[0].mxu0
      %3980 = vmatprep.mubr.f32.mxu0 0.0
      %3981 = vmatmul.mubr.f32.gmra.mrb[0].mxu0 %v3807
      %v3982 = vpop.f32.mrb[0].mxu0
      %v3983 = vadd.f32 %v3662, %v3982
      %v3984 = vpop.f32.mrb[0].mxu0
      %3985 = vmatprep.mubr.f32.mxu0 0.0
      %3986 = vmatmul.mubr.f32.gmra.mrb[0].mxu0 %v3810
      %v3987 = vpop.f32.mrb[0].mxu0
      %v3988 = vadd.f32 %v3667, %v3987
      %v3989 = vpop.f32.mrb[0].mxu0
      %3990 = vmatprep.mubr.f32.mxu0 0.0
      %3991 = vmatmul.mubr.f32.gmra.mrb[0].mxu0 %v3813
      %v3992 = vpop.f32.mrb[0].mxu0
      %v3993 = vadd.f32 %v3672, %v3992
      %v3994 = vpop.f32.mrb[0].mxu0
      %3995 = vmatprep.mubr.f32.mxu0 0.0
      %3996 = vmatmul.mubr.f32.gmra.mrb[0].mxu0 %v3816
      %v3997 = vpop.f32.mrb[0].mxu0
      %v3998 = vadd.f32 %v3677, %v3997
      %v3999 = vpop.f32.mrb[0].mxu0
      %4000 = vmatprep.mubr.f32.mxu0 0.0
      %4001 = vmatmul.mubr.f32.gmra.mrb[0].mxu0 %v3819
      %v4002 = vpop.f32.mrb[0].mxu0
      %v4003 = vadd.f32 %v3682, %v4002
      %v4004 = vpop.f32.mrb[0].mxu0
      %4005 = vmatprep.mubr.f32.mxu0 0.0
      %4006 = vmatmul.mubr.f32.gmra.mrb[0].mxu0 %v3822
      %v4007 = vpop.f32.mrb[0].mxu0
      %v4008 = vadd.f32 %v3687, %v4007
      %v4009 = vpop.f32.mrb[0].mxu0
      %4010 = vmatprep.mubr.f32.mxu0 0.0
      %4011 = vmatmul.mubr.f32.gmra.mrb[0].mxu0 %v3825
      %v4012 = vpop.f32.mrb[0].mxu0
      %v4013 = vadd.f32 %v3692, %v4012
      %v4014 = vpop.f32.mrb[0].mxu0
      %4015 = vmatprep.mubr.f32.mxu0 0.0
      %4016 = vmatmul.mubr.f32.gmra.mrb[0].mxu0 %v3828
      %v4017 = vpop.f32.mrb[0].mxu0
      %v4018 = vadd.f32 %v3697, %v4017
      %v4019 = vpop.f32.mrb[0].mxu0
      %4020 = vmatprep.mubr.f32.mxu0 0.0
      %4021 = vmatmul.mubr.f32.gmra.mrb[0].mxu0 %v3831
      %v4022 = vpop.f32.mrb[0].mxu0
      %v4023 = vadd.f32 %v3702, %v4022
      %v4024 = vpop.f32.mrb[0].mxu0
      %4025 = vmatprep.mubr.f32.mxu0 0.0
      %4026 = vmatmul.mubr.f32.gmra.mrb[0].mxu0 %v3834
      %v4027 = vpop.f32.mrb[0].mxu0
      %v4028 = vadd.f32 %v3707, %v4027
      %v4029 = vpop.f32.mrb[0].mxu0
      %4030 = vmatprep.mubr.f32.mxu0 0.0
      %4031 = vmatmul.mubr.f32.gmra.mrb[0].mxu0 %v3837
      %v4032 = vpop.f32.mrb[0].mxu0
      %v4033 = vadd.f32 %v3712, %v4032
      %v4034 = vpop.f32.mrb[0].mxu0
      %4035 = vmatprep.mubr.f32.mxu0 0.0
      %4036 = vmatmul.mubr.f32.gmra.mrb[0].mxu0 %v3840
      %v4037 = vpop.f32.mrb[0].mxu0
      %v4038 = vadd.f32 %v3717, %v4037
      %v4039 = vpop.f32.mrb[0].mxu0
      %4040 = vmatprep.mubr.f32.mxu0 0.0
      %4041 = vmatmul.mubr.f32.gmra.mrb[0].mxu0 %v3843
      %v4042 = vpop.f32.mrb[0].mxu0
      %v4043 = vadd.f32 %v3722, %v4042
      %v4044 = vpop.f32.mrb[0].mxu0
      %4045 = vmatprep.mubr.f32.mxu0 0.0
      %4046 = vmatmul.mubr.f32.gmra.mrb[0].mxu0 %v3846
      %v4047 = vpop.f32.mrb[0].mxu0
      %v4048 = vadd.f32 %v3727, %v4047
      %v4049 = vpop.f32.mrb[0].mxu0
      %4050 = vmatprep.mubr.f32.mxu0 0.0
      %4051 = vmatmul.mubr.f32.gmra.mrb[0].mxu0 %v3849
      %v4052 = vpop.f32.mrb[0].mxu0
      %v4053 = vadd.f32 %v3732, %v4052
      %v4054 = vpop.f32.mrb[0].mxu0
      %4055 = vmatprep.mubr.f32.mxu0 0.0
      %4056 = vmatmul.mubr.f32.gmra.mrb[0].mxu0 %v3852
      %v4057 = vpop.f32.mrb[0].mxu0
      %v4058 = vadd.f32 %v3737, %v4057
      %v4059 = vpop.f32.mrb[0].mxu0
      %4060 = vmatprep.mubr.f32.mxu0 0.0
      %4061 = vmatmul.mubr.f32.gmra.mrb[0].mxu0 %v3855
      %v4062 = vpop.f32.mrb[0].mxu0
      %v4063 = vadd.f32 %v3742, %v4062
      %v4064 = vpop.f32.mrb[0].mxu0
      %4065 = vmatprep.mubr.f32.mxu0 0.0
      %4066 = vmatmul.mubr.f32.gmra.mrb[0].mxu0 %v3858
      %v4067 = vpop.f32.mrb[0].mxu0
      %v4068 = vadd.f32 %v3747, %v4067
      %v4069 = vpop.f32.mrb[0].mxu0
      %4070 = vmatprep.mubr.f32.mxu0 0.0
      %4071 = vmatmul.mubr.f32.gmra.mrb[0].mxu0 %v3861
      %v4072 = vpop.f32.mrb[0].mxu0
      %v4073 = vadd.f32 %v3752, %v4072
      %v4074 = vpop.f32.mrb[0].mxu0
      %4075 = vmatprep.mubr.f32.mxu0 0.0
      %4076 = vmatmul.mubr.f32.gmra.mrb[0].mxu0 %v3864
      %v4077 = vpop.f32.mrb[0].mxu0
      %v4078 = vadd.f32 %v3757, %v4077
      %v4079 = vpop.f32.mrb[0].mxu0
      %4080 = vmatprep.mubr.f32.mxu0 0.0
      %4081 = vmatmul.mubr.f32.gmra.mrb[0].mxu0 %v3867
      %v4082 = vpop.f32.mrb[0].mxu0
      %v4083 = vadd.f32 %v3762, %v4082
      %v4084 = vpop.f32.mrb[0].mxu0
      %4085 = vmatprep.mubr.f32.mxu0 0.0
      %4086 = vmatmul.mubr.f32.gmra.mrb[0].mxu0 %v3870
      %v4087 = vpop.f32.mrb[0].mxu0
      %v4088 = vadd.f32 %v3767, %v4087
      %v4089 = vpop.f32.mrb[0].mxu0
      %4090 = vmatprep.mubr.f32.mxu0 0.0
      %4091 = vmatmul.mubr.f32.gmra.mrb[0].mxu0 %v3873
      %v4092 = vpop.f32.mrb[0].mxu0
      %v4093 = vadd.f32 %v3772, %v4092
      %v4094 = vpop.f32.mrb[0].mxu0
      %4095 = vmatprep.mubr.f32.mxu0 0.0
      %4096 = vmatmul.mubr.f32.gmra.mrb[0].mxu0 %v3876
      %v4097 = vpop.f32.mrb[0].mxu0
      %v4098 = vadd.f32 %v3777, %v4097
      %v4099 = vpop.f32.mrb[0].mxu0
      %4100 = vmatprep.mubr.f32.mxu0 0.0
      %4101 = vmatmul.mubr.f32.gmra.mrb[0].mxu0 %v3879
      %v4102 = vpop.f32.mrb[0].mxu0
      %v4103 = vadd.f32 %v3782, %v4102
      %v4104 = vpop.f32.mrb[0].mxu0
      %4105 = vdwg.mxu0
      %4106 = vrot.lane.b32.xlu0 %v851, 64
      %v4107 = vpop.permute.xlu0 %4106
      %4108 = vrot.lane.b32.xlu0 %v852, 64
      %v4109 = vpop.permute.xlu0 %4108
      %4110 = vrot.lane.b32.xlu0 %v853, 64
      %v4111 = vpop.permute.xlu0 %4110
      %4112 = vrot.lane.b32.xlu0 %v854, 64
      %v4113 = vpop.permute.xlu0 %4112
      %4114 = vrot.lane.b32.xlu0 %v855, 64
      %v4115 = vpop.permute.xlu0 %4114
      %4116 = vrot.lane.b32.xlu0 %v856, 64
      %v4117 = vpop.permute.xlu0 %4116
      %4118 = vrot.lane.b32.xlu0 %v857, 64
      %v4119 = vpop.permute.xlu0 %4118
      %4120 = vrot.lane.b32.xlu0 %v858, 64
      %v4121 = vpop.permute.xlu0 %4120
      %4122 = vrot.lane.b32.xlu0 %v859, 64
      %v4123 = vpop.permute.xlu0 %4122
      %4124 = vrot.lane.b32.xlu0 %v860, 64
      %v4125 = vpop.permute.xlu0 %4124
      %4126 = vrot.lane.b32.xlu0 %v861, 64
      %v4127 = vpop.permute.xlu0 %4126
      %4128 = vrot.lane.b32.xlu0 %v862, 64
      %v4129 = vpop.permute.xlu0 %4128
      %4130 = vrot.lane.b32.xlu0 %v863, 64
      %v4131 = vpop.permute.xlu0 %4130
      %4132 = vrot.lane.b32.xlu0 %v864, 64
      %v4133 = vpop.permute.xlu0 %4132
      %4134 = vrot.lane.b32.xlu0 %v865, 64
      %v4135 = vpop.permute.xlu0 %4134
      %4136 = vrot.lane.b32.xlu0 %v866, 64
      %v4137 = vpop.permute.xlu0 %4136
      %4138 = vrot.lane.b32.xlu0 %v867, 64
      %v4139 = vpop.permute.xlu0 %4138
      %4140 = vrot.lane.b32.xlu0 %v868, 64
      %v4141 = vpop.permute.xlu0 %4140
      %4142 = vrot.lane.b32.xlu0 %v869, 64
      %v4143 = vpop.permute.xlu0 %4142
      %4144 = vrot.lane.b32.xlu0 %v870, 64
      %v4145 = vpop.permute.xlu0 %4144
      %4146 = vrot.lane.b32.xlu0 %v871, 64
      %v4147 = vpop.permute.xlu0 %4146
      %4148 = vrot.lane.b32.xlu0 %v872, 64
      %v4149 = vpop.permute.xlu0 %4148
      %4150 = vrot.lane.b32.xlu0 %v873, 64
      %v4151 = vpop.permute.xlu0 %4150
      %4152 = vrot.lane.b32.xlu0 %v874, 64
      %v4153 = vpop.permute.xlu0 %4152
      %4154 = vrot.lane.b32.xlu0 %v875, 64
      %v4155 = vpop.permute.xlu0 %4154
      %4156 = vrot.lane.b32.xlu0 %v876, 64
      %v4157 = vpop.permute.xlu0 %4156
      %4158 = vrot.lane.b32.xlu0 %v877, 64
      %v4159 = vpop.permute.xlu0 %4158
      %4160 = vrot.lane.b32.xlu0 %v878, 64
      %v4161 = vpop.permute.xlu0 %4160
      %4162 = vrot.lane.b32.xlu0 %v879, 64
      %v4163 = vpop.permute.xlu0 %4162
      %4164 = vrot.lane.b32.xlu0 %v880, 64
      %v4165 = vpop.permute.xlu0 %4164
      %4166 = vrot.lane.b32.xlu0 %v881, 64
      %v4167 = vpop.permute.xlu0 %4166
      %4168 = vrot.lane.b32.xlu0 %v882, 64
      %v4169 = vpop.permute.xlu0 %4168
      %4170 = vrot.lane.b32.xlu0 %v438, 64
      %v4171 = vpop.permute.xlu0 %4170
      %4172 = vrot.lane.b32.xlu0 %v444, 64
      %v4173 = vpop.permute.xlu0 %4172
      %4174 = vrot.lane.b32.xlu0 %v450, 64
      %v4175 = vpop.permute.xlu0 %4174
      %4176 = vrot.lane.b32.xlu0 %v456, 64
      %v4177 = vpop.permute.xlu0 %4176
      %4178 = vrot.lane.b32.xlu0 %v462, 64
      %v4179 = vpop.permute.xlu0 %4178
      %4180 = vrot.lane.b32.xlu0 %v468, 64
      %v4181 = vpop.permute.xlu0 %4180
      %4182 = vrot.lane.b32.xlu0 %v474, 64
      %v4183 = vpop.permute.xlu0 %4182
      %4184 = vrot.lane.b32.xlu0 %v480, 64
      %v4185 = vpop.permute.xlu0 %4184
      %4186 = vrot.lane.b32.xlu0 %v486, 64
      %v4187 = vpop.permute.xlu0 %4186
      %4188 = vrot.lane.b32.xlu0 %v492, 64
      %v4189 = vpop.permute.xlu0 %4188
      %4190 = vrot.lane.b32.xlu0 %v498, 64
      %v4191 = vpop.permute.xlu0 %4190
      %4192 = vrot.lane.b32.xlu0 %v504, 64
      %v4193 = vpop.permute.xlu0 %4192
      %4194 = vrot.lane.b32.xlu0 %v510, 64
      %v4195 = vpop.permute.xlu0 %4194
      %4196 = vrot.lane.b32.xlu0 %v516, 64
      %v4197 = vpop.permute.xlu0 %4196
      %4198 = vrot.lane.b32.xlu0 %v522, 64
      %v4199 = vpop.permute.xlu0 %4198
      %4200 = vrot.lane.b32.xlu0 %v528, 64
      %v4201 = vpop.permute.xlu0 %4200
      %4202 = vrot.lane.b32.xlu0 %v534, 64
      %v4203 = vpop.permute.xlu0 %4202
      %4204 = vrot.lane.b32.xlu0 %v540, 64
      %v4205 = vpop.permute.xlu0 %4204
      %4206 = vrot.lane.b32.xlu0 %v546, 64
      %v4207 = vpop.permute.xlu0 %4206
      %4208 = vrot.lane.b32.xlu0 %v552, 64
      %v4209 = vpop.permute.xlu0 %4208
      %4210 = vrot.lane.b32.xlu0 %v558, 64
      %v4211 = vpop.permute.xlu0 %4210
      %4212 = vrot.lane.b32.xlu0 %v564, 64
      %v4213 = vpop.permute.xlu0 %4212
      %4214 = vrot.lane.b32.xlu0 %v570, 64
      %v4215 = vpop.permute.xlu0 %4214
      %4216 = vrot.lane.b32.xlu0 %v576, 64
      %v4217 = vpop.permute.xlu0 %4216
      %4218 = vrot.lane.b32.xlu0 %v582, 64
      %v4219 = vpop.permute.xlu0 %4218
      %4220 = vrot.lane.b32.xlu0 %v588, 64
      %v4221 = vpop.permute.xlu0 %4220
      %4222 = vrot.lane.b32.xlu0 %v594, 64
      %v4223 = vpop.permute.xlu0 %4222
      %4224 = vrot.lane.b32.xlu0 %v600, 64
      %v4225 = vpop.permute.xlu0 %4224
      %4226 = vrot.lane.b32.xlu0 %v606, 64
      %v4227 = vpop.permute.xlu0 %4226
      %4228 = vrot.lane.b32.xlu0 %v612, 64
      %v4229 = vpop.permute.xlu0 %4228
      %4230 = vrot.lane.b32.xlu0 %v618, 64
      %v4231 = vpop.permute.xlu0 %4230
      %4232 = vrot.lane.b32.xlu0 %v624, 64
      %v4233 = vpop.permute.xlu0 %4232
      %v4234 = vsel %vm963, %v4107, 0
      %v4236 = vsel %vm963, %v4109, 0
      %v4238 = vsel %vm963, %v4111, 0
      %v4240 = vsel %vm963, %v4113, 0
      %v4242 = vsel %vm963, %v4115, 0
      %v4244 = vsel %vm963, %v4117, 0
      %v4246 = vsel %vm963, %v4119, 0
      %v4248 = vsel %vm963, %v4121, 0
      %v4250 = vsel %vm963, %v4123, 0
      %v4252 = vsel %vm963, %v4125, 0
      %v4254 = vsel %vm963, %v4127, 0
      %v4256 = vsel %vm963, %v4129, 0
      %v4258 = vsel %vm963, %v4131, 0
      %v4260 = vsel %vm963, %v4133, 0
      %v4262 = vsel %vm963, %v4135, 0
      %v4264 = vsel %vm963, %v4137, 0
      %v4266 = vsel %vm963, %v4139, 0
      %v4268 = vsel %vm963, %v4141, 0
      %v4270 = vsel %vm963, %v4143, 0
      %v4272 = vsel %vm963, %v4145, 0
      %v4274 = vsel %vm963, %v4147, 0
      %v4276 = vsel %vm963, %v4149, 0
      %v4278 = vsel %vm963, %v4151, 0
      %v4280 = vsel %vm963, %v4153, 0
      %v4282 = vsel %vm963, %v4155, 0
      %v4284 = vsel %vm963, %v4157, 0
      %v4286 = vsel %vm963, %v4159, 0
      %v4288 = vsel %vm963, %v4161, 0
      %v4290 = vsel %vm963, %v4163, 0
      %v4292 = vsel %vm963, %v4165, 0
      %v4294 = vsel %vm963, %v4167, 0
      %v4296 = vsel %vm963, %v4169, 0
      %v4298 = vsel %vm963, %v4171, 0
      %v4300 = vsel %vm963, %v4173, 0
      %v4302 = vsel %vm963, %v4175, 0
      %v4304 = vsel %vm963, %v4177, 0
      %v4306 = vsel %vm963, %v4179, 0
      %v4308 = vsel %vm963, %v4181, 0
      %v4310 = vsel %vm963, %v4183, 0
      %v4312 = vsel %vm963, %v4185, 0
      %v4314 = vsel %vm963, %v4187, 0
      %v4316 = vsel %vm963, %v4189, 0
      %v4318 = vsel %vm963, %v4191, 0
      %v4320 = vsel %vm963, %v4193, 0
      %v4322 = vsel %vm963, %v4195, 0
      %v4324 = vsel %vm963, %v4197, 0
      %v4326 = vsel %vm963, %v4199, 0
      %v4328 = vsel %vm963, %v4201, 0
      %v4330 = vsel %vm963, %v4203, 0
      %v4332 = vsel %vm963, %v4205, 0
      %v4334 = vsel %vm963, %v4207, 0
      %v4336 = vsel %vm963, %v4209, 0
      %v4338 = vsel %vm963, %v4211, 0
      %v4340 = vsel %vm963, %v4213, 0
      %v4342 = vsel %vm963, %v4215, 0
      %v4344 = vsel %vm963, %v4217, 0
      %v4346 = vsel %vm963, %v4219, 0
      %v4348 = vsel %vm963, %v4221, 0
      %v4350 = vsel %vm963, %v4223, 0
      %v4352 = vsel %vm963, %v4225, 0
      %v4354 = vsel %vm963, %v4227, 0
      %v4356 = vsel %vm963, %v4229, 0
      %v4358 = vsel %vm963, %v4231, 0
      %v4360 = vsel %vm963, %v4233, 0
      %4362 = vmatprep.subr.mxu0 0.0
      %4363 = vmatpush1.xpose.msra.mxu0 %v4298
      %4364 = vmatprep.subr.mxu0 0.0
      %4365 = vmatpush1.xpose.msra.mxu0 %v4300
      %4366 = vmatprep.subr.mxu0 0.0
      %4367 = vmatpush1.xpose.msra.mxu0 %v4302
      %4368 = vmatprep.subr.mxu0 0.0
      %4369 = vmatpush1.xpose.msra.mxu0 %v4304
      %4370 = vmatprep.subr.mxu0 0.0
      %4371 = vmatpush1.xpose.msra.mxu0 %v4306
      %4372 = vmatprep.subr.mxu0 0.0
      %4373 = vmatpush1.xpose.msra.mxu0 %v4308
      %4374 = vmatprep.subr.mxu0 0.0
      %4375 = vmatpush1.xpose.msra.mxu0 %v4310
      %4376 = vmatprep.subr.mxu0 0.0
      %4377 = vmatpush1.xpose.msra.mxu0 %v4312
      %4378 = vmatprep.subr.mxu0 0.0
      %4379 = vmatpush1.xpose.msra.mxu0 %v4314
      %4380 = vmatprep.subr.mxu0 0.0
      %4381 = vmatpush1.xpose.msra.mxu0 %v4316
      %4382 = vmatprep.subr.mxu0 0.0
      %4383 = vmatpush1.xpose.msra.mxu0 %v4318
      %4384 = vmatprep.subr.mxu0 0.0
      %4385 = vmatpush1.xpose.msra.mxu0 %v4320
      %4386 = vmatprep.subr.mxu0 0.0
      %4387 = vmatpush1.xpose.msra.mxu0 %v4322
      %4388 = vmatprep.subr.mxu0 0.0
      %4389 = vmatpush1.xpose.msra.mxu0 %v4324
      %4390 = vmatprep.subr.mxu0 0.0
      %4391 = vmatpush1.xpose.msra.mxu0 %v4326
      %4392 = vmatprep.subr.mxu0 0.0
      %4393 = vmatpush1.xpose.msra.mxu0 %v4328
      %4394 = vmatprep.subr.mxu0 0.0
      %4395 = vmatpush1.xpose.msra.mxu0 %v4330
      %4396 = vmatprep.subr.mxu0 0.0
      %4397 = vmatpush1.xpose.msra.mxu0 %v4332
      %4398 = vmatprep.subr.mxu0 0.0
      %4399 = vmatpush1.xpose.msra.mxu0 %v4334
      %4400 = vmatprep.subr.mxu0 0.0
      %4401 = vmatpush1.xpose.msra.mxu0 %v4336
      %4402 = vmatprep.subr.mxu0 0.0
      %4403 = vmatpush1.xpose.msra.mxu0 %v4338
      %4404 = vmatprep.subr.mxu0 0.0
      %4405 = vmatpush1.xpose.msra.mxu0 %v4340
      %4406 = vmatprep.subr.mxu0 0.0
      %4407 = vmatpush1.xpose.msra.mxu0 %v4342
      %4408 = vmatprep.subr.mxu0 0.0
      %4409 = vmatpush1.xpose.msra.mxu0 %v4344
      %4410 = vmatprep.subr.mxu0 0.0
      %4411 = vmatpush1.xpose.msra.mxu0 %v4346
      %4412 = vmatprep.subr.mxu0 0.0
      %4413 = vmatpush1.xpose.msra.mxu0 %v4348
      %4414 = vmatprep.subr.mxu0 0.0
      %4415 = vmatpush1.xpose.msra.mxu0 %v4350
      %4416 = vmatprep.subr.mxu0 0.0
      %4417 = vmatpush1.xpose.msra.mxu0 %v4352
      %4418 = vmatprep.subr.mxu0 0.0
      %4419 = vmatpush1.xpose.msra.mxu0 %v4354
      %4420 = vmatprep.subr.mxu0 0.0
      %4421 = vmatpush1.xpose.msra.mxu0 %v4356
      %4422 = vmatprep.subr.mxu0 0.0
      %4423 = vmatpush1.xpose.msra.mxu0 %v4358
      %4424 = vmatprep.subr.mxu0 0.0
      %4425 = vmatpush1.xpose.msra.mxu0 %v4360
      %4426 = vmatprep.mubr.f32.mxu0 0.0
      %4427 = vmatmul.mubr.f32.gmra.mrb[0].mxu0 %v4234
      %v4428 = vpop.f32.mrb[0].mxu0
      %v4429 = vadd.f32 %v883, %v4428
      %v4430 = vpop.f32.mrb[0].mxu0
      %v4431 = vadd.f32 %v884, %v4430
      %4432 = vmatprep.mubr.f32.mxu0 0.0
      %4433 = vmatmul.mubr.f32.gmra.mrb[0].mxu0 %v4236
      %v4434 = vpop.f32.mrb[0].mxu0
      %v4435 = vadd.f32 %v885, %v4434
      %v4436 = vpop.f32.mrb[0].mxu0
      %v4437 = vadd.f32 %v886, %v4436
      %4438 = vmatprep.mubr.f32.mxu0 0.0
      %4439 = vmatmul.mubr.f32.gmra.mrb[0].mxu0 %v4238
      %v4440 = vpop.f32.mrb[0].mxu0
      %v4441 = vadd.f32 %v887, %v4440
      %v4442 = vpop.f32.mrb[0].mxu0
      %v4443 = vadd.f32 %v888, %v4442
      %4444 = vmatprep.mubr.f32.mxu0 0.0
      %4445 = vmatmul.mubr.f32.gmra.mrb[0].mxu0 %v4240
      %v4446 = vpop.f32.mrb[0].mxu0
      %v4447 = vadd.f32 %v889, %v4446
      %v4448 = vpop.f32.mrb[0].mxu0
      %v4449 = vadd.f32 %v890, %v4448
      %4450 = vmatprep.mubr.f32.mxu0 0.0
      %4451 = vmatmul.mubr.f32.gmra.mrb[0].mxu0 %v4242
      %v4452 = vpop.f32.mrb[0].mxu0
      %v4453 = vadd.f32 %v891, %v4452
      %v4454 = vpop.f32.mrb[0].mxu0
      %v4455 = vadd.f32 %v892, %v4454
      %4456 = vmatprep.mubr.f32.mxu0 0.0
      %4457 = vmatmul.mubr.f32.gmra.mrb[0].mxu0 %v4244
      %v4458 = vpop.f32.mrb[0].mxu0
      %v4459 = vadd.f32 %v893, %v4458
      %v4460 = vpop.f32.mrb[0].mxu0
      %v4461 = vadd.f32 %v894, %v4460
      %4462 = vmatprep.mubr.f32.mxu0 0.0
      %4463 = vmatmul.mubr.f32.gmra.mrb[0].mxu0 %v4246
      %v4464 = vpop.f32.mrb[0].mxu0
      %v4465 = vadd.f32 %v895, %v4464
      %v4466 = vpop.f32.mrb[0].mxu0
      %v4467 = vadd.f32 %v896, %v4466
      %4468 = vmatprep.mubr.f32.mxu0 0.0
      %4469 = vmatmul.mubr.f32.gmra.mrb[0].mxu0 %v4248
      %v4470 = vpop.f32.mrb[0].mxu0
      %v4471 = vadd.f32 %v897, %v4470
      %v4472 = vpop.f32.mrb[0].mxu0
      %v4473 = vadd.f32 %v898, %v4472
      %4474 = vmatprep.mubr.f32.mxu0 0.0
      %4475 = vmatmul.mubr.f32.gmra.mrb[0].mxu0 %v4250
      %v4476 = vpop.f32.mrb[0].mxu0
      %v4477 = vadd.f32 %v899, %v4476
      %v4478 = vpop.f32.mrb[0].mxu0
      %v4479 = vadd.f32 %v900, %v4478
      %4480 = vmatprep.mubr.f32.mxu0 0.0
      %4481 = vmatmul.mubr.f32.gmra.mrb[0].mxu0 %v4252
      %v4482 = vpop.f32.mrb[0].mxu0
      %v4483 = vadd.f32 %v901, %v4482
      %v4484 = vpop.f32.mrb[0].mxu0
      %v4485 = vadd.f32 %v902, %v4484
      %4486 = vmatprep.mubr.f32.mxu0 0.0
      %4487 = vmatmul.mubr.f32.gmra.mrb[0].mxu0 %v4254
      %v4488 = vpop.f32.mrb[0].mxu0
      %v4489 = vadd.f32 %v903, %v4488
      %v4490 = vpop.f32.mrb[0].mxu0
      %v4491 = vadd.f32 %v904, %v4490
      %4492 = vmatprep.mubr.f32.mxu0 0.0
      %4493 = vmatmul.mubr.f32.gmra.mrb[0].mxu0 %v4256
      %v4494 = vpop.f32.mrb[0].mxu0
      %v4495 = vadd.f32 %v905, %v4494
      %v4496 = vpop.f32.mrb[0].mxu0
      %v4497 = vadd.f32 %v906, %v4496
      %4498 = vmatprep.mubr.f32.mxu0 0.0
      %4499 = vmatmul.mubr.f32.gmra.mrb[0].mxu0 %v4258
      %v4500 = vpop.f32.mrb[0].mxu0
      %v4501 = vadd.f32 %v907, %v4500
      %v4502 = vpop.f32.mrb[0].mxu0
      %v4503 = vadd.f32 %v908, %v4502
      %4504 = vmatprep.mubr.f32.mxu0 0.0
      %4505 = vmatmul.mubr.f32.gmra.mrb[0].mxu0 %v4260
      %v4506 = vpop.f32.mrb[0].mxu0
      %v4507 = vadd.f32 %v909, %v4506
      %v4508 = vpop.f32.mrb[0].mxu0
      %v4509 = vadd.f32 %v910, %v4508
      %4510 = vmatprep.mubr.f32.mxu0 0.0
      %4511 = vmatmul.mubr.f32.gmra.mrb[0].mxu0 %v4262
      %v4512 = vpop.f32.mrb[0].mxu0
      %v4513 = vadd.f32 %v911, %v4512
      %v4514 = vpop.f32.mrb[0].mxu0
      %v4515 = vadd.f32 %v912, %v4514
      %4516 = vmatprep.mubr.f32.mxu0 0.0
      %4517 = vmatmul.mubr.f32.gmra.mrb[0].mxu0 %v4264
      %v4518 = vpop.f32.mrb[0].mxu0
      %v4519 = vadd.f32 %v913, %v4518
      %v4520 = vpop.f32.mrb[0].mxu0
      %v4521 = vadd.f32 %v914, %v4520
      %4522 = vmatprep.mubr.f32.mxu0 0.0
      %4523 = vmatmul.mubr.f32.gmra.mrb[0].mxu0 %v4266
      %v4524 = vpop.f32.mrb[0].mxu0
      %v4525 = vadd.f32 %v915, %v4524
      %v4526 = vpop.f32.mrb[0].mxu0
      %v4527 = vadd.f32 %v916, %v4526
      %4528 = vmatprep.mubr.f32.mxu0 0.0
      %4529 = vmatmul.mubr.f32.gmra.mrb[0].mxu0 %v4268
      %v4530 = vpop.f32.mrb[0].mxu0
      %v4531 = vadd.f32 %v917, %v4530
      %v4532 = vpop.f32.mrb[0].mxu0
      %v4533 = vadd.f32 %v918, %v4532
      %4534 = vmatprep.mubr.f32.mxu0 0.0
      %4535 = vmatmul.mubr.f32.gmra.mrb[0].mxu0 %v4270
      %v4536 = vpop.f32.mrb[0].mxu0
      %v4537 = vadd.f32 %v919, %v4536
      %v4538 = vpop.f32.mrb[0].mxu0
      %v4539 = vadd.f32 %v920, %v4538
      %4540 = vmatprep.mubr.f32.mxu0 0.0
      %4541 = vmatmul.mubr.f32.gmra.mrb[0].mxu0 %v4272
      %v4542 = vpop.f32.mrb[0].mxu0
      %v4543 = vadd.f32 %v921, %v4542
      %v4544 = vpop.f32.mrb[0].mxu0
      %v4545 = vadd.f32 %v922, %v4544
      %4546 = vmatprep.mubr.f32.mxu0 0.0
      %4547 = vmatmul.mubr.f32.gmra.mrb[0].mxu0 %v4274
      %v4548 = vpop.f32.mrb[0].mxu0
      %v4549 = vadd.f32 %v923, %v4548
      %v4550 = vpop.f32.mrb[0].mxu0
      %v4551 = vadd.f32 %v924, %v4550
      %4552 = vmatprep.mubr.f32.mxu0 0.0
      %4553 = vmatmul.mubr.f32.gmra.mrb[0].mxu0 %v4276
      %v4554 = vpop.f32.mrb[0].mxu0
      %v4555 = vadd.f32 %v925, %v4554
      %v4556 = vpop.f32.mrb[0].mxu0
      %v4557 = vadd.f32 %v926, %v4556
      %4558 = vmatprep.mubr.f32.mxu0 0.0
      %4559 = vmatmul.mubr.f32.gmra.mrb[0].mxu0 %v4278
      %v4560 = vpop.f32.mrb[0].mxu0
      %v4561 = vadd.f32 %v927, %v4560
      %v4562 = vpop.f32.mrb[0].mxu0
      %v4563 = vadd.f32 %v928, %v4562
      %4564 = vmatprep.mubr.f32.mxu0 0.0
      %4565 = vmatmul.mubr.f32.gmra.mrb[0].mxu0 %v4280
      %v4566 = vpop.f32.mrb[0].mxu0
      %v4567 = vadd.f32 %v929, %v4566
      %v4568 = vpop.f32.mrb[0].mxu0
      %v4569 = vadd.f32 %v930, %v4568
      %4570 = vmatprep.mubr.f32.mxu0 0.0
      %4571 = vmatmul.mubr.f32.gmra.mrb[0].mxu0 %v4282
      %v4572 = vpop.f32.mrb[0].mxu0
      %v4573 = vadd.f32 %v931, %v4572
      %v4574 = vpop.f32.mrb[0].mxu0
      %v4575 = vadd.f32 %v932, %v4574
      %4576 = vmatprep.mubr.f32.mxu0 0.0
      %4577 = vmatmul.mubr.f32.gmra.mrb[0].mxu0 %v4284
      %v4578 = vpop.f32.mrb[0].mxu0
      %v4579 = vadd.f32 %v933, %v4578
      %v4580 = vpop.f32.mrb[0].mxu0
      %v4581 = vadd.f32 %v934, %v4580
      %4582 = vmatprep.mubr.f32.mxu0 0.0
      %4583 = vmatmul.mubr.f32.gmra.mrb[0].mxu0 %v4286
      %v4584 = vpop.f32.mrb[0].mxu0
      %v4585 = vadd.f32 %v935, %v4584
      %v4586 = vpop.f32.mrb[0].mxu0
      %v4587 = vadd.f32 %v936, %v4586
      %4588 = vmatprep.mubr.f32.mxu0 0.0
      %4589 = vmatmul.mubr.f32.gmra.mrb[0].mxu0 %v4288
      %v4590 = vpop.f32.mrb[0].mxu0
      %v4591 = vadd.f32 %v937, %v4590
      %v4592 = vpop.f32.mrb[0].mxu0
      %v4593 = vadd.f32 %v938, %v4592
      %4594 = vmatprep.mubr.f32.mxu0 0.0
      %4595 = vmatmul.mubr.f32.gmra.mrb[0].mxu0 %v4290
      %v4596 = vpop.f32.mrb[0].mxu0
      %v4597 = vadd.f32 %v939, %v4596
      %v4598 = vpop.f32.mrb[0].mxu0
      %v4599 = vadd.f32 %v940, %v4598
      %4600 = vmatprep.mubr.f32.mxu0 0.0
      %4601 = vmatmul.mubr.f32.gmra.mrb[0].mxu0 %v4292
      %v4602 = vpop.f32.mrb[0].mxu0
      %v4603 = vadd.f32 %v941, %v4602
      %v4604 = vpop.f32.mrb[0].mxu0
      %v4605 = vadd.f32 %v942, %v4604
      %4606 = vmatprep.mubr.f32.mxu0 0.0
      %4607 = vmatmul.mubr.f32.gmra.mrb[0].mxu0 %v4294
      %v4608 = vpop.f32.mrb[0].mxu0
      %v4609 = vadd.f32 %v943, %v4608
      %v4610 = vpop.f32.mrb[0].mxu0
      %v4611 = vadd.f32 %v944, %v4610
      %4612 = vmatprep.mubr.f32.mxu0 0.0
      %4613 = vmatmul.mubr.f32.gmra.mrb[0].mxu0 %v4296
      %v4614 = vpop.f32.mrb[0].mxu0
      %v4615 = vadd.f32 %v945, %v4614
      %v4616 = vpop.f32.mrb[0].mxu0
      %v4617 = vadd.f32 %v946, %v4616
      %4618 = vdwg.mxu0
      %v4619 = vmax.f32 %v4429, %v4431
      %4620 = vmax.xlane.f32.xlu0 %v4619
      %v4621 = vpop.xlane.xlu0 %4620
      %v4622 = vmax.f32 %v4435, %v4437
      %4623 = vmax.xlane.f32.xlu0 %v4622
      %v4624 = vpop.xlane.xlu0 %4623
      %v4625 = vmax.f32 %v4441, %v4443
      %4626 = vmax.xlane.f32.xlu0 %v4625
      %v4627 = vpop.xlane.xlu0 %4626
      %v4628 = vmax.f32 %v4447, %v4449
      %4629 = vmax.xlane.f32.xlu0 %v4628
      %v4630 = vpop.xlane.xlu0 %4629
      %v4631 = vmax.f32 %v4453, %v4455
      %4632 = vmax.xlane.f32.xlu0 %v4631
      %v4633 = vpop.xlane.xlu0 %4632
      %v4634 = vmax.f32 %v4459, %v4461
      %4635 = vmax.xlane.f32.xlu0 %v4634
      %v4636 = vpop.xlane.xlu0 %4635
      %v4637 = vmax.f32 %v4465, %v4467
      %4638 = vmax.xlane.f32.xlu0 %v4637
      %v4639 = vpop.xlane.xlu0 %4638
      %v4640 = vmax.f32 %v4471, %v4473
      %4641 = vmax.xlane.f32.xlu0 %v4640
      %v4642 = vpop.xlane.xlu0 %4641
      %v4643 = vmax.f32 %v4477, %v4479
      %4644 = vmax.xlane.f32.xlu0 %v4643
      %v4645 = vpop.xlane.xlu0 %4644
      %v4646 = vmax.f32 %v4483, %v4485
      %4647 = vmax.xlane.f32.xlu0 %v4646
      %v4648 = vpop.xlane.xlu0 %4647
      %v4649 = vmax.f32 %v4489, %v4491
      %4650 = vmax.xlane.f32.xlu0 %v4649
      %v4651 = vpop.xlane.xlu0 %4650
      %v4652 = vmax.f32 %v4495, %v4497
      %4653 = vmax.xlane.f32.xlu0 %v4652
      %v4654 = vpop.xlane.xlu0 %4653
      %v4655 = vmax.f32 %v4501, %v4503
      %4656 = vmax.xlane.f32.xlu0 %v4655
      %v4657 = vpop.xlane.xlu0 %4656
      %v4658 = vmax.f32 %v4507, %v4509
      %4659 = vmax.xlane.f32.xlu0 %v4658
      %v4660 = vpop.xlane.xlu0 %4659
      %v4661 = vmax.f32 %v4513, %v4515
      %4662 = vmax.xlane.f32.xlu0 %v4661
      %v4663 = vpop.xlane.xlu0 %4662
      %v4664 = vmax.f32 %v4519, %v4521
      %4665 = vmax.xlane.f32.xlu0 %v4664
      %v4666 = vpop.xlane.xlu0 %4665
      %v4667 = vmax.f32 %v4525, %v4527
      %4668 = vmax.xlane.f32.xlu0 %v4667
      %v4669 = vpop.xlane.xlu0 %4668
      %v4670 = vmax.f32 %v4531, %v4533
      %4671 = vmax.xlane.f32.xlu0 %v4670
      %v4672 = vpop.xlane.xlu0 %4671
      %v4673 = vmax.f32 %v4537, %v4539
      %4674 = vmax.xlane.f32.xlu0 %v4673
      %v4675 = vpop.xlane.xlu0 %4674
      %v4676 = vmax.f32 %v4543, %v4545
      %4677 = vmax.xlane.f32.xlu0 %v4676
      %v4678 = vpop.xlane.xlu0 %4677
      %v4679 = vmax.f32 %v4549, %v4551
      %4680 = vmax.xlane.f32.xlu0 %v4679
      %v4681 = vpop.xlane.xlu0 %4680
      %v4682 = vmax.f32 %v4555, %v4557
      %4683 = vmax.xlane.f32.xlu0 %v4682
      %v4684 = vpop.xlane.xlu0 %4683
      %v4685 = vmax.f32 %v4561, %v4563
      %4686 = vmax.xlane.f32.xlu0 %v4685
      %v4687 = vpop.xlane.xlu0 %4686
      %v4688 = vmax.f32 %v4567, %v4569
      %4689 = vmax.xlane.f32.xlu0 %v4688
      %v4690 = vpop.xlane.xlu0 %4689
      %v4691 = vmax.f32 %v4573, %v4575
      %4692 = vmax.xlane.f32.xlu0 %v4691
      %v4693 = vpop.xlane.xlu0 %4692
      %v4694 = vmax.f32 %v4579, %v4581
      %4695 = vmax.xlane.f32.xlu0 %v4694
      %v4696 = vpop.xlane.xlu0 %4695
      %v4697 = vmax.f32 %v4585, %v4587
      %4698 = vmax.xlane.f32.xlu0 %v4697
      %v4699 = vpop.xlane.xlu0 %4698
      %v4700 = vmax.f32 %v4591, %v4593
      %4701 = vmax.xlane.f32.xlu0 %v4700
      %v4702 = vpop.xlane.xlu0 %4701
      %v4703 = vmax.f32 %v4597, %v4599
      %4704 = vmax.xlane.f32.xlu0 %v4703
      %v4705 = vpop.xlane.xlu0 %4704
      %v4706 = vmax.f32 %v4603, %v4605
      %4707 = vmax.xlane.f32.xlu0 %v4706
      %v4708 = vpop.xlane.xlu0 %4707
      %v4709 = vmax.f32 %v4609, %v4611
      %4710 = vmax.xlane.f32.xlu0 %v4709
      %v4711 = vpop.xlane.xlu0 %4710
      %v4712 = vmax.f32 %v4615, %v4617
      %4713 = vmax.xlane.f32.xlu0 %v4712
      %v4714 = vpop.xlane.xlu0 %4713
      %v4715 = vsub.f32 %v4429, %v4621
      %v4716 = vsub.f32 %v4431, %v4621
      %v4717 = vsub.f32 %v4435, %v4624
      %v4718 = vsub.f32 %v4437, %v4624
      %v4719 = vsub.f32 %v4441, %v4627
      %v4720 = vsub.f32 %v4443, %v4627
      %v4721 = vsub.f32 %v4447, %v4630
      %v4722 = vsub.f32 %v4449, %v4630
      %v4723 = vsub.f32 %v4453, %v4633
      %v4724 = vsub.f32 %v4455, %v4633
      %v4725 = vsub.f32 %v4459, %v4636
      %v4726 = vsub.f32 %v4461, %v4636
      %v4727 = vsub.f32 %v4465, %v4639
      %v4728 = vsub.f32 %v4467, %v4639
      %v4729 = vsub.f32 %v4471, %v4642
      %v4730 = vsub.f32 %v4473, %v4642
      %v4731 = vsub.f32 %v4477, %v4645
      %v4732 = vsub.f32 %v4479, %v4645
      %v4733 = vsub.f32 %v4483, %v4648
      %v4734 = vsub.f32 %v4485, %v4648
      %v4735 = vsub.f32 %v4489, %v4651
      %v4736 = vsub.f32 %v4491, %v4651
      %v4737 = vsub.f32 %v4495, %v4654
      %v4738 = vsub.f32 %v4497, %v4654
      %v4739 = vsub.f32 %v4501, %v4657
      %v4740 = vsub.f32 %v4503, %v4657
      %v4741 = vsub.f32 %v4507, %v4660
      %v4742 = vsub.f32 %v4509, %v4660
      %v4743 = vsub.f32 %v4513, %v4663
      %v4744 = vsub.f32 %v4515, %v4663
      %v4745 = vsub.f32 %v4519, %v4666
      %v4746 = vsub.f32 %v4521, %v4666
      %v4747 = vsub.f32 %v4525, %v4669
      %v4748 = vsub.f32 %v4527, %v4669
      %v4749 = vsub.f32 %v4531, %v4672
      %v4750 = vsub.f32 %v4533, %v4672
      %v4751 = vsub.f32 %v4537, %v4675
      %v4752 = vsub.f32 %v4539, %v4675
      %v4753 = vsub.f32 %v4543, %v4678
      %v4754 = vsub.f32 %v4545, %v4678
      %v4755 = vsub.f32 %v4549, %v4681
      %v4756 = vsub.f32 %v4551, %v4681
      %v4757 = vsub.f32 %v4555, %v4684
      %v4758 = vsub.f32 %v4557, %v4684
      %v4759 = vsub.f32 %v4561, %v4687
      %v4760 = vsub.f32 %v4563, %v4687
      %v4761 = vsub.f32 %v4567, %v4690
      %v4762 = vsub.f32 %v4569, %v4690
      %v4763 = vsub.f32 %v4573, %v4693
      %v4764 = vsub.f32 %v4575, %v4693
      %v4765 = vsub.f32 %v4579, %v4696
      %v4766 = vsub.f32 %v4581, %v4696
      %v4767 = vsub.f32 %v4585, %v4699
      %v4768 = vsub.f32 %v4587, %v4699
      %v4769 = vsub.f32 %v4591, %v4702
      %v4770 = vsub.f32 %v4593, %v4702
      %v4771 = vsub.f32 %v4597, %v4705
      %v4772 = vsub.f32 %v4599, %v4705
      %v4773 = vsub.f32 %v4603, %v4708
      %v4774 = vsub.f32 %v4605, %v4708
      %v4775 = vsub.f32 %v4609, %v4711
      %v4776 = vsub.f32 %v4611, %v4711
      %v4777 = vsub.f32 %v4615, %v4714
      %v4778 = vsub.f32 %v4617, %v4714
      %v4779 = vmul.f32 %v4715, 1.442695
      %v4780 = vpow.pop %v4779
      %v4781 = vmul.f32 %v4716, 1.442695
      %v4782 = vpow.pop %v4781
      %v4783 = vmul.f32 %v4717, 1.442695
      %v4784 = vpow.pop %v4783
      %v4785 = vmul.f32 %v4718, 1.442695
      %v4786 = vpow.pop %v4785
      %v4787 = vmul.f32 %v4719, 1.442695
      %v4788 = vpow.pop %v4787
      %v4789 = vmul.f32 %v4720, 1.442695
      %v4790 = vpow.pop %v4789
      %v4791 = vmul.f32 %v4721, 1.442695
      %v4792 = vpow.pop %v4791
      %v4793 = vmul.f32 %v4722, 1.442695
      %v4794 = vpow.pop %v4793
      %v4795 = vmul.f32 %v4723, 1.442695
      %v4796 = vpow.pop %v4795
      %v4797 = vmul.f32 %v4724, 1.442695
      %v4798 = vpow.pop %v4797
      %v4799 = vmul.f32 %v4725, 1.442695
      %v4800 = vpow.pop %v4799
      %v4801 = vmul.f32 %v4726, 1.442695
      %v4802 = vpow.pop %v4801
      %v4803 = vmul.f32 %v4727, 1.442695
      %v4804 = vpow.pop %v4803
      %v4805 = vmul.f32 %v4728, 1.442695
      %v4806 = vpow.pop %v4805
      %v4807 = vmul.f32 %v4729, 1.442695
      %v4808 = vpow.pop %v4807
      %v4809 = vmul.f32 %v4730, 1.442695
      %v4810 = vpow.pop %v4809
      %v4811 = vmul.f32 %v4731, 1.442695
      %v4812 = vpow.pop %v4811
      %v4813 = vmul.f32 %v4732, 1.442695
      %v4814 = vpow.pop %v4813
      %v4815 = vmul.f32 %v4733, 1.442695
      %v4816 = vpow.pop %v4815
      %v4817 = vmul.f32 %v4734, 1.442695
      %v4818 = vpow.pop %v4817
      %v4819 = vmul.f32 %v4735, 1.442695
      %v4820 = vpow.pop %v4819
      %v4821 = vmul.f32 %v4736, 1.442695
      %v4822 = vpow.pop %v4821
      %v4823 = vmul.f32 %v4737, 1.442695
      %v4824 = vpow.pop %v4823
      %v4825 = vmul.f32 %v4738, 1.442695
      %v4826 = vpow.pop %v4825
      %v4827 = vmul.f32 %v4739, 1.442695
      %v4828 = vpow.pop %v4827
      %v4829 = vmul.f32 %v4740, 1.442695
      %v4830 = vpow.pop %v4829
      %v4831 = vmul.f32 %v4741, 1.442695
      %v4832 = vpow.pop %v4831
      %v4833 = vmul.f32 %v4742, 1.442695
      %v4834 = vpow.pop %v4833
      %v4835 = vmul.f32 %v4743, 1.442695
      %v4836 = vpow.pop %v4835
      %v4837 = vmul.f32 %v4744, 1.442695
      %v4838 = vpow.pop %v4837
      %v4839 = vmul.f32 %v4745, 1.442695
      %v4840 = vpow.pop %v4839
      %v4841 = vmul.f32 %v4746, 1.442695
      %v4842 = vpow.pop %v4841
      %v4843 = vmul.f32 %v4747, 1.442695
      %v4844 = vpow.pop %v4843
      %v4845 = vmul.f32 %v4748, 1.442695
      %v4846 = vpow.pop %v4845
      %v4847 = vmul.f32 %v4749, 1.442695
      %v4848 = vpow.pop %v4847
      %v4849 = vmul.f32 %v4750, 1.442695
      %v4850 = vpow.pop %v4849
      %v4851 = vmul.f32 %v4751, 1.442695
      %v4852 = vpow.pop %v4851
      %v4853 = vmul.f32 %v4752, 1.442695
      %v4854 = vpow.pop %v4853
      %v4855 = vmul.f32 %v4753, 1.442695
      %v4856 = vpow.pop %v4855
      %v4857 = vmul.f32 %v4754, 1.442695
      %v4858 = vpow.pop %v4857
      %v4859 = vmul.f32 %v4755, 1.442695
      %v4860 = vpow.pop %v4859
      %v4861 = vmul.f32 %v4756, 1.442695
      %v4862 = vpow.pop %v4861
      %v4863 = vmul.f32 %v4757, 1.442695
      %v4864 = vpow.pop %v4863
      %v4865 = vmul.f32 %v4758, 1.442695
      %v4866 = vpow.pop %v4865
      %v4867 = vmul.f32 %v4759, 1.442695
      %v4868 = vpow.pop %v4867
      %v4869 = vmul.f32 %v4760, 1.442695
      %v4870 = vpow.pop %v4869
      %v4871 = vmul.f32 %v4761, 1.442695
      %v4872 = vpow.pop %v4871
      %v4873 = vmul.f32 %v4762, 1.442695
      %v4874 = vpow.pop %v4873
      %v4875 = vmul.f32 %v4763, 1.442695
      %v4876 = vpow.pop %v4875
      %v4877 = vmul.f32 %v4764, 1.442695
      %v4878 = vpow.pop %v4877
      %v4879 = vmul.f32 %v4765, 1.442695
      %v4880 = vpow.pop %v4879
      %v4881 = vmul.f32 %v4766, 1.442695
      %v4882 = vpow.pop %v4881
      %v4883 = vmul.f32 %v4767, 1.442695
      %v4884 = vpow.pop %v4883
      %v4885 = vmul.f32 %v4768, 1.442695
      %v4886 = vpow.pop %v4885
      %v4887 = vmul.f32 %v4769, 1.442695
      %v4888 = vpow.pop %v4887
      %v4889 = vmul.f32 %v4770, 1.442695
      %v4890 = vpow.pop %v4889
      %v4891 = vmul.f32 %v4771, 1.442695
      %v4892 = vpow.pop %v4891
      %v4893 = vmul.f32 %v4772, 1.442695
      %v4894 = vpow.pop %v4893
      %v4895 = vmul.f32 %v4773, 1.442695
      %v4896 = vpow.pop %v4895
      %v4897 = vmul.f32 %v4774, 1.442695
      %v4898 = vpow.pop %v4897
      %v4899 = vmul.f32 %v4775, 1.442695
      %v4900 = vpow.pop %v4899
      %v4901 = vmul.f32 %v4776, 1.442695
      %v4902 = vpow.pop %v4901
      %v4903 = vmul.f32 %v4777, 1.442695
      %v4904 = vpow.pop %v4903
      %v4905 = vmul.f32 %v4778, 1.442695
      %v4906 = vpow.pop %v4905
      %v4907 = vadd.f32 %v4780, %v4782
      %4908 = vadd.xlane.f32.xlu0 %v4907
      %v4909 = vpop.xlane.xlu0 %4908
      %v4910 = vadd.f32 %v4784, %v4786
      %4911 = vadd.xlane.f32.xlu0 %v4910
      %v4912 = vpop.xlane.xlu0 %4911
      %v4913 = vadd.f32 %v4788, %v4790
      %4914 = vadd.xlane.f32.xlu0 %v4913
      %v4915 = vpop.xlane.xlu0 %4914
      %v4916 = vadd.f32 %v4792, %v4794
      %4917 = vadd.xlane.f32.xlu0 %v4916
      %v4918 = vpop.xlane.xlu0 %4917
      %v4919 = vadd.f32 %v4796, %v4798
      %4920 = vadd.xlane.f32.xlu0 %v4919
      %v4921 = vpop.xlane.xlu0 %4920
      %v4922 = vadd.f32 %v4800, %v4802
      %4923 = vadd.xlane.f32.xlu0 %v4922
      %v4924 = vpop.xlane.xlu0 %4923
      %v4925 = vadd.f32 %v4804, %v4806
      %4926 = vadd.xlane.f32.xlu0 %v4925
      %v4927 = vpop.xlane.xlu0 %4926
      %v4928 = vadd.f32 %v4808, %v4810
      %4929 = vadd.xlane.f32.xlu0 %v4928
      %v4930 = vpop.xlane.xlu0 %4929
      %v4931 = vadd.f32 %v4812, %v4814
      %4932 = vadd.xlane.f32.xlu0 %v4931
      %v4933 = vpop.xlane.xlu0 %4932
      %v4934 = vadd.f32 %v4816, %v4818
      %4935 = vadd.xlane.f32.xlu0 %v4934
      %v4936 = vpop.xlane.xlu0 %4935
      %v4937 = vadd.f32 %v4820, %v4822
      %4938 = vadd.xlane.f32.xlu0 %v4937
      %v4939 = vpop.xlane.xlu0 %4938
      %v4940 = vadd.f32 %v4824, %v4826
      %4941 = vadd.xlane.f32.xlu0 %v4940
      %v4942 = vpop.xlane.xlu0 %4941
      %v4943 = vadd.f32 %v4828, %v4830
      %4944 = vadd.xlane.f32.xlu0 %v4943
      %v4945 = vpop.xlane.xlu0 %4944
      %v4946 = vadd.f32 %v4832, %v4834
      %4947 = vadd.xlane.f32.xlu0 %v4946
      %v4948 = vpop.xlane.xlu0 %4947
      %v4949 = vadd.f32 %v4836, %v4838
      %4950 = vadd.xlane.f32.xlu0 %v4949
      %v4951 = vpop.xlane.xlu0 %4950
      %v4952 = vadd.f32 %v4840, %v4842
      %4953 = vadd.xlane.f32.xlu0 %v4952
      %v4954 = vpop.xlane.xlu0 %4953
      %v4955 = vadd.f32 %v4844, %v4846
      %4956 = vadd.xlane.f32.xlu0 %v4955
      %v4957 = vpop.xlane.xlu0 %4956
      %v4958 = vadd.f32 %v4848, %v4850
      %4959 = vadd.xlane.f32.xlu0 %v4958
      %v4960 = vpop.xlane.xlu0 %4959
      %v4961 = vadd.f32 %v4852, %v4854
      %4962 = vadd.xlane.f32.xlu0 %v4961
      %v4963 = vpop.xlane.xlu0 %4962
      %v4964 = vadd.f32 %v4856, %v4858
      %4965 = vadd.xlane.f32.xlu0 %v4964
      %v4966 = vpop.xlane.xlu0 %4965
      %v4967 = vadd.f32 %v4860, %v4862
      %4968 = vadd.xlane.f32.xlu0 %v4967
      %v4969 = vpop.xlane.xlu0 %4968
      %v4970 = vadd.f32 %v4864, %v4866
      %4971 = vadd.xlane.f32.xlu0 %v4970
      %v4972 = vpop.xlane.xlu0 %4971
      %v4973 = vadd.f32 %v4868, %v4870
      %4974 = vadd.xlane.f32.xlu0 %v4973
      %v4975 = vpop.xlane.xlu0 %4974
      %v4976 = vadd.f32 %v4872, %v4874
      %4977 = vadd.xlane.f32.xlu0 %v4976
      %v4978 = vpop.xlane.xlu0 %4977
      %v4979 = vadd.f32 %v4876, %v4878
      %4980 = vadd.xlane.f32.xlu0 %v4979
      %v4981 = vpop.xlane.xlu0 %4980
      %v4982 = vadd.f32 %v4880, %v4882
      %4983 = vadd.xlane.f32.xlu0 %v4982
      %v4984 = vpop.xlane.xlu0 %4983
      %v4985 = vadd.f32 %v4884, %v4886
      %4986 = vadd.xlane.f32.xlu0 %v4985
      %v4987 = vpop.xlane.xlu0 %4986
      %v4988 = vadd.f32 %v4888, %v4890
      %4989 = vadd.xlane.f32.xlu0 %v4988
      %v4990 = vpop.xlane.xlu0 %4989
      %v4991 = vadd.f32 %v4892, %v4894
      %4992 = vadd.xlane.f32.xlu0 %v4991
      %v4993 = vpop.xlane.xlu0 %4992
      %v4994 = vadd.f32 %v4896, %v4898
      %4995 = vadd.xlane.f32.xlu0 %v4994
      %v4996 = vpop.xlane.xlu0 %4995
      %v4997 = vadd.f32 %v4900, %v4902
      %4998 = vadd.xlane.f32.xlu0 %v4997
      %v4999 = vpop.xlane.xlu0 %4998
      %v5000 = vadd.f32 %v4904, %v4906
      %5001 = vadd.xlane.f32.xlu0 %v5000
      %v5002 = vpop.xlane.xlu0 %5001
      %v5003 = vrcp.pop %v4909
      %v5004 = vrcp.pop %v4912
      %v5005 = vrcp.pop %v4915
      %v5006 = vrcp.pop %v4918
      %v5007 = vrcp.pop %v4921
      %v5008 = vrcp.pop %v4924
      %v5009 = vrcp.pop %v4927
      %v5010 = vrcp.pop %v4930
      %v5011 = vrcp.pop %v4933
      %v5012 = vrcp.pop %v4936
      %v5013 = vrcp.pop %v4939
      %v5014 = vrcp.pop %v4942
      %v5015 = vrcp.pop %v4945
      %v5016 = vrcp.pop %v4948
      %v5017 = vrcp.pop %v4951
      %v5018 = vrcp.pop %v4954
      %v5019 = vrcp.pop %v4957
      %v5020 = vrcp.pop %v4960
      %v5021 = vrcp.pop %v4963
      %v5022 = vrcp.pop %v4966
      %v5023 = vrcp.pop %v4969
      %v5024 = vrcp.pop %v4972
      %v5025 = vrcp.pop %v4975
      %v5026 = vrcp.pop %v4978
      %v5027 = vrcp.pop %v4981
      %v5028 = vrcp.pop %v4984
      %v5029 = vrcp.pop %v4987
      %v5030 = vrcp.pop %v4990
      %v5031 = vrcp.pop %v4993
      %v5032 = vrcp.pop %v4996
      %v5033 = vrcp.pop %v4999
      %v5034 = vrcp.pop %v5002
      %v5035 = vmul.f32 %v4780, %v5003
      %v5036 = vmul.f32 %v4782, %v5003
      %v5037 = vmul.f32 %v4784, %v5004
      %v5038 = vmul.f32 %v4786, %v5004
      %v5039 = vmul.f32 %v4788, %v5005
      %v5040 = vmul.f32 %v4790, %v5005
      %v5041 = vmul.f32 %v4792, %v5006
      %v5042 = vmul.f32 %v4794, %v5006
      %v5043 = vmul.f32 %v4796, %v5007
      %v5044 = vmul.f32 %v4798, %v5007
      %v5045 = vmul.f32 %v4800, %v5008
      %v5046 = vmul.f32 %v4802, %v5008
      %v5047 = vmul.f32 %v4804, %v5009
      %v5048 = vmul.f32 %v4806, %v5009
      %v5049 = vmul.f32 %v4808, %v5010
      %v5050 = vmul.f32 %v4810, %v5010
      %v5051 = vmul.f32 %v4812, %v5011
      %v5052 = vmul.f32 %v4814, %v5011
      %v5053 = vmul.f32 %v4816, %v5012
      %v5054 = vmul.f32 %v4818, %v5012
      %v5055 = vmul.f32 %v4820, %v5013
      %v5056 = vmul.f32 %v4822, %v5013
      %v5057 = vmul.f32 %v4824, %v5014
      %v5058 = vmul.f32 %v4826, %v5014
      %v5059 = vmul.f32 %v4828, %v5015
      %v5060 = vmul.f32 %v4830, %v5015
      %v5061 = vmul.f32 %v4832, %v5016
      %v5062 = vmul.f32 %v4834, %v5016
      %v5063 = vmul.f32 %v4836, %v5017
      %v5064 = vmul.f32 %v4838, %v5017
      %v5065 = vmul.f32 %v4840, %v5018
      %v5066 = vmul.f32 %v4842, %v5018
      %v5067 = vmul.f32 %v4844, %v5019
      %v5068 = vmul.f32 %v4846, %v5019
      %v5069 = vmul.f32 %v4848, %v5020
      %v5070 = vmul.f32 %v4850, %v5020
      %v5071 = vmul.f32 %v4852, %v5021
      %v5072 = vmul.f32 %v4854, %v5021
      %v5073 = vmul.f32 %v4856, %v5022
      %v5074 = vmul.f32 %v4858, %v5022
      %v5075 = vmul.f32 %v4860, %v5023
      %v5076 = vmul.f32 %v4862, %v5023
      %v5077 = vmul.f32 %v4864, %v5024
      %v5078 = vmul.f32 %v4866, %v5024
      %v5079 = vmul.f32 %v4868, %v5025
      %v5080 = vmul.f32 %v4870, %v5025
      %v5081 = vmul.f32 %v4872, %v5026
      %v5082 = vmul.f32 %v4874, %v5026
      %v5083 = vmul.f32 %v4876, %v5027
      %v5084 = vmul.f32 %v4878, %v5027
      %v5085 = vmul.f32 %v4880, %v5028
      %v5086 = vmul.f32 %v4882, %v5028
      %v5087 = vmul.f32 %v4884, %v5029
      %v5088 = vmul.f32 %v4886, %v5029
      %v5089 = vmul.f32 %v4888, %v5030
      %v5090 = vmul.f32 %v4890, %v5030
      %v5091 = vmul.f32 %v4892, %v5031
      %v5092 = vmul.f32 %v4894, %v5031
      %v5093 = vmul.f32 %v4896, %v5032
      %v5094 = vmul.f32 %v4898, %v5032
      %v5095 = vmul.f32 %v4900, %v5033
      %v5096 = vmul.f32 %v4902, %v5033
      %v5097 = vmul.f32 %v4904, %v5034
      %v5098 = vmul.f32 %v4906, %v5034
      %5099 = vrot.lane.b32.xlu0 %v693, 64
      %v5100 = vpop.permute.xlu0 %5099
      %5101 = vrot.lane.b32.xlu0 %v698, 64
      %v5102 = vpop.permute.xlu0 %5101
      %5103 = vrot.lane.b32.xlu0 %v703, 64
      %v5104 = vpop.permute.xlu0 %5103
      %5105 = vrot.lane.b32.xlu0 %v708, 64
      %v5106 = vpop.permute.xlu0 %5105
      %5107 = vrot.lane.b32.xlu0 %v713, 64
      %v5108 = vpop.permute.xlu0 %5107
      %5109 = vrot.lane.b32.xlu0 %v718, 64
      %v5110 = vpop.permute.xlu0 %5109
      %5111 = vrot.lane.b32.xlu0 %v723, 64
      %v5112 = vpop.permute.xlu0 %5111
      %5113 = vrot.lane.b32.xlu0 %v728, 64
      %v5114 = vpop.permute.xlu0 %5113
      %5115 = vrot.lane.b32.xlu0 %v733, 64
      %v5116 = vpop.permute.xlu0 %5115
      %5117 = vrot.lane.b32.xlu0 %v738, 64
      %v5118 = vpop.permute.xlu0 %5117
      %5119 = vrot.lane.b32.xlu0 %v743, 64
      %v5120 = vpop.permute.xlu0 %5119
      %5121 = vrot.lane.b32.xlu0 %v748, 64
      %v5122 = vpop.permute.xlu0 %5121
      %5123 = vrot.lane.b32.xlu0 %v753, 64
      %v5124 = vpop.permute.xlu0 %5123
      %5125 = vrot.lane.b32.xlu0 %v758, 64
      %v5126 = vpop.permute.xlu0 %5125
      %5127 = vrot.lane.b32.xlu0 %v763, 64
      %v5128 = vpop.permute.xlu0 %5127
      %5129 = vrot.lane.b32.xlu0 %v768, 64
      %v5130 = vpop.permute.xlu0 %5129
      %5131 = vrot.lane.b32.xlu0 %v773, 64
      %v5132 = vpop.permute.xlu0 %5131
      %5133 = vrot.lane.b32.xlu0 %v778, 64
      %v5134 = vpop.permute.xlu0 %5133
      %5135 = vrot.lane.b32.xlu0 %v783, 64
      %v5136 = vpop.permute.xlu0 %5135
      %5137 = vrot.lane.b32.xlu0 %v788, 64
      %v5138 = vpop.permute.xlu0 %5137
      %5139 = vrot.lane.b32.xlu0 %v793, 64
      %v5140 = vpop.permute.xlu0 %5139
      %5141 = vrot.lane.b32.xlu0 %v798, 64
      %v5142 = vpop.permute.xlu0 %5141
      %5143 = vrot.lane.b32.xlu0 %v803, 64
      %v5144 = vpop.permute.xlu0 %5143
      %5145 = vrot.lane.b32.xlu0 %v808, 64
      %v5146 = vpop.permute.xlu0 %5145
      %5147 = vrot.lane.b32.xlu0 %v813, 64
      %v5148 = vpop.permute.xlu0 %5147
      %5149 = vrot.lane.b32.xlu0 %v818, 64
      %v5150 = vpop.permute.xlu0 %5149
      %5151 = vrot.lane.b32.xlu0 %v823, 64
      %v5152 = vpop.permute.xlu0 %5151
      %5153 = vrot.lane.b32.xlu0 %v828, 64
      %v5154 = vpop.permute.xlu0 %5153
      %5155 = vrot.lane.b32.xlu0 %v833, 64
      %v5156 = vpop.permute.xlu0 %5155
      %5157 = vrot.lane.b32.xlu0 %v838, 64
      %v5158 = vpop.permute.xlu0 %5157
      %5159 = vrot.lane.b32.xlu0 %v843, 64
      %v5160 = vpop.permute.xlu0 %5159
      %5161 = vrot.lane.b32.xlu0 %v848, 64
      %v5162 = vpop.permute.xlu0 %5161
      %5195 = vmatprep.subr.mxu0 0.0
      %5196 = vmatpush1.msra.mxu0 %v5100
      %5197 = vmatprep.subr.mxu0 0.0
      %5198 = vmatpush1.msra.mxu0 %v5102
      %5199 = vmatprep.subr.mxu0 0.0
      %5200 = vmatpush1.msra.mxu0 %v5104
      %5201 = vmatprep.subr.mxu0 0.0
      %5202 = vmatpush1.msra.mxu0 %v5106
      %5203 = vmatprep.subr.mxu0 0.0
      %5204 = vmatpush1.msra.mxu0 %v5108
      %5205 = vmatprep.subr.mxu0 0.0
      %5206 = vmatpush1.msra.mxu0 %v5110
      %5207 = vmatprep.subr.mxu0 0.0
      %5208 = vmatpush1.msra.mxu0 %v5112
      %5209 = vmatprep.subr.mxu0 0.0
      %5210 = vmatpush1.msra.mxu0 %v5114
      %5211 = vmatprep.subr.mxu0 0.0
      %5212 = vmatpush1.msra.mxu0 %v5116
      %5213 = vmatprep.subr.mxu0 0.0
      %5214 = vmatpush1.msra.mxu0 %v5118
      %5215 = vmatprep.subr.mxu0 0.0
      %5216 = vmatpush1.msra.mxu0 %v5120
      %5217 = vmatprep.subr.mxu0 0.0
      %5218 = vmatpush1.msra.mxu0 %v5122
      %5219 = vmatprep.subr.mxu0 0.0
      %5220 = vmatpush1.msra.mxu0 %v5124
      %5221 = vmatprep.subr.mxu0 0.0
      %5222 = vmatpush1.msra.mxu0 %v5126
      %5223 = vmatprep.subr.mxu0 0.0
      %5224 = vmatpush1.msra.mxu0 %v5128
      %5225 = vmatprep.subr.mxu0 0.0
      %5226 = vmatpush1.msra.mxu0 %v5130
      %5227 = vmatprep.subr.mxu0 0.0
      %5228 = vmatpush1.msra.mxu0 %v5132
      %5229 = vmatprep.subr.mxu0 0.0
      %5230 = vmatpush1.msra.mxu0 %v5134
      %5231 = vmatprep.subr.mxu0 0.0
      %5232 = vmatpush1.msra.mxu0 %v5136
      %5233 = vmatprep.subr.mxu0 0.0
      %5234 = vmatpush1.msra.mxu0 %v5138
      %5235 = vmatprep.subr.mxu0 0.0
      %5236 = vmatpush1.msra.mxu0 %v5140
      %5237 = vmatprep.subr.mxu0 0.0
      %5238 = vmatpush1.msra.mxu0 %v5142
      %5239 = vmatprep.subr.mxu0 0.0
      %5240 = vmatpush1.msra.mxu0 %v5144
      %5241 = vmatprep.subr.mxu0 0.0
      %5242 = vmatpush1.msra.mxu0 %v5146
      %5243 = vmatprep.subr.mxu0 0.0
      %5244 = vmatpush1.msra.mxu0 %v5148
      %5245 = vmatprep.subr.mxu0 0.0
      %5246 = vmatpush1.msra.mxu0 %v5150
      %5247 = vmatprep.subr.mxu0 0.0
      %5248 = vmatpush1.msra.mxu0 %v5152
      %5249 = vmatprep.subr.mxu0 0.0
      %5250 = vmatpush1.msra.mxu0 %v5154
      %5251 = vmatprep.subr.mxu0 0.0
      %5252 = vmatpush1.msra.mxu0 %v5156
      %5253 = vmatprep.subr.mxu0 0.0
      %5254 = vmatpush1.msra.mxu0 %v5158
      %5255 = vmatprep.subr.mxu0 0.0
      %5256 = vmatpush1.msra.mxu0 %v5160
      %5257 = vmatprep.subr.mxu0 0.0
      %5258 = vmatpush1.msra.mxu0 %v5162
      %5259 = vmatprep.mubr.f32.mxu0 %v5036
      %5260 = vmatmul.mubr.f32.gmra.mrb[0].mxu0 %v5035
      %v5261 = vpop.f32.mrb[0].mxu0
      %v5262 = vadd.f32 0.0, %v5261
      %v5263 = vpop.f32.mrb[0].mxu0
      %5264 = vmatprep.mubr.f32.mxu0 %v5038
      %5265 = vmatmul.mubr.f32.gmra.mrb[0].mxu0 %v5037
      %v5266 = vpop.f32.mrb[0].mxu0
      %v5267 = vadd.f32 0.0, %v5266
      %v5268 = vpop.f32.mrb[0].mxu0
      %5269 = vmatprep.mubr.f32.mxu0 %v5040
      %5270 = vmatmul.mubr.f32.gmra.mrb[0].mxu0 %v5039
      %v5271 = vpop.f32.mrb[0].mxu0
      %v5272 = vadd.f32 0.0, %v5271
      %v5273 = vpop.f32.mrb[0].mxu0
      %5274 = vmatprep.mubr.f32.mxu0 %v5042
      %5275 = vmatmul.mubr.f32.gmra.mrb[0].mxu0 %v5041
      %v5276 = vpop.f32.mrb[0].mxu0
      %v5277 = vadd.f32 0.0, %v5276
      %v5278 = vpop.f32.mrb[0].mxu0
      %5279 = vmatprep.mubr.f32.mxu0 %v5044
      %5280 = vmatmul.mubr.f32.gmra.mrb[0].mxu0 %v5043
      %v5281 = vpop.f32.mrb[0].mxu0
      %v5282 = vadd.f32 0.0, %v5281
      %v5283 = vpop.f32.mrb[0].mxu0
      %5284 = vmatprep.mubr.f32.mxu0 %v5046
      %5285 = vmatmul.mubr.f32.gmra.mrb[0].mxu0 %v5045
      %v5286 = vpop.f32.mrb[0].mxu0
      %v5287 = vadd.f32 0.0, %v5286
      %v5288 = vpop.f32.mrb[0].mxu0
      %5289 = vmatprep.mubr.f32.mxu0 %v5048
      %5290 = vmatmul.mubr.f32.gmra.mrb[0].mxu0 %v5047
      %v5291 = vpop.f32.mrb[0].mxu0
      %v5292 = vadd.f32 0.0, %v5291
      %v5293 = vpop.f32.mrb[0].mxu0
      %5294 = vmatprep.mubr.f32.mxu0 %v5050
      %5295 = vmatmul.mubr.f32.gmra.mrb[0].mxu0 %v5049
      %v5296 = vpop.f32.mrb[0].mxu0
      %v5297 = vadd.f32 0.0, %v5296
      %v5298 = vpop.f32.mrb[0].mxu0
      %5299 = vmatprep.mubr.f32.mxu0 %v5052
      %5300 = vmatmul.mubr.f32.gmra.mrb[0].mxu0 %v5051
      %v5301 = vpop.f32.mrb[0].mxu0
      %v5302 = vadd.f32 0.0, %v5301
      %v5303 = vpop.f32.mrb[0].mxu0
      %5304 = vmatprep.mubr.f32.mxu0 %v5054
      %5305 = vmatmul.mubr.f32.gmra.mrb[0].mxu0 %v5053
      %v5306 = vpop.f32.mrb[0].mxu0
      %v5307 = vadd.f32 0.0, %v5306
      %v5308 = vpop.f32.mrb[0].mxu0
      %5309 = vmatprep.mubr.f32.mxu0 %v5056
      %5310 = vmatmul.mubr.f32.gmra.mrb[0].mxu0 %v5055
      %v5311 = vpop.f32.mrb[0].mxu0
      %v5312 = vadd.f32 0.0, %v5311
      %v5313 = vpop.f32.mrb[0].mxu0
      %5314 = vmatprep.mubr.f32.mxu0 %v5058
      %5315 = vmatmul.mubr.f32.gmra.mrb[0].mxu0 %v5057
      %v5316 = vpop.f32.mrb[0].mxu0
      %v5317 = vadd.f32 0.0, %v5316
      %v5318 = vpop.f32.mrb[0].mxu0
      %5319 = vmatprep.mubr.f32.mxu0 %v5060
      %5320 = vmatmul.mubr.f32.gmra.mrb[0].mxu0 %v5059
      %v5321 = vpop.f32.mrb[0].mxu0
      %v5322 = vadd.f32 0.0, %v5321
      %v5323 = vpop.f32.mrb[0].mxu0
      %5324 = vmatprep.mubr.f32.mxu0 %v5062
      %5325 = vmatmul.mubr.f32.gmra.mrb[0].mxu0 %v5061
      %v5326 = vpop.f32.mrb[0].mxu0
      %v5327 = vadd.f32 0.0, %v5326
      %v5328 = vpop.f32.mrb[0].mxu0
      %5329 = vmatprep.mubr.f32.mxu0 %v5064
      %5330 = vmatmul.mubr.f32.gmra.mrb[0].mxu0 %v5063
      %v5331 = vpop.f32.mrb[0].mxu0
      %v5332 = vadd.f32 0.0, %v5331
      %v5333 = vpop.f32.mrb[0].mxu0
      %5334 = vmatprep.mubr.f32.mxu0 %v5066
      %5335 = vmatmul.mubr.f32.gmra.mrb[0].mxu0 %v5065
      %v5336 = vpop.f32.mrb[0].mxu0
      %v5337 = vadd.f32 0.0, %v5336
      %v5338 = vpop.f32.mrb[0].mxu0
      %5339 = vmatprep.mubr.f32.mxu0 %v5068
      %5340 = vmatmul.mubr.f32.gmra.mrb[0].mxu0 %v5067
      %v5341 = vpop.f32.mrb[0].mxu0
      %v5342 = vadd.f32 0.0, %v5341
      %v5343 = vpop.f32.mrb[0].mxu0
      %5344 = vmatprep.mubr.f32.mxu0 %v5070
      %5345 = vmatmul.mubr.f32.gmra.mrb[0].mxu0 %v5069
      %v5346 = vpop.f32.mrb[0].mxu0
      %v5347 = vadd.f32 0.0, %v5346
      %v5348 = vpop.f32.mrb[0].mxu0
      %5349 = vmatprep.mubr.f32.mxu0 %v5072
      %5350 = vmatmul.mubr.f32.gmra.mrb[0].mxu0 %v5071
      %v5351 = vpop.f32.mrb[0].mxu0
      %v5352 = vadd.f32 0.0, %v5351
      %v5353 = vpop.f32.mrb[0].mxu0
      %5354 = vmatprep.mubr.f32.mxu0 %v5074
      %5355 = vmatmul.mubr.f32.gmra.mrb[0].mxu0 %v5073
      %v5356 = vpop.f32.mrb[0].mxu0
      %v5357 = vadd.f32 0.0, %v5356
      %v5358 = vpop.f32.mrb[0].mxu0
      %5359 = vmatprep.mubr.f32.mxu0 %v5076
      %5360 = vmatmul.mubr.f32.gmra.mrb[0].mxu0 %v5075
      %v5361 = vpop.f32.mrb[0].mxu0
      %v5362 = vadd.f32 0.0, %v5361
      %v5363 = vpop.f32.mrb[0].mxu0
      %5364 = vmatprep.mubr.f32.mxu0 %v5078
      %5365 = vmatmul.mubr.f32.gmra.mrb[0].mxu0 %v5077
      %v5366 = vpop.f32.mrb[0].mxu0
      %v5367 = vadd.f32 0.0, %v5366
      %v5368 = vpop.f32.mrb[0].mxu0
      %5369 = vmatprep.mubr.f32.mxu0 %v5080
      %5370 = vmatmul.mubr.f32.gmra.mrb[0].mxu0 %v5079
      %v5371 = vpop.f32.mrb[0].mxu0
      %v5372 = vadd.f32 0.0, %v5371
      %v5373 = vpop.f32.mrb[0].mxu0
      %5374 = vmatprep.mubr.f32.mxu0 %v5082
      %5375 = vmatmul.mubr.f32.gmra.mrb[0].mxu0 %v5081
      %v5376 = vpop.f32.mrb[0].mxu0
      %v5377 = vadd.f32 0.0, %v5376
      %v5378 = vpop.f32.mrb[0].mxu0
      %5379 = vmatprep.mubr.f32.mxu0 %v5084
      %5380 = vmatmul.mubr.f32.gmra.mrb[0].mxu0 %v5083
      %v5381 = vpop.f32.mrb[0].mxu0
      %v5382 = vadd.f32 0.0, %v5381
      %v5383 = vpop.f32.mrb[0].mxu0
      %5384 = vmatprep.mubr.f32.mxu0 %v5086
      %5385 = vmatmul.mubr.f32.gmra.mrb[0].mxu0 %v5085
      %v5386 = vpop.f32.mrb[0].mxu0
      %v5387 = vadd.f32 0.0, %v5386
      %v5388 = vpop.f32.mrb[0].mxu0
      %5389 = vmatprep.mubr.f32.mxu0 %v5088
      %5390 = vmatmul.mubr.f32.gmra.mrb[0].mxu0 %v5087
      %v5391 = vpop.f32.mrb[0].mxu0
      %v5392 = vadd.f32 0.0, %v5391
      %v5393 = vpop.f32.mrb[0].mxu0
      %5394 = vmatprep.mubr.f32.mxu0 %v5090
      %5395 = vmatmul.mubr.f32.gmra.mrb[0].mxu0 %v5089
      %v5396 = vpop.f32.mrb[0].mxu0
      %v5397 = vadd.f32 0.0, %v5396
      %v5398 = vpop.f32.mrb[0].mxu0
      %5399 = vmatprep.mubr.f32.mxu0 %v5092
      %5400 = vmatmul.mubr.f32.gmra.mrb[0].mxu0 %v5091
      %v5401 = vpop.f32.mrb[0].mxu0
      %v5402 = vadd.f32 0.0, %v5401
      %v5403 = vpop.f32.mrb[0].mxu0
      %5404 = vmatprep.mubr.f32.mxu0 %v5094
      %5405 = vmatmul.mubr.f32.gmra.mrb[0].mxu0 %v5093
      %v5406 = vpop.f32.mrb[0].mxu0
      %v5407 = vadd.f32 0.0, %v5406
      %v5408 = vpop.f32.mrb[0].mxu0
      %5409 = vmatprep.mubr.f32.mxu0 %v5096
      %5410 = vmatmul.mubr.f32.gmra.mrb[0].mxu0 %v5095
      %v5411 = vpop.f32.mrb[0].mxu0
      %v5412 = vadd.f32 0.0, %v5411
      %v5413 = vpop.f32.mrb[0].mxu0
      %5414 = vmatprep.mubr.f32.mxu0 %v5098
      %5415 = vmatmul.mubr.f32.gmra.mrb[0].mxu0 %v5097
      %v5416 = vpop.f32.mrb[0].mxu0
      %v5417 = vadd.f32 0.0, %v5416
      %v5418 = vpop.f32.mrb[0].mxu0
      %5419 = vdwg.mxu0
      %v5421 = vsel %vm963, %v5262, 0
      %v5424 = vsel %vm963, %v5267, 0
      %v5427 = vsel %vm963, %v5272, 0
      %v5430 = vsel %vm963, %v5277, 0
      %v5433 = vsel %vm963, %v5282, 0
      %v5436 = vsel %vm963, %v5287, 0
      %v5439 = vsel %vm963, %v5292, 0
      %v5442 = vsel %vm963, %v5297, 0
      %v5445 = vsel %vm963, %v5302, 0
      %v5448 = vsel %vm963, %v5307, 0
      %v5451 = vsel %vm963, %v5312, 0
      %v5454 = vsel %vm963, %v5317, 0
      %v5457 = vsel %vm963, %v5322, 0
      %v5460 = vsel %vm963, %v5327, 0
      %v5463 = vsel %vm963, %v5332, 0
      %v5466 = vsel %vm963, %v5337, 0
      %v5469 = vsel %vm963, %v5342, 0
      %v5472 = vsel %vm963, %v5347, 0
      %v5475 = vsel %vm963, %v5352, 0
      %v5478 = vsel %vm963, %v5357, 0
      %v5481 = vsel %vm963, %v5362, 0
      %v5484 = vsel %vm963, %v5367, 0
      %v5487 = vsel %vm963, %v5372, 0
      %v5490 = vsel %vm963, %v5377, 0
      %v5493 = vsel %vm963, %v5382, 0
      %v5496 = vsel %vm963, %v5387, 0
      %v5499 = vsel %vm963, %v5392, 0
      %v5502 = vsel %vm963, %v5397, 0
      %v5505 = vsel %vm963, %v5402, 0
      %v5508 = vsel %vm963, %v5407, 0
      %v5511 = vsel %vm963, %v5412, 0
      %v5514 = vsel %vm963, %v5417, 0
      %5516 = vmatprep.subr.mxu0 0.0
      %5517 = vmatpush1.msra.mxu0 %v955
      %5518 = vmatprep.subr.mxu0 0.0
      %5519 = vmatpush1.msra.mxu0 %v956
      %5520 = vmatprep.subr.mxu0 0.0
      %5521 = vmatpush1.msra.mxu0 %v957
      %5522 = vmatprep.subr.mxu0 0.0
      %5523 = vmatpush1.msra.mxu0 %v958
      %5524 = vmatprep.subr.mxu0 0.0
      %5525 = vmatpush1.msra.mxu0 0.0
      %5526 = vmatprep.subr.mxu0 0.0
      %5527 = vmatpush1.msra.mxu0 0.0
      %5528 = vmatprep.subr.mxu0 0.0
      %5529 = vmatpush1.msra.mxu0 0.0
      %5530 = vmatprep.subr.mxu0 0.0
      %5531 = vmatpush1.msra.mxu0 0.0
      %5532 = vmatprep.subr.mxu0 0.0
      %5533 = vmatpush1.msra.mxu0 0.0
      %5534 = vmatprep.subr.mxu0 0.0
      %5535 = vmatpush1.msra.mxu0 0.0
      %5536 = vmatprep.subr.mxu0 0.0
      %5537 = vmatpush1.msra.mxu0 0.0
      %5538 = vmatprep.subr.mxu0 0.0
      %5539 = vmatpush1.msra.mxu0 0.0
      %5540 = vmatprep.subr.mxu0 0.0
      %5541 = vmatpush1.msra.mxu0 0.0
      %5542 = vmatprep.subr.mxu0 0.0
      %5543 = vmatpush1.msra.mxu0 0.0
      %5544 = vmatprep.subr.mxu0 0.0
      %5545 = vmatpush1.msra.mxu0 0.0
      %5546 = vmatprep.subr.mxu0 0.0
      %5547 = vmatpush1.msra.mxu0 0.0
      %5548 = vmatprep.subr.mxu0 0.0
      %5549 = vmatpush1.msra.mxu0 0.0
      %5550 = vmatprep.subr.mxu0 0.0
      %5551 = vmatpush1.msra.mxu0 0.0
      %5552 = vmatprep.subr.mxu0 0.0
      %5553 = vmatpush1.msra.mxu0 0.0
      %5554 = vmatprep.subr.mxu0 0.0
      %5555 = vmatpush1.msra.mxu0 0.0
      %5556 = vmatprep.subr.mxu0 0.0
      %5557 = vmatpush1.msra.mxu0 0.0
      %5558 = vmatprep.subr.mxu0 0.0
      %5559 = vmatpush1.msra.mxu0 0.0
      %5560 = vmatprep.subr.mxu0 0.0
      %5561 = vmatpush1.msra.mxu0 0.0
      %5562 = vmatprep.subr.mxu0 0.0
      %5563 = vmatpush1.msra.mxu0 0.0
      %5564 = vmatprep.subr.mxu0 0.0
      %5565 = vmatpush1.msra.mxu0 0.0
      %5566 = vmatprep.subr.mxu0 0.0
      %5567 = vmatpush1.msra.mxu0 0.0
      %5568 = vmatprep.subr.mxu0 0.0
      %5569 = vmatpush1.msra.mxu0 0.0
      %5570 = vmatprep.subr.mxu0 0.0
      %5571 = vmatpush1.msra.mxu0 0.0
      %5572 = vmatprep.subr.mxu0 0.0
      %5573 = vmatpush1.msra.mxu0 0.0
      %5574 = vmatprep.subr.mxu0 0.0
      %5575 = vmatpush1.msra.mxu0 0.0
      %5576 = vmatprep.subr.mxu0 0.0
      %5577 = vmatpush1.msra.mxu0 0.0
      %5578 = vmatprep.subr.mxu0 0.0
      %5579 = vmatpush1.msra.mxu0 0.0
      %5580 = vmatprep.mubr.f32.mxu0 0.0
      %5581 = vmatmul.mubr.f32.gmra.mrb[0].mxu0 %v5421
      %v5582 = vpop.f32.mrb[0].mxu0
      %v5583 = vadd.f32 0.0, %v5582
      %v5584 = vpop.f32.mrb[0].mxu0
      %5585 = vmatprep.mubr.f32.mxu0 0.0
      %5586 = vmatmul.mubr.f32.gmra.mrb[0].mxu0 %v5424
      %v5587 = vpop.f32.mrb[0].mxu0
      %v5588 = vadd.f32 0.0, %v5587
      %v5589 = vpop.f32.mrb[0].mxu0
      %5590 = vmatprep.mubr.f32.mxu0 0.0
      %5591 = vmatmul.mubr.f32.gmra.mrb[0].mxu0 %v5427
      %v5592 = vpop.f32.mrb[0].mxu0
      %v5593 = vadd.f32 0.0, %v5592
      %v5594 = vpop.f32.mrb[0].mxu0
      %5595 = vmatprep.mubr.f32.mxu0 0.0
      %5596 = vmatmul.mubr.f32.gmra.mrb[0].mxu0 %v5430
      %v5597 = vpop.f32.mrb[0].mxu0
      %v5598 = vadd.f32 0.0, %v5597
      %v5599 = vpop.f32.mrb[0].mxu0
      %5600 = vmatprep.mubr.f32.mxu0 0.0
      %5601 = vmatmul.mubr.f32.gmra.mrb[0].mxu0 %v5433
      %v5602 = vpop.f32.mrb[0].mxu0
      %v5603 = vadd.f32 0.0, %v5602
      %v5604 = vpop.f32.mrb[0].mxu0
      %5605 = vmatprep.mubr.f32.mxu0 0.0
      %5606 = vmatmul.mubr.f32.gmra.mrb[0].mxu0 %v5436
      %v5607 = vpop.f32.mrb[0].mxu0
      %v5608 = vadd.f32 0.0, %v5607
      %v5609 = vpop.f32.mrb[0].mxu0
      %5610 = vmatprep.mubr.f32.mxu0 0.0
      %5611 = vmatmul.mubr.f32.gmra.mrb[0].mxu0 %v5439
      %v5612 = vpop.f32.mrb[0].mxu0
      %v5613 = vadd.f32 0.0, %v5612
      %v5614 = vpop.f32.mrb[0].mxu0
      %5615 = vmatprep.mubr.f32.mxu0 0.0
      %5616 = vmatmul.mubr.f32.gmra.mrb[0].mxu0 %v5442
      %v5617 = vpop.f32.mrb[0].mxu0
      %v5618 = vadd.f32 0.0, %v5617
      %v5619 = vpop.f32.mrb[0].mxu0
      %5620 = vmatprep.mubr.f32.mxu0 0.0
      %5621 = vmatmul.mubr.f32.gmra.mrb[0].mxu0 %v5445
      %v5622 = vpop.f32.mrb[0].mxu0
      %v5623 = vadd.f32 0.0, %v5622
      %v5624 = vpop.f32.mrb[0].mxu0
      %5625 = vmatprep.mubr.f32.mxu0 0.0
      %5626 = vmatmul.mubr.f32.gmra.mrb[0].mxu0 %v5448
      %v5627 = vpop.f32.mrb[0].mxu0
      %v5628 = vadd.f32 0.0, %v5627
      %v5629 = vpop.f32.mrb[0].mxu0
      %5630 = vmatprep.mubr.f32.mxu0 0.0
      %5631 = vmatmul.mubr.f32.gmra.mrb[0].mxu0 %v5451
      %v5632 = vpop.f32.mrb[0].mxu0
      %v5633 = vadd.f32 0.0, %v5632
      %v5634 = vpop.f32.mrb[0].mxu0
      %5635 = vmatprep.mubr.f32.mxu0 0.0
      %5636 = vmatmul.mubr.f32.gmra.mrb[0].mxu0 %v5454
      %v5637 = vpop.f32.mrb[0].mxu0
      %v5638 = vadd.f32 0.0, %v5637
      %v5639 = vpop.f32.mrb[0].mxu0
      %5640 = vmatprep.mubr.f32.mxu0 0.0
      %5641 = vmatmul.mubr.f32.gmra.mrb[0].mxu0 %v5457
      %v5642 = vpop.f32.mrb[0].mxu0
      %v5643 = vadd.f32 0.0, %v5642
      %v5644 = vpop.f32.mrb[0].mxu0
      %5645 = vmatprep.mubr.f32.mxu0 0.0
      %5646 = vmatmul.mubr.f32.gmra.mrb[0].mxu0 %v5460
      %v5647 = vpop.f32.mrb[0].mxu0
      %v5648 = vadd.f32 0.0, %v5647
      %v5649 = vpop.f32.mrb[0].mxu0
      %5650 = vmatprep.mubr.f32.mxu0 0.0
      %5651 = vmatmul.mubr.f32.gmra.mrb[0].mxu0 %v5463
      %v5652 = vpop.f32.mrb[0].mxu0
      %v5653 = vadd.f32 0.0, %v5652
      %v5654 = vpop.f32.mrb[0].mxu0
      %5655 = vmatprep.mubr.f32.mxu0 0.0
      %5656 = vmatmul.mubr.f32.gmra.mrb[0].mxu0 %v5466
      %v5657 = vpop.f32.mrb[0].mxu0
      %v5658 = vadd.f32 0.0, %v5657
      %v5659 = vpop.f32.mrb[0].mxu0
      %5660 = vmatprep.mubr.f32.mxu0 0.0
      %5661 = vmatmul.mubr.f32.gmra.mrb[0].mxu0 %v5469
      %v5662 = vpop.f32.mrb[0].mxu0
      %v5663 = vadd.f32 0.0, %v5662
      %v5664 = vpop.f32.mrb[0].mxu0
      %5665 = vmatprep.mubr.f32.mxu0 0.0
      %5666 = vmatmul.mubr.f32.gmra.mrb[0].mxu0 %v5472
      %v5667 = vpop.f32.mrb[0].mxu0
      %v5668 = vadd.f32 0.0, %v5667
      %v5669 = vpop.f32.mrb[0].mxu0
      %5670 = vmatprep.mubr.f32.mxu0 0.0
      %5671 = vmatmul.mubr.f32.gmra.mrb[0].mxu0 %v5475
      %v5672 = vpop.f32.mrb[0].mxu0
      %v5673 = vadd.f32 0.0, %v5672
      %v5674 = vpop.f32.mrb[0].mxu0
      %5675 = vmatprep.mubr.f32.mxu0 0.0
      %5676 = vmatmul.mubr.f32.gmra.mrb[0].mxu0 %v5478
      %v5677 = vpop.f32.mrb[0].mxu0
      %v5678 = vadd.f32 0.0, %v5677
      %v5679 = vpop.f32.mrb[0].mxu0
      %5680 = vmatprep.mubr.f32.mxu0 0.0
      %5681 = vmatmul.mubr.f32.gmra.mrb[0].mxu0 %v5481
      %v5682 = vpop.f32.mrb[0].mxu0
      %v5683 = vadd.f32 0.0, %v5682
      %v5684 = vpop.f32.mrb[0].mxu0
      %5685 = vmatprep.mubr.f32.mxu0 0.0
      %5686 = vmatmul.mubr.f32.gmra.mrb[0].mxu0 %v5484
      %v5687 = vpop.f32.mrb[0].mxu0
      %v5688 = vadd.f32 0.0, %v5687
      %v5689 = vpop.f32.mrb[0].mxu0
      %5690 = vmatprep.mubr.f32.mxu0 0.0
      %5691 = vmatmul.mubr.f32.gmra.mrb[0].mxu0 %v5487
      %v5692 = vpop.f32.mrb[0].mxu0
      %v5693 = vadd.f32 0.0, %v5692
      %v5694 = vpop.f32.mrb[0].mxu0
      %5695 = vmatprep.mubr.f32.mxu0 0.0
      %5696 = vmatmul.mubr.f32.gmra.mrb[0].mxu0 %v5490
      %v5697 = vpop.f32.mrb[0].mxu0
      %v5698 = vadd.f32 0.0, %v5697
      %v5699 = vpop.f32.mrb[0].mxu0
      %5700 = vmatprep.mubr.f32.mxu0 0.0
      %5701 = vmatmul.mubr.f32.gmra.mrb[0].mxu0 %v5493
      %v5702 = vpop.f32.mrb[0].mxu0
      %v5703 = vadd.f32 0.0, %v5702
      %v5704 = vpop.f32.mrb[0].mxu0
      %5705 = vmatprep.mubr.f32.mxu0 0.0
      %5706 = vmatmul.mubr.f32.gmra.mrb[0].mxu0 %v5496
      %v5707 = vpop.f32.mrb[0].mxu0
      %v5708 = vadd.f32 0.0, %v5707
      %v5709 = vpop.f32.mrb[0].mxu0
      %5710 = vmatprep.mubr.f32.mxu0 0.0
      %5711 = vmatmul.mubr.f32.gmra.mrb[0].mxu0 %v5499
      %v5712 = vpop.f32.mrb[0].mxu0
      %v5713 = vadd.f32 0.0, %v5712
      %v5714 = vpop.f32.mrb[0].mxu0
      %5715 = vmatprep.mubr.f32.mxu0 0.0
      %5716 = vmatmul.mubr.f32.gmra.mrb[0].mxu0 %v5502
      %v5717 = vpop.f32.mrb[0].mxu0
      %v5718 = vadd.f32 0.0, %v5717
      %v5719 = vpop.f32.mrb[0].mxu0
      %5720 = vmatprep.mubr.f32.mxu0 0.0
      %5721 = vmatmul.mubr.f32.gmra.mrb[0].mxu0 %v5505
      %v5722 = vpop.f32.mrb[0].mxu0
      %v5723 = vadd.f32 0.0, %v5722
      %v5724 = vpop.f32.mrb[0].mxu0
      %5725 = vmatprep.mubr.f32.mxu0 0.0
      %5726 = vmatmul.mubr.f32.gmra.mrb[0].mxu0 %v5508
      %v5727 = vpop.f32.mrb[0].mxu0
      %v5728 = vadd.f32 0.0, %v5727
      %v5729 = vpop.f32.mrb[0].mxu0
      %5730 = vmatprep.mubr.f32.mxu0 0.0
      %5731 = vmatmul.mubr.f32.gmra.mrb[0].mxu0 %v5511
      %v5732 = vpop.f32.mrb[0].mxu0
      %v5733 = vadd.f32 0.0, %v5732
      %v5734 = vpop.f32.mrb[0].mxu0
      %5735 = vmatprep.mubr.f32.mxu0 0.0
      %5736 = vmatmul.mubr.f32.gmra.mrb[0].mxu0 %v5514
      %v5737 = vpop.f32.mrb[0].mxu0
      %v5738 = vadd.f32 0.0, %v5737
      %v5739 = vpop.f32.mrb[0].mxu0
      %5740 = vdwg.mxu0
      %v5741 = vadd.f32 %v3948, %v5583
      %v5742 = vadd.f32 %v3953, %v5588
      %v5743 = vadd.f32 %v3958, %v5593
      %v5744 = vadd.f32 %v3963, %v5598
      %v5745 = vadd.f32 %v3968, %v5603
      %v5746 = vadd.f32 %v3973, %v5608
      %v5747 = vadd.f32 %v3978, %v5613
      %v5748 = vadd.f32 %v3983, %v5618
      %v5749 = vadd.f32 %v3988, %v5623
      %v5750 = vadd.f32 %v3993, %v5628
      %v5751 = vadd.f32 %v3998, %v5633
      %v5752 = vadd.f32 %v4003, %v5638
      %v5753 = vadd.f32 %v4008, %v5643
      %v5754 = vadd.f32 %v4013, %v5648
      %v5755 = vadd.f32 %v4018, %v5653
      %v5756 = vadd.f32 %v4023, %v5658
      %v5757 = vadd.f32 %v4028, %v5663
      %v5758 = vadd.f32 %v4033, %v5668
      %v5759 = vadd.f32 %v4038, %v5673
      %v5760 = vadd.f32 %v4043, %v5678
      %v5761 = vadd.f32 %v4048, %v5683
      %v5762 = vadd.f32 %v4053, %v5688
      %v5763 = vadd.f32 %v4058, %v5693
      %v5764 = vadd.f32 %v4063, %v5698
      %v5765 = vadd.f32 %v4068, %v5703
      %v5766 = vadd.f32 %v4073, %v5708
      %v5767 = vadd.f32 %v4078, %v5713
      %v5768 = vadd.f32 %v4083, %v5718
      %v5769 = vadd.f32 %v4088, %v5723
      %v5770 = vadd.f32 %v4093, %v5728
      %v5771 = vadd.f32 %v4098, %v5733
      %v5772 = vadd.f32 %v4103, %v5738
      %5773 = vrot.lane.b32.xlu0 %v851, 32
      %v5774 = vpop.permute.xlu0 %5773
      %5775 = vrot.lane.b32.xlu0 %v852, 32
      %v5776 = vpop.permute.xlu0 %5775
      %5777 = vrot.lane.b32.xlu0 %v853, 32
      %v5778 = vpop.permute.xlu0 %5777
      %5779 = vrot.lane.b32.xlu0 %v854, 32
      %v5780 = vpop.permute.xlu0 %5779
      %5781 = vrot.lane.b32.xlu0 %v855, 32
      %v5782 = vpop.permute.xlu0 %5781
      %5783 = vrot.lane.b32.xlu0 %v856, 32
      %v5784 = vpop.permute.xlu0 %5783
      %5785 = vrot.lane.b32.xlu0 %v857, 32
      %v5786 = vpop.permute.xlu0 %5785
      %5787 = vrot.lane.b32.xlu0 %v858, 32
      %v5788 = vpop.permute.xlu0 %5787
      %5789 = vrot.lane.b32.xlu0 %v859, 32
      %v5790 = vpop.permute.xlu0 %5789
      %5791 = vrot.lane.b32.xlu0 %v860, 32
      %v5792 = vpop.permute.xlu0 %5791
      %5793 = vrot.lane.b32.xlu0 %v861, 32
      %v5794 = vpop.permute.xlu0 %5793
      %5795 = vrot.lane.b32.xlu0 %v862, 32
      %v5796 = vpop.permute.xlu0 %5795
      %5797 = vrot.lane.b32.xlu0 %v863, 32
      %v5798 = vpop.permute.xlu0 %5797
      %5799 = vrot.lane.b32.xlu0 %v864, 32
      %v5800 = vpop.permute.xlu0 %5799
      %5801 = vrot.lane.b32.xlu0 %v865, 32
      %v5802 = vpop.permute.xlu0 %5801
      %5803 = vrot.lane.b32.xlu0 %v866, 32
      %v5804 = vpop.permute.xlu0 %5803
      %5805 = vrot.lane.b32.xlu0 %v867, 32
      %v5806 = vpop.permute.xlu0 %5805
      %5807 = vrot.lane.b32.xlu0 %v868, 32
      %v5808 = vpop.permute.xlu0 %5807
      %5809 = vrot.lane.b32.xlu0 %v869, 32
      %v5810 = vpop.permute.xlu0 %5809
      %5811 = vrot.lane.b32.xlu0 %v870, 32
      %v5812 = vpop.permute.xlu0 %5811
      %5813 = vrot.lane.b32.xlu0 %v871, 32
      %v5814 = vpop.permute.xlu0 %5813
      %5815 = vrot.lane.b32.xlu0 %v872, 32
      %v5816 = vpop.permute.xlu0 %5815
      %5817 = vrot.lane.b32.xlu0 %v873, 32
      %v5818 = vpop.permute.xlu0 %5817
      %5819 = vrot.lane.b32.xlu0 %v874, 32
      %v5820 = vpop.permute.xlu0 %5819
      %5821 = vrot.lane.b32.xlu0 %v875, 32
      %v5822 = vpop.permute.xlu0 %5821
      %5823 = vrot.lane.b32.xlu0 %v876, 32
      %v5824 = vpop.permute.xlu0 %5823
      %5825 = vrot.lane.b32.xlu0 %v877, 32
      %v5826 = vpop.permute.xlu0 %5825
      %5827 = vrot.lane.b32.xlu0 %v878, 32
      %v5828 = vpop.permute.xlu0 %5827
      %5829 = vrot.lane.b32.xlu0 %v879, 32
      %v5830 = vpop.permute.xlu0 %5829
      %5831 = vrot.lane.b32.xlu0 %v880, 32
      %v5832 = vpop.permute.xlu0 %5831
      %5833 = vrot.lane.b32.xlu0 %v881, 32
      %v5834 = vpop.permute.xlu0 %5833
      %5835 = vrot.lane.b32.xlu0 %v882, 32
      %v5836 = vpop.permute.xlu0 %5835
      %5837 = vrot.lane.b32.xlu0 %v438, 32
      %v5838 = vpop.permute.xlu0 %5837
      %5839 = vrot.lane.b32.xlu0 %v444, 32
      %v5840 = vpop.permute.xlu0 %5839
      %5841 = vrot.lane.b32.xlu0 %v450, 32
      %v5842 = vpop.permute.xlu0 %5841
      %5843 = vrot.lane.b32.xlu0 %v456, 32
      %v5844 = vpop.permute.xlu0 %5843
      %5845 = vrot.lane.b32.xlu0 %v462, 32
      %v5846 = vpop.permute.xlu0 %5845
      %5847 = vrot.lane.b32.xlu0 %v468, 32
      %v5848 = vpop.permute.xlu0 %5847
      %5849 = vrot.lane.b32.xlu0 %v474, 32
      %v5850 = vpop.permute.xlu0 %5849
      %5851 = vrot.lane.b32.xlu0 %v480, 32
      %v5852 = vpop.permute.xlu0 %5851
      %5853 = vrot.lane.b32.xlu0 %v486, 32
      %v5854 = vpop.permute.xlu0 %5853
      %5855 = vrot.lane.b32.xlu0 %v492, 32
      %v5856 = vpop.permute.xlu0 %5855
      %5857 = vrot.lane.b32.xlu0 %v498, 32
      %v5858 = vpop.permute.xlu0 %5857
      %5859 = vrot.lane.b32.xlu0 %v504, 32
      %v5860 = vpop.permute.xlu0 %5859
      %5861 = vrot.lane.b32.xlu0 %v510, 32
      %v5862 = vpop.permute.xlu0 %5861
      %5863 = vrot.lane.b32.xlu0 %v516, 32
      %v5864 = vpop.permute.xlu0 %5863
      %5865 = vrot.lane.b32.xlu0 %v522, 32
      %v5866 = vpop.permute.xlu0 %5865
      %5867 = vrot.lane.b32.xlu0 %v528, 32
      %v5868 = vpop.permute.xlu0 %5867
      %5869 = vrot.lane.b32.xlu0 %v534, 32
      %v5870 = vpop.permute.xlu0 %5869
      %5871 = vrot.lane.b32.xlu0 %v540, 32
      %v5872 = vpop.permute.xlu0 %5871
      %5873 = vrot.lane.b32.xlu0 %v546, 32
      %v5874 = vpop.permute.xlu0 %5873
      %5875 = vrot.lane.b32.xlu0 %v552, 32
      %v5876 = vpop.permute.xlu0 %5875
      %5877 = vrot.lane.b32.xlu0 %v558, 32
      %v5878 = vpop.permute.xlu0 %5877
      %5879 = vrot.lane.b32.xlu0 %v564, 32
      %v5880 = vpop.permute.xlu0 %5879
      %5881 = vrot.lane.b32.xlu0 %v570, 32
      %v5882 = vpop.permute.xlu0 %5881
      %5883 = vrot.lane.b32.xlu0 %v576, 32
      %v5884 = vpop.permute.xlu0 %5883
      %5885 = vrot.lane.b32.xlu0 %v582, 32
      %v5886 = vpop.permute.xlu0 %5885
      %5887 = vrot.lane.b32.xlu0 %v588, 32
      %v5888 = vpop.permute.xlu0 %5887
      %5889 = vrot.lane.b32.xlu0 %v594, 32
      %v5890 = vpop.permute.xlu0 %5889
      %5891 = vrot.lane.b32.xlu0 %v600, 32
      %v5892 = vpop.permute.xlu0 %5891
      %5893 = vrot.lane.b32.xlu0 %v606, 32
      %v5894 = vpop.permute.xlu0 %5893
      %5895 = vrot.lane.b32.xlu0 %v612, 32
      %v5896 = vpop.permute.xlu0 %5895
      %5897 = vrot.lane.b32.xlu0 %v618, 32
      %v5898 = vpop.permute.xlu0 %5897
      %5899 = vrot.lane.b32.xlu0 %v624, 32
      %v5900 = vpop.permute.xlu0 %5899
      %v5901 = vsel %vm963, %v5774, 0
      %v5903 = vsel %vm963, %v5776, 0
      %v5905 = vsel %vm963, %v5778, 0
      %v5907 = vsel %vm963, %v5780, 0
      %v5909 = vsel %vm963, %v5782, 0
      %v5911 = vsel %vm963, %v5784, 0
      %v5913 = vsel %vm963, %v5786, 0
      %v5915 = vsel %vm963, %v5788, 0
      %v5917 = vsel %vm963, %v5790, 0
      %v5919 = vsel %vm963, %v5792, 0
      %v5921 = vsel %vm963, %v5794, 0
      %v5923 = vsel %vm963, %v5796, 0
      %v5925 = vsel %vm963, %v5798, 0
      %v5927 = vsel %vm963, %v5800, 0
      %v5929 = vsel %vm963, %v5802, 0
      %v5931 = vsel %vm963, %v5804, 0
      %v5933 = vsel %vm963, %v5806, 0
      %v5935 = vsel %vm963, %v5808, 0
      %v5937 = vsel %vm963, %v5810, 0
      %v5939 = vsel %vm963, %v5812, 0
      %v5941 = vsel %vm963, %v5814, 0
      %v5943 = vsel %vm963, %v5816, 0
      %v5945 = vsel %vm963, %v5818, 0
      %v5947 = vsel %vm963, %v5820, 0
      %v5949 = vsel %vm963, %v5822, 0
      %v5951 = vsel %vm963, %v5824, 0
      %v5953 = vsel %vm963, %v5826, 0
      %v5955 = vsel %vm963, %v5828, 0
      %v5957 = vsel %vm963, %v5830, 0
      %v5959 = vsel %vm963, %v5832, 0
      %v5961 = vsel %vm963, %v5834, 0
      %v5963 = vsel %vm963, %v5836, 0
      %v5965 = vsel %vm963, %v5838, 0
      %v5967 = vsel %vm963, %v5840, 0
      %v5969 = vsel %vm963, %v5842, 0
      %v5971 = vsel %vm963, %v5844, 0
      %v5973 = vsel %vm963, %v5846, 0
      %v5975 = vsel %vm963, %v5848, 0
      %v5977 = vsel %vm963, %v5850, 0
      %v5979 = vsel %vm963, %v5852, 0
      %v5981 = vsel %vm963, %v5854, 0
      %v5983 = vsel %vm963, %v5856, 0
      %v5985 = vsel %vm963, %v5858, 0
      %v5987 = vsel %vm963, %v5860, 0
      %v5989 = vsel %vm963, %v5862, 0
      %v5991 = vsel %vm963, %v5864, 0
      %v5993 = vsel %vm963, %v5866, 0
      %v5995 = vsel %vm963, %v5868, 0
      %v5997 = vsel %vm963, %v5870, 0
      %v5999 = vsel %vm963, %v5872, 0
      %v6001 = vsel %vm963, %v5874, 0
      %v6003 = vsel %vm963, %v5876, 0
      %v6005 = vsel %vm963, %v5878, 0
      %v6007 = vsel %vm963, %v5880, 0
      %v6009 = vsel %vm963, %v5882, 0
      %v6011 = vsel %vm963, %v5884, 0
      %v6013 = vsel %vm963, %v5886, 0
      %v6015 = vsel %vm963, %v5888, 0
      %v6017 = vsel %vm963, %v5890, 0
      %v6019 = vsel %vm963, %v5892, 0
      %v6021 = vsel %vm963, %v5894, 0
      %v6023 = vsel %vm963, %v5896, 0
      %v6025 = vsel %vm963, %v5898, 0
      %v6027 = vsel %vm963, %v5900, 0
      %6029 = vmatprep.subr.mxu0 0.0
      %6030 = vmatpush1.xpose.msra.mxu0 %v5965
      %6031 = vmatprep.subr.mxu0 0.0
      %6032 = vmatpush1.xpose.msra.mxu0 %v5967
      %6033 = vmatprep.subr.mxu0 0.0
      %6034 = vmatpush1.xpose.msra.mxu0 %v5969
      %6035 = vmatprep.subr.mxu0 0.0
      %6036 = vmatpush1.xpose.msra.mxu0 %v5971
      %6037 = vmatprep.subr.mxu0 0.0
      %6038 = vmatpush1.xpose.msra.mxu0 %v5973
      %6039 = vmatprep.subr.mxu0 0.0
      %6040 = vmatpush1.xpose.msra.mxu0 %v5975
      %6041 = vmatprep.subr.mxu0 0.0
      %6042 = vmatpush1.xpose.msra.mxu0 %v5977
      %6043 = vmatprep.subr.mxu0 0.0
      %6044 = vmatpush1.xpose.msra.mxu0 %v5979
      %6045 = vmatprep.subr.mxu0 0.0
      %6046 = vmatpush1.xpose.msra.mxu0 %v5981
      %6047 = vmatprep.subr.mxu0 0.0
      %6048 = vmatpush1.xpose.msra.mxu0 %v5983
      %6049 = vmatprep.subr.mxu0 0.0
      %6050 = vmatpush1.xpose.msra.mxu0 %v5985
      %6051 = vmatprep.subr.mxu0 0.0
      %6052 = vmatpush1.xpose.msra.mxu0 %v5987
      %6053 = vmatprep.subr.mxu0 0.0
      %6054 = vmatpush1.xpose.msra.mxu0 %v5989
      %6055 = vmatprep.subr.mxu0 0.0
      %6056 = vmatpush1.xpose.msra.mxu0 %v5991
      %6057 = vmatprep.subr.mxu0 0.0
      %6058 = vmatpush1.xpose.msra.mxu0 %v5993
      %6059 = vmatprep.subr.mxu0 0.0
      %6060 = vmatpush1.xpose.msra.mxu0 %v5995
      %6061 = vmatprep.subr.mxu0 0.0
      %6062 = vmatpush1.xpose.msra.mxu0 %v5997
      %6063 = vmatprep.subr.mxu0 0.0
      %6064 = vmatpush1.xpose.msra.mxu0 %v5999
      %6065 = vmatprep.subr.mxu0 0.0
      %6066 = vmatpush1.xpose.msra.mxu0 %v6001
      %6067 = vmatprep.subr.mxu0 0.0
      %6068 = vmatpush1.xpose.msra.mxu0 %v6003
      %6069 = vmatprep.subr.mxu0 0.0
      %6070 = vmatpush1.xpose.msra.mxu0 %v6005
      %6071 = vmatprep.subr.mxu0 0.0
      %6072 = vmatpush1.xpose.msra.mxu0 %v6007
      %6073 = vmatprep.subr.mxu0 0.0
      %6074 = vmatpush1.xpose.msra.mxu0 %v6009
      %6075 = vmatprep.subr.mxu0 0.0
      %6076 = vmatpush1.xpose.msra.mxu0 %v6011
      %6077 = vmatprep.subr.mxu0 0.0
      %6078 = vmatpush1.xpose.msra.mxu0 %v6013
      %6079 = vmatprep.subr.mxu0 0.0
      %6080 = vmatpush1.xpose.msra.mxu0 %v6015
      %6081 = vmatprep.subr.mxu0 0.0
      %6082 = vmatpush1.xpose.msra.mxu0 %v6017
      %6083 = vmatprep.subr.mxu0 0.0
      %6084 = vmatpush1.xpose.msra.mxu0 %v6019
      %6085 = vmatprep.subr.mxu0 0.0
      %6086 = vmatpush1.xpose.msra.mxu0 %v6021
      %6087 = vmatprep.subr.mxu0 0.0
      %6088 = vmatpush1.xpose.msra.mxu0 %v6023
      %6089 = vmatprep.subr.mxu0 0.0
      %6090 = vmatpush1.xpose.msra.mxu0 %v6025
      %6091 = vmatprep.subr.mxu0 0.0
      %6092 = vmatpush1.xpose.msra.mxu0 %v6027
      %6093 = vmatprep.mubr.f32.mxu0 0.0
      %6094 = vmatmul.mubr.f32.gmra.mrb[0].mxu0 %v5901
      %v6095 = vpop.f32.mrb[0].mxu0
      %v6096 = vadd.f32 %v883, %v6095
      %v6097 = vpop.f32.mrb[0].mxu0
      %v6098 = vadd.f32 %v884, %v6097
      %6099 = vmatprep.mubr.f32.mxu0 0.0
      %6100 = vmatmul.mubr.f32.gmra.mrb[0].mxu0 %v5903
      %v6101 = vpop.f32.mrb[0].mxu0
      %v6102 = vadd.f32 %v885, %v6101
      %v6103 = vpop.f32.mrb[0].mxu0
      %v6104 = vadd.f32 %v886, %v6103
      %6105 = vmatprep.mubr.f32.mxu0 0.0
      %6106 = vmatmul.mubr.f32.gmra.mrb[0].mxu0 %v5905
      %v6107 = vpop.f32.mrb[0].mxu0
      %v6108 = vadd.f32 %v887, %v6107
      %v6109 = vpop.f32.mrb[0].mxu0
      %v6110 = vadd.f32 %v888, %v6109
      %6111 = vmatprep.mubr.f32.mxu0 0.0
      %6112 = vmatmul.mubr.f32.gmra.mrb[0].mxu0 %v5907
      %v6113 = vpop.f32.mrb[0].mxu0
      %v6114 = vadd.f32 %v889, %v6113
      %v6115 = vpop.f32.mrb[0].mxu0
      %v6116 = vadd.f32 %v890, %v6115
      %6117 = vmatprep.mubr.f32.mxu0 0.0
      %6118 = vmatmul.mubr.f32.gmra.mrb[0].mxu0 %v5909
      %v6119 = vpop.f32.mrb[0].mxu0
      %v6120 = vadd.f32 %v891, %v6119
      %v6121 = vpop.f32.mrb[0].mxu0
      %v6122 = vadd.f32 %v892, %v6121
      %6123 = vmatprep.mubr.f32.mxu0 0.0
      %6124 = vmatmul.mubr.f32.gmra.mrb[0].mxu0 %v5911
      %v6125 = vpop.f32.mrb[0].mxu0
      %v6126 = vadd.f32 %v893, %v6125
      %v6127 = vpop.f32.mrb[0].mxu0
      %v6128 = vadd.f32 %v894, %v6127
      %6129 = vmatprep.mubr.f32.mxu0 0.0
      %6130 = vmatmul.mubr.f32.gmra.mrb[0].mxu0 %v5913
      %v6131 = vpop.f32.mrb[0].mxu0
      %v6132 = vadd.f32 %v895, %v6131
      %v6133 = vpop.f32.mrb[0].mxu0
      %v6134 = vadd.f32 %v896, %v6133
      %6135 = vmatprep.mubr.f32.mxu0 0.0
      %6136 = vmatmul.mubr.f32.gmra.mrb[0].mxu0 %v5915
      %v6137 = vpop.f32.mrb[0].mxu0
      %v6138 = vadd.f32 %v897, %v6137
      %v6139 = vpop.f32.mrb[0].mxu0
      %v6140 = vadd.f32 %v898, %v6139
      %6141 = vmatprep.mubr.f32.mxu0 0.0
      %6142 = vmatmul.mubr.f32.gmra.mrb[0].mxu0 %v5917
      %v6143 = vpop.f32.mrb[0].mxu0
      %v6144 = vadd.f32 %v899, %v6143
      %v6145 = vpop.f32.mrb[0].mxu0
      %v6146 = vadd.f32 %v900, %v6145
      %6147 = vmatprep.mubr.f32.mxu0 0.0
      %6148 = vmatmul.mubr.f32.gmra.mrb[0].mxu0 %v5919
      %v6149 = vpop.f32.mrb[0].mxu0
      %v6150 = vadd.f32 %v901, %v6149
      %v6151 = vpop.f32.mrb[0].mxu0
      %v6152 = vadd.f32 %v902, %v6151
      %6153 = vmatprep.mubr.f32.mxu0 0.0
      %6154 = vmatmul.mubr.f32.gmra.mrb[0].mxu0 %v5921
      %v6155 = vpop.f32.mrb[0].mxu0
      %v6156 = vadd.f32 %v903, %v6155
      %v6157 = vpop.f32.mrb[0].mxu0
      %v6158 = vadd.f32 %v904, %v6157
      %6159 = vmatprep.mubr.f32.mxu0 0.0
      %6160 = vmatmul.mubr.f32.gmra.mrb[0].mxu0 %v5923
      %v6161 = vpop.f32.mrb[0].mxu0
      %v6162 = vadd.f32 %v905, %v6161
      %v6163 = vpop.f32.mrb[0].mxu0
      %v6164 = vadd.f32 %v906, %v6163
      %6165 = vmatprep.mubr.f32.mxu0 0.0
      %6166 = vmatmul.mubr.f32.gmra.mrb[0].mxu0 %v5925
      %v6167 = vpop.f32.mrb[0].mxu0
      %v6168 = vadd.f32 %v907, %v6167
      %v6169 = vpop.f32.mrb[0].mxu0
      %v6170 = vadd.f32 %v908, %v6169
      %6171 = vmatprep.mubr.f32.mxu0 0.0
      %6172 = vmatmul.mubr.f32.gmra.mrb[0].mxu0 %v5927
      %v6173 = vpop.f32.mrb[0].mxu0
      %v6174 = vadd.f32 %v909, %v6173
      %v6175 = vpop.f32.mrb[0].mxu0
      %v6176 = vadd.f32 %v910, %v6175
      %6177 = vmatprep.mubr.f32.mxu0 0.0
      %6178 = vmatmul.mubr.f32.gmra.mrb[0].mxu0 %v5929
      %v6179 = vpop.f32.mrb[0].mxu0
      %v6180 = vadd.f32 %v911, %v6179
      %v6181 = vpop.f32.mrb[0].mxu0
      %v6182 = vadd.f32 %v912, %v6181
      %6183 = vmatprep.mubr.f32.mxu0 0.0
      %6184 = vmatmul.mubr.f32.gmra.mrb[0].mxu0 %v5931
      %v6185 = vpop.f32.mrb[0].mxu0
      %v6186 = vadd.f32 %v913, %v6185
      %v6187 = vpop.f32.mrb[0].mxu0
      %v6188 = vadd.f32 %v914, %v6187
      %6189 = vmatprep.mubr.f32.mxu0 0.0
      %6190 = vmatmul.mubr.f32.gmra.mrb[0].mxu0 %v5933
      %v6191 = vpop.f32.mrb[0].mxu0
      %v6192 = vadd.f32 %v915, %v6191
      %v6193 = vpop.f32.mrb[0].mxu0
      %v6194 = vadd.f32 %v916, %v6193
      %6195 = vmatprep.mubr.f32.mxu0 0.0
      %6196 = vmatmul.mubr.f32.gmra.mrb[0].mxu0 %v5935
      %v6197 = vpop.f32.mrb[0].mxu0
      %v6198 = vadd.f32 %v917, %v6197
      %v6199 = vpop.f32.mrb[0].mxu0
      %v6200 = vadd.f32 %v918, %v6199
      %6201 = vmatprep.mubr.f32.mxu0 0.0
      %6202 = vmatmul.mubr.f32.gmra.mrb[0].mxu0 %v5937
      %v6203 = vpop.f32.mrb[0].mxu0
      %v6204 = vadd.f32 %v919, %v6203
      %v6205 = vpop.f32.mrb[0].mxu0
      %v6206 = vadd.f32 %v920, %v6205
      %6207 = vmatprep.mubr.f32.mxu0 0.0
      %6208 = vmatmul.mubr.f32.gmra.mrb[0].mxu0 %v5939
      %v6209 = vpop.f32.mrb[0].mxu0
      %v6210 = vadd.f32 %v921, %v6209
      %v6211 = vpop.f32.mrb[0].mxu0
      %v6212 = vadd.f32 %v922, %v6211
      %6213 = vmatprep.mubr.f32.mxu0 0.0
      %6214 = vmatmul.mubr.f32.gmra.mrb[0].mxu0 %v5941
      %v6215 = vpop.f32.mrb[0].mxu0
      %v6216 = vadd.f32 %v923, %v6215
      %v6217 = vpop.f32.mrb[0].mxu0
      %v6218 = vadd.f32 %v924, %v6217
      %6219 = vmatprep.mubr.f32.mxu0 0.0
      %6220 = vmatmul.mubr.f32.gmra.mrb[0].mxu0 %v5943
      %v6221 = vpop.f32.mrb[0].mxu0
      %v6222 = vadd.f32 %v925, %v6221
      %v6223 = vpop.f32.mrb[0].mxu0
      %v6224 = vadd.f32 %v926, %v6223
      %6225 = vmatprep.mubr.f32.mxu0 0.0
      %6226 = vmatmul.mubr.f32.gmra.mrb[0].mxu0 %v5945
      %v6227 = vpop.f32.mrb[0].mxu0
      %v6228 = vadd.f32 %v927, %v6227
      %v6229 = vpop.f32.mrb[0].mxu0
      %v6230 = vadd.f32 %v928, %v6229
      %6231 = vmatprep.mubr.f32.mxu0 0.0
      %6232 = vmatmul.mubr.f32.gmra.mrb[0].mxu0 %v5947
      %v6233 = vpop.f32.mrb[0].mxu0
      %v6234 = vadd.f32 %v929, %v6233
      %v6235 = vpop.f32.mrb[0].mxu0
      %v6236 = vadd.f32 %v930, %v6235
      %6237 = vmatprep.mubr.f32.mxu0 0.0
      %6238 = vmatmul.mubr.f32.gmra.mrb[0].mxu0 %v5949
      %v6239 = vpop.f32.mrb[0].mxu0
      %v6240 = vadd.f32 %v931, %v6239
      %v6241 = vpop.f32.mrb[0].mxu0
      %v6242 = vadd.f32 %v932, %v6241
      %6243 = vmatprep.mubr.f32.mxu0 0.0
      %6244 = vmatmul.mubr.f32.gmra.mrb[0].mxu0 %v5951
      %v6245 = vpop.f32.mrb[0].mxu0
      %v6246 = vadd.f32 %v933, %v6245
      %v6247 = vpop.f32.mrb[0].mxu0
      %v6248 = vadd.f32 %v934, %v6247
      %6249 = vmatprep.mubr.f32.mxu0 0.0
      %6250 = vmatmul.mubr.f32.gmra.mrb[0].mxu0 %v5953
      %v6251 = vpop.f32.mrb[0].mxu0
      %v6252 = vadd.f32 %v935, %v6251
      %v6253 = vpop.f32.mrb[0].mxu0
      %v6254 = vadd.f32 %v936, %v6253
      %6255 = vmatprep.mubr.f32.mxu0 0.0
      %6256 = vmatmul.mubr.f32.gmra.mrb[0].mxu0 %v5955
      %v6257 = vpop.f32.mrb[0].mxu0
      %v6258 = vadd.f32 %v937, %v6257
      %v6259 = vpop.f32.mrb[0].mxu0
      %v6260 = vadd.f32 %v938, %v6259
      %6261 = vmatprep.mubr.f32.mxu0 0.0
      %6262 = vmatmul.mubr.f32.gmra.mrb[0].mxu0 %v5957
      %v6263 = vpop.f32.mrb[0].mxu0
      %v6264 = vadd.f32 %v939, %v6263
      %v6265 = vpop.f32.mrb[0].mxu0
      %v6266 = vadd.f32 %v940, %v6265
      %6267 = vmatprep.mubr.f32.mxu0 0.0
      %6268 = vmatmul.mubr.f32.gmra.mrb[0].mxu0 %v5959
      %v6269 = vpop.f32.mrb[0].mxu0
      %v6270 = vadd.f32 %v941, %v6269
      %v6271 = vpop.f32.mrb[0].mxu0
      %v6272 = vadd.f32 %v942, %v6271
      %6273 = vmatprep.mubr.f32.mxu0 0.0
      %6274 = vmatmul.mubr.f32.gmra.mrb[0].mxu0 %v5961
      %v6275 = vpop.f32.mrb[0].mxu0
      %v6276 = vadd.f32 %v943, %v6275
      %v6277 = vpop.f32.mrb[0].mxu0
      %v6278 = vadd.f32 %v944, %v6277
      %6279 = vmatprep.mubr.f32.mxu0 0.0
      %6280 = vmatmul.mubr.f32.gmra.mrb[0].mxu0 %v5963
      %v6281 = vpop.f32.mrb[0].mxu0
      %v6282 = vadd.f32 %v945, %v6281
      %v6283 = vpop.f32.mrb[0].mxu0
      %v6284 = vadd.f32 %v946, %v6283
      %6285 = vdwg.mxu0
      %v6286 = vmax.f32 %v6096, %v6098
      %6287 = vmax.xlane.f32.xlu0 %v6286
      %v6288 = vpop.xlane.xlu0 %6287
      %v6289 = vmax.f32 %v6102, %v6104
      %6290 = vmax.xlane.f32.xlu0 %v6289
      %v6291 = vpop.xlane.xlu0 %6290
      %v6292 = vmax.f32 %v6108, %v6110
      %6293 = vmax.xlane.f32.xlu0 %v6292
      %v6294 = vpop.xlane.xlu0 %6293
      %v6295 = vmax.f32 %v6114, %v6116
      %6296 = vmax.xlane.f32.xlu0 %v6295
      %v6297 = vpop.xlane.xlu0 %6296
      %v6298 = vmax.f32 %v6120, %v6122
      %6299 = vmax.xlane.f32.xlu0 %v6298
      %v6300 = vpop.xlane.xlu0 %6299
      %v6301 = vmax.f32 %v6126, %v6128
      %6302 = vmax.xlane.f32.xlu0 %v6301
      %v6303 = vpop.xlane.xlu0 %6302
      %v6304 = vmax.f32 %v6132, %v6134
      %6305 = vmax.xlane.f32.xlu0 %v6304
      %v6306 = vpop.xlane.xlu0 %6305
      %v6307 = vmax.f32 %v6138, %v6140
      %6308 = vmax.xlane.f32.xlu0 %v6307
      %v6309 = vpop.xlane.xlu0 %6308
      %v6310 = vmax.f32 %v6144, %v6146
      %6311 = vmax.xlane.f32.xlu0 %v6310
      %v6312 = vpop.xlane.xlu0 %6311
      %v6313 = vmax.f32 %v6150, %v6152
      %6314 = vmax.xlane.f32.xlu0 %v6313
      %v6315 = vpop.xlane.xlu0 %6314
      %v6316 = vmax.f32 %v6156, %v6158
      %6317 = vmax.xlane.f32.xlu0 %v6316
      %v6318 = vpop.xlane.xlu0 %6317
      %v6319 = vmax.f32 %v6162, %v6164
      %6320 = vmax.xlane.f32.xlu0 %v6319
      %v6321 = vpop.xlane.xlu0 %6320
      %v6322 = vmax.f32 %v6168, %v6170
      %6323 = vmax.xlane.f32.xlu0 %v6322
      %v6324 = vpop.xlane.xlu0 %6323
      %v6325 = vmax.f32 %v6174, %v6176
      %6326 = vmax.xlane.f32.xlu0 %v6325
      %v6327 = vpop.xlane.xlu0 %6326
      %v6328 = vmax.f32 %v6180, %v6182
      %6329 = vmax.xlane.f32.xlu0 %v6328
      %v6330 = vpop.xlane.xlu0 %6329
      %v6331 = vmax.f32 %v6186, %v6188
      %6332 = vmax.xlane.f32.xlu0 %v6331
      %v6333 = vpop.xlane.xlu0 %6332
      %v6334 = vmax.f32 %v6192, %v6194
      %6335 = vmax.xlane.f32.xlu0 %v6334
      %v6336 = vpop.xlane.xlu0 %6335
      %v6337 = vmax.f32 %v6198, %v6200
      %6338 = vmax.xlane.f32.xlu0 %v6337
      %v6339 = vpop.xlane.xlu0 %6338
      %v6340 = vmax.f32 %v6204, %v6206
      %6341 = vmax.xlane.f32.xlu0 %v6340
      %v6342 = vpop.xlane.xlu0 %6341
      %v6343 = vmax.f32 %v6210, %v6212
      %6344 = vmax.xlane.f32.xlu0 %v6343
      %v6345 = vpop.xlane.xlu0 %6344
      %v6346 = vmax.f32 %v6216, %v6218
      %6347 = vmax.xlane.f32.xlu0 %v6346
      %v6348 = vpop.xlane.xlu0 %6347
      %v6349 = vmax.f32 %v6222, %v6224
      %6350 = vmax.xlane.f32.xlu0 %v6349
      %v6351 = vpop.xlane.xlu0 %6350
      %v6352 = vmax.f32 %v6228, %v6230
      %6353 = vmax.xlane.f32.xlu0 %v6352
      %v6354 = vpop.xlane.xlu0 %6353
      %v6355 = vmax.f32 %v6234, %v6236
      %6356 = vmax.xlane.f32.xlu0 %v6355
      %v6357 = vpop.xlane.xlu0 %6356
      %v6358 = vmax.f32 %v6240, %v6242
      %6359 = vmax.xlane.f32.xlu0 %v6358
      %v6360 = vpop.xlane.xlu0 %6359
      %v6361 = vmax.f32 %v6246, %v6248
      %6362 = vmax.xlane.f32.xlu0 %v6361
      %v6363 = vpop.xlane.xlu0 %6362
      %v6364 = vmax.f32 %v6252, %v6254
      %6365 = vmax.xlane.f32.xlu0 %v6364
      %v6366 = vpop.xlane.xlu0 %6365
      %v6367 = vmax.f32 %v6258, %v6260
      %6368 = vmax.xlane.f32.xlu0 %v6367
      %v6369 = vpop.xlane.xlu0 %6368
      %v6370 = vmax.f32 %v6264, %v6266
      %6371 = vmax.xlane.f32.xlu0 %v6370
      %v6372 = vpop.xlane.xlu0 %6371
      %v6373 = vmax.f32 %v6270, %v6272
      %6374 = vmax.xlane.f32.xlu0 %v6373
      %v6375 = vpop.xlane.xlu0 %6374
      %v6376 = vmax.f32 %v6276, %v6278
      %6377 = vmax.xlane.f32.xlu0 %v6376
      %v6378 = vpop.xlane.xlu0 %6377
      %v6379 = vmax.f32 %v6282, %v6284
      %6380 = vmax.xlane.f32.xlu0 %v6379
      %v6381 = vpop.xlane.xlu0 %6380
      %v6382 = vsub.f32 %v6096, %v6288
      %v6383 = vsub.f32 %v6098, %v6288
      %v6384 = vsub.f32 %v6102, %v6291
      %v6385 = vsub.f32 %v6104, %v6291
      %v6386 = vsub.f32 %v6108, %v6294
      %v6387 = vsub.f32 %v6110, %v6294
      %v6388 = vsub.f32 %v6114, %v6297
      %v6389 = vsub.f32 %v6116, %v6297
      %v6390 = vsub.f32 %v6120, %v6300
      %v6391 = vsub.f32 %v6122, %v6300
      %v6392 = vsub.f32 %v6126, %v6303
      %v6393 = vsub.f32 %v6128, %v6303
      %v6394 = vsub.f32 %v6132, %v6306
      %v6395 = vsub.f32 %v6134, %v6306
      %v6396 = vsub.f32 %v6138, %v6309
      %v6397 = vsub.f32 %v6140, %v6309
      %v6398 = vsub.f32 %v6144, %v6312
      %v6399 = vsub.f32 %v6146, %v6312
      %v6400 = vsub.f32 %v6150, %v6315
      %v6401 = vsub.f32 %v6152, %v6315
      %v6402 = vsub.f32 %v6156, %v6318
      %v6403 = vsub.f32 %v6158, %v6318
      %v6404 = vsub.f32 %v6162, %v6321
      %v6405 = vsub.f32 %v6164, %v6321
      %v6406 = vsub.f32 %v6168, %v6324
      %v6407 = vsub.f32 %v6170, %v6324
      %v6408 = vsub.f32 %v6174, %v6327
      %v6409 = vsub.f32 %v6176, %v6327
      %v6410 = vsub.f32 %v6180, %v6330
      %v6411 = vsub.f32 %v6182, %v6330
      %v6412 = vsub.f32 %v6186, %v6333
      %v6413 = vsub.f32 %v6188, %v6333
      %v6414 = vsub.f32 %v6192, %v6336
      %v6415 = vsub.f32 %v6194, %v6336
      %v6416 = vsub.f32 %v6198, %v6339
      %v6417 = vsub.f32 %v6200, %v6339
      %v6418 = vsub.f32 %v6204, %v6342
      %v6419 = vsub.f32 %v6206, %v6342
      %v6420 = vsub.f32 %v6210, %v6345
      %v6421 = vsub.f32 %v6212, %v6345
      %v6422 = vsub.f32 %v6216, %v6348
      %v6423 = vsub.f32 %v6218, %v6348
      %v6424 = vsub.f32 %v6222, %v6351
      %v6425 = vsub.f32 %v6224, %v6351
      %v6426 = vsub.f32 %v6228, %v6354
      %v6427 = vsub.f32 %v6230, %v6354
      %v6428 = vsub.f32 %v6234, %v6357
      %v6429 = vsub.f32 %v6236, %v6357
      %v6430 = vsub.f32 %v6240, %v6360
      %v6431 = vsub.f32 %v6242, %v6360
      %v6432 = vsub.f32 %v6246, %v6363
      %v6433 = vsub.f32 %v6248, %v6363
      %v6434 = vsub.f32 %v6252, %v6366
      %v6435 = vsub.f32 %v6254, %v6366
      %v6436 = vsub.f32 %v6258, %v6369
      %v6437 = vsub.f32 %v6260, %v6369
      %v6438 = vsub.f32 %v6264, %v6372
      %v6439 = vsub.f32 %v6266, %v6372
      %v6440 = vsub.f32 %v6270, %v6375
      %v6441 = vsub.f32 %v6272, %v6375
      %v6442 = vsub.f32 %v6276, %v6378
      %v6443 = vsub.f32 %v6278, %v6378
      %v6444 = vsub.f32 %v6282, %v6381
      %v6445 = vsub.f32 %v6284, %v6381
      %v6446 = vmul.f32 %v6382, 1.442695
      %v6447 = vpow.pop %v6446
      %v6448 = vmul.f32 %v6383, 1.442695
      %v6449 = vpow.pop %v6448
      %v6450 = vmul.f32 %v6384, 1.442695
      %v6451 = vpow.pop %v6450
      %v6452 = vmul.f32 %v6385, 1.442695
      %v6453 = vpow.pop %v6452
      %v6454 = vmul.f32 %v6386, 1.442695
      %v6455 = vpow.pop %v6454
      %v6456 = vmul.f32 %v6387, 1.442695
      %v6457 = vpow.pop %v6456
      %v6458 = vmul.f32 %v6388, 1.442695
      %v6459 = vpow.pop %v6458
      %v6460 = vmul.f32 %v6389, 1.442695
      %v6461 = vpow.pop %v6460
      %v6462 = vmul.f32 %v6390, 1.442695
      %v6463 = vpow.pop %v6462
      %v6464 = vmul.f32 %v6391, 1.442695
      %v6465 = vpow.pop %v6464
      %v6466 = vmul.f32 %v6392, 1.442695
      %v6467 = vpow.pop %v6466
      %v6468 = vmul.f32 %v6393, 1.442695
      %v6469 = vpow.pop %v6468
      %v6470 = vmul.f32 %v6394, 1.442695
      %v6471 = vpow.pop %v6470
      %v6472 = vmul.f32 %v6395, 1.442695
      %v6473 = vpow.pop %v6472
      %v6474 = vmul.f32 %v6396, 1.442695
      %v6475 = vpow.pop %v6474
      %v6476 = vmul.f32 %v6397, 1.442695
      %v6477 = vpow.pop %v6476
      %v6478 = vmul.f32 %v6398, 1.442695
      %v6479 = vpow.pop %v6478
      %v6480 = vmul.f32 %v6399, 1.442695
      %v6481 = vpow.pop %v6480
      %v6482 = vmul.f32 %v6400, 1.442695
      %v6483 = vpow.pop %v6482
      %v6484 = vmul.f32 %v6401, 1.442695
      %v6485 = vpow.pop %v6484
      %v6486 = vmul.f32 %v6402, 1.442695
      %v6487 = vpow.pop %v6486
      %v6488 = vmul.f32 %v6403, 1.442695
      %v6489 = vpow.pop %v6488
      %v6490 = vmul.f32 %v6404, 1.442695
      %v6491 = vpow.pop %v6490
      %v6492 = vmul.f32 %v6405, 1.442695
      %v6493 = vpow.pop %v6492
      %v6494 = vmul.f32 %v6406, 1.442695
      %v6495 = vpow.pop %v6494
      %v6496 = vmul.f32 %v6407, 1.442695
      %v6497 = vpow.pop %v6496
      %v6498 = vmul.f32 %v6408, 1.442695
      %v6499 = vpow.pop %v6498
      %v6500 = vmul.f32 %v6409, 1.442695
      %v6501 = vpow.pop %v6500
      %v6502 = vmul.f32 %v6410, 1.442695
      %v6503 = vpow.pop %v6502
      %v6504 = vmul.f32 %v6411, 1.442695
      %v6505 = vpow.pop %v6504
      %v6506 = vmul.f32 %v6412, 1.442695
      %v6507 = vpow.pop %v6506
      %v6508 = vmul.f32 %v6413, 1.442695
      %v6509 = vpow.pop %v6508
      %v6510 = vmul.f32 %v6414, 1.442695
      %v6511 = vpow.pop %v6510
      %v6512 = vmul.f32 %v6415, 1.442695
      %v6513 = vpow.pop %v6512
      %v6514 = vmul.f32 %v6416, 1.442695
      %v6515 = vpow.pop %v6514
      %v6516 = vmul.f32 %v6417, 1.442695
      %v6517 = vpow.pop %v6516
      %v6518 = vmul.f32 %v6418, 1.442695
      %v6519 = vpow.pop %v6518
      %v6520 = vmul.f32 %v6419, 1.442695
      %v6521 = vpow.pop %v6520
      %v6522 = vmul.f32 %v6420, 1.442695
      %v6523 = vpow.pop %v6522
      %v6524 = vmul.f32 %v6421, 1.442695
      %v6525 = vpow.pop %v6524
      %v6526 = vmul.f32 %v6422, 1.442695
      %v6527 = vpow.pop %v6526
      %v6528 = vmul.f32 %v6423, 1.442695
      %v6529 = vpow.pop %v6528
      %v6530 = vmul.f32 %v6424, 1.442695
      %v6531 = vpow.pop %v6530
      %v6532 = vmul.f32 %v6425, 1.442695
      %v6533 = vpow.pop %v6532
      %v6534 = vmul.f32 %v6426, 1.442695
      %v6535 = vpow.pop %v6534
      %v6536 = vmul.f32 %v6427, 1.442695
      %v6537 = vpow.pop %v6536
      %v6538 = vmul.f32 %v6428, 1.442695
      %v6539 = vpow.pop %v6538
      %v6540 = vmul.f32 %v6429, 1.442695
      %v6541 = vpow.pop %v6540
      %v6542 = vmul.f32 %v6430, 1.442695
      %v6543 = vpow.pop %v6542
      %v6544 = vmul.f32 %v6431, 1.442695
      %v6545 = vpow.pop %v6544
      %v6546 = vmul.f32 %v6432, 1.442695
      %v6547 = vpow.pop %v6546
      %v6548 = vmul.f32 %v6433, 1.442695
      %v6549 = vpow.pop %v6548
      %v6550 = vmul.f32 %v6434, 1.442695
      %v6551 = vpow.pop %v6550
      %v6552 = vmul.f32 %v6435, 1.442695
      %v6553 = vpow.pop %v6552
      %v6554 = vmul.f32 %v6436, 1.442695
      %v6555 = vpow.pop %v6554
      %v6556 = vmul.f32 %v6437, 1.442695
      %v6557 = vpow.pop %v6556
      %v6558 = vmul.f32 %v6438, 1.442695
      %v6559 = vpow.pop %v6558
      %v6560 = vmul.f32 %v6439, 1.442695
      %v6561 = vpow.pop %v6560
      %v6562 = vmul.f32 %v6440, 1.442695
      %v6563 = vpow.pop %v6562
      %v6564 = vmul.f32 %v6441, 1.442695
      %v6565 = vpow.pop %v6564
      %v6566 = vmul.f32 %v6442, 1.442695
      %v6567 = vpow.pop %v6566
      %v6568 = vmul.f32 %v6443, 1.442695
      %v6569 = vpow.pop %v6568
      %v6570 = vmul.f32 %v6444, 1.442695
      %v6571 = vpow.pop %v6570
      %v6572 = vmul.f32 %v6445, 1.442695
      %v6573 = vpow.pop %v6572
      %v6574 = vadd.f32 %v6447, %v6449
      %6575 = vadd.xlane.f32.xlu0 %v6574
      %v6576 = vpop.xlane.xlu0 %6575
      %v6577 = vadd.f32 %v6451, %v6453
      %6578 = vadd.xlane.f32.xlu0 %v6577
      %v6579 = vpop.xlane.xlu0 %6578
      %v6580 = vadd.f32 %v6455, %v6457
      %6581 = vadd.xlane.f32.xlu0 %v6580
      %v6582 = vpop.xlane.xlu0 %6581
      %v6583 = vadd.f32 %v6459, %v6461
      %6584 = vadd.xlane.f32.xlu0 %v6583
      %v6585 = vpop.xlane.xlu0 %6584
      %v6586 = vadd.f32 %v6463, %v6465
      %6587 = vadd.xlane.f32.xlu0 %v6586
      %v6588 = vpop.xlane.xlu0 %6587
      %v6589 = vadd.f32 %v6467, %v6469
      %6590 = vadd.xlane.f32.xlu0 %v6589
      %v6591 = vpop.xlane.xlu0 %6590
      %v6592 = vadd.f32 %v6471, %v6473
      %6593 = vadd.xlane.f32.xlu0 %v6592
      %v6594 = vpop.xlane.xlu0 %6593
      %v6595 = vadd.f32 %v6475, %v6477
      %6596 = vadd.xlane.f32.xlu0 %v6595
      %v6597 = vpop.xlane.xlu0 %6596
      %v6598 = vadd.f32 %v6479, %v6481
      %6599 = vadd.xlane.f32.xlu0 %v6598
      %v6600 = vpop.xlane.xlu0 %6599
      %v6601 = vadd.f32 %v6483, %v6485
      %6602 = vadd.xlane.f32.xlu0 %v6601
      %v6603 = vpop.xlane.xlu0 %6602
      %v6604 = vadd.f32 %v6487, %v6489
      %6605 = vadd.xlane.f32.xlu0 %v6604
      %v6606 = vpop.xlane.xlu0 %6605
      %v6607 = vadd.f32 %v6491, %v6493
      %6608 = vadd.xlane.f32.xlu0 %v6607
      %v6609 = vpop.xlane.xlu0 %6608
      %v6610 = vadd.f32 %v6495, %v6497
      %6611 = vadd.xlane.f32.xlu0 %v6610
      %v6612 = vpop.xlane.xlu0 %6611
      %v6613 = vadd.f32 %v6499, %v6501
      %6614 = vadd.xlane.f32.xlu0 %v6613
      %v6615 = vpop.xlane.xlu0 %6614
      %v6616 = vadd.f32 %v6503, %v6505
      %6617 = vadd.xlane.f32.xlu0 %v6616
      %v6618 = vpop.xlane.xlu0 %6617
      %v6619 = vadd.f32 %v6507, %v6509
      %6620 = vadd.xlane.f32.xlu0 %v6619
      %v6621 = vpop.xlane.xlu0 %6620
      %v6622 = vadd.f32 %v6511, %v6513
      %6623 = vadd.xlane.f32.xlu0 %v6622
      %v6624 = vpop.xlane.xlu0 %6623
      %v6625 = vadd.f32 %v6515, %v6517
      %6626 = vadd.xlane.f32.xlu0 %v6625
      %v6627 = vpop.xlane.xlu0 %6626
      %v6628 = vadd.f32 %v6519, %v6521
      %6629 = vadd.xlane.f32.xlu0 %v6628
      %v6630 = vpop.xlane.xlu0 %6629
      %v6631 = vadd.f32 %v6523, %v6525
      %6632 = vadd.xlane.f32.xlu0 %v6631
      %v6633 = vpop.xlane.xlu0 %6632
      %v6634 = vadd.f32 %v6527, %v6529
      %6635 = vadd.xlane.f32.xlu0 %v6634
      %v6636 = vpop.xlane.xlu0 %6635
      %v6637 = vadd.f32 %v6531, %v6533
      %6638 = vadd.xlane.f32.xlu0 %v6637
      %v6639 = vpop.xlane.xlu0 %6638
      %v6640 = vadd.f32 %v6535, %v6537
      %6641 = vadd.xlane.f32.xlu0 %v6640
      %v6642 = vpop.xlane.xlu0 %6641
      %v6643 = vadd.f32 %v6539, %v6541
      %6644 = vadd.xlane.f32.xlu0 %v6643
      %v6645 = vpop.xlane.xlu0 %6644
      %v6646 = vadd.f32 %v6543, %v6545
      %6647 = vadd.xlane.f32.xlu0 %v6646
      %v6648 = vpop.xlane.xlu0 %6647
      %v6649 = vadd.f32 %v6547, %v6549
      %6650 = vadd.xlane.f32.xlu0 %v6649
      %v6651 = vpop.xlane.xlu0 %6650
      %v6652 = vadd.f32 %v6551, %v6553
      %6653 = vadd.xlane.f32.xlu0 %v6652
      %v6654 = vpop.xlane.xlu0 %6653
      %v6655 = vadd.f32 %v6555, %v6557
      %6656 = vadd.xlane.f32.xlu0 %v6655
      %v6657 = vpop.xlane.xlu0 %6656
      %v6658 = vadd.f32 %v6559, %v6561
      %6659 = vadd.xlane.f32.xlu0 %v6658
      %v6660 = vpop.xlane.xlu0 %6659
      %v6661 = vadd.f32 %v6563, %v6565
      %6662 = vadd.xlane.f32.xlu0 %v6661
      %v6663 = vpop.xlane.xlu0 %6662
      %v6664 = vadd.f32 %v6567, %v6569
      %6665 = vadd.xlane.f32.xlu0 %v6664
      %v6666 = vpop.xlane.xlu0 %6665
      %v6667 = vadd.f32 %v6571, %v6573
      %6668 = vadd.xlane.f32.xlu0 %v6667
      %v6669 = vpop.xlane.xlu0 %6668
      %v6670 = vrcp.pop %v6576
      %v6671 = vrcp.pop %v6579
      %v6672 = vrcp.pop %v6582
      %v6673 = vrcp.pop %v6585
      %v6674 = vrcp.pop %v6588
      %v6675 = vrcp.pop %v6591
      %v6676 = vrcp.pop %v6594
      %v6677 = vrcp.pop %v6597
      %v6678 = vrcp.pop %v6600
      %v6679 = vrcp.pop %v6603
      %v6680 = vrcp.pop %v6606
      %v6681 = vrcp.pop %v6609
      %v6682 = vrcp.pop %v6612
      %v6683 = vrcp.pop %v6615
      %v6684 = vrcp.pop %v6618
      %v6685 = vrcp.pop %v6621
      %v6686 = vrcp.pop %v6624
      %v6687 = vrcp.pop %v6627
      %v6688 = vrcp.pop %v6630
      %v6689 = vrcp.pop %v6633
      %v6690 = vrcp.pop %v6636
      %v6691 = vrcp.pop %v6639
      %v6692 = vrcp.pop %v6642
      %v6693 = vrcp.pop %v6645
      %v6694 = vrcp.pop %v6648
      %v6695 = vrcp.pop %v6651
      %v6696 = vrcp.pop %v6654
      %v6697 = vrcp.pop %v6657
      %v6698 = vrcp.pop %v6660
      %v6699 = vrcp.pop %v6663
      %v6700 = vrcp.pop %v6666
      %v6701 = vrcp.pop %v6669
      %v6702 = vmul.f32 %v6447, %v6670
      %v6703 = vmul.f32 %v6449, %v6670
      %v6704 = vmul.f32 %v6451, %v6671
      %v6705 = vmul.f32 %v6453, %v6671
      %v6706 = vmul.f32 %v6455, %v6672
      %v6707 = vmul.f32 %v6457, %v6672
      %v6708 = vmul.f32 %v6459, %v6673
      %v6709 = vmul.f32 %v6461, %v6673
      %v6710 = vmul.f32 %v6463, %v6674
      %v6711 = vmul.f32 %v6465, %v6674
      %v6712 = vmul.f32 %v6467, %v6675
      %v6713 = vmul.f32 %v6469, %v6675
      %v6714 = vmul.f32 %v6471, %v6676
      %v6715 = vmul.f32 %v6473, %v6676
      %v6716 = vmul.f32 %v6475, %v6677
      %v6717 = vmul.f32 %v6477, %v6677
      %v6718 = vmul.f32 %v6479, %v6678
      %v6719 = vmul.f32 %v6481, %v6678
      %v6720 = vmul.f32 %v6483, %v6679
      %v6721 = vmul.f32 %v6485, %v6679
      %v6722 = vmul.f32 %v6487, %v6680
      %v6723 = vmul.f32 %v6489, %v6680
      %v6724 = vmul.f32 %v6491, %v6681
      %v6725 = vmul.f32 %v6493, %v6681
      %v6726 = vmul.f32 %v6495, %v6682
      %v6727 = vmul.f32 %v6497, %v6682
      %v6728 = vmul.f32 %v6499, %v6683
      %v6729 = vmul.f32 %v6501, %v6683
      %v6730 = vmul.f32 %v6503, %v6684
      %v6731 = vmul.f32 %v6505, %v6684
      %v6732 = vmul.f32 %v6507, %v6685
      %v6733 = vmul.f32 %v6509, %v6685
      %v6734 = vmul.f32 %v6511, %v6686
      %v6735 = vmul.f32 %v6513, %v6686
      %v6736 = vmul.f32 %v6515, %v6687
      %v6737 = vmul.f32 %v6517, %v6687
      %v6738 = vmul.f32 %v6519, %v6688
      %v6739 = vmul.f32 %v6521, %v6688
      %v6740 = vmul.f32 %v6523, %v6689
      %v6741 = vmul.f32 %v6525, %v6689
      %v6742 = vmul.f32 %v6527, %v6690
      %v6743 = vmul.f32 %v6529, %v6690
      %v6744 = vmul.f32 %v6531, %v6691
      %v6745 = vmul.f32 %v6533, %v6691
      %v6746 = vmul.f32 %v6535, %v6692
      %v6747 = vmul.f32 %v6537, %v6692
      %v6748 = vmul.f32 %v6539, %v6693
      %v6749 = vmul.f32 %v6541, %v6693
      %v6750 = vmul.f32 %v6543, %v6694
      %v6751 = vmul.f32 %v6545, %v6694
      %v6752 = vmul.f32 %v6547, %v6695
      %v6753 = vmul.f32 %v6549, %v6695
      %v6754 = vmul.f32 %v6551, %v6696
      %v6755 = vmul.f32 %v6553, %v6696
      %v6756 = vmul.f32 %v6555, %v6697
      %v6757 = vmul.f32 %v6557, %v6697
      %v6758 = vmul.f32 %v6559, %v6698
      %v6759 = vmul.f32 %v6561, %v6698
      %v6760 = vmul.f32 %v6563, %v6699
      %v6761 = vmul.f32 %v6565, %v6699
      %v6762 = vmul.f32 %v6567, %v6700
      %v6763 = vmul.f32 %v6569, %v6700
      %v6764 = vmul.f32 %v6571, %v6701
      %v6765 = vmul.f32 %v6573, %v6701
      %6766 = vrot.lane.b32.xlu0 %v693, 32
      %v6767 = vpop.permute.xlu0 %6766
      %6768 = vrot.lane.b32.xlu0 %v698, 32
      %v6769 = vpop.permute.xlu0 %6768
      %6770 = vrot.lane.b32.xlu0 %v703, 32
      %v6771 = vpop.permute.xlu0 %6770
      %6772 = vrot.lane.b32.xlu0 %v708, 32
      %v6773 = vpop.permute.xlu0 %6772
      %6774 = vrot.lane.b32.xlu0 %v713, 32
      %v6775 = vpop.permute.xlu0 %6774
      %6776 = vrot.lane.b32.xlu0 %v718, 32
      %v6777 = vpop.permute.xlu0 %6776
      %6778 = vrot.lane.b32.xlu0 %v723, 32
      %v6779 = vpop.permute.xlu0 %6778
      %6780 = vrot.lane.b32.xlu0 %v728, 32
      %v6781 = vpop.permute.xlu0 %6780
      %6782 = vrot.lane.b32.xlu0 %v733, 32
      %v6783 = vpop.permute.xlu0 %6782
      %6784 = vrot.lane.b32.xlu0 %v738, 32
      %v6785 = vpop.permute.xlu0 %6784
      %6786 = vrot.lane.b32.xlu0 %v743, 32
      %v6787 = vpop.permute.xlu0 %6786
      %6788 = vrot.lane.b32.xlu0 %v748, 32
      %v6789 = vpop.permute.xlu0 %6788
      %6790 = vrot.lane.b32.xlu0 %v753, 32
      %v6791 = vpop.permute.xlu0 %6790
      %6792 = vrot.lane.b32.xlu0 %v758, 32
      %v6793 = vpop.permute.xlu0 %6792
      %6794 = vrot.lane.b32.xlu0 %v763, 32
      %v6795 = vpop.permute.xlu0 %6794
      %6796 = vrot.lane.b32.xlu0 %v768, 32
      %v6797 = vpop.permute.xlu0 %6796
      %6798 = vrot.lane.b32.xlu0 %v773, 32
      %v6799 = vpop.permute.xlu0 %6798
      %6800 = vrot.lane.b32.xlu0 %v778, 32
      %v6801 = vpop.permute.xlu0 %6800
      %6802 = vrot.lane.b32.xlu0 %v783, 32
      %v6803 = vpop.permute.xlu0 %6802
      %6804 = vrot.lane.b32.xlu0 %v788, 32
      %v6805 = vpop.permute.xlu0 %6804
      %6806 = vrot.lane.b32.xlu0 %v793, 32
      %v6807 = vpop.permute.xlu0 %6806
      %6808 = vrot.lane.b32.xlu0 %v798, 32
      %v6809 = vpop.permute.xlu0 %6808
      %6810 = vrot.lane.b32.xlu0 %v803, 32
      %v6811 = vpop.permute.xlu0 %6810
      %6812 = vrot.lane.b32.xlu0 %v808, 32
      %v6813 = vpop.permute.xlu0 %6812
      %6814 = vrot.lane.b32.xlu0 %v813, 32
      %v6815 = vpop.permute.xlu0 %6814
      %6816 = vrot.lane.b32.xlu0 %v818, 32
      %v6817 = vpop.permute.xlu0 %6816
      %6818 = vrot.lane.b32.xlu0 %v823, 32
      %v6819 = vpop.permute.xlu0 %6818
      %6820 = vrot.lane.b32.xlu0 %v828, 32
      %v6821 = vpop.permute.xlu0 %6820
      %6822 = vrot.lane.b32.xlu0 %v833, 32
      %v6823 = vpop.permute.xlu0 %6822
      %6824 = vrot.lane.b32.xlu0 %v838, 32
      %v6825 = vpop.permute.xlu0 %6824
      %6826 = vrot.lane.b32.xlu0 %v843, 32
      %v6827 = vpop.permute.xlu0 %6826
      %6828 = vrot.lane.b32.xlu0 %v848, 32
      %v6829 = vpop.permute.xlu0 %6828
      %6862 = vmatprep.subr.mxu0 0.0
      %6863 = vmatpush1.msra.mxu0 %v6767
      %6864 = vmatprep.subr.mxu0 0.0
      %6865 = vmatpush1.msra.mxu0 %v6769
      %6866 = vmatprep.subr.mxu0 0.0
      %6867 = vmatpush1.msra.mxu0 %v6771
      %6868 = vmatprep.subr.mxu0 0.0
      %6869 = vmatpush1.msra.mxu0 %v6773
      %6870 = vmatprep.subr.mxu0 0.0
      %6871 = vmatpush1.msra.mxu0 %v6775
      %6872 = vmatprep.subr.mxu0 0.0
      %6873 = vmatpush1.msra.mxu0 %v6777
      %6874 = vmatprep.subr.mxu0 0.0
      %6875 = vmatpush1.msra.mxu0 %v6779
      %6876 = vmatprep.subr.mxu0 0.0
      %6877 = vmatpush1.msra.mxu0 %v6781
      %6878 = vmatprep.subr.mxu0 0.0
      %6879 = vmatpush1.msra.mxu0 %v6783
      %6880 = vmatprep.subr.mxu0 0.0
      %6881 = vmatpush1.msra.mxu0 %v6785
      %6882 = vmatprep.subr.mxu0 0.0
      %6883 = vmatpush1.msra.mxu0 %v6787
      %6884 = vmatprep.subr.mxu0 0.0
      %6885 = vmatpush1.msra.mxu0 %v6789
      %6886 = vmatprep.subr.mxu0 0.0
      %6887 = vmatpush1.msra.mxu0 %v6791
      %6888 = vmatprep.subr.mxu0 0.0
      %6889 = vmatpush1.msra.mxu0 %v6793
      %6890 = vmatprep.subr.mxu0 0.0
      %6891 = vmatpush1.msra.mxu0 %v6795
      %6892 = vmatprep.subr.mxu0 0.0
      %6893 = vmatpush1.msra.mxu0 %v6797
      %6894 = vmatprep.subr.mxu0 0.0
      %6895 = vmatpush1.msra.mxu0 %v6799
      %6896 = vmatprep.subr.mxu0 0.0
      %6897 = vmatpush1.msra.mxu0 %v6801
      %6898 = vmatprep.subr.mxu0 0.0
      %6899 = vmatpush1.msra.mxu0 %v6803
      %6900 = vmatprep.subr.mxu0 0.0
      %6901 = vmatpush1.msra.mxu0 %v6805
      %6902 = vmatprep.subr.mxu0 0.0
      %6903 = vmatpush1.msra.mxu0 %v6807
      %6904 = vmatprep.subr.mxu0 0.0
      %6905 = vmatpush1.msra.mxu0 %v6809
      %6906 = vmatprep.subr.mxu0 0.0
      %6907 = vmatpush1.msra.mxu0 %v6811
      %6908 = vmatprep.subr.mxu0 0.0
      %6909 = vmatpush1.msra.mxu0 %v6813
      %6910 = vmatprep.subr.mxu0 0.0
      %6911 = vmatpush1.msra.mxu0 %v6815
      %6912 = vmatprep.subr.mxu0 0.0
      %6913 = vmatpush1.msra.mxu0 %v6817
      %6914 = vmatprep.subr.mxu0 0.0
      %6915 = vmatpush1.msra.mxu0 %v6819
      %6916 = vmatprep.subr.mxu0 0.0
      %6917 = vmatpush1.msra.mxu0 %v6821
      %6918 = vmatprep.subr.mxu0 0.0
      %6919 = vmatpush1.msra.mxu0 %v6823
      %6920 = vmatprep.subr.mxu0 0.0
      %6921 = vmatpush1.msra.mxu0 %v6825
      %6922 = vmatprep.subr.mxu0 0.0
      %6923 = vmatpush1.msra.mxu0 %v6827
      %6924 = vmatprep.subr.mxu0 0.0
      %6925 = vmatpush1.msra.mxu0 %v6829
      %6926 = vmatprep.mubr.f32.mxu0 %v6703
      %6927 = vmatmul.mubr.f32.gmra.mrb[0].mxu0 %v6702
      %v6928 = vpop.f32.mrb[0].mxu0
      %v6929 = vadd.f32 0.0, %v6928
      %v6930 = vpop.f32.mrb[0].mxu0
      %6931 = vmatprep.mubr.f32.mxu0 %v6705
      %6932 = vmatmul.mubr.f32.gmra.mrb[0].mxu0 %v6704
      %v6933 = vpop.f32.mrb[0].mxu0
      %v6934 = vadd.f32 0.0, %v6933
      %v6935 = vpop.f32.mrb[0].mxu0
      %6936 = vmatprep.mubr.f32.mxu0 %v6707
      %6937 = vmatmul.mubr.f32.gmra.mrb[0].mxu0 %v6706
      %v6938 = vpop.f32.mrb[0].mxu0
      %v6939 = vadd.f32 0.0, %v6938
      %v6940 = vpop.f32.mrb[0].mxu0
      %6941 = vmatprep.mubr.f32.mxu0 %v6709
      %6942 = vmatmul.mubr.f32.gmra.mrb[0].mxu0 %v6708
      %v6943 = vpop.f32.mrb[0].mxu0
      %v6944 = vadd.f32 0.0, %v6943
      %v6945 = vpop.f32.mrb[0].mxu0
      %6946 = vmatprep.mubr.f32.mxu0 %v6711
      %6947 = vmatmul.mubr.f32.gmra.mrb[0].mxu0 %v6710
      %v6948 = vpop.f32.mrb[0].mxu0
      %v6949 = vadd.f32 0.0, %v6948
      %v6950 = vpop.f32.mrb[0].mxu0
      %6951 = vmatprep.mubr.f32.mxu0 %v6713
      %6952 = vmatmul.mubr.f32.gmra.mrb[0].mxu0 %v6712
      %v6953 = vpop.f32.mrb[0].mxu0
      %v6954 = vadd.f32 0.0, %v6953
      %v6955 = vpop.f32.mrb[0].mxu0
      %6956 = vmatprep.mubr.f32.mxu0 %v6715
      %6957 = vmatmul.mubr.f32.gmra.mrb[0].mxu0 %v6714
      %v6958 = vpop.f32.mrb[0].mxu0
      %v6959 = vadd.f32 0.0, %v6958
      %v6960 = vpop.f32.mrb[0].mxu0
      %6961 = vmatprep.mubr.f32.mxu0 %v6717
      %6962 = vmatmul.mubr.f32.gmra.mrb[0].mxu0 %v6716
      %v6963 = vpop.f32.mrb[0].mxu0
      %v6964 = vadd.f32 0.0, %v6963
      %v6965 = vpop.f32.mrb[0].mxu0
      %6966 = vmatprep.mubr.f32.mxu0 %v6719
      %6967 = vmatmul.mubr.f32.gmra.mrb[0].mxu0 %v6718
      %v6968 = vpop.f32.mrb[0].mxu0
      %v6969 = vadd.f32 0.0, %v6968
      %v6970 = vpop.f32.mrb[0].mxu0
      %6971 = vmatprep.mubr.f32.mxu0 %v6721
      %6972 = vmatmul.mubr.f32.gmra.mrb[0].mxu0 %v6720
      %v6973 = vpop.f32.mrb[0].mxu0
      %v6974 = vadd.f32 0.0, %v6973
      %v6975 = vpop.f32.mrb[0].mxu0
      %6976 = vmatprep.mubr.f32.mxu0 %v6723
      %6977 = vmatmul.mubr.f32.gmra.mrb[0].mxu0 %v6722
      %v6978 = vpop.f32.mrb[0].mxu0
      %v6979 = vadd.f32 0.0, %v6978
      %v6980 = vpop.f32.mrb[0].mxu0
      %6981 = vmatprep.mubr.f32.mxu0 %v6725
      %6982 = vmatmul.mubr.f32.gmra.mrb[0].mxu0 %v6724
      %v6983 = vpop.f32.mrb[0].mxu0
      %v6984 = vadd.f32 0.0, %v6983
      %v6985 = vpop.f32.mrb[0].mxu0
      %6986 = vmatprep.mubr.f32.mxu0 %v6727
      %6987 = vmatmul.mubr.f32.gmra.mrb[0].mxu0 %v6726
      %v6988 = vpop.f32.mrb[0].mxu0
      %v6989 = vadd.f32 0.0, %v6988
      %v6990 = vpop.f32.mrb[0].mxu0
      %6991 = vmatprep.mubr.f32.mxu0 %v6729
      %6992 = vmatmul.mubr.f32.gmra.mrb[0].mxu0 %v6728
      %v6993 = vpop.f32.mrb[0].mxu0
      %v6994 = vadd.f32 0.0, %v6993
      %v6995 = vpop.f32.mrb[0].mxu0
      %6996 = vmatprep.mubr.f32.mxu0 %v6731
      %6997 = vmatmul.mubr.f32.gmra.mrb[0].mxu0 %v6730
      %v6998 = vpop.f32.mrb[0].mxu0
      %v6999 = vadd.f32 0.0, %v6998
      %v7000 = vpop.f32.mrb[0].mxu0
      %7001 = vmatprep.mubr.f32.mxu0 %v6733
      %7002 = vmatmul.mubr.f32.gmra.mrb[0].mxu0 %v6732
      %v7003 = vpop.f32.mrb[0].mxu0
      %v7004 = vadd.f32 0.0, %v7003
      %v7005 = vpop.f32.mrb[0].mxu0
      %7006 = vmatprep.mubr.f32.mxu0 %v6735
      %7007 = vmatmul.mubr.f32.gmra.mrb[0].mxu0 %v6734
      %v7008 = vpop.f32.mrb[0].mxu0
      %v7009 = vadd.f32 0.0, %v7008
      %v7010 = vpop.f32.mrb[0].mxu0
      %7011 = vmatprep.mubr.f32.mxu0 %v6737
      %7012 = vmatmul.mubr.f32.gmra.mrb[0].mxu0 %v6736
      %v7013 = vpop.f32.mrb[0].mxu0
      %v7014 = vadd.f32 0.0, %v7013
      %v7015 = vpop.f32.mrb[0].mxu0
      %7016 = vmatprep.mubr.f32.mxu0 %v6739
      %7017 = vmatmul.mubr.f32.gmra.mrb[0].mxu0 %v6738
      %v7018 = vpop.f32.mrb[0].mxu0
      %v7019 = vadd.f32 0.0, %v7018
      %v7020 = vpop.f32.mrb[0].mxu0
      %7021 = vmatprep.mubr.f32.mxu0 %v6741
      %7022 = vmatmul.mubr.f32.gmra.mrb[0].mxu0 %v6740
      %v7023 = vpop.f32.mrb[0].mxu0
      %v7024 = vadd.f32 0.0, %v7023
      %v7025 = vpop.f32.mrb[0].mxu0
      %7026 = vmatprep.mubr.f32.mxu0 %v6743
      %7027 = vmatmul.mubr.f32.gmra.mrb[0].mxu0 %v6742
      %v7028 = vpop.f32.mrb[0].mxu0
      %v7029 = vadd.f32 0.0, %v7028
      %v7030 = vpop.f32.mrb[0].mxu0
      %7031 = vmatprep.mubr.f32.mxu0 %v6745
      %7032 = vmatmul.mubr.f32.gmra.mrb[0].mxu0 %v6744
      %v7033 = vpop.f32.mrb[0].mxu0
      %v7034 = vadd.f32 0.0, %v7033
      %v7035 = vpop.f32.mrb[0].mxu0
      %7036 = vmatprep.mubr.f32.mxu0 %v6747
      %7037 = vmatmul.mubr.f32.gmra.mrb[0].mxu0 %v6746
      %v7038 = vpop.f32.mrb[0].mxu0
      %v7039 = vadd.f32 0.0, %v7038
      %v7040 = vpop.f32.mrb[0].mxu0
      %7041 = vmatprep.mubr.f32.mxu0 %v6749
      %7042 = vmatmul.mubr.f32.gmra.mrb[0].mxu0 %v6748
      %v7043 = vpop.f32.mrb[0].mxu0
      %v7044 = vadd.f32 0.0, %v7043
      %v7045 = vpop.f32.mrb[0].mxu0
      %7046 = vmatprep.mubr.f32.mxu0 %v6751
      %7047 = vmatmul.mubr.f32.gmra.mrb[0].mxu0 %v6750
      %v7048 = vpop.f32.mrb[0].mxu0
      %v7049 = vadd.f32 0.0, %v7048
      %v7050 = vpop.f32.mrb[0].mxu0
      %7051 = vmatprep.mubr.f32.mxu0 %v6753
      %7052 = vmatmul.mubr.f32.gmra.mrb[0].mxu0 %v6752
      %v7053 = vpop.f32.mrb[0].mxu0
      %v7054 = vadd.f32 0.0, %v7053
      %v7055 = vpop.f32.mrb[0].mxu0
      %7056 = vmatprep.mubr.f32.mxu0 %v6755
      %7057 = vmatmul.mubr.f32.gmra.mrb[0].mxu0 %v6754
      %v7058 = vpop.f32.mrb[0].mxu0
      %v7059 = vadd.f32 0.0, %v7058
      %v7060 = vpop.f32.mrb[0].mxu0
      %7061 = vmatprep.mubr.f32.mxu0 %v6757
      %7062 = vmatmul.mubr.f32.gmra.mrb[0].mxu0 %v6756
      %v7063 = vpop.f32.mrb[0].mxu0
      %v7064 = vadd.f32 0.0, %v7063
      %v7065 = vpop.f32.mrb[0].mxu0
      %7066 = vmatprep.mubr.f32.mxu0 %v6759
      %7067 = vmatmul.mubr.f32.gmra.mrb[0].mxu0 %v6758
      %v7068 = vpop.f32.mrb[0].mxu0
      %v7069 = vadd.f32 0.0, %v7068
      %v7070 = vpop.f32.mrb[0].mxu0
      %7071 = vmatprep.mubr.f32.mxu0 %v6761
      %7072 = vmatmul.mubr.f32.gmra.mrb[0].mxu0 %v6760
      %v7073 = vpop.f32.mrb[0].mxu0
      %v7074 = vadd.f32 0.0, %v7073
      %v7075 = vpop.f32.mrb[0].mxu0
      %7076 = vmatprep.mubr.f32.mxu0 %v6763
      %7077 = vmatmul.mubr.f32.gmra.mrb[0].mxu0 %v6762
      %v7078 = vpop.f32.mrb[0].mxu0
      %v7079 = vadd.f32 0.0, %v7078
      %v7080 = vpop.f32.mrb[0].mxu0
      %7081 = vmatprep.mubr.f32.mxu0 %v6765
      %7082 = vmatmul.mubr.f32.gmra.mrb[0].mxu0 %v6764
      %v7083 = vpop.f32.mrb[0].mxu0
      %v7084 = vadd.f32 0.0, %v7083
      %v7085 = vpop.f32.mrb[0].mxu0
      %7086 = vdwg.mxu0
      %v7088 = vsel %vm963, %v6929, 0
      %v7091 = vsel %vm963, %v6934, 0
      %v7094 = vsel %vm963, %v6939, 0
      %v7097 = vsel %vm963, %v6944, 0
      %v7100 = vsel %vm963, %v6949, 0
      %v7103 = vsel %vm963, %v6954, 0
      %v7106 = vsel %vm963, %v6959, 0
      %v7109 = vsel %vm963, %v6964, 0
      %v7112 = vsel %vm963, %v6969, 0
      %v7115 = vsel %vm963, %v6974, 0
      %v7118 = vsel %vm963, %v6979, 0
      %v7121 = vsel %vm963, %v6984, 0
      %v7124 = vsel %vm963, %v6989, 0
      %v7127 = vsel %vm963, %v6994, 0
      %v7130 = vsel %vm963, %v6999, 0
      %v7133 = vsel %vm963, %v7004, 0
      %v7136 = vsel %vm963, %v7009, 0
      %v7139 = vsel %vm963, %v7014, 0
      %v7142 = vsel %vm963, %v7019, 0
      %v7145 = vsel %vm963, %v7024, 0
      %v7148 = vsel %vm963, %v7029, 0
      %v7151 = vsel %vm963, %v7034, 0
      %v7154 = vsel %vm963, %v7039, 0
      %v7157 = vsel %vm963, %v7044, 0
      %v7160 = vsel %vm963, %v7049, 0
      %v7163 = vsel %vm963, %v7054, 0
      %v7166 = vsel %vm963, %v7059, 0
      %v7169 = vsel %vm963, %v7064, 0
      %v7172 = vsel %vm963, %v7069, 0
      %v7175 = vsel %vm963, %v7074, 0
      %v7178 = vsel %vm963, %v7079, 0
      %v7181 = vsel %vm963, %v7084, 0
      %7183 = vmatprep.subr.mxu0 0.0
      %7184 = vmatpush1.msra.mxu0 %v959
      %7185 = vmatprep.subr.mxu0 0.0
      %7186 = vmatpush1.msra.mxu0 %v960
      %7187 = vmatprep.subr.mxu0 0.0
      %7188 = vmatpush1.msra.mxu0 %v961
      %7189 = vmatprep.subr.mxu0 0.0
      %7190 = vmatpush1.msra.mxu0 %v962
      %7191 = vmatprep.subr.mxu0 0.0
      %7192 = vmatpush1.msra.mxu0 0.0
      %7193 = vmatprep.subr.mxu0 0.0
      %7194 = vmatpush1.msra.mxu0 0.0
      %7195 = vmatprep.subr.mxu0 0.0
      %7196 = vmatpush1.msra.mxu0 0.0
      %7197 = vmatprep.subr.mxu0 0.0
      %7198 = vmatpush1.msra.mxu0 0.0
      %7199 = vmatprep.subr.mxu0 0.0
      %7200 = vmatpush1.msra.mxu0 0.0
      %7201 = vmatprep.subr.mxu0 0.0
      %7202 = vmatpush1.msra.mxu0 0.0
      %7203 = vmatprep.subr.mxu0 0.0
      %7204 = vmatpush1.msra.mxu0 0.0
      %7205 = vmatprep.subr.mxu0 0.0
      %7206 = vmatpush1.msra.mxu0 0.0
      %7207 = vmatprep.subr.mxu0 0.0
      %7208 = vmatpush1.msra.mxu0 0.0
      %7209 = vmatprep.subr.mxu0 0.0
      %7210 = vmatpush1.msra.mxu0 0.0
      %7211 = vmatprep.subr.mxu0 0.0
      %7212 = vmatpush1.msra.mxu0 0.0
      %7213 = vmatprep.subr.mxu0 0.0
      %7214 = vmatpush1.msra.mxu0 0.0
      %7215 = vmatprep.subr.mxu0 0.0
      %7216 = vmatpush1.msra.mxu0 0.0
      %7217 = vmatprep.subr.mxu0 0.0
      %7218 = vmatpush1.msra.mxu0 0.0
      %7219 = vmatprep.subr.mxu0 0.0
      %7220 = vmatpush1.msra.mxu0 0.0
      %7221 = vmatprep.subr.mxu0 0.0
      %7222 = vmatpush1.msra.mxu0 0.0
      %7223 = vmatprep.subr.mxu0 0.0
      %7224 = vmatpush1.msra.mxu0 0.0
      %7225 = vmatprep.subr.mxu0 0.0
      %7226 = vmatpush1.msra.mxu0 0.0
      %7227 = vmatprep.subr.mxu0 0.0
      %7228 = vmatpush1.msra.mxu0 0.0
      %7229 = vmatprep.subr.mxu0 0.0
      %7230 = vmatpush1.msra.mxu0 0.0
      %7231 = vmatprep.subr.mxu0 0.0
      %7232 = vmatpush1.msra.mxu0 0.0
      %7233 = vmatprep.subr.mxu0 0.0
      %7234 = vmatpush1.msra.mxu0 0.0
      %7235 = vmatprep.subr.mxu0 0.0
      %7236 = vmatpush1.msra.mxu0 0.0
      %7237 = vmatprep.subr.mxu0 0.0
      %7238 = vmatpush1.msra.mxu0 0.0
      %7239 = vmatprep.subr.mxu0 0.0
      %7240 = vmatpush1.msra.mxu0 0.0
      %7241 = vmatprep.subr.mxu0 0.0
      %7242 = vmatpush1.msra.mxu0 0.0
      %7243 = vmatprep.subr.mxu0 0.0
      %7244 = vmatpush1.msra.mxu0 0.0
      %7245 = vmatprep.subr.mxu0 0.0
      %7246 = vmatpush1.msra.mxu0 0.0
      %7247 = vmatprep.mubr.f32.mxu0 0.0
      %7248 = vmatmul.mubr.f32.gmra.mrb[0].mxu0 %v7088
      %v7249 = vpop.f32.mrb[0].mxu0
      %v7250 = vadd.f32 0.0, %v7249
      %v7251 = vpop.f32.mrb[0].mxu0
      %7252 = vmatprep.mubr.f32.mxu0 0.0
      %7253 = vmatmul.mubr.f32.gmra.mrb[0].mxu0 %v7091
      %v7254 = vpop.f32.mrb[0].mxu0
      %v7255 = vadd.f32 0.0, %v7254
      %v7256 = vpop.f32.mrb[0].mxu0
      %7257 = vmatprep.mubr.f32.mxu0 0.0
      %7258 = vmatmul.mubr.f32.gmra.mrb[0].mxu0 %v7094
      %v7259 = vpop.f32.mrb[0].mxu0
      %v7260 = vadd.f32 0.0, %v7259
      %v7261 = vpop.f32.mrb[0].mxu0
      %7262 = vmatprep.mubr.f32.mxu0 0.0
      %7263 = vmatmul.mubr.f32.gmra.mrb[0].mxu0 %v7097
      %v7264 = vpop.f32.mrb[0].mxu0
      %v7265 = vadd.f32 0.0, %v7264
      %v7266 = vpop.f32.mrb[0].mxu0
      %7267 = vmatprep.mubr.f32.mxu0 0.0
      %7268 = vmatmul.mubr.f32.gmra.mrb[0].mxu0 %v7100
      %v7269 = vpop.f32.mrb[0].mxu0
      %v7270 = vadd.f32 0.0, %v7269
      %v7271 = vpop.f32.mrb[0].mxu0
      %7272 = vmatprep.mubr.f32.mxu0 0.0
      %7273 = vmatmul.mubr.f32.gmra.mrb[0].mxu0 %v7103
      %v7274 = vpop.f32.mrb[0].mxu0
      %v7275 = vadd.f32 0.0, %v7274
      %v7276 = vpop.f32.mrb[0].mxu0
      %7277 = vmatprep.mubr.f32.mxu0 0.0
      %7278 = vmatmul.mubr.f32.gmra.mrb[0].mxu0 %v7106
      %v7279 = vpop.f32.mrb[0].mxu0
      %v7280 = vadd.f32 0.0, %v7279
      %v7281 = vpop.f32.mrb[0].mxu0
      %7282 = vmatprep.mubr.f32.mxu0 0.0
      %7283 = vmatmul.mubr.f32.gmra.mrb[0].mxu0 %v7109
      %v7284 = vpop.f32.mrb[0].mxu0
      %v7285 = vadd.f32 0.0, %v7284
      %v7286 = vpop.f32.mrb[0].mxu0
      %7287 = vmatprep.mubr.f32.mxu0 0.0
      %7288 = vmatmul.mubr.f32.gmra.mrb[0].mxu0 %v7112
      %v7289 = vpop.f32.mrb[0].mxu0
      %v7290 = vadd.f32 0.0, %v7289
      %v7291 = vpop.f32.mrb[0].mxu0
      %7292 = vmatprep.mubr.f32.mxu0 0.0
      %7293 = vmatmul.mubr.f32.gmra.mrb[0].mxu0 %v7115
      %v7294 = vpop.f32.mrb[0].mxu0
      %v7295 = vadd.f32 0.0, %v7294
      %v7296 = vpop.f32.mrb[0].mxu0
      %7297 = vmatprep.mubr.f32.mxu0 0.0
      %7298 = vmatmul.mubr.f32.gmra.mrb[0].mxu0 %v7118
      %v7299 = vpop.f32.mrb[0].mxu0
      %v7300 = vadd.f32 0.0, %v7299
      %v7301 = vpop.f32.mrb[0].mxu0
      %7302 = vmatprep.mubr.f32.mxu0 0.0
      %7303 = vmatmul.mubr.f32.gmra.mrb[0].mxu0 %v7121
      %v7304 = vpop.f32.mrb[0].mxu0
      %v7305 = vadd.f32 0.0, %v7304
      %v7306 = vpop.f32.mrb[0].mxu0
      %7307 = vmatprep.mubr.f32.mxu0 0.0
      %7308 = vmatmul.mubr.f32.gmra.mrb[0].mxu0 %v7124
      %v7309 = vpop.f32.mrb[0].mxu0
      %v7310 = vadd.f32 0.0, %v7309
      %v7311 = vpop.f32.mrb[0].mxu0
      %7312 = vmatprep.mubr.f32.mxu0 0.0
      %7313 = vmatmul.mubr.f32.gmra.mrb[0].mxu0 %v7127
      %v7314 = vpop.f32.mrb[0].mxu0
      %v7315 = vadd.f32 0.0, %v7314
      %v7316 = vpop.f32.mrb[0].mxu0
      %7317 = vmatprep.mubr.f32.mxu0 0.0
      %7318 = vmatmul.mubr.f32.gmra.mrb[0].mxu0 %v7130
      %v7319 = vpop.f32.mrb[0].mxu0
      %v7320 = vadd.f32 0.0, %v7319
      %v7321 = vpop.f32.mrb[0].mxu0
      %7322 = vmatprep.mubr.f32.mxu0 0.0
      %7323 = vmatmul.mubr.f32.gmra.mrb[0].mxu0 %v7133
      %v7324 = vpop.f32.mrb[0].mxu0
      %v7325 = vadd.f32 0.0, %v7324
      %v7326 = vpop.f32.mrb[0].mxu0
      %7327 = vmatprep.mubr.f32.mxu0 0.0
      %7328 = vmatmul.mubr.f32.gmra.mrb[0].mxu0 %v7136
      %v7329 = vpop.f32.mrb[0].mxu0
      %v7330 = vadd.f32 0.0, %v7329
      %v7331 = vpop.f32.mrb[0].mxu0
      %7332 = vmatprep.mubr.f32.mxu0 0.0
      %7333 = vmatmul.mubr.f32.gmra.mrb[0].mxu0 %v7139
      %v7334 = vpop.f32.mrb[0].mxu0
      %v7335 = vadd.f32 0.0, %v7334
      %v7336 = vpop.f32.mrb[0].mxu0
      %7337 = vmatprep.mubr.f32.mxu0 0.0
      %7338 = vmatmul.mubr.f32.gmra.mrb[0].mxu0 %v7142
      %v7339 = vpop.f32.mrb[0].mxu0
      %v7340 = vadd.f32 0.0, %v7339
      %v7341 = vpop.f32.mrb[0].mxu0
      %7342 = vmatprep.mubr.f32.mxu0 0.0
      %7343 = vmatmul.mubr.f32.gmra.mrb[0].mxu0 %v7145
      %v7344 = vpop.f32.mrb[0].mxu0
      %v7345 = vadd.f32 0.0, %v7344
      %v7346 = vpop.f32.mrb[0].mxu0
      %7347 = vmatprep.mubr.f32.mxu0 0.0
      %7348 = vmatmul.mubr.f32.gmra.mrb[0].mxu0 %v7148
      %v7349 = vpop.f32.mrb[0].mxu0
      %v7350 = vadd.f32 0.0, %v7349
      %v7351 = vpop.f32.mrb[0].mxu0
      %7352 = vmatprep.mubr.f32.mxu0 0.0
      %7353 = vmatmul.mubr.f32.gmra.mrb[0].mxu0 %v7151
      %v7354 = vpop.f32.mrb[0].mxu0
      %v7355 = vadd.f32 0.0, %v7354
      %v7356 = vpop.f32.mrb[0].mxu0
      %7357 = vmatprep.mubr.f32.mxu0 0.0
      %7358 = vmatmul.mubr.f32.gmra.mrb[0].mxu0 %v7154
      %v7359 = vpop.f32.mrb[0].mxu0
      %v7360 = vadd.f32 0.0, %v7359
      %v7361 = vpop.f32.mrb[0].mxu0
      %7362 = vmatprep.mubr.f32.mxu0 0.0
      %7363 = vmatmul.mubr.f32.gmra.mrb[0].mxu0 %v7157
      %v7364 = vpop.f32.mrb[0].mxu0
      %v7365 = vadd.f32 0.0, %v7364
      %v7366 = vpop.f32.mrb[0].mxu0
      %7367 = vmatprep.mubr.f32.mxu0 0.0
      %7368 = vmatmul.mubr.f32.gmra.mrb[0].mxu0 %v7160
      %v7369 = vpop.f32.mrb[0].mxu0
      %v7370 = vadd.f32 0.0, %v7369
      %v7371 = vpop.f32.mrb[0].mxu0
      %7372 = vmatprep.mubr.f32.mxu0 0.0
      %7373 = vmatmul.mubr.f32.gmra.mrb[0].mxu0 %v7163
      %v7374 = vpop.f32.mrb[0].mxu0
      %v7375 = vadd.f32 0.0, %v7374
      %v7376 = vpop.f32.mrb[0].mxu0
      %7377 = vmatprep.mubr.f32.mxu0 0.0
      %7378 = vmatmul.mubr.f32.gmra.mrb[0].mxu0 %v7166
      %v7379 = vpop.f32.mrb[0].mxu0
      %v7380 = vadd.f32 0.0, %v7379
      %v7381 = vpop.f32.mrb[0].mxu0
      %7382 = vmatprep.mubr.f32.mxu0 0.0
      %7383 = vmatmul.mubr.f32.gmra.mrb[0].mxu0 %v7169
      %v7384 = vpop.f32.mrb[0].mxu0
      %v7385 = vadd.f32 0.0, %v7384
      %v7386 = vpop.f32.mrb[0].mxu0
      %7387 = vmatprep.mubr.f32.mxu0 0.0
      %7388 = vmatmul.mubr.f32.gmra.mrb[0].mxu0 %v7172
      %v7389 = vpop.f32.mrb[0].mxu0
      %v7390 = vadd.f32 0.0, %v7389
      %v7391 = vpop.f32.mrb[0].mxu0
      %7392 = vmatprep.mubr.f32.mxu0 0.0
      %7393 = vmatmul.mubr.f32.gmra.mrb[0].mxu0 %v7175
      %v7394 = vpop.f32.mrb[0].mxu0
      %v7395 = vadd.f32 0.0, %v7394
      %v7396 = vpop.f32.mrb[0].mxu0
      %7397 = vmatprep.mubr.f32.mxu0 0.0
      %7398 = vmatmul.mubr.f32.gmra.mrb[0].mxu0 %v7178
      %v7399 = vpop.f32.mrb[0].mxu0
      %v7400 = vadd.f32 0.0, %v7399
      %v7401 = vpop.f32.mrb[0].mxu0
      %7402 = vmatprep.mubr.f32.mxu0 0.0
      %7403 = vmatmul.mubr.f32.gmra.mrb[0].mxu0 %v7181
      %v7404 = vpop.f32.mrb[0].mxu0
      %v7405 = vadd.f32 0.0, %v7404
      %v7406 = vpop.f32.mrb[0].mxu0
      %7407 = vdwg.mxu0
      %v7408 = vadd.f32 %v5741, %v7250
      %v7409 = vadd.f32 %v5742, %v7255
      %v7410 = vadd.f32 %v5743, %v7260
      %v7411 = vadd.f32 %v5744, %v7265
      %v7412 = vadd.f32 %v5745, %v7270
      %v7413 = vadd.f32 %v5746, %v7275
      %v7414 = vadd.f32 %v5747, %v7280
      %v7415 = vadd.f32 %v5748, %v7285
      %v7416 = vadd.f32 %v5749, %v7290
      %v7417 = vadd.f32 %v5750, %v7295
      %v7418 = vadd.f32 %v5751, %v7300
      %v7419 = vadd.f32 %v5752, %v7305
      %v7420 = vadd.f32 %v5753, %v7310
      %v7421 = vadd.f32 %v5754, %v7315
      %v7422 = vadd.f32 %v5755, %v7320
      %v7423 = vadd.f32 %v5756, %v7325
      %v7424 = vadd.f32 %v5757, %v7330
      %v7425 = vadd.f32 %v5758, %v7335
      %v7426 = vadd.f32 %v5759, %v7340
      %v7427 = vadd.f32 %v5760, %v7345
      %v7428 = vadd.f32 %v5761, %v7350
      %v7429 = vadd.f32 %v5762, %v7355
      %v7430 = vadd.f32 %v5763, %v7360
      %v7431 = vadd.f32 %v5764, %v7365
      %v7432 = vadd.f32 %v5765, %v7370
      %v7433 = vadd.f32 %v5766, %v7375
      %v7434 = vadd.f32 %v5767, %v7380
      %v7435 = vadd.f32 %v5768, %v7385
      %v7436 = vadd.f32 %v5769, %v7390
      %v7437 = vadd.f32 %v5770, %v7395
      %v7438 = vadd.f32 %v5771, %v7400
      %v7439 = vadd.f32 %v5772, %v7405
      %v7440 = vld [vmem:[%s5] sm:$0x1]
      %v7442 = vlaneseq
      %v7443 = vshrl.u32 %v7442, 7
      %v7444 = vsub.s32 0, %v7443
      %v7445 = vrot.slane %v7440, %v7444
      %v7447 = vadd.f32 %v7408, %v7445
      %v7448 = vadd.f32 %v7409, %v7445
      %v7449 = vadd.f32 %v7410, %v7445
      %v7450 = vadd.f32 %v7411, %v7445
      %v7451 = vadd.f32 %v7412, %v7445
      %v7452 = vadd.f32 %v7413, %v7445
      %v7453 = vadd.f32 %v7414, %v7445
      %v7454 = vadd.f32 %v7415, %v7445
      %v7455 = vadd.f32 %v7416, %v7445
      %v7456 = vadd.f32 %v7417, %v7445
      %v7457 = vadd.f32 %v7418, %v7445
      %v7458 = vadd.f32 %v7419, %v7445
      %v7459 = vadd.f32 %v7420, %v7445
      %v7460 = vadd.f32 %v7421, %v7445
      %v7461 = vadd.f32 %v7422, %v7445
      %v7462 = vadd.f32 %v7423, %v7445
      %v7463 = vadd.f32 %v7424, %v7445
      %v7464 = vadd.f32 %v7425, %v7445
      %v7465 = vadd.f32 %v7426, %v7445
      %v7466 = vadd.f32 %v7427, %v7445
      %v7467 = vadd.f32 %v7428, %v7445
      %v7468 = vadd.f32 %v7429, %v7445
      %v7469 = vadd.f32 %v7430, %v7445
      %v7470 = vadd.f32 %v7431, %v7445
      %v7471 = vadd.f32 %v7432, %v7445
      %v7472 = vadd.f32 %v7433, %v7445
      %v7473 = vadd.f32 %v7434, %v7445
      %v7474 = vadd.f32 %v7435, %v7445
      %v7475 = vadd.f32 %v7436, %v7445
      %v7476 = vadd.f32 %v7437, %v7445
      %v7477 = vadd.f32 %v7438, %v7445
      %v7478 = vadd.f32 %v7439, %v7445
      %7479 = vst [vmem:[%s271] sm:$0xff] %v7447
      %7480 = vst [vmem:[%s271 + $0x8] sm:$0xff] %v7448
      %7481 = vst [vmem:[%s271 + $0x10] sm:$0xff] %v7449
      %7482 = vst [vmem:[%s271 + $0x18] sm:$0xff] %v7450
      %7483 = vst [vmem:[%s271 + $0x20] sm:$0xff] %v7451
      %7484 = vst [vmem:[%s271 + $0x28] sm:$0xff] %v7452
      %7485 = vst [vmem:[%s271 + $0x30] sm:$0xff] %v7453
      %7486 = vst [vmem:[%s271 + $0x38] sm:$0xff] %v7454
      %7487 = vst [vmem:[%s271 + $0x40] sm:$0xff] %v7455
      %7488 = vst [vmem:[%s271 + $0x48] sm:$0xff] %v7456
      %7489 = vst [vmem:[%s271 + $0x50] sm:$0xff] %v7457
      %7490 = vst [vmem:[%s271 + $0x58] sm:$0xff] %v7458
      %7491 = vst [vmem:[%s271 + $0x60] sm:$0xff] %v7459
      %7492 = vst [vmem:[%s271 + $0x68] sm:$0xff] %v7460
      %7493 = vst [vmem:[%s271 + $0x70] sm:$0xff] %v7461
      %7494 = vst [vmem:[%s271 + $0x78] sm:$0xff] %v7462
      %7495 = vst [vmem:[%s271 + $0x80] sm:$0xff] %v7463
      %7496 = vst [vmem:[%s271 + $0x88] sm:$0xff] %v7464
      %7497 = vst [vmem:[%s271 + $0x90] sm:$0xff] %v7465
      %7498 = vst [vmem:[%s271 + $0x98] sm:$0xff] %v7466
      %7499 = vst [vmem:[%s271 + $0xa0] sm:$0xff] %v7467
      %7500 = vst [vmem:[%s271 + $0xa8] sm:$0xff] %v7468
      %7501 = vst [vmem:[%s271 + $0xb0] sm:$0xff] %v7469
      %7502 = vst [vmem:[%s271 + $0xb8] sm:$0xff] %v7470
      %7503 = vst [vmem:[%s271 + $0xc0] sm:$0xff] %v7471
      %7504 = vst [vmem:[%s271 + $0xc8] sm:$0xff] %v7472
      %7505 = vst [vmem:[%s271 + $0xd0] sm:$0xff] %v7473
      %7506 = vst [vmem:[%s271 + $0xd8] sm:$0xff] %v7474
      %7507 = vst [vmem:[%s271 + $0xe0] sm:$0xff] %v7475
      %7508 = vst [vmem:[%s271 + $0xe8] sm:$0xff] %v7476
      %7509 = vst [vmem:[%s271 + $0xf0] sm:$0xff] %v7477
      %7510 = vst [vmem:[%s271 + $0xf8] sm:$0xff] %v7478
      %p7511 = scmp.lt.s32.totalorder %s17, 1
      %s7512 = scalar_select %p7511, %s17, 1
      %s7513 = smul.addr %s7512, 32
      %s7514 = smul.addr %s7513, 8
      %s7515 = scalar_lea.vmem %s6, %s7514
      // Predicated region
      $region45: #{_lambda_.1} parent=43 // pred_check
        %p7516 = pneg %p171
      $region46: #{_lambda_.1} parent=43 // pred_check_branch
        %7518 = sbr.rel (%p7516) target = $region48
      $region47: #{_lambda_.1} parent=43 // pred_region
        _
      $region48: #{_lambda_.1} parent=43 // pred_fallthru
        _
    $region44: #{_lambda_.1} parent=5 // pred_fallthru
      _
    %p7519 = scmp.le.s32.totalorder 2, %s12
    // Predicated region
    $region49: #{_lambda_.1} parent=5 // pred_check
      %p7520 = pneg %p7519
    $region50: #{_lambda_.1} parent=5 // pred_check_branch
      %7522 = sbr.rel (%p7520) target = $region52
    $region51: #{_lambda_.1} parent=5 // pred_region
      %s7523 = ssub.s32 %s12, 2
      // Predicated region
      $region53: #{_lambda_.1} parent=51 // pred_check
        %p7524 = pneg %p177
      $region54: #{_lambda_.1} parent=51 // pred_check_branch
        %7526 = sbr.rel (%p7524) target = $region56
      $region55: #{_lambda_.1} parent=51 // pred_region
        %p7527 = scmp.lt.s32.totalorder %s18, 1
        %s7528 = scalar_select %p7527, %s18, 1
        %s7529 = smul.addr %s7528, 32
        %s7530 = smul.addr %s7529, 8
        %s7531 = scalar_lea.vmem %s6, %s7530
      $region56: #{_lambda_.1} parent=51 // pred_fallthru
        _
    $region52: #{_lambda_.1} parent=5 // pred_fallthru
      _
  $region6: #{_lambda_.1} parent=0 // loop_footer
    %s16 = sadd.s32 1, %s12
  $region7: #{_lambda_.1} parent=0 // loop_footer_branch
    %11 = sbr.rel target = $region3
  $region8: #{_lambda_.1} parent=0 // loop_exit
    _

</llo_original>
